<compile_context>
chip_gen: v6e
topology: v6e:2x2x1
jax: 0.10.0
libtpu: 0.0.40
codegen_flags: <defaults>
</compile_context>

<pallas_src>
import functools

import jax
import jax.numpy as jnp
from jax.experimental import pallas as pl
from jax.experimental.pallas import tpu as pltpu


def _round_up(x, m):
    return (x + m - 1) // m * m


# ---------------------------------------------------------------------------
# Fused kernel: conv3x3(SAME) + bias + ReLU + global-average-pool + fc head.
# Grid = (B, R) with R = cdiv(H, tr); spatial axis is the reduction axis.
#
#   x_ref  : (tr+2, W+2, cin_p)  bf16  haloed row tile of one batch element
#   wt_ref : (9, cin_p, cout_p)  bf16  conv weights, tap-major (dy*3 + dx)
#   bc_ref : (1, cout_p)         f32   conv bias
#   wh_ref : (cout_p, nc_p)      f32   head weight
#   bh_ref : (1, nc_p)           f32   head bias
#   o_ref  : (1, nc_p)           f32   logits for this batch element
#   acc_ref: (1, cout_p)         f32   GAP accumulator (VMEM scratch)
# ---------------------------------------------------------------------------
def _fused_classifier_kernel(x_ref, wt_ref, bc_ref, wh_ref, bh_ref, o_ref,
                             acc_ref, *, tr, h, w, cout_p):
    r = pl.program_id(1)

    @pl.when(r == 0)
    def _init():
        acc_ref[...] = jnp.zeros_like(acc_ref)

    bias = bc_ref[...]                                    # (1, cout_p) f32

    # tr output rows per grid step; conv is expressed as 9 shifted
    # (W, Cin) @ (Cin, Cout) matmuls per row — im2col lives only in vregs.
    for rr in range(tr):
        row_acc = jnp.zeros((w, cout_p), jnp.float32)
        for dy in range(3):
            for dx in range(3):
                tap = x_ref[rr + dy, dx:dx + w, :]        # (w, cin_p) bf16
                row_acc = row_acc + jnp.dot(
                    tap, wt_ref[dy * 3 + dx],
                    preferred_element_type=jnp.float32)
        act = jnp.maximum(row_acc + bias, 0.0)            # (w, cout_p)
        colsum = jnp.sum(act, axis=0, keepdims=True)      # (1, cout_p)
        valid = (r * tr + rr) < h                         # tail-row mask
        acc_ref[...] += jnp.where(valid, colsum, 0.0)

    @pl.when(r == pl.num_programs(1) - 1)
    def _finalize():
        pooled = acc_ref[...] * (1.0 / (h * w))           # (1, cout_p) f32
        logits = jnp.dot(pooled, wh_ref[...],
                         preferred_element_type=jnp.float32) + bh_ref[...]
        o_ref[...] = logits                               # lane-dense (1, nc_p)


def classifier_forward(x_nchw, params, *, tile_rows=8):
    """Forward pass of the Classifier. x is NCHW like PyTorch."""
    w_conv, b_conv, w_head, b_head = params
    B, Cin, H, W = x_nchw.shape
    Cout = w_conv.shape[0]
    NC = w_head.shape[1]

    tr = min(tile_rows, H)
    R = pl.cdiv(H, tr)
    Hp = R * tr

    cin_p = _round_up(Cin, 8)        # contraction dim, sublane aligned
    cout_p = _round_up(Cout, 128)    # lane-dense conv channels
    nc_p = _round_up(NC, 128)        # lane-dense logits

    # ---- layout plumbing (plain JAX): NCHW -> NHWC, SAME pad, halo row tiles
    x = jnp.transpose(x_nchw, (0, 2, 3, 1))               # (B, H, W, Cin)
    x = jnp.pad(x, ((0, 0), (1, 1 + Hp - H), (1, 1), (0, cin_p - Cin)))
    # x: (B, Hp+2, W+2, cin_p).  Halo tiles: rows [r*tr, r*tr + tr + 2).
    row_idx = jnp.arange(R)[:, None] * tr + jnp.arange(tr + 2)[None, :]
    xt = x[:, row_idx, :, :].astype(jnp.bfloat16)         # (B,R,tr+2,W+2,cin_p)

    # conv weight (Cout, Cin, 3, 3) -> (3,3,Cin,Cout) -> (9, cin_p, cout_p)
    wt = jnp.transpose(w_conv, (2, 3, 1, 0)).reshape(9, Cin, Cout)
    wt = jnp.pad(wt, ((0, 0), (0, cin_p - Cin),
                      (0, cout_p - Cout))).astype(jnp.bfloat16)
    bc = jnp.pad(b_conv, (0, cout_p - Cout)).reshape(1, cout_p).astype(jnp.float32)
    wh = jnp.pad(w_head, ((0, cout_p - Cout),
                          (0, nc_p - NC))).astype(jnp.float32)
    bh = jnp.pad(b_head, (0, nc_p - NC)).reshape(1, nc_p).astype(jnp.float32)

    kernel = functools.partial(_fused_classifier_kernel,
                               tr=tr, h=H, w=W, cout_p=cout_p)

    out = pl.pallas_call(
        kernel,
        out_shape=jax.ShapeDtypeStruct((B, 1, nc_p), jnp.float32),
        grid_spec=pltpu.PrefetchScalarGridSpec(
            num_scalar_prefetch=0,
            grid=(B, R),
            in_specs=[
                pl.BlockSpec((None, None, tr + 2, W + 2, cin_p),
                             lambda b, r: (b, r, 0, 0, 0)),
                pl.BlockSpec((9, cin_p, cout_p), lambda b, r: (0, 0, 0)),
                pl.BlockSpec((1, cout_p), lambda b, r: (0, 0)),
                pl.BlockSpec((cout_p, nc_p), lambda b, r: (0, 0)),
                pl.BlockSpec((1, nc_p), lambda b, r: (0, 0)),
            ],
            out_specs=pl.BlockSpec((None, 1, nc_p), lambda b, r: (b, 0, 0)),
            scratch_shapes=[pltpu.VMEM((1, cout_p), jnp.float32)],
        ),
        compiler_params=pltpu.CompilerParams(
            dimension_semantics=("parallel", "arbitrary")),
    )(xt, wt, bc, wh, bh)

    return out[:, 0, :NC]                                  # (B, num_classes)


# ---------------------------------------------------------------------------
# Pure-JAX reference for verification
# ---------------------------------------------------------------------------
def reference_forward(x_nchw, params):
    w_conv, b_conv, w_head, b_head = params
    y = jax.lax.conv_general_dilated(
        x_nchw, w_conv, window_strides=(1, 1), padding="SAME",
        dimension_numbers=("NCHW", "OIHW", "NCHW"))
    y = jax.nn.relu(y + b_conv[None, :, None, None])
    pooled = jnp.mean(y, axis=(2, 3))
    return pooled @ w_head + b_head


if __name__ == "__main__":
    # Small shapes consistent with an image classifier forward.
    B, Cin, H, W = 2, 4, 16, 16
    Chid = 32
    num_classes = 10

    key = jax.random.PRNGKey(0)
    kx, kw1, kb1, kw2, kb2 = jax.random.split(key, 5)

    x = jax.random.normal(kx, (B, Cin, H, W), dtype=jnp.float32)

    w_conv = 0.1 * jax.random.normal(kw1, (Chid, Cin, 3, 3), dtype=jnp.float32)
    b_conv = 0.05 * jax.random.normal(kb1, (Chid,), dtype=jnp.float32)
    w_head = 0.1 * jax.random.normal(kw2, (Chid, num_classes), dtype=jnp.float32)
    b_head = 0.05 * jax.random.normal(kb2, (num_classes,), dtype=jnp.float32)
    params = (w_conv, b_conv, w_head, b_head)

    out = classifier_forward(x, params)
    out = jax.block_until_ready(out)

    ref = jax.block_until_ready(reference_forward(x, params))
    assert out.shape == (B, num_classes), out.shape
    assert jnp.allclose(out, ref, atol=1e-2, rtol=1e-2), (
        "mismatch vs reference: max abs err "
        f"{float(jnp.max(jnp.abs(out - ref)))}")

    print("KERNEL_OK")
</pallas_src>

<mosaic_0001>
module attributes {stable_mosaic.version = 11 : i64} {
  func.func @_fused_classifier_kernel(%arg0: i32, %arg1: i32, %arg2: memref<1x1x10x18x8xbf16, #tpu.memory_space<vmem>>, %arg3: memref<9x8x128xbf16, #tpu.memory_space<vmem>>, %arg4: memref<1x128xf32, #tpu.memory_space<vmem>>, %arg5: memref<128x128xf32, #tpu.memory_space<vmem>>, %arg6: memref<1x128xf32, #tpu.memory_space<vmem>>, %arg7: memref<1x1x128xf32, #tpu.memory_space<vmem>>, %arg8: memref<1x128xf32, #tpu.memory_space<vmem>>) attributes {dimension_semantics = [#tpu.dimension_semantics<parallel>, #tpu.dimension_semantics<arbitrary>], iteration_bounds = array<i64: 2, 2>, scalar_prefetch = 0 : i64, scratch_operands = 1 : i64, tpu.core_type = #tpu.core_type<tc>, window_params = [{transform_indices = @transform_0, window_bounds = array<i64: 1, 1, 10, 18, 8>}, {pipeline_mode = #tpu.pipeline_mode<synchronous>, transform_indices = @transform_1, window_bounds = array<i64: 9, 8, 128>}, {pipeline_mode = #tpu.pipeline_mode<synchronous>, transform_indices = @transform_2, window_bounds = array<i64: 1, 128>}, {pipeline_mode = #tpu.pipeline_mode<synchronous>, transform_indices = @transform_3, window_bounds = array<i64: 128, 128>}, {pipeline_mode = #tpu.pipeline_mode<synchronous>, transform_indices = @transform_4, window_bounds = array<i64: 1, 128>}, {transform_indices = @transform_5, window_bounds = array<i64: 1, 1, 128>}]} {
    %c0_i32 = arith.constant 0 : i32
    %0 = arith.cmpi eq, %arg1, %c0_i32 : i32
    %1 = arith.extui %0 : i1 to i32
    %c0_i32_0 = arith.constant 0 : i32
    %2 = arith.cmpi ne, %1, %c0_i32_0 : i32
    scf.if %2 {
      %cst_721 = arith.constant 0.000000e+00 : f32
      %559 = vector.broadcast %cst_721 : f32 to vector<1x128xf32>
      %c0_722 = arith.constant 0 : index
      %c0_723 = arith.constant 0 : index
      %560 = vector.load %arg8[%c0_722, %c0_723] : memref<1x128xf32, #tpu.memory_space<vmem>>, vector<1x128xf32>
      tpu.vector_store %arg8[%c0_722, %c0_723], %559 {strides = array<i32>} : memref<1x128xf32, #tpu.memory_space<vmem>>, vector<1x128xf32>,
    } else {
    }
    %c0 = arith.constant 0 : index
    %c0_1 = arith.constant 0 : index
    %3 = vector.load %arg4[%c0, %c0_1] : memref<1x128xf32, #tpu.memory_space<vmem>>, vector<1x128xf32>
    %cst = arith.constant 0.000000e+00 : f32
    %4 = vector.broadcast %cst : f32 to vector<16x128xf32>
    %c0_2 = arith.constant 0 : index
    %c0_3 = arith.constant 0 : index
    %c0_4 = arith.constant 0 : index
    %c0_5 = arith.constant 0 : index
    %c0_6 = arith.constant 0 : index
    %5 = vector.load %arg2[%c0_2, %c0_3, %c0_4, %c0_5, %c0_6] : memref<1x1x10x18x8xbf16, #tpu.memory_space<vmem>>, vector<1x1x1x16x8xbf16>
    %6 = vector.shape_cast %5 : vector<1x1x1x16x8xbf16> to vector<16x8xbf16>
    %c0_7 = arith.constant 0 : index
    %c0_8 = arith.constant 0 : index
    %c0_9 = arith.constant 0 : index
    %7 = vector.load %arg3[%c0_7, %c0_8, %c0_9] : memref<9x8x128xbf16, #tpu.memory_space<vmem>>, vector<1x8x128xbf16>
    %8 = vector.shape_cast %7 : vector<1x8x128xbf16> to vector<8x128xbf16>
    %cst_10 = arith.constant dense<0.000000e+00> : vector<16x128xf32>
    %9 = tpu.matmul %6, %8, %cst_10 {dimension_numbers = #tpu.dot_dimension_numbers<[1], [0], [0], [1], [0, 0, 1, 1], [], []>} : vector<16x8xbf16>, vector<8x128xbf16>, vector<16x128xf32> -> vector<16x128xf32>
    %10 = arith.addf %4, %9 : vector<16x128xf32>
    %c0_11 = arith.constant 0 : index
    %c0_12 = arith.constant 0 : index
    %c0_13 = arith.constant 0 : index
    %c1 = arith.constant 1 : index
    %c0_14 = arith.constant 0 : index
    %11 = vector.load %arg2[%c0_11, %c0_12, %c0_13, %c1, %c0_14] : memref<1x1x10x18x8xbf16, #tpu.memory_space<vmem>>, vector<1x1x1x16x8xbf16>
    %12 = vector.shape_cast %11 : vector<1x1x1x16x8xbf16> to vector<16x8xbf16>
    %c1_15 = arith.constant 1 : index
    %c0_16 = arith.constant 0 : index
    %c0_17 = arith.constant 0 : index
    %13 = vector.load %arg3[%c1_15, %c0_16, %c0_17] : memref<9x8x128xbf16, #tpu.memory_space<vmem>>, vector<1x8x128xbf16>
    %14 = vector.shape_cast %13 : vector<1x8x128xbf16> to vector<8x128xbf16>
    %cst_18 = arith.constant dense<0.000000e+00> : vector<16x128xf32>
    %15 = tpu.matmul %12, %14, %cst_18 {dimension_numbers = #tpu.dot_dimension_numbers<[1], [0], [0], [1], [0, 0, 1, 1], [], []>} : vector<16x8xbf16>, vector<8x128xbf16>, vector<16x128xf32> -> vector<16x128xf32>
    %16 = arith.addf %10, %15 : vector<16x128xf32>
    %c0_19 = arith.constant 0 : index
    %c0_20 = arith.constant 0 : index
    %c0_21 = arith.constant 0 : index
    %c2 = arith.constant 2 : index
    %c0_22 = arith.constant 0 : index
    %17 = vector.load %arg2[%c0_19, %c0_20, %c0_21, %c2, %c0_22] : memref<1x1x10x18x8xbf16, #tpu.memory_space<vmem>>, vector<1x1x1x16x8xbf16>
    %18 = vector.shape_cast %17 : vector<1x1x1x16x8xbf16> to vector<16x8xbf16>
    %c2_23 = arith.constant 2 : index
    %c0_24 = arith.constant 0 : index
    %c0_25 = arith.constant 0 : index
    %19 = vector.load %arg3[%c2_23, %c0_24, %c0_25] : memref<9x8x128xbf16, #tpu.memory_space<vmem>>, vector<1x8x128xbf16>
    %20 = vector.shape_cast %19 : vector<1x8x128xbf16> to vector<8x128xbf16>
    %cst_26 = arith.constant dense<0.000000e+00> : vector<16x128xf32>
    %21 = tpu.matmul %18, %20, %cst_26 {dimension_numbers = #tpu.dot_dimension_numbers<[1], [0], [0], [1], [0, 0, 1, 1], [], []>} : vector<16x8xbf16>, vector<8x128xbf16>, vector<16x128xf32> -> vector<16x128xf32>
    %22 = arith.addf %16, %21 : vector<16x128xf32>
    %c0_27 = arith.constant 0 : index
    %c0_28 = arith.constant 0 : index
    %c1_29 = arith.constant 1 : index
    %c0_30 = arith.constant 0 : index
    %c0_31 = arith.constant 0 : index
    %23 = vector.load %arg2[%c0_27, %c0_28, %c1_29, %c0_30, %c0_31] : memref<1x1x10x18x8xbf16, #tpu.memory_space<vmem>>, vector<1x1x1x16x8xbf16>
    %24 = vector.shape_cast %23 : vector<1x1x1x16x8xbf16> to vector<16x8xbf16>
    %c3 = arith.constant 3 : index
    %c0_32 = arith.constant 0 : index
    %c0_33 = arith.constant 0 : index
    %25 = vector.load %arg3[%c3, %c0_32, %c0_33] : memref<9x8x128xbf16, #tpu.memory_space<vmem>>, vector<1x8x128xbf16>
    %26 = vector.shape_cast %25 : vector<1x8x128xbf16> to vector<8x128xbf16>
    %cst_34 = arith.constant dense<0.000000e+00> : vector<16x128xf32>
    %27 = tpu.matmul %24, %26, %cst_34 {dimension_numbers = #tpu.dot_dimension_numbers<[1], [0], [0], [1], [0, 0, 1, 1], [], []>} : vector<16x8xbf16>, vector<8x128xbf16>, vector<16x128xf32> -> vector<16x128xf32>
    %28 = arith.addf %22, %27 : vector<16x128xf32>
    %c0_35 = arith.constant 0 : index
    %c0_36 = arith.constant 0 : index
    %c1_37 = arith.constant 1 : index
    %c1_38 = arith.constant 1 : index
    %c0_39 = arith.constant 0 : index
    %29 = vector.load %arg2[%c0_35, %c0_36, %c1_37, %c1_38, %c0_39] : memref<1x1x10x18x8xbf16, #tpu.memory_space<vmem>>, vector<1x1x1x16x8xbf16>
    %30 = vector.shape_cast %29 : vector<1x1x1x16x8xbf16> to vector<16x8xbf16>
    %c4 = arith.constant 4 : index
    %c0_40 = arith.constant 0 : index
    %c0_41 = arith.constant 0 : index
    %31 = vector.load %arg3[%c4, %c0_40, %c0_41] : memref<9x8x128xbf16, #tpu.memory_space<vmem>>, vector<1x8x128xbf16>
    %32 = vector.shape_cast %31 : vector<1x8x128xbf16> to vector<8x128xbf16>
    %cst_42 = arith.constant dense<0.000000e+00> : vector<16x128xf32>
    %33 = tpu.matmul %30, %32, %cst_42 {dimension_numbers = #tpu.dot_dimension_numbers<[1], [0], [0], [1], [0, 0, 1, 1], [], []>} : vector<16x8xbf16>, vector<8x128xbf16>, vector<16x128xf32> -> vector<16x128xf32>
    %34 = arith.addf %28, %33 : vector<16x128xf32>
    %c0_43 = arith.constant 0 : index
    %c0_44 = arith.constant 0 : index
    %c1_45 = arith.constant 1 : index
    %c2_46 = arith.constant 2 : index
    %c0_47 = arith.constant 0 : index
    %35 = vector.load %arg2[%c0_43, %c0_44, %c1_45, %c2_46, %c0_47] : memref<1x1x10x18x8xbf16, #tpu.memory_space<vmem>>, vector<1x1x1x16x8xbf16>
    %36 = vector.shape_cast %35 : vector<1x1x1x16x8xbf16> to vector<16x8xbf16>
    %c5 = arith.constant 5 : index
    %c0_48 = arith.constant 0 : index
    %c0_49 = arith.constant 0 : index
    %37 = vector.load %arg3[%c5, %c0_48, %c0_49] : memref<9x8x128xbf16, #tpu.memory_space<vmem>>, vector<1x8x128xbf16>
    %38 = vector.shape_cast %37 : vector<1x8x128xbf16> to vector<8x128xbf16>
    %cst_50 = arith.constant dense<0.000000e+00> : vector<16x128xf32>
    %39 = tpu.matmul %36, %38, %cst_50 {dimension_numbers = #tpu.dot_dimension_numbers<[1], [0], [0], [1], [0, 0, 1, 1], [], []>} : vector<16x8xbf16>, vector<8x128xbf16>, vector<16x128xf32> -> vector<16x128xf32>
    %40 = arith.addf %34, %39 : vector<16x128xf32>
    %c0_51 = arith.constant 0 : index
    %c0_52 = arith.constant 0 : index
    %c2_53 = arith.constant 2 : index
    %c0_54 = arith.constant 0 : index
    %c0_55 = arith.constant 0 : index
    %41 = vector.load %arg2[%c0_51, %c0_52, %c2_53, %c0_54, %c0_55] : memref<1x1x10x18x8xbf16, #tpu.memory_space<vmem>>, vector<1x1x1x16x8xbf16>
    %42 = vector.shape_cast %41 : vector<1x1x1x16x8xbf16> to vector<16x8xbf16>
    %c6 = arith.constant 6 : index
    %c0_56 = arith.constant 0 : index
    %c0_57 = arith.constant 0 : index
    %43 = vector.load %arg3[%c6, %c0_56, %c0_57] : memref<9x8x128xbf16, #tpu.memory_space<vmem>>, vector<1x8x128xbf16>
    %44 = vector.shape_cast %43 : vector<1x8x128xbf16> to vector<8x128xbf16>
    %cst_58 = arith.constant dense<0.000000e+00> : vector<16x128xf32>
    %45 = tpu.matmul %42, %44, %cst_58 {dimension_numbers = #tpu.dot_dimension_numbers<[1], [0], [0], [1], [0, 0, 1, 1], [], []>} : vector<16x8xbf16>, vector<8x128xbf16>, vector<16x128xf32> -> vector<16x128xf32>
    %46 = arith.addf %40, %45 : vector<16x128xf32>
    %c0_59 = arith.constant 0 : index
    %c0_60 = arith.constant 0 : index
    %c2_61 = arith.constant 2 : index
    %c1_62 = arith.constant 1 : index
    %c0_63 = arith.constant 0 : index
    %47 = vector.load %arg2[%c0_59, %c0_60, %c2_61, %c1_62, %c0_63] : memref<1x1x10x18x8xbf16, #tpu.memory_space<vmem>>, vector<1x1x1x16x8xbf16>
    %48 = vector.shape_cast %47 : vector<1x1x1x16x8xbf16> to vector<16x8xbf16>
    %c7 = arith.constant 7 : index
    %c0_64 = arith.constant 0 : index
    %c0_65 = arith.constant 0 : index
    %49 = vector.load %arg3[%c7, %c0_64, %c0_65] : memref<9x8x128xbf16, #tpu.memory_space<vmem>>, vector<1x8x128xbf16>
    %50 = vector.shape_cast %49 : vector<1x8x128xbf16> to vector<8x128xbf16>
    %cst_66 = arith.constant dense<0.000000e+00> : vector<16x128xf32>
    %51 = tpu.matmul %48, %50, %cst_66 {dimension_numbers = #tpu.dot_dimension_numbers<[1], [0], [0], [1], [0, 0, 1, 1], [], []>} : vector<16x8xbf16>, vector<8x128xbf16>, vector<16x128xf32> -> vector<16x128xf32>
    %52 = arith.addf %46, %51 : vector<16x128xf32>
    %c0_67 = arith.constant 0 : index
    %c0_68 = arith.constant 0 : index
    %c2_69 = arith.constant 2 : index
    %c2_70 = arith.constant 2 : index
    %c0_71 = arith.constant 0 : index
    %53 = vector.load %arg2[%c0_67, %c0_68, %c2_69, %c2_70, %c0_71] : memref<1x1x10x18x8xbf16, #tpu.memory_space<vmem>>, vector<1x1x1x16x8xbf16>
    %54 = vector.shape_cast %53 : vector<1x1x1x16x8xbf16> to vector<16x8xbf16>
    %c8 = arith.constant 8 : index
    %c0_72 = arith.constant 0 : index
    %c0_73 = arith.constant 0 : index
    %55 = vector.load %arg3[%c8, %c0_72, %c0_73] : memref<9x8x128xbf16, #tpu.memory_space<vmem>>, vector<1x8x128xbf16>
    %56 = vector.shape_cast %55 : vector<1x8x128xbf16> to vector<8x128xbf16>
    %cst_74 = arith.constant dense<0.000000e+00> : vector<16x128xf32>
    %57 = tpu.matmul %54, %56, %cst_74 {dimension_numbers = #tpu.dot_dimension_numbers<[1], [0], [0], [1], [0, 0, 1, 1], [], []>} : vector<16x8xbf16>, vector<8x128xbf16>, vector<16x128xf32> -> vector<16x128xf32>
    %58 = arith.addf %52, %57 : vector<16x128xf32>
    %59 = vector.broadcast %3 : vector<1x128xf32> to vector<16x128xf32>
    %60 = arith.addf %58, %59 : vector<16x128xf32>
    %cst_75 = arith.constant 0.000000e+00 : f32
    %61 = vector.broadcast %cst_75 : f32 to vector<16x128xf32>
    %62 = arith.maximumf %60, %61 : vector<16x128xf32>
    %cst_76 = arith.constant dense<0.000000e+00> : vector<128xf32>
    %63 = vector.multi_reduction <add>, %62, %cst_76 [0] : vector<16x128xf32> to vector<128xf32>
    %64 = vector.shape_cast %63 : vector<128xf32> to vector<1x128xf32>
    %c8_i32 = arith.constant 8 : i32
    %65 = arith.muli %arg1, %c8_i32 : i32
    %c0_i32_77 = arith.constant 0 : i32
    %66 = arith.addi %65, %c0_i32_77 : i32
    %c16_i32 = arith.constant 16 : i32
    %67 = arith.cmpi slt, %66, %c16_i32 : i32
    %c0_78 = arith.constant 0 : index
    %c0_79 = arith.constant 0 : index
    %68 = vector.load %arg8[%c0_78, %c0_79] : memref<1x128xf32, #tpu.memory_space<vmem>>, vector<1x128xf32>
    %cst_80 = arith.constant 0.000000e+00 : f32
    %69 = vector.broadcast %cst_80 : f32 to vector<1x128xf32>
    %70 = arith.select %67, %64, %69 : vector<1x128xf32>
    %71 = arith.addf %68, %70 : vector<1x128xf32>
    %c0_81 = arith.constant 0 : index
    %c0_82 = arith.constant 0 : index
    %72 = vector.load %arg8[%c0_81, %c0_82] : memref<1x128xf32, #tpu.memory_space<vmem>>, vector<1x128xf32>
    tpu.vector_store %arg8[%c0_81, %c0_82], %71 {strides = array<i32>} : memref<1x128xf32, #tpu.memory_space<vmem>>, vector<1x128xf32>,
    %cst_83 = arith.constant 0.000000e+00 : f32
    %73 = vector.broadcast %cst_83 : f32 to vector<16x128xf32>
    %c0_84 = arith.constant 0 : index
    %c0_85 = arith.constant 0 : index
    %c1_86 = arith.constant 1 : index
    %c0_87 = arith.constant 0 : index
    %c0_88 = arith.constant 0 : index
    %74 = vector.load %arg2[%c0_84, %c0_85, %c1_86, %c0_87, %c0_88] : memref<1x1x10x18x8xbf16, #tpu.memory_space<vmem>>, vector<1x1x1x16x8xbf16>
    %75 = vector.shape_cast %74 : vector<1x1x1x16x8xbf16> to vector<16x8xbf16>
    %c0_89 = arith.constant 0 : index
    %c0_90 = arith.constant 0 : index
    %c0_91 = arith.constant 0 : index
    %76 = vector.load %arg3[%c0_89, %c0_90, %c0_91] : memref<9x8x128xbf16, #tpu.memory_space<vmem>>, vector<1x8x128xbf16>
    %77 = vector.shape_cast %76 : vector<1x8x128xbf16> to vector<8x128xbf16>
    %cst_92 = arith.constant dense<0.000000e+00> : vector<16x128xf32>
    %78 = tpu.matmul %75, %77, %cst_92 {dimension_numbers = #tpu.dot_dimension_numbers<[1], [0], [0], [1], [0, 0, 1, 1], [], []>} : vector<16x8xbf16>, vector<8x128xbf16>, vector<16x128xf32> -> vector<16x128xf32>
    %79 = arith.addf %73, %78 : vector<16x128xf32>
    %c0_93 = arith.constant 0 : index
    %c0_94 = arith.constant 0 : index
    %c1_95 = arith.constant 1 : index
    %c1_96 = arith.constant 1 : index
    %c0_97 = arith.constant 0 : index
    %80 = vector.load %arg2[%c0_93, %c0_94, %c1_95, %c1_96, %c0_97] : memref<1x1x10x18x8xbf16, #tpu.memory_space<vmem>>, vector<1x1x1x16x8xbf16>
    %81 = vector.shape_cast %80 : vector<1x1x1x16x8xbf16> to vector<16x8xbf16>
    %c1_98 = arith.constant 1 : index
    %c0_99 = arith.constant 0 : index
    %c0_100 = arith.constant 0 : index
    %82 = vector.load %arg3[%c1_98, %c0_99, %c0_100] : memref<9x8x128xbf16, #tpu.memory_space<vmem>>, vector<1x8x128xbf16>
    %83 = vector.shape_cast %82 : vector<1x8x128xbf16> to vector<8x128xbf16>
    %cst_101 = arith.constant dense<0.000000e+00> : vector<16x128xf32>
    %84 = tpu.matmul %81, %83, %cst_101 {dimension_numbers = #tpu.dot_dimension_numbers<[1], [0], [0], [1], [0, 0, 1, 1], [], []>} : vector<16x8xbf16>, vector<8x128xbf16>, vector<16x128xf32> -> vector<16x128xf32>
    %85 = arith.addf %79, %84 : vector<16x128xf32>
    %c0_102 = arith.constant 0 : index
    %c0_103 = arith.constant 0 : index
    %c1_104 = arith.constant 1 : index
    %c2_105 = arith.constant 2 : index
    %c0_106 = arith.constant 0 : index
    %86 = vector.load %arg2[%c0_102, %c0_103, %c1_104, %c2_105, %c0_106] : memref<1x1x10x18x8xbf16, #tpu.memory_space<vmem>>, vector<1x1x1x16x8xbf16>
    %87 = vector.shape_cast %86 : vector<1x1x1x16x8xbf16> to vector<16x8xbf16>
    %c2_107 = arith.constant 2 : index
    %c0_108 = arith.constant 0 : index
    %c0_109 = arith.constant 0 : index
    %88 = vector.load %arg3[%c2_107, %c0_108, %c0_109] : memref<9x8x128xbf16, #tpu.memory_space<vmem>>, vector<1x8x128xbf16>
    %89 = vector.shape_cast %88 : vector<1x8x128xbf16> to vector<8x128xbf16>
    %cst_110 = arith.constant dense<0.000000e+00> : vector<16x128xf32>
    %90 = tpu.matmul %87, %89, %cst_110 {dimension_numbers = #tpu.dot_dimension_numbers<[1], [0], [0], [1], [0, 0, 1, 1], [], []>} : vector<16x8xbf16>, vector<8x128xbf16>, vector<16x128xf32> -> vector<16x128xf32>
    %91 = arith.addf %85, %90 : vector<16x128xf32>
    %c0_111 = arith.constant 0 : index
    %c0_112 = arith.constant 0 : index
    %c2_113 = arith.constant 2 : index
    %c0_114 = arith.constant 0 : index
    %c0_115 = arith.constant 0 : index
    %92 = vector.load %arg2[%c0_111, %c0_112, %c2_113, %c0_114, %c0_115] : memref<1x1x10x18x8xbf16, #tpu.memory_space<vmem>>, vector<1x1x1x16x8xbf16>
    %93 = vector.shape_cast %92 : vector<1x1x1x16x8xbf16> to vector<16x8xbf16>
    %c3_116 = arith.constant 3 : index
    %c0_117 = arith.constant 0 : index
    %c0_118 = arith.constant 0 : index
    %94 = vector.load %arg3[%c3_116, %c0_117, %c0_118] : memref<9x8x128xbf16, #tpu.memory_space<vmem>>, vector<1x8x128xbf16>
    %95 = vector.shape_cast %94 : vector<1x8x128xbf16> to vector<8x128xbf16>
    %cst_119 = arith.constant dense<0.000000e+00> : vector<16x128xf32>
    %96 = tpu.matmul %93, %95, %cst_119 {dimension_numbers = #tpu.dot_dimension_numbers<[1], [0], [0], [1], [0, 0, 1, 1], [], []>} : vector<16x8xbf16>, vector<8x128xbf16>, vector<16x128xf32> -> vector<16x128xf32>
    %97 = arith.addf %91, %96 : vector<16x128xf32>
    %c0_120 = arith.constant 0 : index
    %c0_121 = arith.constant 0 : index
    %c2_122 = arith.constant 2 : index
    %c1_123 = arith.constant 1 : index
    %c0_124 = arith.constant 0 : index
    %98 = vector.load %arg2[%c0_120, %c0_121, %c2_122, %c1_123, %c0_124] : memref<1x1x10x18x8xbf16, #tpu.memory_space<vmem>>, vector<1x1x1x16x8xbf16>
    %99 = vector.shape_cast %98 : vector<1x1x1x16x8xbf16> to vector<16x8xbf16>
    %c4_125 = arith.constant 4 : index
    %c0_126 = arith.constant 0 : index
    %c0_127 = arith.constant 0 : index
    %100 = vector.load %arg3[%c4_125, %c0_126, %c0_127] : memref<9x8x128xbf16, #tpu.memory_space<vmem>>, vector<1x8x128xbf16>
    %101 = vector.shape_cast %100 : vector<1x8x128xbf16> to vector<8x128xbf16>
    %cst_128 = arith.constant dense<0.000000e+00> : vector<16x128xf32>
    %102 = tpu.matmul %99, %101, %cst_128 {dimension_numbers = #tpu.dot_dimension_numbers<[1], [0], [0], [1], [0, 0, 1, 1], [], []>} : vector<16x8xbf16>, vector<8x128xbf16>, vector<16x128xf32> -> vector<16x128xf32>
    %103 = arith.addf %97, %102 : vector<16x128xf32>
    %c0_129 = arith.constant 0 : index
    %c0_130 = arith.constant 0 : index
    %c2_131 = arith.constant 2 : index
    %c2_132 = arith.constant 2 : index
    %c0_133 = arith.constant 0 : index
    %104 = vector.load %arg2[%c0_129, %c0_130, %c2_131, %c2_132, %c0_133] : memref<1x1x10x18x8xbf16, #tpu.memory_space<vmem>>, vector<1x1x1x16x8xbf16>
    %105 = vector.shape_cast %104 : vector<1x1x1x16x8xbf16> to vector<16x8xbf16>
    %c5_134 = arith.constant 5 : index
    %c0_135 = arith.constant 0 : index
    %c0_136 = arith.constant 0 : index
    %106 = vector.load %arg3[%c5_134, %c0_135, %c0_136] : memref<9x8x128xbf16, #tpu.memory_space<vmem>>, vector<1x8x128xbf16>
    %107 = vector.shape_cast %106 : vector<1x8x128xbf16> to vector<8x128xbf16>
    %cst_137 = arith.constant dense<0.000000e+00> : vector<16x128xf32>
    %108 = tpu.matmul %105, %107, %cst_137 {dimension_numbers = #tpu.dot_dimension_numbers<[1], [0], [0], [1], [0, 0, 1, 1], [], []>} : vector<16x8xbf16>, vector<8x128xbf16>, vector<16x128xf32> -> vector<16x128xf32>
    %109 = arith.addf %103, %108 : vector<16x128xf32>
    %c0_138 = arith.constant 0 : index
    %c0_139 = arith.constant 0 : index
    %c3_140 = arith.constant 3 : index
    %c0_141 = arith.constant 0 : index
    %c0_142 = arith.constant 0 : index
    %110 = vector.load %arg2[%c0_138, %c0_139, %c3_140, %c0_141, %c0_142] : memref<1x1x10x18x8xbf16, #tpu.memory_space<vmem>>, vector<1x1x1x16x8xbf16>
    %111 = vector.shape_cast %110 : vector<1x1x1x16x8xbf16> to vector<16x8xbf16>
    %c6_143 = arith.constant 6 : index
    %c0_144 = arith.constant 0 : index
    %c0_145 = arith.constant 0 : index
    %112 = vector.load %arg3[%c6_143, %c0_144, %c0_145] : memref<9x8x128xbf16, #tpu.memory_space<vmem>>, vector<1x8x128xbf16>
    %113 = vector.shape_cast %112 : vector<1x8x128xbf16> to vector<8x128xbf16>
    %cst_146 = arith.constant dense<0.000000e+00> : vector<16x128xf32>
    %114 = tpu.matmul %111, %113, %cst_146 {dimension_numbers = #tpu.dot_dimension_numbers<[1], [0], [0], [1], [0, 0, 1, 1], [], []>} : vector<16x8xbf16>, vector<8x128xbf16>, vector<16x128xf32> -> vector<16x128xf32>
    %115 = arith.addf %109, %114 : vector<16x128xf32>
    %c0_147 = arith.constant 0 : index
    %c0_148 = arith.constant 0 : index
    %c3_149 = arith.constant 3 : index
    %c1_150 = arith.constant 1 : index
    %c0_151 = arith.constant 0 : index
    %116 = vector.load %arg2[%c0_147, %c0_148, %c3_149, %c1_150, %c0_151] : memref<1x1x10x18x8xbf16, #tpu.memory_space<vmem>>, vector<1x1x1x16x8xbf16>
    %117 = vector.shape_cast %116 : vector<1x1x1x16x8xbf16> to vector<16x8xbf16>
    %c7_152 = arith.constant 7 : index
    %c0_153 = arith.constant 0 : index
    %c0_154 = arith.constant 0 : index
    %118 = vector.load %arg3[%c7_152, %c0_153, %c0_154] : memref<9x8x128xbf16, #tpu.memory_space<vmem>>, vector<1x8x128xbf16>
    %119 = vector.shape_cast %118 : vector<1x8x128xbf16> to vector<8x128xbf16>
    %cst_155 = arith.constant dense<0.000000e+00> : vector<16x128xf32>
    %120 = tpu.matmul %117, %119, %cst_155 {dimension_numbers = #tpu.dot_dimension_numbers<[1], [0], [0], [1], [0, 0, 1, 1], [], []>} : vector<16x8xbf16>, vector<8x128xbf16>, vector<16x128xf32> -> vector<16x128xf32>
    %121 = arith.addf %115, %120 : vector<16x128xf32>
    %c0_156 = arith.constant 0 : index
    %c0_157 = arith.constant 0 : index
    %c3_158 = arith.constant 3 : index
    %c2_159 = arith.constant 2 : index
    %c0_160 = arith.constant 0 : index
    %122 = vector.load %arg2[%c0_156, %c0_157, %c3_158, %c2_159, %c0_160] : memref<1x1x10x18x8xbf16, #tpu.memory_space<vmem>>, vector<1x1x1x16x8xbf16>
    %123 = vector.shape_cast %122 : vector<1x1x1x16x8xbf16> to vector<16x8xbf16>
    %c8_161 = arith.constant 8 : index
    %c0_162 = arith.constant 0 : index
    %c0_163 = arith.constant 0 : index
    %124 = vector.load %arg3[%c8_161, %c0_162, %c0_163] : memref<9x8x128xbf16, #tpu.memory_space<vmem>>, vector<1x8x128xbf16>
    %125 = vector.shape_cast %124 : vector<1x8x128xbf16> to vector<8x128xbf16>
    %cst_164 = arith.constant dense<0.000000e+00> : vector<16x128xf32>
    %126 = tpu.matmul %123, %125, %cst_164 {dimension_numbers = #tpu.dot_dimension_numbers<[1], [0], [0], [1], [0, 0, 1, 1], [], []>} : vector<16x8xbf16>, vector<8x128xbf16>, vector<16x128xf32> -> vector<16x128xf32>
    %127 = arith.addf %121, %126 : vector<16x128xf32>
    %128 = vector.broadcast %3 : vector<1x128xf32> to vector<16x128xf32>
    %129 = arith.addf %127, %128 : vector<16x128xf32>
    %cst_165 = arith.constant 0.000000e+00 : f32
    %130 = vector.broadcast %cst_165 : f32 to vector<16x128xf32>
    %131 = arith.maximumf %129, %130 : vector<16x128xf32>
    %cst_166 = arith.constant dense<0.000000e+00> : vector<128xf32>
    %132 = vector.multi_reduction <add>, %131, %cst_166 [0] : vector<16x128xf32> to vector<128xf32>
    %133 = vector.shape_cast %132 : vector<128xf32> to vector<1x128xf32>
    %c8_i32_167 = arith.constant 8 : i32
    %134 = arith.muli %arg1, %c8_i32_167 : i32
    %c1_i32 = arith.constant 1 : i32
    %135 = arith.addi %134, %c1_i32 : i32
    %c16_i32_168 = arith.constant 16 : i32
    %136 = arith.cmpi slt, %135, %c16_i32_168 : i32
    %c0_169 = arith.constant 0 : index
    %c0_170 = arith.constant 0 : index
    %137 = vector.load %arg8[%c0_169, %c0_170] : memref<1x128xf32, #tpu.memory_space<vmem>>, vector<1x128xf32>
    %cst_171 = arith.constant 0.000000e+00 : f32
    %138 = vector.broadcast %cst_171 : f32 to vector<1x128xf32>
    %139 = arith.select %136, %133, %138 : vector<1x128xf32>
    %140 = arith.addf %137, %139 : vector<1x128xf32>
    %c0_172 = arith.constant 0 : index
    %c0_173 = arith.constant 0 : index
    %141 = vector.load %arg8[%c0_172, %c0_173] : memref<1x128xf32, #tpu.memory_space<vmem>>, vector<1x128xf32>
    tpu.vector_store %arg8[%c0_172, %c0_173], %140 {strides = array<i32>} : memref<1x128xf32, #tpu.memory_space<vmem>>, vector<1x128xf32>,
    %cst_174 = arith.constant 0.000000e+00 : f32
    %142 = vector.broadcast %cst_174 : f32 to vector<16x128xf32>
    %c0_175 = arith.constant 0 : index
    %c0_176 = arith.constant 0 : index
    %c2_177 = arith.constant 2 : index
    %c0_178 = arith.constant 0 : index
    %c0_179 = arith.constant 0 : index
    %143 = vector.load %arg2[%c0_175, %c0_176, %c2_177, %c0_178, %c0_179] : memref<1x1x10x18x8xbf16, #tpu.memory_space<vmem>>, vector<1x1x1x16x8xbf16>
    %144 = vector.shape_cast %143 : vector<1x1x1x16x8xbf16> to vector<16x8xbf16>
    %c0_180 = arith.constant 0 : index
    %c0_181 = arith.constant 0 : index
    %c0_182 = arith.constant 0 : index
    %145 = vector.load %arg3[%c0_180, %c0_181, %c0_182] : memref<9x8x128xbf16, #tpu.memory_space<vmem>>, vector<1x8x128xbf16>
    %146 = vector.shape_cast %145 : vector<1x8x128xbf16> to vector<8x128xbf16>
    %cst_183 = arith.constant dense<0.000000e+00> : vector<16x128xf32>
    %147 = tpu.matmul %144, %146, %cst_183 {dimension_numbers = #tpu.dot_dimension_numbers<[1], [0], [0], [1], [0, 0, 1, 1], [], []>} : vector<16x8xbf16>, vector<8x128xbf16>, vector<16x128xf32> -> vector<16x128xf32>
    %148 = arith.addf %142, %147 : vector<16x128xf32>
    %c0_184 = arith.constant 0 : index
    %c0_185 = arith.constant 0 : index
    %c2_186 = arith.constant 2 : index
    %c1_187 = arith.constant 1 : index
    %c0_188 = arith.constant 0 : index
    %149 = vector.load %arg2[%c0_184, %c0_185, %c2_186, %c1_187, %c0_188] : memref<1x1x10x18x8xbf16, #tpu.memory_space<vmem>>, vector<1x1x1x16x8xbf16>
    %150 = vector.shape_cast %149 : vector<1x1x1x16x8xbf16> to vector<16x8xbf16>
    %c1_189 = arith.constant 1 : index
    %c0_190 = arith.constant 0 : index
    %c0_191 = arith.constant 0 : index
    %151 = vector.load %arg3[%c1_189, %c0_190, %c0_191] : memref<9x8x128xbf16, #tpu.memory_space<vmem>>, vector<1x8x128xbf16>
    %152 = vector.shape_cast %151 : vector<1x8x128xbf16> to vector<8x128xbf16>
    %cst_192 = arith.constant dense<0.000000e+00> : vector<16x128xf32>
    %153 = tpu.matmul %150, %152, %cst_192 {dimension_numbers = #tpu.dot_dimension_numbers<[1], [0], [0], [1], [0, 0, 1, 1], [], []>} : vector<16x8xbf16>, vector<8x128xbf16>, vector<16x128xf32> -> vector<16x128xf32>
    %154 = arith.addf %148, %153 : vector<16x128xf32>
    %c0_193 = arith.constant 0 : index
    %c0_194 = arith.constant 0 : index
    %c2_195 = arith.constant 2 : index
    %c2_196 = arith.constant 2 : index
    %c0_197 = arith.constant 0 : index
    %155 = vector.load %arg2[%c0_193, %c0_194, %c2_195, %c2_196, %c0_197] : memref<1x1x10x18x8xbf16, #tpu.memory_space<vmem>>, vector<1x1x1x16x8xbf16>
    %156 = vector.shape_cast %155 : vector<1x1x1x16x8xbf16> to vector<16x8xbf16>
    %c2_198 = arith.constant 2 : index
    %c0_199 = arith.constant 0 : index
    %c0_200 = arith.constant 0 : index
    %157 = vector.load %arg3[%c2_198, %c0_199, %c0_200] : memref<9x8x128xbf16, #tpu.memory_space<vmem>>, vector<1x8x128xbf16>
    %158 = vector.shape_cast %157 : vector<1x8x128xbf16> to vector<8x128xbf16>
    %cst_201 = arith.constant dense<0.000000e+00> : vector<16x128xf32>
    %159 = tpu.matmul %156, %158, %cst_201 {dimension_numbers = #tpu.dot_dimension_numbers<[1], [0], [0], [1], [0, 0, 1, 1], [], []>} : vector<16x8xbf16>, vector<8x128xbf16>, vector<16x128xf32> -> vector<16x128xf32>
    %160 = arith.addf %154, %159 : vector<16x128xf32>
    %c0_202 = arith.constant 0 : index
    %c0_203 = arith.constant 0 : index
    %c3_204 = arith.constant 3 : index
    %c0_205 = arith.constant 0 : index
    %c0_206 = arith.constant 0 : index
    %161 = vector.load %arg2[%c0_202, %c0_203, %c3_204, %c0_205, %c0_206] : memref<1x1x10x18x8xbf16, #tpu.memory_space<vmem>>, vector<1x1x1x16x8xbf16>
    %162 = vector.shape_cast %161 : vector<1x1x1x16x8xbf16> to vector<16x8xbf16>
    %c3_207 = arith.constant 3 : index
    %c0_208 = arith.constant 0 : index
    %c0_209 = arith.constant 0 : index
    %163 = vector.load %arg3[%c3_207, %c0_208, %c0_209] : memref<9x8x128xbf16, #tpu.memory_space<vmem>>, vector<1x8x128xbf16>
    %164 = vector.shape_cast %163 : vector<1x8x128xbf16> to vector<8x128xbf16>
    %cst_210 = arith.constant dense<0.000000e+00> : vector<16x128xf32>
    %165 = tpu.matmul %162, %164, %cst_210 {dimension_numbers = #tpu.dot_dimension_numbers<[1], [0], [0], [1], [0, 0, 1, 1], [], []>} : vector<16x8xbf16>, vector<8x128xbf16>, vector<16x128xf32> -> vector<16x128xf32>
    %166 = arith.addf %160, %165 : vector<16x128xf32>
    %c0_211 = arith.constant 0 : index
    %c0_212 = arith.constant 0 : index
    %c3_213 = arith.constant 3 : index
    %c1_214 = arith.constant 1 : index
    %c0_215 = arith.constant 0 : index
    %167 = vector.load %arg2[%c0_211, %c0_212, %c3_213, %c1_214, %c0_215] : memref<1x1x10x18x8xbf16, #tpu.memory_space<vmem>>, vector<1x1x1x16x8xbf16>
    %168 = vector.shape_cast %167 : vector<1x1x1x16x8xbf16> to vector<16x8xbf16>
    %c4_216 = arith.constant 4 : index
    %c0_217 = arith.constant 0 : index
    %c0_218 = arith.constant 0 : index
    %169 = vector.load %arg3[%c4_216, %c0_217, %c0_218] : memref<9x8x128xbf16, #tpu.memory_space<vmem>>, vector<1x8x128xbf16>
    %170 = vector.shape_cast %169 : vector<1x8x128xbf16> to vector<8x128xbf16>
    %cst_219 = arith.constant dense<0.000000e+00> : vector<16x128xf32>
    %171 = tpu.matmul %168, %170, %cst_219 {dimension_numbers = #tpu.dot_dimension_numbers<[1], [0], [0], [1], [0, 0, 1, 1], [], []>} : vector<16x8xbf16>, vector<8x128xbf16>, vector<16x128xf32> -> vector<16x128xf32>
    %172 = arith.addf %166, %171 : vector<16x128xf32>
    %c0_220 = arith.constant 0 : index
    %c0_221 = arith.constant 0 : index
    %c3_222 = arith.constant 3 : index
    %c2_223 = arith.constant 2 : index
    %c0_224 = arith.constant 0 : index
    %173 = vector.load %arg2[%c0_220, %c0_221, %c3_222, %c2_223, %c0_224] : memref<1x1x10x18x8xbf16, #tpu.memory_space<vmem>>, vector<1x1x1x16x8xbf16>
    %174 = vector.shape_cast %173 : vector<1x1x1x16x8xbf16> to vector<16x8xbf16>
    %c5_225 = arith.constant 5 : index
    %c0_226 = arith.constant 0 : index
    %c0_227 = arith.constant 0 : index
    %175 = vector.load %arg3[%c5_225, %c0_226, %c0_227] : memref<9x8x128xbf16, #tpu.memory_space<vmem>>, vector<1x8x128xbf16>
    %176 = vector.shape_cast %175 : vector<1x8x128xbf16> to vector<8x128xbf16>
    %cst_228 = arith.constant dense<0.000000e+00> : vector<16x128xf32>
    %177 = tpu.matmul %174, %176, %cst_228 {dimension_numbers = #tpu.dot_dimension_numbers<[1], [0], [0], [1], [0, 0, 1, 1], [], []>} : vector<16x8xbf16>, vector<8x128xbf16>, vector<16x128xf32> -> vector<16x128xf32>
    %178 = arith.addf %172, %177 : vector<16x128xf32>
    %c0_229 = arith.constant 0 : index
    %c0_230 = arith.constant 0 : index
    %c4_231 = arith.constant 4 : index
    %c0_232 = arith.constant 0 : index
    %c0_233 = arith.constant 0 : index
    %179 = vector.load %arg2[%c0_229, %c0_230, %c4_231, %c0_232, %c0_233] : memref<1x1x10x18x8xbf16, #tpu.memory_space<vmem>>, vector<1x1x1x16x8xbf16>
    %180 = vector.shape_cast %179 : vector<1x1x1x16x8xbf16> to vector<16x8xbf16>
    %c6_234 = arith.constant 6 : index
    %c0_235 = arith.constant 0 : index
    %c0_236 = arith.constant 0 : index
    %181 = vector.load %arg3[%c6_234, %c0_235, %c0_236] : memref<9x8x128xbf16, #tpu.memory_space<vmem>>, vector<1x8x128xbf16>
    %182 = vector.shape_cast %181 : vector<1x8x128xbf16> to vector<8x128xbf16>
    %cst_237 = arith.constant dense<0.000000e+00> : vector<16x128xf32>
    %183 = tpu.matmul %180, %182, %cst_237 {dimension_numbers = #tpu.dot_dimension_numbers<[1], [0], [0], [1], [0, 0, 1, 1], [], []>} : vector<16x8xbf16>, vector<8x128xbf16>, vector<16x128xf32> -> vector<16x128xf32>
    %184 = arith.addf %178, %183 : vector<16x128xf32>
    %c0_238 = arith.constant 0 : index
    %c0_239 = arith.constant 0 : index
    %c4_240 = arith.constant 4 : index
    %c1_241 = arith.constant 1 : index
    %c0_242 = arith.constant 0 : index
    %185 = vector.load %arg2[%c0_238, %c0_239, %c4_240, %c1_241, %c0_242] : memref<1x1x10x18x8xbf16, #tpu.memory_space<vmem>>, vector<1x1x1x16x8xbf16>
    %186 = vector.shape_cast %185 : vector<1x1x1x16x8xbf16> to vector<16x8xbf16>
    %c7_243 = arith.constant 7 : index
    %c0_244 = arith.constant 0 : index
    %c0_245 = arith.constant 0 : index
    %187 = vector.load %arg3[%c7_243, %c0_244, %c0_245] : memref<9x8x128xbf16, #tpu.memory_space<vmem>>, vector<1x8x128xbf16>
    %188 = vector.shape_cast %187 : vector<1x8x128xbf16> to vector<8x128xbf16>
    %cst_246 = arith.constant dense<0.000000e+00> : vector<16x128xf32>
    %189 = tpu.matmul %186, %188, %cst_246 {dimension_numbers = #tpu.dot_dimension_numbers<[1], [0], [0], [1], [0, 0, 1, 1], [], []>} : vector<16x8xbf16>, vector<8x128xbf16>, vector<16x128xf32> -> vector<16x128xf32>
    %190 = arith.addf %184, %189 : vector<16x128xf32>
    %c0_247 = arith.constant 0 : index
    %c0_248 = arith.constant 0 : index
    %c4_249 = arith.constant 4 : index
    %c2_250 = arith.constant 2 : index
    %c0_251 = arith.constant 0 : index
    %191 = vector.load %arg2[%c0_247, %c0_248, %c4_249, %c2_250, %c0_251] : memref<1x1x10x18x8xbf16, #tpu.memory_space<vmem>>, vector<1x1x1x16x8xbf16>
    %192 = vector.shape_cast %191 : vector<1x1x1x16x8xbf16> to vector<16x8xbf16>
    %c8_252 = arith.constant 8 : index
    %c0_253 = arith.constant 0 : index
    %c0_254 = arith.constant 0 : index
    %193 = vector.load %arg3[%c8_252, %c0_253, %c0_254] : memref<9x8x128xbf16, #tpu.memory_space<vmem>>, vector<1x8x128xbf16>
    %194 = vector.shape_cast %193 : vector<1x8x128xbf16> to vector<8x128xbf16>
    %cst_255 = arith.constant dense<0.000000e+00> : vector<16x128xf32>
    %195 = tpu.matmul %192, %194, %cst_255 {dimension_numbers = #tpu.dot_dimension_numbers<[1], [0], [0], [1], [0, 0, 1, 1], [], []>} : vector<16x8xbf16>, vector<8x128xbf16>, vector<16x128xf32> -> vector<16x128xf32>
    %196 = arith.addf %190, %195 : vector<16x128xf32>
    %197 = vector.broadcast %3 : vector<1x128xf32> to vector<16x128xf32>
    %198 = arith.addf %196, %197 : vector<16x128xf32>
    %cst_256 = arith.constant 0.000000e+00 : f32
    %199 = vector.broadcast %cst_256 : f32 to vector<16x128xf32>
    %200 = arith.maximumf %198, %199 : vector<16x128xf32>
    %cst_257 = arith.constant dense<0.000000e+00> : vector<128xf32>
    %201 = vector.multi_reduction <add>, %200, %cst_257 [0] : vector<16x128xf32> to vector<128xf32>
    %202 = vector.shape_cast %201 : vector<128xf32> to vector<1x128xf32>
    %c8_i32_258 = arith.constant 8 : i32
    %203 = arith.muli %arg1, %c8_i32_258 : i32
    %c2_i32 = arith.constant 2 : i32
    %204 = arith.addi %203, %c2_i32 : i32
    %c16_i32_259 = arith.constant 16 : i32
    %205 = arith.cmpi slt, %204, %c16_i32_259 : i32
    %c0_260 = arith.constant 0 : index
    %c0_261 = arith.constant 0 : index
    %206 = vector.load %arg8[%c0_260, %c0_261] : memref<1x128xf32, #tpu.memory_space<vmem>>, vector<1x128xf32>
    %cst_262 = arith.constant 0.000000e+00 : f32
    %207 = vector.broadcast %cst_262 : f32 to vector<1x128xf32>
    %208 = arith.select %205, %202, %207 : vector<1x128xf32>
    %209 = arith.addf %206, %208 : vector<1x128xf32>
    %c0_263 = arith.constant 0 : index
    %c0_264 = arith.constant 0 : index
    %210 = vector.load %arg8[%c0_263, %c0_264] : memref<1x128xf32, #tpu.memory_space<vmem>>, vector<1x128xf32>
    tpu.vector_store %arg8[%c0_263, %c0_264], %209 {strides = array<i32>} : memref<1x128xf32, #tpu.memory_space<vmem>>, vector<1x128xf32>,
    %cst_265 = arith.constant 0.000000e+00 : f32
    %211 = vector.broadcast %cst_265 : f32 to vector<16x128xf32>
    %c0_266 = arith.constant 0 : index
    %c0_267 = arith.constant 0 : index
    %c3_268 = arith.constant 3 : index
    %c0_269 = arith.constant 0 : index
    %c0_270 = arith.constant 0 : index
    %212 = vector.load %arg2[%c0_266, %c0_267, %c3_268, %c0_269, %c0_270] : memref<1x1x10x18x8xbf16, #tpu.memory_space<vmem>>, vector<1x1x1x16x8xbf16>
    %213 = vector.shape_cast %212 : vector<1x1x1x16x8xbf16> to vector<16x8xbf16>
    %c0_271 = arith.constant 0 : index
    %c0_272 = arith.constant 0 : index
    %c0_273 = arith.constant 0 : index
    %214 = vector.load %arg3[%c0_271, %c0_272, %c0_273] : memref<9x8x128xbf16, #tpu.memory_space<vmem>>, vector<1x8x128xbf16>
    %215 = vector.shape_cast %214 : vector<1x8x128xbf16> to vector<8x128xbf16>
    %cst_274 = arith.constant dense<0.000000e+00> : vector<16x128xf32>
    %216 = tpu.matmul %213, %215, %cst_274 {dimension_numbers = #tpu.dot_dimension_numbers<[1], [0], [0], [1], [0, 0, 1, 1], [], []>} : vector<16x8xbf16>, vector<8x128xbf16>, vector<16x128xf32> -> vector<16x128xf32>
    %217 = arith.addf %211, %216 : vector<16x128xf32>
    %c0_275 = arith.constant 0 : index
    %c0_276 = arith.constant 0 : index
    %c3_277 = arith.constant 3 : index
    %c1_278 = arith.constant 1 : index
    %c0_279 = arith.constant 0 : index
    %218 = vector.load %arg2[%c0_275, %c0_276, %c3_277, %c1_278, %c0_279] : memref<1x1x10x18x8xbf16, #tpu.memory_space<vmem>>, vector<1x1x1x16x8xbf16>
    %219 = vector.shape_cast %218 : vector<1x1x1x16x8xbf16> to vector<16x8xbf16>
    %c1_280 = arith.constant 1 : index
    %c0_281 = arith.constant 0 : index
    %c0_282 = arith.constant 0 : index
    %220 = vector.load %arg3[%c1_280, %c0_281, %c0_282] : memref<9x8x128xbf16, #tpu.memory_space<vmem>>, vector<1x8x128xbf16>
    %221 = vector.shape_cast %220 : vector<1x8x128xbf16> to vector<8x128xbf16>
    %cst_283 = arith.constant dense<0.000000e+00> : vector<16x128xf32>
    %222 = tpu.matmul %219, %221, %cst_283 {dimension_numbers = #tpu.dot_dimension_numbers<[1], [0], [0], [1], [0, 0, 1, 1], [], []>} : vector<16x8xbf16>, vector<8x128xbf16>, vector<16x128xf32> -> vector<16x128xf32>
    %223 = arith.addf %217, %222 : vector<16x128xf32>
    %c0_284 = arith.constant 0 : index
    %c0_285 = arith.constant 0 : index
    %c3_286 = arith.constant 3 : index
    %c2_287 = arith.constant 2 : index
    %c0_288 = arith.constant 0 : index
    %224 = vector.load %arg2[%c0_284, %c0_285, %c3_286, %c2_287, %c0_288] : memref<1x1x10x18x8xbf16, #tpu.memory_space<vmem>>, vector<1x1x1x16x8xbf16>
    %225 = vector.shape_cast %224 : vector<1x1x1x16x8xbf16> to vector<16x8xbf16>
    %c2_289 = arith.constant 2 : index
    %c0_290 = arith.constant 0 : index
    %c0_291 = arith.constant 0 : index
    %226 = vector.load %arg3[%c2_289, %c0_290, %c0_291] : memref<9x8x128xbf16, #tpu.memory_space<vmem>>, vector<1x8x128xbf16>
    %227 = vector.shape_cast %226 : vector<1x8x128xbf16> to vector<8x128xbf16>
    %cst_292 = arith.constant dense<0.000000e+00> : vector<16x128xf32>
    %228 = tpu.matmul %225, %227, %cst_292 {dimension_numbers = #tpu.dot_dimension_numbers<[1], [0], [0], [1], [0, 0, 1, 1], [], []>} : vector<16x8xbf16>, vector<8x128xbf16>, vector<16x128xf32> -> vector<16x128xf32>
    %229 = arith.addf %223, %228 : vector<16x128xf32>
    %c0_293 = arith.constant 0 : index
    %c0_294 = arith.constant 0 : index
    %c4_295 = arith.constant 4 : index
    %c0_296 = arith.constant 0 : index
    %c0_297 = arith.constant 0 : index
    %230 = vector.load %arg2[%c0_293, %c0_294, %c4_295, %c0_296, %c0_297] : memref<1x1x10x18x8xbf16, #tpu.memory_space<vmem>>, vector<1x1x1x16x8xbf16>
    %231 = vector.shape_cast %230 : vector<1x1x1x16x8xbf16> to vector<16x8xbf16>
    %c3_298 = arith.constant 3 : index
    %c0_299 = arith.constant 0 : index
    %c0_300 = arith.constant 0 : index
    %232 = vector.load %arg3[%c3_298, %c0_299, %c0_300] : memref<9x8x128xbf16, #tpu.memory_space<vmem>>, vector<1x8x128xbf16>
    %233 = vector.shape_cast %232 : vector<1x8x128xbf16> to vector<8x128xbf16>
    %cst_301 = arith.constant dense<0.000000e+00> : vector<16x128xf32>
    %234 = tpu.matmul %231, %233, %cst_301 {dimension_numbers = #tpu.dot_dimension_numbers<[1], [0], [0], [1], [0, 0, 1, 1], [], []>} : vector<16x8xbf16>, vector<8x128xbf16>, vector<16x128xf32> -> vector<16x128xf32>
    %235 = arith.addf %229, %234 : vector<16x128xf32>
    %c0_302 = arith.constant 0 : index
    %c0_303 = arith.constant 0 : index
    %c4_304 = arith.constant 4 : index
    %c1_305 = arith.constant 1 : index
    %c0_306 = arith.constant 0 : index
    %236 = vector.load %arg2[%c0_302, %c0_303, %c4_304, %c1_305, %c0_306] : memref<1x1x10x18x8xbf16, #tpu.memory_space<vmem>>, vector<1x1x1x16x8xbf16>
    %237 = vector.shape_cast %236 : vector<1x1x1x16x8xbf16> to vector<16x8xbf16>
    %c4_307 = arith.constant 4 : index
    %c0_308 = arith.constant 0 : index
    %c0_309 = arith.constant 0 : index
    %238 = vector.load %arg3[%c4_307, %c0_308, %c0_309] : memref<9x8x128xbf16, #tpu.memory_space<vmem>>, vector<1x8x128xbf16>
    %239 = vector.shape_cast %238 : vector<1x8x128xbf16> to vector<8x128xbf16>
    %cst_310 = arith.constant dense<0.000000e+00> : vector<16x128xf32>
    %240 = tpu.matmul %237, %239, %cst_310 {dimension_numbers = #tpu.dot_dimension_numbers<[1], [0], [0], [1], [0, 0, 1, 1], [], []>} : vector<16x8xbf16>, vector<8x128xbf16>, vector<16x128xf32> -> vector<16x128xf32>
    %241 = arith.addf %235, %240 : vector<16x128xf32>
    %c0_311 = arith.constant 0 : index
    %c0_312 = arith.constant 0 : index
    %c4_313 = arith.constant 4 : index
    %c2_314 = arith.constant 2 : index
    %c0_315 = arith.constant 0 : index
    %242 = vector.load %arg2[%c0_311, %c0_312, %c4_313, %c2_314, %c0_315] : memref<1x1x10x18x8xbf16, #tpu.memory_space<vmem>>, vector<1x1x1x16x8xbf16>
    %243 = vector.shape_cast %242 : vector<1x1x1x16x8xbf16> to vector<16x8xbf16>
    %c5_316 = arith.constant 5 : index
    %c0_317 = arith.constant 0 : index
    %c0_318 = arith.constant 0 : index
    %244 = vector.load %arg3[%c5_316, %c0_317, %c0_318] : memref<9x8x128xbf16, #tpu.memory_space<vmem>>, vector<1x8x128xbf16>
    %245 = vector.shape_cast %244 : vector<1x8x128xbf16> to vector<8x128xbf16>
    %cst_319 = arith.constant dense<0.000000e+00> : vector<16x128xf32>
    %246 = tpu.matmul %243, %245, %cst_319 {dimension_numbers = #tpu.dot_dimension_numbers<[1], [0], [0], [1], [0, 0, 1, 1], [], []>} : vector<16x8xbf16>, vector<8x128xbf16>, vector<16x128xf32> -> vector<16x128xf32>
    %247 = arith.addf %241, %246 : vector<16x128xf32>
    %c0_320 = arith.constant 0 : index
    %c0_321 = arith.constant 0 : index
    %c5_322 = arith.constant 5 : index
    %c0_323 = arith.constant 0 : index
    %c0_324 = arith.constant 0 : index
    %248 = vector.load %arg2[%c0_320, %c0_321, %c5_322, %c0_323, %c0_324] : memref<1x1x10x18x8xbf16, #tpu.memory_space<vmem>>, vector<1x1x1x16x8xbf16>
    %249 = vector.shape_cast %248 : vector<1x1x1x16x8xbf16> to vector<16x8xbf16>
    %c6_325 = arith.constant 6 : index
    %c0_326 = arith.constant 0 : index
    %c0_327 = arith.constant 0 : index
    %250 = vector.load %arg3[%c6_325, %c0_326, %c0_327] : memref<9x8x128xbf16, #tpu.memory_space<vmem>>, vector<1x8x128xbf16>
    %251 = vector.shape_cast %250 : vector<1x8x128xbf16> to vector<8x128xbf16>
    %cst_328 = arith.constant dense<0.000000e+00> : vector<16x128xf32>
    %252 = tpu.matmul %249, %251, %cst_328 {dimension_numbers = #tpu.dot_dimension_numbers<[1], [0], [0], [1], [0, 0, 1, 1], [], []>} : vector<16x8xbf16>, vector<8x128xbf16>, vector<16x128xf32> -> vector<16x128xf32>
    %253 = arith.addf %247, %252 : vector<16x128xf32>
    %c0_329 = arith.constant 0 : index
    %c0_330 = arith.constant 0 : index
    %c5_331 = arith.constant 5 : index
    %c1_332 = arith.constant 1 : index
    %c0_333 = arith.constant 0 : index
    %254 = vector.load %arg2[%c0_329, %c0_330, %c5_331, %c1_332, %c0_333] : memref<1x1x10x18x8xbf16, #tpu.memory_space<vmem>>, vector<1x1x1x16x8xbf16>
    %255 = vector.shape_cast %254 : vector<1x1x1x16x8xbf16> to vector<16x8xbf16>
    %c7_334 = arith.constant 7 : index
    %c0_335 = arith.constant 0 : index
    %c0_336 = arith.constant 0 : index
    %256 = vector.load %arg3[%c7_334, %c0_335, %c0_336] : memref<9x8x128xbf16, #tpu.memory_space<vmem>>, vector<1x8x128xbf16>
    %257 = vector.shape_cast %256 : vector<1x8x128xbf16> to vector<8x128xbf16>
    %cst_337 = arith.constant dense<0.000000e+00> : vector<16x128xf32>
    %258 = tpu.matmul %255, %257, %cst_337 {dimension_numbers = #tpu.dot_dimension_numbers<[1], [0], [0], [1], [0, 0, 1, 1], [], []>} : vector<16x8xbf16>, vector<8x128xbf16>, vector<16x128xf32> -> vector<16x128xf32>
    %259 = arith.addf %253, %258 : vector<16x128xf32>
    %c0_338 = arith.constant 0 : index
    %c0_339 = arith.constant 0 : index
    %c5_340 = arith.constant 5 : index
    %c2_341 = arith.constant 2 : index
    %c0_342 = arith.constant 0 : index
    %260 = vector.load %arg2[%c0_338, %c0_339, %c5_340, %c2_341, %c0_342] : memref<1x1x10x18x8xbf16, #tpu.memory_space<vmem>>, vector<1x1x1x16x8xbf16>
    %261 = vector.shape_cast %260 : vector<1x1x1x16x8xbf16> to vector<16x8xbf16>
    %c8_343 = arith.constant 8 : index
    %c0_344 = arith.constant 0 : index
    %c0_345 = arith.constant 0 : index
    %262 = vector.load %arg3[%c8_343, %c0_344, %c0_345] : memref<9x8x128xbf16, #tpu.memory_space<vmem>>, vector<1x8x128xbf16>
    %263 = vector.shape_cast %262 : vector<1x8x128xbf16> to vector<8x128xbf16>
    %cst_346 = arith.constant dense<0.000000e+00> : vector<16x128xf32>
    %264 = tpu.matmul %261, %263, %cst_346 {dimension_numbers = #tpu.dot_dimension_numbers<[1], [0], [0], [1], [0, 0, 1, 1], [], []>} : vector<16x8xbf16>, vector<8x128xbf16>, vector<16x128xf32> -> vector<16x128xf32>
    %265 = arith.addf %259, %264 : vector<16x128xf32>
    %266 = vector.broadcast %3 : vector<1x128xf32> to vector<16x128xf32>
    %267 = arith.addf %265, %266 : vector<16x128xf32>
    %cst_347 = arith.constant 0.000000e+00 : f32
    %268 = vector.broadcast %cst_347 : f32 to vector<16x128xf32>
    %269 = arith.maximumf %267, %268 : vector<16x128xf32>
    %cst_348 = arith.constant dense<0.000000e+00> : vector<128xf32>
    %270 = vector.multi_reduction <add>, %269, %cst_348 [0] : vector<16x128xf32> to vector<128xf32>
    %271 = vector.shape_cast %270 : vector<128xf32> to vector<1x128xf32>
    %c8_i32_349 = arith.constant 8 : i32
    %272 = arith.muli %arg1, %c8_i32_349 : i32
    %c3_i32 = arith.constant 3 : i32
    %273 = arith.addi %272, %c3_i32 : i32
    %c16_i32_350 = arith.constant 16 : i32
    %274 = arith.cmpi slt, %273, %c16_i32_350 : i32
    %c0_351 = arith.constant 0 : index
    %c0_352 = arith.constant 0 : index
    %275 = vector.load %arg8[%c0_351, %c0_352] : memref<1x128xf32, #tpu.memory_space<vmem>>, vector<1x128xf32>
    %cst_353 = arith.constant 0.000000e+00 : f32
    %276 = vector.broadcast %cst_353 : f32 to vector<1x128xf32>
    %277 = arith.select %274, %271, %276 : vector<1x128xf32>
    %278 = arith.addf %275, %277 : vector<1x128xf32>
    %c0_354 = arith.constant 0 : index
    %c0_355 = arith.constant 0 : index
    %279 = vector.load %arg8[%c0_354, %c0_355] : memref<1x128xf32, #tpu.memory_space<vmem>>, vector<1x128xf32>
    tpu.vector_store %arg8[%c0_354, %c0_355], %278 {strides = array<i32>} : memref<1x128xf32, #tpu.memory_space<vmem>>, vector<1x128xf32>,
    %cst_356 = arith.constant 0.000000e+00 : f32
    %280 = vector.broadcast %cst_356 : f32 to vector<16x128xf32>
    %c0_357 = arith.constant 0 : index
    %c0_358 = arith.constant 0 : index
    %c4_359 = arith.constant 4 : index
    %c0_360 = arith.constant 0 : index
    %c0_361 = arith.constant 0 : index
    %281 = vector.load %arg2[%c0_357, %c0_358, %c4_359, %c0_360, %c0_361] : memref<1x1x10x18x8xbf16, #tpu.memory_space<vmem>>, vector<1x1x1x16x8xbf16>
    %282 = vector.shape_cast %281 : vector<1x1x1x16x8xbf16> to vector<16x8xbf16>
    %c0_362 = arith.constant 0 : index
    %c0_363 = arith.constant 0 : index
    %c0_364 = arith.constant 0 : index
    %283 = vector.load %arg3[%c0_362, %c0_363, %c0_364] : memref<9x8x128xbf16, #tpu.memory_space<vmem>>, vector<1x8x128xbf16>
    %284 = vector.shape_cast %283 : vector<1x8x128xbf16> to vector<8x128xbf16>
    %cst_365 = arith.constant dense<0.000000e+00> : vector<16x128xf32>
    %285 = tpu.matmul %282, %284, %cst_365 {dimension_numbers = #tpu.dot_dimension_numbers<[1], [0], [0], [1], [0, 0, 1, 1], [], []>} : vector<16x8xbf16>, vector<8x128xbf16>, vector<16x128xf32> -> vector<16x128xf32>
    %286 = arith.addf %280, %285 : vector<16x128xf32>
    %c0_366 = arith.constant 0 : index
    %c0_367 = arith.constant 0 : index
    %c4_368 = arith.constant 4 : index
    %c1_369 = arith.constant 1 : index
    %c0_370 = arith.constant 0 : index
    %287 = vector.load %arg2[%c0_366, %c0_367, %c4_368, %c1_369, %c0_370] : memref<1x1x10x18x8xbf16, #tpu.memory_space<vmem>>, vector<1x1x1x16x8xbf16>
    %288 = vector.shape_cast %287 : vector<1x1x1x16x8xbf16> to vector<16x8xbf16>
    %c1_371 = arith.constant 1 : index
    %c0_372 = arith.constant 0 : index
    %c0_373 = arith.constant 0 : index
    %289 = vector.load %arg3[%c1_371, %c0_372, %c0_373] : memref<9x8x128xbf16, #tpu.memory_space<vmem>>, vector<1x8x128xbf16>
    %290 = vector.shape_cast %289 : vector<1x8x128xbf16> to vector<8x128xbf16>
    %cst_374 = arith.constant dense<0.000000e+00> : vector<16x128xf32>
    %291 = tpu.matmul %288, %290, %cst_374 {dimension_numbers = #tpu.dot_dimension_numbers<[1], [0], [0], [1], [0, 0, 1, 1], [], []>} : vector<16x8xbf16>, vector<8x128xbf16>, vector<16x128xf32> -> vector<16x128xf32>
    %292 = arith.addf %286, %291 : vector<16x128xf32>
    %c0_375 = arith.constant 0 : index
    %c0_376 = arith.constant 0 : index
    %c4_377 = arith.constant 4 : index
    %c2_378 = arith.constant 2 : index
    %c0_379 = arith.constant 0 : index
    %293 = vector.load %arg2[%c0_375, %c0_376, %c4_377, %c2_378, %c0_379] : memref<1x1x10x18x8xbf16, #tpu.memory_space<vmem>>, vector<1x1x1x16x8xbf16>
    %294 = vector.shape_cast %293 : vector<1x1x1x16x8xbf16> to vector<16x8xbf16>
    %c2_380 = arith.constant 2 : index
    %c0_381 = arith.constant 0 : index
    %c0_382 = arith.constant 0 : index
    %295 = vector.load %arg3[%c2_380, %c0_381, %c0_382] : memref<9x8x128xbf16, #tpu.memory_space<vmem>>, vector<1x8x128xbf16>
    %296 = vector.shape_cast %295 : vector<1x8x128xbf16> to vector<8x128xbf16>
    %cst_383 = arith.constant dense<0.000000e+00> : vector<16x128xf32>
    %297 = tpu.matmul %294, %296, %cst_383 {dimension_numbers = #tpu.dot_dimension_numbers<[1], [0], [0], [1], [0, 0, 1, 1], [], []>} : vector<16x8xbf16>, vector<8x128xbf16>, vector<16x128xf32> -> vector<16x128xf32>
    %298 = arith.addf %292, %297 : vector<16x128xf32>
    %c0_384 = arith.constant 0 : index
    %c0_385 = arith.constant 0 : index
    %c5_386 = arith.constant 5 : index
    %c0_387 = arith.constant 0 : index
    %c0_388 = arith.constant 0 : index
    %299 = vector.load %arg2[%c0_384, %c0_385, %c5_386, %c0_387, %c0_388] : memref<1x1x10x18x8xbf16, #tpu.memory_space<vmem>>, vector<1x1x1x16x8xbf16>
    %300 = vector.shape_cast %299 : vector<1x1x1x16x8xbf16> to vector<16x8xbf16>
    %c3_389 = arith.constant 3 : index
    %c0_390 = arith.constant 0 : index
    %c0_391 = arith.constant 0 : index
    %301 = vector.load %arg3[%c3_389, %c0_390, %c0_391] : memref<9x8x128xbf16, #tpu.memory_space<vmem>>, vector<1x8x128xbf16>
    %302 = vector.shape_cast %301 : vector<1x8x128xbf16> to vector<8x128xbf16>
    %cst_392 = arith.constant dense<0.000000e+00> : vector<16x128xf32>
    %303 = tpu.matmul %300, %302, %cst_392 {dimension_numbers = #tpu.dot_dimension_numbers<[1], [0], [0], [1], [0, 0, 1, 1], [], []>} : vector<16x8xbf16>, vector<8x128xbf16>, vector<16x128xf32> -> vector<16x128xf32>
    %304 = arith.addf %298, %303 : vector<16x128xf32>
    %c0_393 = arith.constant 0 : index
    %c0_394 = arith.constant 0 : index
    %c5_395 = arith.constant 5 : index
    %c1_396 = arith.constant 1 : index
    %c0_397 = arith.constant 0 : index
    %305 = vector.load %arg2[%c0_393, %c0_394, %c5_395, %c1_396, %c0_397] : memref<1x1x10x18x8xbf16, #tpu.memory_space<vmem>>, vector<1x1x1x16x8xbf16>
    %306 = vector.shape_cast %305 : vector<1x1x1x16x8xbf16> to vector<16x8xbf16>
    %c4_398 = arith.constant 4 : index
    %c0_399 = arith.constant 0 : index
    %c0_400 = arith.constant 0 : index
    %307 = vector.load %arg3[%c4_398, %c0_399, %c0_400] : memref<9x8x128xbf16, #tpu.memory_space<vmem>>, vector<1x8x128xbf16>
    %308 = vector.shape_cast %307 : vector<1x8x128xbf16> to vector<8x128xbf16>
    %cst_401 = arith.constant dense<0.000000e+00> : vector<16x128xf32>
    %309 = tpu.matmul %306, %308, %cst_401 {dimension_numbers = #tpu.dot_dimension_numbers<[1], [0], [0], [1], [0, 0, 1, 1], [], []>} : vector<16x8xbf16>, vector<8x128xbf16>, vector<16x128xf32> -> vector<16x128xf32>
    %310 = arith.addf %304, %309 : vector<16x128xf32>
    %c0_402 = arith.constant 0 : index
    %c0_403 = arith.constant 0 : index
    %c5_404 = arith.constant 5 : index
    %c2_405 = arith.constant 2 : index
    %c0_406 = arith.constant 0 : index
    %311 = vector.load %arg2[%c0_402, %c0_403, %c5_404, %c2_405, %c0_406] : memref<1x1x10x18x8xbf16, #tpu.memory_space<vmem>>, vector<1x1x1x16x8xbf16>
    %312 = vector.shape_cast %311 : vector<1x1x1x16x8xbf16> to vector<16x8xbf16>
    %c5_407 = arith.constant 5 : index
    %c0_408 = arith.constant 0 : index
    %c0_409 = arith.constant 0 : index
    %313 = vector.load %arg3[%c5_407, %c0_408, %c0_409] : memref<9x8x128xbf16, #tpu.memory_space<vmem>>, vector<1x8x128xbf16>
    %314 = vector.shape_cast %313 : vector<1x8x128xbf16> to vector<8x128xbf16>
    %cst_410 = arith.constant dense<0.000000e+00> : vector<16x128xf32>
    %315 = tpu.matmul %312, %314, %cst_410 {dimension_numbers = #tpu.dot_dimension_numbers<[1], [0], [0], [1], [0, 0, 1, 1], [], []>} : vector<16x8xbf16>, vector<8x128xbf16>, vector<16x128xf32> -> vector<16x128xf32>
    %316 = arith.addf %310, %315 : vector<16x128xf32>
    %c0_411 = arith.constant 0 : index
    %c0_412 = arith.constant 0 : index
    %c6_413 = arith.constant 6 : index
    %c0_414 = arith.constant 0 : index
    %c0_415 = arith.constant 0 : index
    %317 = vector.load %arg2[%c0_411, %c0_412, %c6_413, %c0_414, %c0_415] : memref<1x1x10x18x8xbf16, #tpu.memory_space<vmem>>, vector<1x1x1x16x8xbf16>
    %318 = vector.shape_cast %317 : vector<1x1x1x16x8xbf16> to vector<16x8xbf16>
    %c6_416 = arith.constant 6 : index
    %c0_417 = arith.constant 0 : index
    %c0_418 = arith.constant 0 : index
    %319 = vector.load %arg3[%c6_416, %c0_417, %c0_418] : memref<9x8x128xbf16, #tpu.memory_space<vmem>>, vector<1x8x128xbf16>
    %320 = vector.shape_cast %319 : vector<1x8x128xbf16> to vector<8x128xbf16>
    %cst_419 = arith.constant dense<0.000000e+00> : vector<16x128xf32>
    %321 = tpu.matmul %318, %320, %cst_419 {dimension_numbers = #tpu.dot_dimension_numbers<[1], [0], [0], [1], [0, 0, 1, 1], [], []>} : vector<16x8xbf16>, vector<8x128xbf16>, vector<16x128xf32> -> vector<16x128xf32>
    %322 = arith.addf %316, %321 : vector<16x128xf32>
    %c0_420 = arith.constant 0 : index
    %c0_421 = arith.constant 0 : index
    %c6_422 = arith.constant 6 : index
    %c1_423 = arith.constant 1 : index
    %c0_424 = arith.constant 0 : index
    %323 = vector.load %arg2[%c0_420, %c0_421, %c6_422, %c1_423, %c0_424] : memref<1x1x10x18x8xbf16, #tpu.memory_space<vmem>>, vector<1x1x1x16x8xbf16>
    %324 = vector.shape_cast %323 : vector<1x1x1x16x8xbf16> to vector<16x8xbf16>
    %c7_425 = arith.constant 7 : index
    %c0_426 = arith.constant 0 : index
    %c0_427 = arith.constant 0 : index
    %325 = vector.load %arg3[%c7_425, %c0_426, %c0_427] : memref<9x8x128xbf16, #tpu.memory_space<vmem>>, vector<1x8x128xbf16>
    %326 = vector.shape_cast %325 : vector<1x8x128xbf16> to vector<8x128xbf16>
    %cst_428 = arith.constant dense<0.000000e+00> : vector<16x128xf32>
    %327 = tpu.matmul %324, %326, %cst_428 {dimension_numbers = #tpu.dot_dimension_numbers<[1], [0], [0], [1], [0, 0, 1, 1], [], []>} : vector<16x8xbf16>, vector<8x128xbf16>, vector<16x128xf32> -> vector<16x128xf32>
    %328 = arith.addf %322, %327 : vector<16x128xf32>
    %c0_429 = arith.constant 0 : index
    %c0_430 = arith.constant 0 : index
    %c6_431 = arith.constant 6 : index
    %c2_432 = arith.constant 2 : index
    %c0_433 = arith.constant 0 : index
    %329 = vector.load %arg2[%c0_429, %c0_430, %c6_431, %c2_432, %c0_433] : memref<1x1x10x18x8xbf16, #tpu.memory_space<vmem>>, vector<1x1x1x16x8xbf16>
    %330 = vector.shape_cast %329 : vector<1x1x1x16x8xbf16> to vector<16x8xbf16>
    %c8_434 = arith.constant 8 : index
    %c0_435 = arith.constant 0 : index
    %c0_436 = arith.constant 0 : index
    %331 = vector.load %arg3[%c8_434, %c0_435, %c0_436] : memref<9x8x128xbf16, #tpu.memory_space<vmem>>, vector<1x8x128xbf16>
    %332 = vector.shape_cast %331 : vector<1x8x128xbf16> to vector<8x128xbf16>
    %cst_437 = arith.constant dense<0.000000e+00> : vector<16x128xf32>
    %333 = tpu.matmul %330, %332, %cst_437 {dimension_numbers = #tpu.dot_dimension_numbers<[1], [0], [0], [1], [0, 0, 1, 1], [], []>} : vector<16x8xbf16>, vector<8x128xbf16>, vector<16x128xf32> -> vector<16x128xf32>
    %334 = arith.addf %328, %333 : vector<16x128xf32>
    %335 = vector.broadcast %3 : vector<1x128xf32> to vector<16x128xf32>
    %336 = arith.addf %334, %335 : vector<16x128xf32>
    %cst_438 = arith.constant 0.000000e+00 : f32
    %337 = vector.broadcast %cst_438 : f32 to vector<16x128xf32>
    %338 = arith.maximumf %336, %337 : vector<16x128xf32>
    %cst_439 = arith.constant dense<0.000000e+00> : vector<128xf32>
    %339 = vector.multi_reduction <add>, %338, %cst_439 [0] : vector<16x128xf32> to vector<128xf32>
    %340 = vector.shape_cast %339 : vector<128xf32> to vector<1x128xf32>
    %c8_i32_440 = arith.constant 8 : i32
    %341 = arith.muli %arg1, %c8_i32_440 : i32
    %c4_i32 = arith.constant 4 : i32
    %342 = arith.addi %341, %c4_i32 : i32
    %c16_i32_441 = arith.constant 16 : i32
    %343 = arith.cmpi slt, %342, %c16_i32_441 : i32
    %c0_442 = arith.constant 0 : index
    %c0_443 = arith.constant 0 : index
    %344 = vector.load %arg8[%c0_442, %c0_443] : memref<1x128xf32, #tpu.memory_space<vmem>>, vector<1x128xf32>
    %cst_444 = arith.constant 0.000000e+00 : f32
    %345 = vector.broadcast %cst_444 : f32 to vector<1x128xf32>
    %346 = arith.select %343, %340, %345 : vector<1x128xf32>
    %347 = arith.addf %344, %346 : vector<1x128xf32>
    %c0_445 = arith.constant 0 : index
    %c0_446 = arith.constant 0 : index
    %348 = vector.load %arg8[%c0_445, %c0_446] : memref<1x128xf32, #tpu.memory_space<vmem>>, vector<1x128xf32>
    tpu.vector_store %arg8[%c0_445, %c0_446], %347 {strides = array<i32>} : memref<1x128xf32, #tpu.memory_space<vmem>>, vector<1x128xf32>,
    %cst_447 = arith.constant 0.000000e+00 : f32
    %349 = vector.broadcast %cst_447 : f32 to vector<16x128xf32>
    %c0_448 = arith.constant 0 : index
    %c0_449 = arith.constant 0 : index
    %c5_450 = arith.constant 5 : index
    %c0_451 = arith.constant 0 : index
    %c0_452 = arith.constant 0 : index
    %350 = vector.load %arg2[%c0_448, %c0_449, %c5_450, %c0_451, %c0_452] : memref<1x1x10x18x8xbf16, #tpu.memory_space<vmem>>, vector<1x1x1x16x8xbf16>
    %351 = vector.shape_cast %350 : vector<1x1x1x16x8xbf16> to vector<16x8xbf16>
    %c0_453 = arith.constant 0 : index
    %c0_454 = arith.constant 0 : index
    %c0_455 = arith.constant 0 : index
    %352 = vector.load %arg3[%c0_453, %c0_454, %c0_455] : memref<9x8x128xbf16, #tpu.memory_space<vmem>>, vector<1x8x128xbf16>
    %353 = vector.shape_cast %352 : vector<1x8x128xbf16> to vector<8x128xbf16>
    %cst_456 = arith.constant dense<0.000000e+00> : vector<16x128xf32>
    %354 = tpu.matmul %351, %353, %cst_456 {dimension_numbers = #tpu.dot_dimension_numbers<[1], [0], [0], [1], [0, 0, 1, 1], [], []>} : vector<16x8xbf16>, vector<8x128xbf16>, vector<16x128xf32> -> vector<16x128xf32>
    %355 = arith.addf %349, %354 : vector<16x128xf32>
    %c0_457 = arith.constant 0 : index
    %c0_458 = arith.constant 0 : index
    %c5_459 = arith.constant 5 : index
    %c1_460 = arith.constant 1 : index
    %c0_461 = arith.constant 0 : index
    %356 = vector.load %arg2[%c0_457, %c0_458, %c5_459, %c1_460, %c0_461] : memref<1x1x10x18x8xbf16, #tpu.memory_space<vmem>>, vector<1x1x1x16x8xbf16>
    %357 = vector.shape_cast %356 : vector<1x1x1x16x8xbf16> to vector<16x8xbf16>
    %c1_462 = arith.constant 1 : index
    %c0_463 = arith.constant 0 : index
    %c0_464 = arith.constant 0 : index
    %358 = vector.load %arg3[%c1_462, %c0_463, %c0_464] : memref<9x8x128xbf16, #tpu.memory_space<vmem>>, vector<1x8x128xbf16>
    %359 = vector.shape_cast %358 : vector<1x8x128xbf16> to vector<8x128xbf16>
    %cst_465 = arith.constant dense<0.000000e+00> : vector<16x128xf32>
    %360 = tpu.matmul %357, %359, %cst_465 {dimension_numbers = #tpu.dot_dimension_numbers<[1], [0], [0], [1], [0, 0, 1, 1], [], []>} : vector<16x8xbf16>, vector<8x128xbf16>, vector<16x128xf32> -> vector<16x128xf32>
    %361 = arith.addf %355, %360 : vector<16x128xf32>
    %c0_466 = arith.constant 0 : index
    %c0_467 = arith.constant 0 : index
    %c5_468 = arith.constant 5 : index
    %c2_469 = arith.constant 2 : index
    %c0_470 = arith.constant 0 : index
    %362 = vector.load %arg2[%c0_466, %c0_467, %c5_468, %c2_469, %c0_470] : memref<1x1x10x18x8xbf16, #tpu.memory_space<vmem>>, vector<1x1x1x16x8xbf16>
    %363 = vector.shape_cast %362 : vector<1x1x1x16x8xbf16> to vector<16x8xbf16>
    %c2_471 = arith.constant 2 : index
    %c0_472 = arith.constant 0 : index
    %c0_473 = arith.constant 0 : index
    %364 = vector.load %arg3[%c2_471, %c0_472, %c0_473] : memref<9x8x128xbf16, #tpu.memory_space<vmem>>, vector<1x8x128xbf16>
    %365 = vector.shape_cast %364 : vector<1x8x128xbf16> to vector<8x128xbf16>
    %cst_474 = arith.constant dense<0.000000e+00> : vector<16x128xf32>
    %366 = tpu.matmul %363, %365, %cst_474 {dimension_numbers = #tpu.dot_dimension_numbers<[1], [0], [0], [1], [0, 0, 1, 1], [], []>} : vector<16x8xbf16>, vector<8x128xbf16>, vector<16x128xf32> -> vector<16x128xf32>
    %367 = arith.addf %361, %366 : vector<16x128xf32>
    %c0_475 = arith.constant 0 : index
    %c0_476 = arith.constant 0 : index
    %c6_477 = arith.constant 6 : index
    %c0_478 = arith.constant 0 : index
    %c0_479 = arith.constant 0 : index
    %368 = vector.load %arg2[%c0_475, %c0_476, %c6_477, %c0_478, %c0_479] : memref<1x1x10x18x8xbf16, #tpu.memory_space<vmem>>, vector<1x1x1x16x8xbf16>
    %369 = vector.shape_cast %368 : vector<1x1x1x16x8xbf16> to vector<16x8xbf16>
    %c3_480 = arith.constant 3 : index
    %c0_481 = arith.constant 0 : index
    %c0_482 = arith.constant 0 : index
    %370 = vector.load %arg3[%c3_480, %c0_481, %c0_482] : memref<9x8x128xbf16, #tpu.memory_space<vmem>>, vector<1x8x128xbf16>
    %371 = vector.shape_cast %370 : vector<1x8x128xbf16> to vector<8x128xbf16>
    %cst_483 = arith.constant dense<0.000000e+00> : vector<16x128xf32>
    %372 = tpu.matmul %369, %371, %cst_483 {dimension_numbers = #tpu.dot_dimension_numbers<[1], [0], [0], [1], [0, 0, 1, 1], [], []>} : vector<16x8xbf16>, vector<8x128xbf16>, vector<16x128xf32> -> vector<16x128xf32>
    %373 = arith.addf %367, %372 : vector<16x128xf32>
    %c0_484 = arith.constant 0 : index
    %c0_485 = arith.constant 0 : index
    %c6_486 = arith.constant 6 : index
    %c1_487 = arith.constant 1 : index
    %c0_488 = arith.constant 0 : index
    %374 = vector.load %arg2[%c0_484, %c0_485, %c6_486, %c1_487, %c0_488] : memref<1x1x10x18x8xbf16, #tpu.memory_space<vmem>>, vector<1x1x1x16x8xbf16>
    %375 = vector.shape_cast %374 : vector<1x1x1x16x8xbf16> to vector<16x8xbf16>
    %c4_489 = arith.constant 4 : index
    %c0_490 = arith.constant 0 : index
    %c0_491 = arith.constant 0 : index
    %376 = vector.load %arg3[%c4_489, %c0_490, %c0_491] : memref<9x8x128xbf16, #tpu.memory_space<vmem>>, vector<1x8x128xbf16>
    %377 = vector.shape_cast %376 : vector<1x8x128xbf16> to vector<8x128xbf16>
    %cst_492 = arith.constant dense<0.000000e+00> : vector<16x128xf32>
    %378 = tpu.matmul %375, %377, %cst_492 {dimension_numbers = #tpu.dot_dimension_numbers<[1], [0], [0], [1], [0, 0, 1, 1], [], []>} : vector<16x8xbf16>, vector<8x128xbf16>, vector<16x128xf32> -> vector<16x128xf32>
    %379 = arith.addf %373, %378 : vector<16x128xf32>
    %c0_493 = arith.constant 0 : index
    %c0_494 = arith.constant 0 : index
    %c6_495 = arith.constant 6 : index
    %c2_496 = arith.constant 2 : index
    %c0_497 = arith.constant 0 : index
    %380 = vector.load %arg2[%c0_493, %c0_494, %c6_495, %c2_496, %c0_497] : memref<1x1x10x18x8xbf16, #tpu.memory_space<vmem>>, vector<1x1x1x16x8xbf16>
    %381 = vector.shape_cast %380 : vector<1x1x1x16x8xbf16> to vector<16x8xbf16>
    %c5_498 = arith.constant 5 : index
    %c0_499 = arith.constant 0 : index
    %c0_500 = arith.constant 0 : index
    %382 = vector.load %arg3[%c5_498, %c0_499, %c0_500] : memref<9x8x128xbf16, #tpu.memory_space<vmem>>, vector<1x8x128xbf16>
    %383 = vector.shape_cast %382 : vector<1x8x128xbf16> to vector<8x128xbf16>
    %cst_501 = arith.constant dense<0.000000e+00> : vector<16x128xf32>
    %384 = tpu.matmul %381, %383, %cst_501 {dimension_numbers = #tpu.dot_dimension_numbers<[1], [0], [0], [1], [0, 0, 1, 1], [], []>} : vector<16x8xbf16>, vector<8x128xbf16>, vector<16x128xf32> -> vector<16x128xf32>
    %385 = arith.addf %379, %384 : vector<16x128xf32>
    %c0_502 = arith.constant 0 : index
    %c0_503 = arith.constant 0 : index
    %c7_504 = arith.constant 7 : index
    %c0_505 = arith.constant 0 : index
    %c0_506 = arith.constant 0 : index
    %386 = vector.load %arg2[%c0_502, %c0_503, %c7_504, %c0_505, %c0_506] : memref<1x1x10x18x8xbf16, #tpu.memory_space<vmem>>, vector<1x1x1x16x8xbf16>
    %387 = vector.shape_cast %386 : vector<1x1x1x16x8xbf16> to vector<16x8xbf16>
    %c6_507 = arith.constant 6 : index
    %c0_508 = arith.constant 0 : index
    %c0_509 = arith.constant 0 : index
    %388 = vector.load %arg3[%c6_507, %c0_508, %c0_509] : memref<9x8x128xbf16, #tpu.memory_space<vmem>>, vector<1x8x128xbf16>
    %389 = vector.shape_cast %388 : vector<1x8x128xbf16> to vector<8x128xbf16>
    %cst_510 = arith.constant dense<0.000000e+00> : vector<16x128xf32>
    %390 = tpu.matmul %387, %389, %cst_510 {dimension_numbers = #tpu.dot_dimension_numbers<[1], [0], [0], [1], [0, 0, 1, 1], [], []>} : vector<16x8xbf16>, vector<8x128xbf16>, vector<16x128xf32> -> vector<16x128xf32>
    %391 = arith.addf %385, %390 : vector<16x128xf32>
    %c0_511 = arith.constant 0 : index
    %c0_512 = arith.constant 0 : index
    %c7_513 = arith.constant 7 : index
    %c1_514 = arith.constant 1 : index
    %c0_515 = arith.constant 0 : index
    %392 = vector.load %arg2[%c0_511, %c0_512, %c7_513, %c1_514, %c0_515] : memref<1x1x10x18x8xbf16, #tpu.memory_space<vmem>>, vector<1x1x1x16x8xbf16>
    %393 = vector.shape_cast %392 : vector<1x1x1x16x8xbf16> to vector<16x8xbf16>
    %c7_516 = arith.constant 7 : index
    %c0_517 = arith.constant 0 : index
    %c0_518 = arith.constant 0 : index
    %394 = vector.load %arg3[%c7_516, %c0_517, %c0_518] : memref<9x8x128xbf16, #tpu.memory_space<vmem>>, vector<1x8x128xbf16>
    %395 = vector.shape_cast %394 : vector<1x8x128xbf16> to vector<8x128xbf16>
    %cst_519 = arith.constant dense<0.000000e+00> : vector<16x128xf32>
    %396 = tpu.matmul %393, %395, %cst_519 {dimension_numbers = #tpu.dot_dimension_numbers<[1], [0], [0], [1], [0, 0, 1, 1], [], []>} : vector<16x8xbf16>, vector<8x128xbf16>, vector<16x128xf32> -> vector<16x128xf32>
    %397 = arith.addf %391, %396 : vector<16x128xf32>
    %c0_520 = arith.constant 0 : index
    %c0_521 = arith.constant 0 : index
    %c7_522 = arith.constant 7 : index
    %c2_523 = arith.constant 2 : index
    %c0_524 = arith.constant 0 : index
    %398 = vector.load %arg2[%c0_520, %c0_521, %c7_522, %c2_523, %c0_524] : memref<1x1x10x18x8xbf16, #tpu.memory_space<vmem>>, vector<1x1x1x16x8xbf16>
    %399 = vector.shape_cast %398 : vector<1x1x1x16x8xbf16> to vector<16x8xbf16>
    %c8_525 = arith.constant 8 : index
    %c0_526 = arith.constant 0 : index
    %c0_527 = arith.constant 0 : index
    %400 = vector.load %arg3[%c8_525, %c0_526, %c0_527] : memref<9x8x128xbf16, #tpu.memory_space<vmem>>, vector<1x8x128xbf16>
    %401 = vector.shape_cast %400 : vector<1x8x128xbf16> to vector<8x128xbf16>
    %cst_528 = arith.constant dense<0.000000e+00> : vector<16x128xf32>
    %402 = tpu.matmul %399, %401, %cst_528 {dimension_numbers = #tpu.dot_dimension_numbers<[1], [0], [0], [1], [0, 0, 1, 1], [], []>} : vector<16x8xbf16>, vector<8x128xbf16>, vector<16x128xf32> -> vector<16x128xf32>
    %403 = arith.addf %397, %402 : vector<16x128xf32>
    %404 = vector.broadcast %3 : vector<1x128xf32> to vector<16x128xf32>
    %405 = arith.addf %403, %404 : vector<16x128xf32>
    %cst_529 = arith.constant 0.000000e+00 : f32
    %406 = vector.broadcast %cst_529 : f32 to vector<16x128xf32>
    %407 = arith.maximumf %405, %406 : vector<16x128xf32>
    %cst_530 = arith.constant dense<0.000000e+00> : vector<128xf32>
    %408 = vector.multi_reduction <add>, %407, %cst_530 [0] : vector<16x128xf32> to vector<128xf32>
    %409 = vector.shape_cast %408 : vector<128xf32> to vector<1x128xf32>
    %c8_i32_531 = arith.constant 8 : i32
    %410 = arith.muli %arg1, %c8_i32_531 : i32
    %c5_i32 = arith.constant 5 : i32
    %411 = arith.addi %410, %c5_i32 : i32
    %c16_i32_532 = arith.constant 16 : i32
    %412 = arith.cmpi slt, %411, %c16_i32_532 : i32
    %c0_533 = arith.constant 0 : index
    %c0_534 = arith.constant 0 : index
    %413 = vector.load %arg8[%c0_533, %c0_534] : memref<1x128xf32, #tpu.memory_space<vmem>>, vector<1x128xf32>
    %cst_535 = arith.constant 0.000000e+00 : f32
    %414 = vector.broadcast %cst_535 : f32 to vector<1x128xf32>
    %415 = arith.select %412, %409, %414 : vector<1x128xf32>
    %416 = arith.addf %413, %415 : vector<1x128xf32>
    %c0_536 = arith.constant 0 : index
    %c0_537 = arith.constant 0 : index
    %417 = vector.load %arg8[%c0_536, %c0_537] : memref<1x128xf32, #tpu.memory_space<vmem>>, vector<1x128xf32>
    tpu.vector_store %arg8[%c0_536, %c0_537], %416 {strides = array<i32>} : memref<1x128xf32, #tpu.memory_space<vmem>>, vector<1x128xf32>,
    %cst_538 = arith.constant 0.000000e+00 : f32
    %418 = vector.broadcast %cst_538 : f32 to vector<16x128xf32>
    %c0_539 = arith.constant 0 : index
    %c0_540 = arith.constant 0 : index
    %c6_541 = arith.constant 6 : index
    %c0_542 = arith.constant 0 : index
    %c0_543 = arith.constant 0 : index
    %419 = vector.load %arg2[%c0_539, %c0_540, %c6_541, %c0_542, %c0_543] : memref<1x1x10x18x8xbf16, #tpu.memory_space<vmem>>, vector<1x1x1x16x8xbf16>
    %420 = vector.shape_cast %419 : vector<1x1x1x16x8xbf16> to vector<16x8xbf16>
    %c0_544 = arith.constant 0 : index
    %c0_545 = arith.constant 0 : index
    %c0_546 = arith.constant 0 : index
    %421 = vector.load %arg3[%c0_544, %c0_545, %c0_546] : memref<9x8x128xbf16, #tpu.memory_space<vmem>>, vector<1x8x128xbf16>
    %422 = vector.shape_cast %421 : vector<1x8x128xbf16> to vector<8x128xbf16>
    %cst_547 = arith.constant dense<0.000000e+00> : vector<16x128xf32>
    %423 = tpu.matmul %420, %422, %cst_547 {dimension_numbers = #tpu.dot_dimension_numbers<[1], [0], [0], [1], [0, 0, 1, 1], [], []>} : vector<16x8xbf16>, vector<8x128xbf16>, vector<16x128xf32> -> vector<16x128xf32>
    %424 = arith.addf %418, %423 : vector<16x128xf32>
    %c0_548 = arith.constant 0 : index
    %c0_549 = arith.constant 0 : index
    %c6_550 = arith.constant 6 : index
    %c1_551 = arith.constant 1 : index
    %c0_552 = arith.constant 0 : index
    %425 = vector.load %arg2[%c0_548, %c0_549, %c6_550, %c1_551, %c0_552] : memref<1x1x10x18x8xbf16, #tpu.memory_space<vmem>>, vector<1x1x1x16x8xbf16>
    %426 = vector.shape_cast %425 : vector<1x1x1x16x8xbf16> to vector<16x8xbf16>
    %c1_553 = arith.constant 1 : index
    %c0_554 = arith.constant 0 : index
    %c0_555 = arith.constant 0 : index
    %427 = vector.load %arg3[%c1_553, %c0_554, %c0_555] : memref<9x8x128xbf16, #tpu.memory_space<vmem>>, vector<1x8x128xbf16>
    %428 = vector.shape_cast %427 : vector<1x8x128xbf16> to vector<8x128xbf16>
    %cst_556 = arith.constant dense<0.000000e+00> : vector<16x128xf32>
    %429 = tpu.matmul %426, %428, %cst_556 {dimension_numbers = #tpu.dot_dimension_numbers<[1], [0], [0], [1], [0, 0, 1, 1], [], []>} : vector<16x8xbf16>, vector<8x128xbf16>, vector<16x128xf32> -> vector<16x128xf32>
    %430 = arith.addf %424, %429 : vector<16x128xf32>
    %c0_557 = arith.constant 0 : index
    %c0_558 = arith.constant 0 : index
    %c6_559 = arith.constant 6 : index
    %c2_560 = arith.constant 2 : index
    %c0_561 = arith.constant 0 : index
    %431 = vector.load %arg2[%c0_557, %c0_558, %c6_559, %c2_560, %c0_561] : memref<1x1x10x18x8xbf16, #tpu.memory_space<vmem>>, vector<1x1x1x16x8xbf16>
    %432 = vector.shape_cast %431 : vector<1x1x1x16x8xbf16> to vector<16x8xbf16>
    %c2_562 = arith.constant 2 : index
    %c0_563 = arith.constant 0 : index
    %c0_564 = arith.constant 0 : index
    %433 = vector.load %arg3[%c2_562, %c0_563, %c0_564] : memref<9x8x128xbf16, #tpu.memory_space<vmem>>, vector<1x8x128xbf16>
    %434 = vector.shape_cast %433 : vector<1x8x128xbf16> to vector<8x128xbf16>
    %cst_565 = arith.constant dense<0.000000e+00> : vector<16x128xf32>
    %435 = tpu.matmul %432, %434, %cst_565 {dimension_numbers = #tpu.dot_dimension_numbers<[1], [0], [0], [1], [0, 0, 1, 1], [], []>} : vector<16x8xbf16>, vector<8x128xbf16>, vector<16x128xf32> -> vector<16x128xf32>
    %436 = arith.addf %430, %435 : vector<16x128xf32>
    %c0_566 = arith.constant 0 : index
    %c0_567 = arith.constant 0 : index
    %c7_568 = arith.constant 7 : index
    %c0_569 = arith.constant 0 : index
    %c0_570 = arith.constant 0 : index
    %437 = vector.load %arg2[%c0_566, %c0_567, %c7_568, %c0_569, %c0_570] : memref<1x1x10x18x8xbf16, #tpu.memory_space<vmem>>, vector<1x1x1x16x8xbf16>
    %438 = vector.shape_cast %437 : vector<1x1x1x16x8xbf16> to vector<16x8xbf16>
    %c3_571 = arith.constant 3 : index
    %c0_572 = arith.constant 0 : index
    %c0_573 = arith.constant 0 : index
    %439 = vector.load %arg3[%c3_571, %c0_572, %c0_573] : memref<9x8x128xbf16, #tpu.memory_space<vmem>>, vector<1x8x128xbf16>
    %440 = vector.shape_cast %439 : vector<1x8x128xbf16> to vector<8x128xbf16>
    %cst_574 = arith.constant dense<0.000000e+00> : vector<16x128xf32>
    %441 = tpu.matmul %438, %440, %cst_574 {dimension_numbers = #tpu.dot_dimension_numbers<[1], [0], [0], [1], [0, 0, 1, 1], [], []>} : vector<16x8xbf16>, vector<8x128xbf16>, vector<16x128xf32> -> vector<16x128xf32>
    %442 = arith.addf %436, %441 : vector<16x128xf32>
    %c0_575 = arith.constant 0 : index
    %c0_576 = arith.constant 0 : index
    %c7_577 = arith.constant 7 : index
    %c1_578 = arith.constant 1 : index
    %c0_579 = arith.constant 0 : index
    %443 = vector.load %arg2[%c0_575, %c0_576, %c7_577, %c1_578, %c0_579] : memref<1x1x10x18x8xbf16, #tpu.memory_space<vmem>>, vector<1x1x1x16x8xbf16>
    %444 = vector.shape_cast %443 : vector<1x1x1x16x8xbf16> to vector<16x8xbf16>
    %c4_580 = arith.constant 4 : index
    %c0_581 = arith.constant 0 : index
    %c0_582 = arith.constant 0 : index
    %445 = vector.load %arg3[%c4_580, %c0_581, %c0_582] : memref<9x8x128xbf16, #tpu.memory_space<vmem>>, vector<1x8x128xbf16>
    %446 = vector.shape_cast %445 : vector<1x8x128xbf16> to vector<8x128xbf16>
    %cst_583 = arith.constant dense<0.000000e+00> : vector<16x128xf32>
    %447 = tpu.matmul %444, %446, %cst_583 {dimension_numbers = #tpu.dot_dimension_numbers<[1], [0], [0], [1], [0, 0, 1, 1], [], []>} : vector<16x8xbf16>, vector<8x128xbf16>, vector<16x128xf32> -> vector<16x128xf32>
    %448 = arith.addf %442, %447 : vector<16x128xf32>
    %c0_584 = arith.constant 0 : index
    %c0_585 = arith.constant 0 : index
    %c7_586 = arith.constant 7 : index
    %c2_587 = arith.constant 2 : index
    %c0_588 = arith.constant 0 : index
    %449 = vector.load %arg2[%c0_584, %c0_585, %c7_586, %c2_587, %c0_588] : memref<1x1x10x18x8xbf16, #tpu.memory_space<vmem>>, vector<1x1x1x16x8xbf16>
    %450 = vector.shape_cast %449 : vector<1x1x1x16x8xbf16> to vector<16x8xbf16>
    %c5_589 = arith.constant 5 : index
    %c0_590 = arith.constant 0 : index
    %c0_591 = arith.constant 0 : index
    %451 = vector.load %arg3[%c5_589, %c0_590, %c0_591] : memref<9x8x128xbf16, #tpu.memory_space<vmem>>, vector<1x8x128xbf16>
    %452 = vector.shape_cast %451 : vector<1x8x128xbf16> to vector<8x128xbf16>
    %cst_592 = arith.constant dense<0.000000e+00> : vector<16x128xf32>
    %453 = tpu.matmul %450, %452, %cst_592 {dimension_numbers = #tpu.dot_dimension_numbers<[1], [0], [0], [1], [0, 0, 1, 1], [], []>} : vector<16x8xbf16>, vector<8x128xbf16>, vector<16x128xf32> -> vector<16x128xf32>
    %454 = arith.addf %448, %453 : vector<16x128xf32>
    %c0_593 = arith.constant 0 : index
    %c0_594 = arith.constant 0 : index
    %c8_595 = arith.constant 8 : index
    %c0_596 = arith.constant 0 : index
    %c0_597 = arith.constant 0 : index
    %455 = vector.load %arg2[%c0_593, %c0_594, %c8_595, %c0_596, %c0_597] : memref<1x1x10x18x8xbf16, #tpu.memory_space<vmem>>, vector<1x1x1x16x8xbf16>
    %456 = vector.shape_cast %455 : vector<1x1x1x16x8xbf16> to vector<16x8xbf16>
    %c6_598 = arith.constant 6 : index
    %c0_599 = arith.constant 0 : index
    %c0_600 = arith.constant 0 : index
    %457 = vector.load %arg3[%c6_598, %c0_599, %c0_600] : memref<9x8x128xbf16, #tpu.memory_space<vmem>>, vector<1x8x128xbf16>
    %458 = vector.shape_cast %457 : vector<1x8x128xbf16> to vector<8x128xbf16>
    %cst_601 = arith.constant dense<0.000000e+00> : vector<16x128xf32>
    %459 = tpu.matmul %456, %458, %cst_601 {dimension_numbers = #tpu.dot_dimension_numbers<[1], [0], [0], [1], [0, 0, 1, 1], [], []>} : vector<16x8xbf16>, vector<8x128xbf16>, vector<16x128xf32> -> vector<16x128xf32>
    %460 = arith.addf %454, %459 : vector<16x128xf32>
    %c0_602 = arith.constant 0 : index
    %c0_603 = arith.constant 0 : index
    %c8_604 = arith.constant 8 : index
    %c1_605 = arith.constant 1 : index
    %c0_606 = arith.constant 0 : index
    %461 = vector.load %arg2[%c0_602, %c0_603, %c8_604, %c1_605, %c0_606] : memref<1x1x10x18x8xbf16, #tpu.memory_space<vmem>>, vector<1x1x1x16x8xbf16>
    %462 = vector.shape_cast %461 : vector<1x1x1x16x8xbf16> to vector<16x8xbf16>
    %c7_607 = arith.constant 7 : index
    %c0_608 = arith.constant 0 : index
    %c0_609 = arith.constant 0 : index
    %463 = vector.load %arg3[%c7_607, %c0_608, %c0_609] : memref<9x8x128xbf16, #tpu.memory_space<vmem>>, vector<1x8x128xbf16>
    %464 = vector.shape_cast %463 : vector<1x8x128xbf16> to vector<8x128xbf16>
    %cst_610 = arith.constant dense<0.000000e+00> : vector<16x128xf32>
    %465 = tpu.matmul %462, %464, %cst_610 {dimension_numbers = #tpu.dot_dimension_numbers<[1], [0], [0], [1], [0, 0, 1, 1], [], []>} : vector<16x8xbf16>, vector<8x128xbf16>, vector<16x128xf32> -> vector<16x128xf32>
    %466 = arith.addf %460, %465 : vector<16x128xf32>
    %c0_611 = arith.constant 0 : index
    %c0_612 = arith.constant 0 : index
    %c8_613 = arith.constant 8 : index
    %c2_614 = arith.constant 2 : index
    %c0_615 = arith.constant 0 : index
    %467 = vector.load %arg2[%c0_611, %c0_612, %c8_613, %c2_614, %c0_615] : memref<1x1x10x18x8xbf16, #tpu.memory_space<vmem>>, vector<1x1x1x16x8xbf16>
    %468 = vector.shape_cast %467 : vector<1x1x1x16x8xbf16> to vector<16x8xbf16>
    %c8_616 = arith.constant 8 : index
    %c0_617 = arith.constant 0 : index
    %c0_618 = arith.constant 0 : index
    %469 = vector.load %arg3[%c8_616, %c0_617, %c0_618] : memref<9x8x128xbf16, #tpu.memory_space<vmem>>, vector<1x8x128xbf16>
    %470 = vector.shape_cast %469 : vector<1x8x128xbf16> to vector<8x128xbf16>
    %cst_619 = arith.constant dense<0.000000e+00> : vector<16x128xf32>
    %471 = tpu.matmul %468, %470, %cst_619 {dimension_numbers = #tpu.dot_dimension_numbers<[1], [0], [0], [1], [0, 0, 1, 1], [], []>} : vector<16x8xbf16>, vector<8x128xbf16>, vector<16x128xf32> -> vector<16x128xf32>
    %472 = arith.addf %466, %471 : vector<16x128xf32>
    %473 = vector.broadcast %3 : vector<1x128xf32> to vector<16x128xf32>
    %474 = arith.addf %472, %473 : vector<16x128xf32>
    %cst_620 = arith.constant 0.000000e+00 : f32
    %475 = vector.broadcast %cst_620 : f32 to vector<16x128xf32>
    %476 = arith.maximumf %474, %475 : vector<16x128xf32>
    %cst_621 = arith.constant dense<0.000000e+00> : vector<128xf32>
    %477 = vector.multi_reduction <add>, %476, %cst_621 [0] : vector<16x128xf32> to vector<128xf32>
    %478 = vector.shape_cast %477 : vector<128xf32> to vector<1x128xf32>
    %c8_i32_622 = arith.constant 8 : i32
    %479 = arith.muli %arg1, %c8_i32_622 : i32
    %c6_i32 = arith.constant 6 : i32
    %480 = arith.addi %479, %c6_i32 : i32
    %c16_i32_623 = arith.constant 16 : i32
    %481 = arith.cmpi slt, %480, %c16_i32_623 : i32
    %c0_624 = arith.constant 0 : index
    %c0_625 = arith.constant 0 : index
    %482 = vector.load %arg8[%c0_624, %c0_625] : memref<1x128xf32, #tpu.memory_space<vmem>>, vector<1x128xf32>
    %cst_626 = arith.constant 0.000000e+00 : f32
    %483 = vector.broadcast %cst_626 : f32 to vector<1x128xf32>
    %484 = arith.select %481, %478, %483 : vector<1x128xf32>
    %485 = arith.addf %482, %484 : vector<1x128xf32>
    %c0_627 = arith.constant 0 : index
    %c0_628 = arith.constant 0 : index
    %486 = vector.load %arg8[%c0_627, %c0_628] : memref<1x128xf32, #tpu.memory_space<vmem>>, vector<1x128xf32>
    tpu.vector_store %arg8[%c0_627, %c0_628], %485 {strides = array<i32>} : memref<1x128xf32, #tpu.memory_space<vmem>>, vector<1x128xf32>,
    %cst_629 = arith.constant 0.000000e+00 : f32
    %487 = vector.broadcast %cst_629 : f32 to vector<16x128xf32>
    %c0_630 = arith.constant 0 : index
    %c0_631 = arith.constant 0 : index
    %c7_632 = arith.constant 7 : index
    %c0_633 = arith.constant 0 : index
    %c0_634 = arith.constant 0 : index
    %488 = vector.load %arg2[%c0_630, %c0_631, %c7_632, %c0_633, %c0_634] : memref<1x1x10x18x8xbf16, #tpu.memory_space<vmem>>, vector<1x1x1x16x8xbf16>
    %489 = vector.shape_cast %488 : vector<1x1x1x16x8xbf16> to vector<16x8xbf16>
    %c0_635 = arith.constant 0 : index
    %c0_636 = arith.constant 0 : index
    %c0_637 = arith.constant 0 : index
    %490 = vector.load %arg3[%c0_635, %c0_636, %c0_637] : memref<9x8x128xbf16, #tpu.memory_space<vmem>>, vector<1x8x128xbf16>
    %491 = vector.shape_cast %490 : vector<1x8x128xbf16> to vector<8x128xbf16>
    %cst_638 = arith.constant dense<0.000000e+00> : vector<16x128xf32>
    %492 = tpu.matmul %489, %491, %cst_638 {dimension_numbers = #tpu.dot_dimension_numbers<[1], [0], [0], [1], [0, 0, 1, 1], [], []>} : vector<16x8xbf16>, vector<8x128xbf16>, vector<16x128xf32> -> vector<16x128xf32>
    %493 = arith.addf %487, %492 : vector<16x128xf32>
    %c0_639 = arith.constant 0 : index
    %c0_640 = arith.constant 0 : index
    %c7_641 = arith.constant 7 : index
    %c1_642 = arith.constant 1 : index
    %c0_643 = arith.constant 0 : index
    %494 = vector.load %arg2[%c0_639, %c0_640, %c7_641, %c1_642, %c0_643] : memref<1x1x10x18x8xbf16, #tpu.memory_space<vmem>>, vector<1x1x1x16x8xbf16>
    %495 = vector.shape_cast %494 : vector<1x1x1x16x8xbf16> to vector<16x8xbf16>
    %c1_644 = arith.constant 1 : index
    %c0_645 = arith.constant 0 : index
    %c0_646 = arith.constant 0 : index
    %496 = vector.load %arg3[%c1_644, %c0_645, %c0_646] : memref<9x8x128xbf16, #tpu.memory_space<vmem>>, vector<1x8x128xbf16>
    %497 = vector.shape_cast %496 : vector<1x8x128xbf16> to vector<8x128xbf16>
    %cst_647 = arith.constant dense<0.000000e+00> : vector<16x128xf32>
    %498 = tpu.matmul %495, %497, %cst_647 {dimension_numbers = #tpu.dot_dimension_numbers<[1], [0], [0], [1], [0, 0, 1, 1], [], []>} : vector<16x8xbf16>, vector<8x128xbf16>, vector<16x128xf32> -> vector<16x128xf32>
    %499 = arith.addf %493, %498 : vector<16x128xf32>
    %c0_648 = arith.constant 0 : index
    %c0_649 = arith.constant 0 : index
    %c7_650 = arith.constant 7 : index
    %c2_651 = arith.constant 2 : index
    %c0_652 = arith.constant 0 : index
    %500 = vector.load %arg2[%c0_648, %c0_649, %c7_650, %c2_651, %c0_652] : memref<1x1x10x18x8xbf16, #tpu.memory_space<vmem>>, vector<1x1x1x16x8xbf16>
    %501 = vector.shape_cast %500 : vector<1x1x1x16x8xbf16> to vector<16x8xbf16>
    %c2_653 = arith.constant 2 : index
    %c0_654 = arith.constant 0 : index
    %c0_655 = arith.constant 0 : index
    %502 = vector.load %arg3[%c2_653, %c0_654, %c0_655] : memref<9x8x128xbf16, #tpu.memory_space<vmem>>, vector<1x8x128xbf16>
    %503 = vector.shape_cast %502 : vector<1x8x128xbf16> to vector<8x128xbf16>
    %cst_656 = arith.constant dense<0.000000e+00> : vector<16x128xf32>
    %504 = tpu.matmul %501, %503, %cst_656 {dimension_numbers = #tpu.dot_dimension_numbers<[1], [0], [0], [1], [0, 0, 1, 1], [], []>} : vector<16x8xbf16>, vector<8x128xbf16>, vector<16x128xf32> -> vector<16x128xf32>
    %505 = arith.addf %499, %504 : vector<16x128xf32>
    %c0_657 = arith.constant 0 : index
    %c0_658 = arith.constant 0 : index
    %c8_659 = arith.constant 8 : index
    %c0_660 = arith.constant 0 : index
    %c0_661 = arith.constant 0 : index
    %506 = vector.load %arg2[%c0_657, %c0_658, %c8_659, %c0_660, %c0_661] : memref<1x1x10x18x8xbf16, #tpu.memory_space<vmem>>, vector<1x1x1x16x8xbf16>
    %507 = vector.shape_cast %506 : vector<1x1x1x16x8xbf16> to vector<16x8xbf16>
    %c3_662 = arith.constant 3 : index
    %c0_663 = arith.constant 0 : index
    %c0_664 = arith.constant 0 : index
    %508 = vector.load %arg3[%c3_662, %c0_663, %c0_664] : memref<9x8x128xbf16, #tpu.memory_space<vmem>>, vector<1x8x128xbf16>
    %509 = vector.shape_cast %508 : vector<1x8x128xbf16> to vector<8x128xbf16>
    %cst_665 = arith.constant dense<0.000000e+00> : vector<16x128xf32>
    %510 = tpu.matmul %507, %509, %cst_665 {dimension_numbers = #tpu.dot_dimension_numbers<[1], [0], [0], [1], [0, 0, 1, 1], [], []>} : vector<16x8xbf16>, vector<8x128xbf16>, vector<16x128xf32> -> vector<16x128xf32>
    %511 = arith.addf %505, %510 : vector<16x128xf32>
    %c0_666 = arith.constant 0 : index
    %c0_667 = arith.constant 0 : index
    %c8_668 = arith.constant 8 : index
    %c1_669 = arith.constant 1 : index
    %c0_670 = arith.constant 0 : index
    %512 = vector.load %arg2[%c0_666, %c0_667, %c8_668, %c1_669, %c0_670] : memref<1x1x10x18x8xbf16, #tpu.memory_space<vmem>>, vector<1x1x1x16x8xbf16>
    %513 = vector.shape_cast %512 : vector<1x1x1x16x8xbf16> to vector<16x8xbf16>
    %c4_671 = arith.constant 4 : index
    %c0_672 = arith.constant 0 : index
    %c0_673 = arith.constant 0 : index
    %514 = vector.load %arg3[%c4_671, %c0_672, %c0_673] : memref<9x8x128xbf16, #tpu.memory_space<vmem>>, vector<1x8x128xbf16>
    %515 = vector.shape_cast %514 : vector<1x8x128xbf16> to vector<8x128xbf16>
    %cst_674 = arith.constant dense<0.000000e+00> : vector<16x128xf32>
    %516 = tpu.matmul %513, %515, %cst_674 {dimension_numbers = #tpu.dot_dimension_numbers<[1], [0], [0], [1], [0, 0, 1, 1], [], []>} : vector<16x8xbf16>, vector<8x128xbf16>, vector<16x128xf32> -> vector<16x128xf32>
    %517 = arith.addf %511, %516 : vector<16x128xf32>
    %c0_675 = arith.constant 0 : index
    %c0_676 = arith.constant 0 : index
    %c8_677 = arith.constant 8 : index
    %c2_678 = arith.constant 2 : index
    %c0_679 = arith.constant 0 : index
    %518 = vector.load %arg2[%c0_675, %c0_676, %c8_677, %c2_678, %c0_679] : memref<1x1x10x18x8xbf16, #tpu.memory_space<vmem>>, vector<1x1x1x16x8xbf16>
    %519 = vector.shape_cast %518 : vector<1x1x1x16x8xbf16> to vector<16x8xbf16>
    %c5_680 = arith.constant 5 : index
    %c0_681 = arith.constant 0 : index
    %c0_682 = arith.constant 0 : index
    %520 = vector.load %arg3[%c5_680, %c0_681, %c0_682] : memref<9x8x128xbf16, #tpu.memory_space<vmem>>, vector<1x8x128xbf16>
    %521 = vector.shape_cast %520 : vector<1x8x128xbf16> to vector<8x128xbf16>
    %cst_683 = arith.constant dense<0.000000e+00> : vector<16x128xf32>
    %522 = tpu.matmul %519, %521, %cst_683 {dimension_numbers = #tpu.dot_dimension_numbers<[1], [0], [0], [1], [0, 0, 1, 1], [], []>} : vector<16x8xbf16>, vector<8x128xbf16>, vector<16x128xf32> -> vector<16x128xf32>
    %523 = arith.addf %517, %522 : vector<16x128xf32>
    %c0_684 = arith.constant 0 : index
    %c0_685 = arith.constant 0 : index
    %c9 = arith.constant 9 : index
    %c0_686 = arith.constant 0 : index
    %c0_687 = arith.constant 0 : index
    %524 = vector.load %arg2[%c0_684, %c0_685, %c9, %c0_686, %c0_687] : memref<1x1x10x18x8xbf16, #tpu.memory_space<vmem>>, vector<1x1x1x16x8xbf16>
    %525 = vector.shape_cast %524 : vector<1x1x1x16x8xbf16> to vector<16x8xbf16>
    %c6_688 = arith.constant 6 : index
    %c0_689 = arith.constant 0 : index
    %c0_690 = arith.constant 0 : index
    %526 = vector.load %arg3[%c6_688, %c0_689, %c0_690] : memref<9x8x128xbf16, #tpu.memory_space<vmem>>, vector<1x8x128xbf16>
    %527 = vector.shape_cast %526 : vector<1x8x128xbf16> to vector<8x128xbf16>
    %cst_691 = arith.constant dense<0.000000e+00> : vector<16x128xf32>
    %528 = tpu.matmul %525, %527, %cst_691 {dimension_numbers = #tpu.dot_dimension_numbers<[1], [0], [0], [1], [0, 0, 1, 1], [], []>} : vector<16x8xbf16>, vector<8x128xbf16>, vector<16x128xf32> -> vector<16x128xf32>
    %529 = arith.addf %523, %528 : vector<16x128xf32>
    %c0_692 = arith.constant 0 : index
    %c0_693 = arith.constant 0 : index
    %c9_694 = arith.constant 9 : index
    %c1_695 = arith.constant 1 : index
    %c0_696 = arith.constant 0 : index
    %530 = vector.load %arg2[%c0_692, %c0_693, %c9_694, %c1_695, %c0_696] : memref<1x1x10x18x8xbf16, #tpu.memory_space<vmem>>, vector<1x1x1x16x8xbf16>
    %531 = vector.shape_cast %530 : vector<1x1x1x16x8xbf16> to vector<16x8xbf16>
    %c7_697 = arith.constant 7 : index
    %c0_698 = arith.constant 0 : index
    %c0_699 = arith.constant 0 : index
    %532 = vector.load %arg3[%c7_697, %c0_698, %c0_699] : memref<9x8x128xbf16, #tpu.memory_space<vmem>>, vector<1x8x128xbf16>
    %533 = vector.shape_cast %532 : vector<1x8x128xbf16> to vector<8x128xbf16>
    %cst_700 = arith.constant dense<0.000000e+00> : vector<16x128xf32>
    %534 = tpu.matmul %531, %533, %cst_700 {dimension_numbers = #tpu.dot_dimension_numbers<[1], [0], [0], [1], [0, 0, 1, 1], [], []>} : vector<16x8xbf16>, vector<8x128xbf16>, vector<16x128xf32> -> vector<16x128xf32>
    %535 = arith.addf %529, %534 : vector<16x128xf32>
    %c0_701 = arith.constant 0 : index
    %c0_702 = arith.constant 0 : index
    %c9_703 = arith.constant 9 : index
    %c2_704 = arith.constant 2 : index
    %c0_705 = arith.constant 0 : index
    %536 = vector.load %arg2[%c0_701, %c0_702, %c9_703, %c2_704, %c0_705] : memref<1x1x10x18x8xbf16, #tpu.memory_space<vmem>>, vector<1x1x1x16x8xbf16>
    %537 = vector.shape_cast %536 : vector<1x1x1x16x8xbf16> to vector<16x8xbf16>
    %c8_706 = arith.constant 8 : index
    %c0_707 = arith.constant 0 : index
    %c0_708 = arith.constant 0 : index
    %538 = vector.load %arg3[%c8_706, %c0_707, %c0_708] : memref<9x8x128xbf16, #tpu.memory_space<vmem>>, vector<1x8x128xbf16>
    %539 = vector.shape_cast %538 : vector<1x8x128xbf16> to vector<8x128xbf16>
    %cst_709 = arith.constant dense<0.000000e+00> : vector<16x128xf32>
    %540 = tpu.matmul %537, %539, %cst_709 {dimension_numbers = #tpu.dot_dimension_numbers<[1], [0], [0], [1], [0, 0, 1, 1], [], []>} : vector<16x8xbf16>, vector<8x128xbf16>, vector<16x128xf32> -> vector<16x128xf32>
    %541 = arith.addf %535, %540 : vector<16x128xf32>
    %542 = vector.broadcast %3 : vector<1x128xf32> to vector<16x128xf32>
    %543 = arith.addf %541, %542 : vector<16x128xf32>
    %cst_710 = arith.constant 0.000000e+00 : f32
    %544 = vector.broadcast %cst_710 : f32 to vector<16x128xf32>
    %545 = arith.maximumf %543, %544 : vector<16x128xf32>
    %cst_711 = arith.constant dense<0.000000e+00> : vector<128xf32>
    %546 = vector.multi_reduction <add>, %545, %cst_711 [0] : vector<16x128xf32> to vector<128xf32>
    %547 = vector.shape_cast %546 : vector<128xf32> to vector<1x128xf32>
    %c8_i32_712 = arith.constant 8 : i32
    %548 = arith.muli %arg1, %c8_i32_712 : i32
    %c7_i32 = arith.constant 7 : i32
    %549 = arith.addi %548, %c7_i32 : i32
    %c16_i32_713 = arith.constant 16 : i32
    %550 = arith.cmpi slt, %549, %c16_i32_713 : i32
    %c0_714 = arith.constant 0 : index
    %c0_715 = arith.constant 0 : index
    %551 = vector.load %arg8[%c0_714, %c0_715] : memref<1x128xf32, #tpu.memory_space<vmem>>, vector<1x128xf32>
    %cst_716 = arith.constant 0.000000e+00 : f32
    %552 = vector.broadcast %cst_716 : f32 to vector<1x128xf32>
    %553 = arith.select %550, %547, %552 : vector<1x128xf32>
    %554 = arith.addf %551, %553 : vector<1x128xf32>
    %c0_717 = arith.constant 0 : index
    %c0_718 = arith.constant 0 : index
    %555 = vector.load %arg8[%c0_717, %c0_718] : memref<1x128xf32, #tpu.memory_space<vmem>>, vector<1x128xf32>
    tpu.vector_store %arg8[%c0_717, %c0_718], %554 {strides = array<i32>} : memref<1x128xf32, #tpu.memory_space<vmem>>, vector<1x128xf32>,
    %c1_i32_719 = arith.constant 1 : i32
    %556 = arith.cmpi eq, %arg1, %c1_i32_719 : i32
    %557 = arith.extui %556 : i1 to i32
    %c0_i32_720 = arith.constant 0 : i32
    %558 = arith.cmpi ne, %557, %c0_i32_720 : i32
    scf.if %558 {
      %c0_721 = arith.constant 0 : index
      %c0_722 = arith.constant 0 : index
      %559 = vector.load %arg8[%c0_721, %c0_722] : memref<1x128xf32, #tpu.memory_space<vmem>>, vector<1x128xf32>
      %cst_723 = arith.constant 3.906250e-03 : f32
      %560 = vector.broadcast %cst_723 : f32 to vector<1x128xf32>
      %561 = arith.mulf %559, %560 : vector<1x128xf32>
      %c0_724 = arith.constant 0 : index
      %c0_725 = arith.constant 0 : index
      %562 = vector.load %arg5[%c0_724, %c0_725] : memref<128x128xf32, #tpu.memory_space<vmem>>, vector<128x128xf32>
      %cst_726 = arith.constant dense<0.000000e+00> : vector<1x128xf32>
      %563 = tpu.matmul %561, %562, %cst_726 {dimension_numbers = #tpu.dot_dimension_numbers<[1], [0], [0], [1], [0, 0, 1, 1], [], []>} : vector<1x128xf32>, vector<128x128xf32>, vector<1x128xf32> -> vector<1x128xf32>
      %c0_727 = arith.constant 0 : index
      %c0_728 = arith.constant 0 : index
      %564 = vector.load %arg6[%c0_727, %c0_728] : memref<1x128xf32, #tpu.memory_space<vmem>>, vector<1x128xf32>
      %565 = arith.addf %563, %564 : vector<1x128xf32>
      %c0_729 = arith.constant 0 : index
      %c0_730 = arith.constant 0 : index
      %c0_731 = arith.constant 0 : index
      %566 = vector.load %arg7[%c0_729, %c0_730, %c0_731] : memref<1x1x128xf32, #tpu.memory_space<vmem>>, vector<1x1x128xf32>
      %567 = vector.shape_cast %566 : vector<1x1x128xf32> to vector<1x128xf32>
      %568 = vector.shape_cast %565 : vector<1x128xf32> to vector<1x1x128xf32>
      tpu.vector_store %arg7[%c0_729, %c0_730, %c0_731], %568 {strides = array<i32>} : memref<1x1x128xf32, #tpu.memory_space<vmem>>, vector<1x1x128xf32>,
    } else {
    }
    return
  }
  func.func @transform_0(%arg0: i32, %arg1: i32) -> (i32, i32, i32, i32, i32) {
    %c0_i32 = arith.constant 0 : i32
    %c0_i32_0 = arith.constant 0 : i32
    %c0_i32_1 = arith.constant 0 : i32
    %c0_i32_2 = arith.constant 0 : i32
    return %arg0, %arg1, %c0_i32, %c0_i32_0, %c0_i32_1 : i32, i32, i32, i32, i32
  }
  func.func @transform_1(%arg0: i32, %arg1: i32) -> (i32, i32, i32) {
    %c0_i32 = arith.constant 0 : i32
    %c0_i32_0 = arith.constant 0 : i32
    %c0_i32_1 = arith.constant 0 : i32
    %c0_i32_2 = arith.constant 0 : i32
    return %c0_i32, %c0_i32_0, %c0_i32_1 : i32, i32, i32
  }
  func.func @transform_2(%arg0: i32, %arg1: i32) -> (i32, i32) {
    %c0_i32 = arith.constant 0 : i32
    %c0_i32_0 = arith.constant 0 : i32
    %c0_i32_1 = arith.constant 0 : i32
    return %c0_i32, %c0_i32_0 : i32, i32
  }
  func.func @transform_3(%arg0: i32, %arg1: i32) -> (i32, i32) {
    %c0_i32 = arith.constant 0 : i32
    %c0_i32_0 = arith.constant 0 : i32
    %c0_i32_1 = arith.constant 0 : i32
    return %c0_i32, %c0_i32_0 : i32, i32
  }
  func.func @transform_4(%arg0: i32, %arg1: i32) -> (i32, i32) {
    %c0_i32 = arith.constant 0 : i32
    %c0_i32_0 = arith.constant 0 : i32
    %c0_i32_1 = arith.constant 0 : i32
    return %c0_i32, %c0_i32_0 : i32, i32
  }
  func.func @transform_5(%arg0: i32, %arg1: i32) -> (i32, i32, i32) {
    %c0_i32 = arith.constant 0 : i32
    %c0_i32_0 = arith.constant 0 : i32
    %c0_i32_1 = arith.constant 0 : i32
    return %arg0, %c0_i32, %c0_i32_0 : i32, i32, i32
  }
}

</mosaic_0001>

<llo_original>
// kernel: tpu_custom_call.1
$region0: #{tpu_custom_call.1}
  #allocation0 [shape = 'u32[]', space=smem, size = 0x4, offset = 0x4, fixed_abs, tag = 'smem constant byte address 0x4 - core index']
  #allocation1 [shape = 'u32[144,128]{1,0:T(1,128)}', space=vmem, size = 0x12000, scoped, tag = 'internal scratch']
  #allocation2 [shape = 'f32[1,128]{1,0:T(1,128)}', space=vmem, size = 0x200, scoped, tag = 'scratch operand']
  %s0 = inlined_call_operand.vmem [shape: bf16[2,2,10,18,8], index: 0, kind: input, shape index: {}]
  %s1 = inlined_call_operand.vmem [shape: bf16[9,8,128], index: 1, kind: input, shape index: {}]
  %s2 = inlined_call_operand.vmem [shape: f32[1,128], index: 2, kind: input, shape index: {}]
  %s3 = inlined_call_operand.vmem [shape: f32[128,128], index: 3, kind: input, shape index: {}]
  %s4 = inlined_call_operand.vmem [shape: f32[1,128], index: 4, kind: input, shape index: {}]
  %s5 = inlined_call_operand.hbm [shape: f32[2,1,128], index: 5, kind: output, shape index: {}]
  %s6 = sld [smem:[#allocation0]]
  $region61: #{tpu_custom_call.1} parent=0
    _
  %s8 = ssub.s32 1, %s6
  %s9 = scalar_select 0, %s8, %s6
  $region1: #{tpu_custom_call.1} parent=0
    #allocation3 [shape = 'u8[1024]{0}', space=vmem, size = 0x400, scoped, tag = 'output window, operand 0']
    #allocation4 [shape = 's32[2]{0}', space=sflag, size = 0x8, scoped, tag = 'scoped memory for tpu_custom_call.1']
    %10 = vsyncpa [#allocation4], 0
    %s11 = scalar_lea.sflag [#allocation4], 1
    %12 = vsyncpa %s11, 0
    loop: start=0, step=1, limit=6
    $region2: #{tpu_custom_call.1} parent=1 // loop_pre_header
      _
    $region3: #{tpu_custom_call.1} parent=1 // loop_header
      %s14 = sphi 0, %s18
      %p15 = scmp.ge.s32.totalorder %s14, 6
      %s21 = sphi 0, %s33
      %s22 = sphi 0, %s29
      %s23 = sphi 0, %s21
      %s24 = sphi 0, %s22
      %s25 = sphi 0, %s23
      %s26 = sphi 0, %s24
      %s38 = sphi 0, %s40
      %s41 = sphi 0, %s38
      %s42 = sphi 0, %s41
      %s58 = sphi 0, %s42
      %s62 = sphi 0, %s62
      %s64 = sphi 0, %s62
      %s65 = sphi 0, %s64
      %s79 = sphi 0, %s65
      %s83 = sphi 0, %s83
      %s85 = sphi 0, %s83
      %s86 = sphi 0, %s85
      %s100 = sphi 0, %s86
      %s104 = sphi 0, %s104
      %s106 = sphi 0, %s104
      %s107 = sphi 0, %s106
      %s121 = sphi 0, %s107
      %s125 = sphi 0, %s125
      %s127 = sphi 0, %s125
      %s128 = sphi 0, %s127
      %s142 = sphi 0, %s128
      %s148 = sphi 0, %s150
      %s151 = sphi 0, %s148
      %s152 = sphi 0, %s151
      %s168 = sphi 0, %s152
    $region4: #{tpu_custom_call.1} parent=1 // loop_header_branch
      %17 = sbr.rel (%p15) target = $region8
    $region5: #{tpu_custom_call.1} parent=1 // loop_body
      %s19 = ssub.s32 %s14, 1
      %s20 = ssub.s32 %s14, 2
      %s27 = sadd.s32 1, %s22
      %p28 = scmp.ge.s32.totalorder %s27, 2
      %s29 = scalar_select %p28, 0, %s27
      %s30 = sadd.s32 1, %s21
      %s31 = scalar_select %p28, %s30, %s21
      %p32 = scmp.ge.s32.totalorder %s31, 2
      %s33 = scalar_select %p32, 0, %s31
      %s34 = ssub.s32 %s21, %s33
      %s35 = ssub.s32 %s22, %s29
      %s36 = sor.u32 %s34, %s35
      %p37 = scmp.eq.s32.totalorder %s36, 0
      %s39 = sadd.s32 %s38, 1
      %s40 = scalar_select %p37, %s38, %s39
      %p43 = pneg %p37
      %p44 = scmp.eq.s32.totalorder %s14, 3
      %p45 = por %p43, %p44
      %p46 = scmp.ne.s32.totalorder %s38, %s41
      %p47 = scmp.eq.s32.totalorder %s14, 0
      %p48 = por %p46, %p47
      %p49 = scmp.ne.s32.totalorder %s38, %s41
      %p50 = scmp.eq.s32.totalorder %s19, 3
      %p51 = por %p49, %p50
      %p52 = scmp.ne.s32.totalorder %s41, %s42
      %p53 = scmp.eq.s32.totalorder %s19, 0
      %p54 = por %p52, %p53
      %p55 = scmp.ne.s32.totalorder %s41, %s42
      %p56 = scmp.eq.s32.totalorder %s20, 3
      %p57 = por %p55, %p56
      %p59 = scmp.ne.s32.totalorder %s42, %s58
      %p60 = scmp.eq.s32.totalorder %s20, 0
      %p61 = por %p59, %p60
      %s63 = sadd.s32 %s62, 1
      %p66 = scmp.eq.s32.totalorder %s14, 3
      %p67 = scmp.ne.s32.totalorder %s62, %s64
      %p68 = scmp.eq.s32.totalorder %s14, 0
      %p69 = por %p67, %p68
      %p70 = scmp.ne.s32.totalorder %s62, %s64
      %p71 = scmp.eq.s32.totalorder %s19, 3
      %p72 = por %p70, %p71
      %p73 = scmp.ne.s32.totalorder %s64, %s65
      %p74 = scmp.eq.s32.totalorder %s19, 0
      %p75 = por %p73, %p74
      %p76 = scmp.ne.s32.totalorder %s64, %s65
      %p77 = scmp.eq.s32.totalorder %s20, 3
      %p78 = por %p76, %p77
      %p80 = scmp.ne.s32.totalorder %s65, %s79
      %p81 = scmp.eq.s32.totalorder %s20, 0
      %p82 = por %p80, %p81
      %s84 = sadd.s32 %s83, 1
      %p87 = scmp.eq.s32.totalorder %s14, 3
      %p88 = scmp.ne.s32.totalorder %s83, %s85
      %p89 = scmp.eq.s32.totalorder %s14, 0
      %p90 = por %p88, %p89
      %p91 = scmp.ne.s32.totalorder %s83, %s85
      %p92 = scmp.eq.s32.totalorder %s19, 3
      %p93 = por %p91, %p92
      %p94 = scmp.ne.s32.totalorder %s85, %s86
      %p95 = scmp.eq.s32.totalorder %s19, 0
      %p96 = por %p94, %p95
      %p97 = scmp.ne.s32.totalorder %s85, %s86
      %p98 = scmp.eq.s32.totalorder %s20, 3
      %p99 = por %p97, %p98
      %p101 = scmp.ne.s32.totalorder %s86, %s100
      %p102 = scmp.eq.s32.totalorder %s20, 0
      %p103 = por %p101, %p102
      %s105 = sadd.s32 %s104, 1
      %p108 = scmp.eq.s32.totalorder %s14, 3
      %p109 = scmp.ne.s32.totalorder %s104, %s106
      %p110 = scmp.eq.s32.totalorder %s14, 0
      %p111 = por %p109, %p110
      %p112 = scmp.ne.s32.totalorder %s104, %s106
      %p113 = scmp.eq.s32.totalorder %s19, 3
      %p114 = por %p112, %p113
      %p115 = scmp.ne.s32.totalorder %s106, %s107
      %p116 = scmp.eq.s32.totalorder %s19, 0
      %p117 = por %p115, %p116
      %p118 = scmp.ne.s32.totalorder %s106, %s107
      %p119 = scmp.eq.s32.totalorder %s20, 3
      %p120 = por %p118, %p119
      %p122 = scmp.ne.s32.totalorder %s107, %s121
      %p123 = scmp.eq.s32.totalorder %s20, 0
      %p124 = por %p122, %p123
      %s126 = sadd.s32 %s125, 1
      %p129 = scmp.eq.s32.totalorder %s14, 3
      %p130 = scmp.ne.s32.totalorder %s125, %s127
      %p131 = scmp.eq.s32.totalorder %s14, 0
      %p132 = por %p130, %p131
      %p133 = scmp.ne.s32.totalorder %s125, %s127
      %p134 = scmp.eq.s32.totalorder %s19, 3
      %p135 = por %p133, %p134
      %p136 = scmp.ne.s32.totalorder %s127, %s128
      %p137 = scmp.eq.s32.totalorder %s19, 0
      %p138 = por %p136, %p137
      %p139 = scmp.ne.s32.totalorder %s127, %s128
      %p140 = scmp.eq.s32.totalorder %s20, 3
      %p141 = por %p139, %p140
      %p143 = scmp.ne.s32.totalorder %s128, %s142
      %p144 = scmp.eq.s32.totalorder %s20, 0
      %p145 = por %p143, %p144
      %s146 = ssub.s32 %s21, %s33
      %p147 = scmp.eq.s32.totalorder %s146, 0
      %s149 = sadd.s32 %s148, 1
      %s150 = scalar_select %p147, %s148, %s149
      %p153 = pneg %p147
      %p154 = scmp.eq.s32.totalorder %s14, 3
      %p155 = por %p153, %p154
      %p156 = scmp.ne.s32.totalorder %s148, %s151
      %p157 = scmp.eq.s32.totalorder %s14, 0
      %p158 = por %p156, %p157
      %p159 = scmp.ne.s32.totalorder %s148, %s151
      %p160 = scmp.eq.s32.totalorder %s19, 3
      %p161 = por %p159, %p160
      %p162 = scmp.ne.s32.totalorder %s151, %s152
      %p163 = scmp.eq.s32.totalorder %s19, 0
      %p164 = por %p162, %p163
      %p165 = scmp.ne.s32.totalorder %s151, %s152
      %p166 = scmp.eq.s32.totalorder %s20, 3
      %p167 = por %p165, %p166
      %p169 = scmp.ne.s32.totalorder %s152, %s168
      %p170 = scmp.eq.s32.totalorder %s20, 0
      %p171 = por %p169, %p170
      %p172 = scmp.le.s32.totalorder 1, %s14
      %p173 = scmp.lt.s32.totalorder %s14, 5
      %p174 = pnand %p172, %p173
      %p175 = pneg %p174
      // Predicated region
      $region9: #{tpu_custom_call.1} parent=5 // pred_check
        _
      $region10: #{tpu_custom_call.1} parent=5 // pred_check_branch
        %177 = sbr.rel (%p174) target = $region12
      $region11: #{tpu_custom_call.1} parent=5 // pred_region
        %s178 = ssub.s32 %s14, 1
        // Predicated region
        $region13: #{tpu_custom_call.1} parent=11 // pred_check
          %p179 = pneg %p75
        $region14: #{tpu_custom_call.1} parent=11 // pred_check_branch
          %181 = sbr.rel (%p179) target = $region16
        $region15: #{tpu_custom_call.1} parent=11 // pred_region
          _
        $region16: #{tpu_custom_call.1} parent=11 // pred_fallthru
          _
        // Predicated region
        $region17: #{tpu_custom_call.1} parent=11 // pred_check
          %p182 = pneg %p96
        $region18: #{tpu_custom_call.1} parent=11 // pred_check_branch
          %184 = sbr.rel (%p182) target = $region20
        $region19: #{tpu_custom_call.1} parent=11 // pred_region
          _
        $region20: #{tpu_custom_call.1} parent=11 // pred_fallthru
          _
        // Predicated region
        $region21: #{tpu_custom_call.1} parent=11 // pred_check
          %p185 = pneg %p117
        $region22: #{tpu_custom_call.1} parent=11 // pred_check_branch
          %187 = sbr.rel (%p185) target = $region24
        $region23: #{tpu_custom_call.1} parent=11 // pred_region
          _
        $region24: #{tpu_custom_call.1} parent=11 // pred_fallthru
          _
        // Predicated region
        $region25: #{tpu_custom_call.1} parent=11 // pred_check
          %p188 = pneg %p138
        $region26: #{tpu_custom_call.1} parent=11 // pred_check_branch
          %190 = sbr.rel (%p188) target = $region28
        $region27: #{tpu_custom_call.1} parent=11 // pred_region
          _
        $region28: #{tpu_custom_call.1} parent=11 // pred_fallthru
          _
      $region12: #{tpu_custom_call.1} parent=5 // pred_fallthru
        _
      %p191 = scmp.lt.s32.totalorder %s14, 4
      // Predicated region
      $region29: #{tpu_custom_call.1} parent=5 // pred_check
        %p192 = pneg %p191
      $region30: #{tpu_custom_call.1} parent=5 // pred_check_branch
        %194 = sbr.rel (%p192) target = $region32
      $region31: #{tpu_custom_call.1} parent=5 // pred_region
        // Predicated region
        $region33: #{tpu_custom_call.1} parent=31 // pred_check
          %p195 = pneg %p48
        $region34: #{tpu_custom_call.1} parent=31 // pred_check_branch
          %197 = sbr.rel (%p195) target = $region36
        $region35: #{tpu_custom_call.1} parent=31 // pred_region
          %p198 = scmp.lt.s32.totalorder %s21, 1
          %s199 = scalar_select %p198, %s21, 1
          %p200 = scmp.lt.s32.totalorder %s22, 1
          %s201 = scalar_select %p200, %s22, 1
          %s202 = smul.addr %s201, 30
          %s203 = smul.addr %s199, 60
          %s204 = sadd.s32 %s202, %s203
          %s205 = smul.addr %s204, 4
          %s206 = scalar_lea.vmem %s0, %s205
        $region36: #{tpu_custom_call.1} parent=31 // pred_fallthru
          _
      $region32: #{tpu_custom_call.1} parent=5 // pred_fallthru
        _
      %p207 = scmp.le.s32.totalorder 1, %s14
      %p208 = scmp.lt.s32.totalorder %s14, 5
      %p209 = pnand %p207, %p208
      %p210 = pneg %p209
      // Predicated region
      $region37: #{tpu_custom_call.1} parent=5 // pred_check
        _
      $region38: #{tpu_custom_call.1} parent=5 // pred_check_branch
        %212 = sbr.rel (%p209) target = $region40
      $region39: #{tpu_custom_call.1} parent=5 // pred_region
        %s213 = ssub.s32 %s14, 1
        %p214 = scmp.lt.s32.totalorder %s23, 1
        %s215 = scalar_select %p214, %s23, 1
        %p216 = scmp.lt.s32.totalorder %s24, 1
        %s217 = scalar_select %p216, %s24, 1
        %s218 = smul.addr %s217, 30
        %s219 = smul.addr %s215, 60
        %s220 = sadd.s32 %s218, %s219
        %s221 = smul.addr %s220, 4
        %s222 = scalar_lea.vmem %s0, %s221
        %p223 = pneg %p54
        %p224 = pneg %p51
        %p225 = pneg %p75
        %p226 = pneg %p72
        %p227 = pneg %p96
        %p228 = pneg %p93
        %p229 = pneg %p117
        %p230 = pneg %p114
        %p231 = pneg %p138
        %p232 = pneg %p135
        %p233 = pneg %p164
        %p234 = pneg %p161
        %s235 = sand.u32 %s151, 1
        %s236 = scalar_lea.sflag [#allocation4], %s235
        %s237 = sand.u32 %s151, 1
        %s238 = scalar_lea.vmem [#allocation3], %s237
        %p239 = scmp.lt.s32.totalorder %s23, 1
        %s240 = scalar_select %p239, %s23, 1
        %p241 = scmp.lt.s32.totalorder %s24, 1
        %s242 = scalar_select %p241, %s24, 1
        %s243 = smul.addr %s242, 30
        %s244 = smul.addr %s240, 60
        %s245 = sadd.s32 %s243, %s244
        %s246 = smul.addr %s245, 4
        %s247 = scalar_lea.vmem %s0, %s246
        %p249 = scmp.eq.s32.totalorder %s24, 0
        // Predicated region
        $region41: #{tpu_custom_call.1} parent=39 // pred_check
          %p250 = pneg %p249
        $region42: #{tpu_custom_call.1} parent=39 // pred_check_branch
          %252 = sbr.rel (%p250) target = $region44
        $region43: #{tpu_custom_call.1} parent=39 // pred_region
          %253 = vst [vmem:[#allocation2] sm:$0x1] 0.0
        $region44: #{tpu_custom_call.1} parent=39 // pred_fallthru
          _
        %v254 = vld [vmem:[%s2] sm:$0x1]
        %v255 = vld [vmem:[%s247] sm:$0xf]
        %v256 = vld [vmem:[%s247 + $0x4] sm:$0xf]
        %v257 = vld [vmem:[%s1] sm:$0xf]
        %v258 = vld [vmem:[%s247 + $0x8] sm:$0x1]
        %s259 = scalar_lea.vmem %s1, 4
        %v260 = vld [vmem:[%s259] sm:$0xf]
        %v264 = vunpack.c.l.b16 %v255
        %v265 = vunpack.c.l.b16 %v256
        %v266 = vunpack.c.l.b16 %v258
        %v267 = vpack.c.b16 %v265, %v264
        %v268 = vpack.c.b16 %v266, %v266
        %vm269 = vsmask.f32 7424
        %v271 = vshrl.u32 %v267, 16
        %v273 = vshll.u32 %v267, 16
        %v275 = vrot.slane %v273, 1
        %v276 = vor.u32 %v271, %v275
        %v278 = vshll.u32 %v268, 16
        %v280 = vrot.slane %v278, 1
        %v281 = vsel %vm269, %v276, %v280
        %vm282 = vcmask 64512
        %v284 = vsel %vm282, %v281, 0
        %vm286 = vcmask 1043456
        %v288 = vsel %vm286, %v260, 0
        %290 = vmatprep.subr.bf16.mxu0 0
        %291 = vmatpush1.bf16.msra.mxu0 0
        %292 = vmatprep.subr.bf16.mxu0 0
        %293 = vmatpush1.bf16.msra.mxu0 0
        %294 = vmatprep.subr.bf16.mxu0 0
        %295 = vmatpush1.bf16.msra.mxu0 0
        %296 = vmatprep.subr.bf16.mxu0 0
        %297 = vmatpush1.bf16.msra.mxu0 0
        %298 = vmatprep.subr.bf16.mxu0 0
        %299 = vmatpush1.bf16.msra.mxu0 0
        %300 = vmatprep.subr.bf16.mxu0 0
        %301 = vmatpush1.bf16.msra.mxu0 0
        %302 = vmatprep.subr.bf16.mxu0 0
        %303 = vmatpush1.bf16.msra.mxu0 0
        %304 = vmatprep.subr.bf16.mxu0 0
        %305 = vmatpush1.bf16.msra.mxu0 %v288
        %306 = vmatprep.subr.bf16.mxu0 0
        %307 = vmatpush2.bf16.msra.mxu0 0
        %308 = vmatprep.subr.bf16.mxu0 0
        %309 = vmatpush2.bf16.msra.mxu0 0
        %310 = vmatprep.subr.bf16.mxu0 0
        %311 = vmatpush2.bf16.msra.mxu0 0
        %312 = vmatprep.subr.bf16.mxu0 0
        %313 = vmatpush2.bf16.msra.mxu0 0
        %314 = vmatprep.subr.bf16.mxu0 0
        %315 = vmatpush2.bf16.msra.mxu0 0
        %316 = vmatprep.subr.bf16.mxu0 0
        %317 = vmatpush2.bf16.msra.mxu0 0
        %318 = vmatprep.subr.bf16.mxu0 0
        %319 = vmatpush2.bf16.msra.mxu0 0
        %320 = vmatprep.subr.bf16.mxu0 0
        %321 = vmatpush2.bf16.msra.mxu0 0
        %322 = vmatprep.mubr.bf16.mxu0 0
        %323 = vmatmul.mubr.bf16.gmra.mxu0 %v284
        %v324 = vpop.f32.mrf.mxu0
        %v325 = vadd.f32 0.0, %v324
        %v326 = vpop.f32.mrf.mxu0
        %v327 = vpop.f32.mrf.mxu0
        %v328 = vadd.f32 0.0, %v327
        %v329 = vpop.f32.mrf.mxu0
        %330 = vdwg.mxu0
        %v331 = vsel %vm282, %v267, 0
        %v334 = vsel %vm286, %v257, 0
        %336 = vmatprep.subr.bf16.mxu0 0
        %337 = vmatpush1.bf16.msra.mxu0 0
        %338 = vmatprep.subr.bf16.mxu0 0
        %339 = vmatpush1.bf16.msra.mxu0 0
        %340 = vmatprep.subr.bf16.mxu0 0
        %341 = vmatpush1.bf16.msra.mxu0 0
        %342 = vmatprep.subr.bf16.mxu0 0
        %343 = vmatpush1.bf16.msra.mxu0 0
        %344 = vmatprep.subr.bf16.mxu0 0
        %345 = vmatpush1.bf16.msra.mxu0 0
        %346 = vmatprep.subr.bf16.mxu0 0
        %347 = vmatpush1.bf16.msra.mxu0 0
        %348 = vmatprep.subr.bf16.mxu0 0
        %349 = vmatpush1.bf16.msra.mxu0 0
        %350 = vmatprep.subr.bf16.mxu0 0
        %351 = vmatpush1.bf16.msra.mxu0 %v334
        %352 = vmatprep.subr.bf16.mxu0 0
        %353 = vmatpush2.bf16.msra.mxu0 0
        %354 = vmatprep.subr.bf16.mxu0 0
        %355 = vmatpush2.bf16.msra.mxu0 0
        %356 = vmatprep.subr.bf16.mxu0 0
        %357 = vmatpush2.bf16.msra.mxu0 0
        %358 = vmatprep.subr.bf16.mxu0 0
        %359 = vmatpush2.bf16.msra.mxu0 0
        %360 = vmatprep.subr.bf16.mxu0 0
        %361 = vmatpush2.bf16.msra.mxu0 0
        %362 = vmatprep.subr.bf16.mxu0 0
        %363 = vmatpush2.bf16.msra.mxu0 0
        %364 = vmatprep.subr.bf16.mxu0 0
        %365 = vmatpush2.bf16.msra.mxu0 0
        %366 = vmatprep.subr.bf16.mxu0 0
        %367 = vmatpush2.bf16.msra.mxu0 0
        %368 = vmatprep.mubr.bf16.mxu0 0
        %369 = vmatmul.mubr.bf16.gmra.mxu0 %v331
        %v370 = vpop.f32.mrf.mxu0
        %v371 = vadd.f32 %v325, %v370
        %v372 = vpop.f32.mrf.mxu0
        %v373 = vpop.f32.mrf.mxu0
        %v374 = vadd.f32 %v328, %v373
        %v375 = vpop.f32.mrf.mxu0
        %376 = vdwg.mxu0
        %v377 = vld [vmem:[%s247] sm:$0xe]
        %s378 = scalar_lea.vmem %s1, 8
        %v379 = vld [vmem:[%s378] sm:$0xf]
        %v381 = vunpack.c.l.b16 %v377
        %v382 = vpack.c.b16 %v265, %v381
        %vm383 = vcmask 1046528
        %v384 = vrot.slane %v382, 1
        %v385 = vrot.slane %v268, 1
        %v386 = vsel %vm383, %v384, %v385
        %v388 = vsel %vm282, %v386, 0
        %v391 = vsel %vm286, %v379, 0
        %393 = vmatprep.subr.bf16.mxu0 0
        %394 = vmatpush1.bf16.msra.mxu0 0
        %395 = vmatprep.subr.bf16.mxu0 0
        %396 = vmatpush1.bf16.msra.mxu0 0
        %397 = vmatprep.subr.bf16.mxu0 0
        %398 = vmatpush1.bf16.msra.mxu0 0
        %399 = vmatprep.subr.bf16.mxu0 0
        %400 = vmatpush1.bf16.msra.mxu0 0
        %401 = vmatprep.subr.bf16.mxu0 0
        %402 = vmatpush1.bf16.msra.mxu0 0
        %403 = vmatprep.subr.bf16.mxu0 0
        %404 = vmatpush1.bf16.msra.mxu0 0
        %405 = vmatprep.subr.bf16.mxu0 0
        %406 = vmatpush1.bf16.msra.mxu0 0
        %407 = vmatprep.subr.bf16.mxu0 0
        %408 = vmatpush1.bf16.msra.mxu0 %v391
        %409 = vmatprep.subr.bf16.mxu0 0
        %410 = vmatpush2.bf16.msra.mxu0 0
        %411 = vmatprep.subr.bf16.mxu0 0
        %412 = vmatpush2.bf16.msra.mxu0 0
        %413 = vmatprep.subr.bf16.mxu0 0
        %414 = vmatpush2.bf16.msra.mxu0 0
        %415 = vmatprep.subr.bf16.mxu0 0
        %416 = vmatpush2.bf16.msra.mxu0 0
        %417 = vmatprep.subr.bf16.mxu0 0
        %418 = vmatpush2.bf16.msra.mxu0 0
        %419 = vmatprep.subr.bf16.mxu0 0
        %420 = vmatpush2.bf16.msra.mxu0 0
        %421 = vmatprep.subr.bf16.mxu0 0
        %422 = vmatpush2.bf16.msra.mxu0 0
        %423 = vmatprep.subr.bf16.mxu0 0
        %424 = vmatpush2.bf16.msra.mxu0 0
        %425 = vmatprep.mubr.bf16.mxu0 0
        %426 = vmatmul.mubr.bf16.gmra.mxu0 %v388
        %v427 = vpop.f32.mrf.mxu0
        %v428 = vadd.f32 0.0, %v427
        %v429 = vpop.f32.mrf.mxu0
        %v430 = vpop.f32.mrf.mxu0
        %v431 = vadd.f32 0.0, %v430
        %v432 = vpop.f32.mrf.mxu0
        %433 = vdwg.mxu0
        %v434 = vadd.f32 %v371, %v428
        %v435 = vadd.f32 %v374, %v431
        %s436 = scalar_lea.vmem %s247, 12
        %v437 = vld [vmem:[%s436] sm:$0xf]
        %v438 = vld [vmem:[%s436 + $0x4] sm:$0xf]
        %s439 = scalar_lea.vmem %s1, 12
        %v440 = vld [vmem:[%s439] sm:$0xf]
        %v443 = vunpack.c.l.b16 %v437
        %v444 = vunpack.c.l.b16 %v438
        %v445 = vpack.c.b16 %v444, %v443
        %v447 = vsel %vm282, %v445, 0
        %v450 = vsel %vm286, %v440, 0
        %452 = vmatprep.subr.bf16.mxu0 0
        %453 = vmatpush1.bf16.msra.mxu0 0
        %454 = vmatprep.subr.bf16.mxu0 0
        %455 = vmatpush1.bf16.msra.mxu0 0
        %456 = vmatprep.subr.bf16.mxu0 0
        %457 = vmatpush1.bf16.msra.mxu0 0
        %458 = vmatprep.subr.bf16.mxu0 0
        %459 = vmatpush1.bf16.msra.mxu0 0
        %460 = vmatprep.subr.bf16.mxu0 0
        %461 = vmatpush1.bf16.msra.mxu0 0
        %462 = vmatprep.subr.bf16.mxu0 0
        %463 = vmatpush1.bf16.msra.mxu0 0
        %464 = vmatprep.subr.bf16.mxu0 0
        %465 = vmatpush1.bf16.msra.mxu0 0
        %466 = vmatprep.subr.bf16.mxu0 0
        %467 = vmatpush1.bf16.msra.mxu0 %v450
        %468 = vmatprep.subr.bf16.mxu0 0
        %469 = vmatpush2.bf16.msra.mxu0 0
        %470 = vmatprep.subr.bf16.mxu0 0
        %471 = vmatpush2.bf16.msra.mxu0 0
        %472 = vmatprep.subr.bf16.mxu0 0
        %473 = vmatpush2.bf16.msra.mxu0 0
        %474 = vmatprep.subr.bf16.mxu0 0
        %475 = vmatpush2.bf16.msra.mxu0 0
        %476 = vmatprep.subr.bf16.mxu0 0
        %477 = vmatpush2.bf16.msra.mxu0 0
        %478 = vmatprep.subr.bf16.mxu0 0
        %479 = vmatpush2.bf16.msra.mxu0 0
        %480 = vmatprep.subr.bf16.mxu0 0
        %481 = vmatpush2.bf16.msra.mxu0 0
        %482 = vmatprep.subr.bf16.mxu0 0
        %483 = vmatpush2.bf16.msra.mxu0 0
        %484 = vmatprep.mubr.bf16.mxu0 0
        %485 = vmatmul.mubr.bf16.gmra.mxu0 %v447
        %v486 = vpop.f32.mrf.mxu0
        %v487 = vadd.f32 0.0, %v486
        %v488 = vpop.f32.mrf.mxu0
        %v489 = vpop.f32.mrf.mxu0
        %v490 = vadd.f32 0.0, %v489
        %v491 = vpop.f32.mrf.mxu0
        %492 = vdwg.mxu0
        %v493 = vadd.f32 %v434, %v487
        %v494 = vadd.f32 %v435, %v490
        %v495 = vld [vmem:[%s436] sm:$0xf]
        %v496 = vld [vmem:[%s436 + $0x4] sm:$0xf]
        %v497 = vld [vmem:[%s436 + $0x8] sm:$0x1]
        %s498 = scalar_lea.vmem %s1, 16
        %v499 = vld [vmem:[%s498] sm:$0xf]
        %v503 = vunpack.c.l.b16 %v495
        %v504 = vunpack.c.l.b16 %v496
        %v505 = vunpack.c.l.b16 %v497
        %v506 = vpack.c.b16 %v504, %v503
        %v507 = vpack.c.b16 %v505, %v505
        %v509 = vshrl.u32 %v506, 16
        %v511 = vshll.u32 %v506, 16
        %v513 = vrot.slane %v511, 1
        %v514 = vor.u32 %v509, %v513
        %v516 = vshll.u32 %v507, 16
        %v518 = vrot.slane %v516, 1
        %v519 = vsel %vm269, %v514, %v518
        %v521 = vsel %vm282, %v519, 0
        %v524 = vsel %vm286, %v499, 0
        %526 = vmatprep.subr.bf16.mxu0 0
        %527 = vmatpush1.bf16.msra.mxu0 0
        %528 = vmatprep.subr.bf16.mxu0 0
        %529 = vmatpush1.bf16.msra.mxu0 0
        %530 = vmatprep.subr.bf16.mxu0 0
        %531 = vmatpush1.bf16.msra.mxu0 0
        %532 = vmatprep.subr.bf16.mxu0 0
        %533 = vmatpush1.bf16.msra.mxu0 0
        %534 = vmatprep.subr.bf16.mxu0 0
        %535 = vmatpush1.bf16.msra.mxu0 0
        %536 = vmatprep.subr.bf16.mxu0 0
        %537 = vmatpush1.bf16.msra.mxu0 0
        %538 = vmatprep.subr.bf16.mxu0 0
        %539 = vmatpush1.bf16.msra.mxu0 0
        %540 = vmatprep.subr.bf16.mxu0 0
        %541 = vmatpush1.bf16.msra.mxu0 %v524
        %542 = vmatprep.subr.bf16.mxu0 0
        %543 = vmatpush2.bf16.msra.mxu0 0
        %544 = vmatprep.subr.bf16.mxu0 0
        %545 = vmatpush2.bf16.msra.mxu0 0
        %546 = vmatprep.subr.bf16.mxu0 0
        %547 = vmatpush2.bf16.msra.mxu0 0
        %548 = vmatprep.subr.bf16.mxu0 0
        %549 = vmatpush2.bf16.msra.mxu0 0
        %550 = vmatprep.subr.bf16.mxu0 0
        %551 = vmatpush2.bf16.msra.mxu0 0
        %552 = vmatprep.subr.bf16.mxu0 0
        %553 = vmatpush2.bf16.msra.mxu0 0
        %554 = vmatprep.subr.bf16.mxu0 0
        %555 = vmatpush2.bf16.msra.mxu0 0
        %556 = vmatprep.subr.bf16.mxu0 0
        %557 = vmatpush2.bf16.msra.mxu0 0
        %558 = vmatprep.mubr.bf16.mxu0 0
        %559 = vmatmul.mubr.bf16.gmra.mxu0 %v521
        %v560 = vpop.f32.mrf.mxu0
        %v561 = vadd.f32 0.0, %v560
        %v562 = vpop.f32.mrf.mxu0
        %v563 = vpop.f32.mrf.mxu0
        %v564 = vadd.f32 0.0, %v563
        %v565 = vpop.f32.mrf.mxu0
        %566 = vdwg.mxu0
        %v567 = vadd.f32 %v493, %v561
        %v568 = vadd.f32 %v494, %v564
        %v569 = vld [vmem:[%s436] sm:$0xe]
        %s570 = scalar_lea.vmem %s1, 20
        %v571 = vld [vmem:[%s570] sm:$0xf]
        %v573 = vunpack.c.l.b16 %v569
        %v574 = vpack.c.b16 %v504, %v573
        %v575 = vrot.slane %v574, 1
        %v576 = vrot.slane %v507, 1
        %v577 = vsel %vm383, %v575, %v576
        %v579 = vsel %vm282, %v577, 0
        %v582 = vsel %vm286, %v571, 0
        %584 = vmatprep.subr.bf16.mxu0 0
        %585 = vmatpush1.bf16.msra.mxu0 0
        %586 = vmatprep.subr.bf16.mxu0 0
        %587 = vmatpush1.bf16.msra.mxu0 0
        %588 = vmatprep.subr.bf16.mxu0 0
        %589 = vmatpush1.bf16.msra.mxu0 0
        %590 = vmatprep.subr.bf16.mxu0 0
        %591 = vmatpush1.bf16.msra.mxu0 0
        %592 = vmatprep.subr.bf16.mxu0 0
        %593 = vmatpush1.bf16.msra.mxu0 0
        %594 = vmatprep.subr.bf16.mxu0 0
        %595 = vmatpush1.bf16.msra.mxu0 0
        %596 = vmatprep.subr.bf16.mxu0 0
        %597 = vmatpush1.bf16.msra.mxu0 0
        %598 = vmatprep.subr.bf16.mxu0 0
        %599 = vmatpush1.bf16.msra.mxu0 %v582
        %600 = vmatprep.subr.bf16.mxu0 0
        %601 = vmatpush2.bf16.msra.mxu0 0
        %602 = vmatprep.subr.bf16.mxu0 0
        %603 = vmatpush2.bf16.msra.mxu0 0
        %604 = vmatprep.subr.bf16.mxu0 0
        %605 = vmatpush2.bf16.msra.mxu0 0
        %606 = vmatprep.subr.bf16.mxu0 0
        %607 = vmatpush2.bf16.msra.mxu0 0
        %608 = vmatprep.subr.bf16.mxu0 0
        %609 = vmatpush2.bf16.msra.mxu0 0
        %610 = vmatprep.subr.bf16.mxu0 0
        %611 = vmatpush2.bf16.msra.mxu0 0
        %612 = vmatprep.subr.bf16.mxu0 0
        %613 = vmatpush2.bf16.msra.mxu0 0
        %614 = vmatprep.subr.bf16.mxu0 0
        %615 = vmatpush2.bf16.msra.mxu0 0
        %616 = vmatprep.mubr.bf16.mxu0 0
        %617 = vmatmul.mubr.bf16.gmra.mxu0 %v579
        %v618 = vpop.f32.mrf.mxu0
        %v619 = vadd.f32 0.0, %v618
        %v620 = vpop.f32.mrf.mxu0
        %v621 = vpop.f32.mrf.mxu0
        %v622 = vadd.f32 0.0, %v621
        %v623 = vpop.f32.mrf.mxu0
        %624 = vdwg.mxu0
        %v625 = vadd.f32 %v567, %v619
        %v626 = vadd.f32 %v568, %v622
        %s627 = scalar_lea.vmem %s247, 24
        %v628 = vld [vmem:[%s627] sm:$0xf]
        %v629 = vld [vmem:[%s627 + $0x4] sm:$0xf]
        %s630 = scalar_lea.vmem %s1, 24
        %v631 = vld [vmem:[%s630] sm:$0xf]
        %v634 = vunpack.c.l.b16 %v628
        %v635 = vunpack.c.l.b16 %v629
        %v636 = vpack.c.b16 %v635, %v634
        %v638 = vsel %vm282, %v636, 0
        %v641 = vsel %vm286, %v631, 0
        %643 = vmatprep.subr.bf16.mxu0 0
        %644 = vmatpush1.bf16.msra.mxu0 0
        %645 = vmatprep.subr.bf16.mxu0 0
        %646 = vmatpush1.bf16.msra.mxu0 0
        %647 = vmatprep.subr.bf16.mxu0 0
        %648 = vmatpush1.bf16.msra.mxu0 0
        %649 = vmatprep.subr.bf16.mxu0 0
        %650 = vmatpush1.bf16.msra.mxu0 0
        %651 = vmatprep.subr.bf16.mxu0 0
        %652 = vmatpush1.bf16.msra.mxu0 0
        %653 = vmatprep.subr.bf16.mxu0 0
        %654 = vmatpush1.bf16.msra.mxu0 0
        %655 = vmatprep.subr.bf16.mxu0 0
        %656 = vmatpush1.bf16.msra.mxu0 0
        %657 = vmatprep.subr.bf16.mxu0 0
        %658 = vmatpush1.bf16.msra.mxu0 %v641
        %659 = vmatprep.subr.bf16.mxu0 0
        %660 = vmatpush2.bf16.msra.mxu0 0
        %661 = vmatprep.subr.bf16.mxu0 0
        %662 = vmatpush2.bf16.msra.mxu0 0
        %663 = vmatprep.subr.bf16.mxu0 0
        %664 = vmatpush2.bf16.msra.mxu0 0
        %665 = vmatprep.subr.bf16.mxu0 0
        %666 = vmatpush2.bf16.msra.mxu0 0
        %667 = vmatprep.subr.bf16.mxu0 0
        %668 = vmatpush2.bf16.msra.mxu0 0
        %669 = vmatprep.subr.bf16.mxu0 0
        %670 = vmatpush2.bf16.msra.mxu0 0
        %671 = vmatprep.subr.bf16.mxu0 0
        %672 = vmatpush2.bf16.msra.mxu0 0
        %673 = vmatprep.subr.bf16.mxu0 0
        %674 = vmatpush2.bf16.msra.mxu0 0
        %675 = vmatprep.mubr.bf16.mxu0 0
        %676 = vmatmul.mubr.bf16.gmra.mxu0 %v638
        %v677 = vpop.f32.mrf.mxu0
        %v678 = vadd.f32 0.0, %v677
        %v679 = vpop.f32.mrf.mxu0
        %v680 = vpop.f32.mrf.mxu0
        %v681 = vadd.f32 0.0, %v680
        %v682 = vpop.f32.mrf.mxu0
        %683 = vdwg.mxu0
        %v684 = vadd.f32 %v625, %v678
        %v685 = vadd.f32 %v626, %v681
        %v686 = vld [vmem:[%s627] sm:$0xf]
        %v687 = vld [vmem:[%s627 + $0x4] sm:$0xf]
        %v688 = vld [vmem:[%s627 + $0x8] sm:$0x1]
        %s689 = scalar_lea.vmem %s1, 28
        %v690 = vld [vmem:[%s689] sm:$0xf]
        %v694 = vunpack.c.l.b16 %v686
        %v695 = vunpack.c.l.b16 %v687
        %v696 = vunpack.c.l.b16 %v688
        %v697 = vpack.c.b16 %v695, %v694
        %v698 = vpack.c.b16 %v696, %v696
        %v700 = vshrl.u32 %v697, 16
        %v702 = vshll.u32 %v697, 16
        %v704 = vrot.slane %v702, 1
        %v705 = vor.u32 %v700, %v704
        %v707 = vshll.u32 %v698, 16
        %v709 = vrot.slane %v707, 1
        %v710 = vsel %vm269, %v705, %v709
        %v712 = vsel %vm282, %v710, 0
        %v715 = vsel %vm286, %v690, 0
        %717 = vmatprep.subr.bf16.mxu0 0
        %718 = vmatpush1.bf16.msra.mxu0 0
        %719 = vmatprep.subr.bf16.mxu0 0
        %720 = vmatpush1.bf16.msra.mxu0 0
        %721 = vmatprep.subr.bf16.mxu0 0
        %722 = vmatpush1.bf16.msra.mxu0 0
        %723 = vmatprep.subr.bf16.mxu0 0
        %724 = vmatpush1.bf16.msra.mxu0 0
        %725 = vmatprep.subr.bf16.mxu0 0
        %726 = vmatpush1.bf16.msra.mxu0 0
        %727 = vmatprep.subr.bf16.mxu0 0
        %728 = vmatpush1.bf16.msra.mxu0 0
        %729 = vmatprep.subr.bf16.mxu0 0
        %730 = vmatpush1.bf16.msra.mxu0 0
        %731 = vmatprep.subr.bf16.mxu0 0
        %732 = vmatpush1.bf16.msra.mxu0 %v715
        %733 = vmatprep.subr.bf16.mxu0 0
        %734 = vmatpush2.bf16.msra.mxu0 0
        %735 = vmatprep.subr.bf16.mxu0 0
        %736 = vmatpush2.bf16.msra.mxu0 0
        %737 = vmatprep.subr.bf16.mxu0 0
        %738 = vmatpush2.bf16.msra.mxu0 0
        %739 = vmatprep.subr.bf16.mxu0 0
        %740 = vmatpush2.bf16.msra.mxu0 0
        %741 = vmatprep.subr.bf16.mxu0 0
        %742 = vmatpush2.bf16.msra.mxu0 0
        %743 = vmatprep.subr.bf16.mxu0 0
        %744 = vmatpush2.bf16.msra.mxu0 0
        %745 = vmatprep.subr.bf16.mxu0 0
        %746 = vmatpush2.bf16.msra.mxu0 0
        %747 = vmatprep.subr.bf16.mxu0 0
        %748 = vmatpush2.bf16.msra.mxu0 0
        %749 = vmatprep.mubr.bf16.mxu0 0
        %750 = vmatmul.mubr.bf16.gmra.mxu0 %v712
        %v751 = vpop.f32.mrf.mxu0
        %v752 = vadd.f32 0.0, %v751
        %v753 = vpop.f32.mrf.mxu0
        %v754 = vpop.f32.mrf.mxu0
        %v755 = vadd.f32 0.0, %v754
        %v756 = vpop.f32.mrf.mxu0
        %757 = vdwg.mxu0
        %v758 = vadd.f32 %v684, %v752
        %v759 = vadd.f32 %v685, %v755
        %v760 = vld [vmem:[%s627] sm:$0xe]
        %s761 = scalar_lea.vmem %s1, 32
        %v762 = vld [vmem:[%s761] sm:$0xf]
        %v764 = vunpack.c.l.b16 %v760
        %v765 = vpack.c.b16 %v695, %v764
        %v766 = vrot.slane %v765, 1
        %v767 = vrot.slane %v698, 1
        %v768 = vsel %vm383, %v766, %v767
        %v770 = vsel %vm282, %v768, 0
        %v773 = vsel %vm286, %v762, 0
        %775 = vmatprep.subr.bf16.mxu0 0
        %776 = vmatpush1.bf16.msra.mxu0 0
        %777 = vmatprep.subr.bf16.mxu0 0
        %778 = vmatpush1.bf16.msra.mxu0 0
        %779 = vmatprep.subr.bf16.mxu0 0
        %780 = vmatpush1.bf16.msra.mxu0 0
        %781 = vmatprep.subr.bf16.mxu0 0
        %782 = vmatpush1.bf16.msra.mxu0 0
        %783 = vmatprep.subr.bf16.mxu0 0
        %784 = vmatpush1.bf16.msra.mxu0 0
        %785 = vmatprep.subr.bf16.mxu0 0
        %786 = vmatpush1.bf16.msra.mxu0 0
        %787 = vmatprep.subr.bf16.mxu0 0
        %788 = vmatpush1.bf16.msra.mxu0 0
        %789 = vmatprep.subr.bf16.mxu0 0
        %790 = vmatpush1.bf16.msra.mxu0 %v773
        %791 = vmatprep.subr.bf16.mxu0 0
        %792 = vmatpush2.bf16.msra.mxu0 0
        %793 = vmatprep.subr.bf16.mxu0 0
        %794 = vmatpush2.bf16.msra.mxu0 0
        %795 = vmatprep.subr.bf16.mxu0 0
        %796 = vmatpush2.bf16.msra.mxu0 0
        %797 = vmatprep.subr.bf16.mxu0 0
        %798 = vmatpush2.bf16.msra.mxu0 0
        %799 = vmatprep.subr.bf16.mxu0 0
        %800 = vmatpush2.bf16.msra.mxu0 0
        %801 = vmatprep.subr.bf16.mxu0 0
        %802 = vmatpush2.bf16.msra.mxu0 0
        %803 = vmatprep.subr.bf16.mxu0 0
        %804 = vmatpush2.bf16.msra.mxu0 0
        %805 = vmatprep.subr.bf16.mxu0 0
        %806 = vmatpush2.bf16.msra.mxu0 0
        %807 = vmatprep.mubr.bf16.mxu0 0
        %808 = vmatmul.mubr.bf16.gmra.mxu0 %v770
        %v809 = vpop.f32.mrf.mxu0
        %v810 = vadd.f32 0.0, %v809
        %v811 = vpop.f32.mrf.mxu0
        %v812 = vpop.f32.mrf.mxu0
        %v813 = vadd.f32 0.0, %v812
        %v814 = vpop.f32.mrf.mxu0
        %815 = vdwg.mxu0
        %v816 = vadd.f32 %v758, %v810
        %v817 = vadd.f32 %v759, %v813
        %v819 = vlaneseq
        %v820 = vshrl.u32 %v819, 7
        %v821 = vsub.s32 0, %v820
        %v822 = vrot.slane %v254, %v821
        %v824 = vadd.f32 %v816, %v822
        %v825 = vadd.f32 %v817, %v822
        %v826 = vmax.f32 %v824, 0.0
        %v827 = vmax.f32 %v825, 0.0
        %v828 = vadd.f32 %v826, %v827
        %v829 = vrot.slane %v828, 4
        %v830 = vadd.f32 %v828, %v829
        %v831 = vrot.slane %v830, 2
        %v832 = vadd.f32 %v830, %v831
        %v833 = vrot.slane %v832, 1
        %v834 = vadd.f32 %v832, %v833
        %s835 = smul.u32 %s24, 8
        %p836 = scmp.lt.s32.totalorder %s835, 16
        %v837 = vld [vmem:[#allocation2] sm:$0x1]
        %s838 = scalar_select %p836, 1, 0
        %v839 = vstv %s838
        %vm840 = vcmp.eq.s32.totalorder %v839, 1
        %v841 = vsel %vm840, %v834, 0.0
        %v842 = vadd.f32 %v837, %v841
        %843 = vst [vmem:[#allocation2] sm:$0x1] %v842
        %v844 = vld [vmem:[%s436] sm:$0xf]
        %v845 = vld [vmem:[%s436 + $0x4] sm:$0xf]
        %v846 = vld [vmem:[%s1] sm:$0xf]
        %v847 = vld [vmem:[%s436 + $0x8] sm:$0x1]
        %v848 = vld [vmem:[%s259] sm:$0xf]
        %v852 = vunpack.c.l.b16 %v844
        %v853 = vunpack.c.l.b16 %v845
        %v854 = vunpack.c.l.b16 %v847
        %v855 = vpack.c.b16 %v853, %v852
        %v856 = vpack.c.b16 %v854, %v854
        %v858 = vshrl.u32 %v855, 16
        %v860 = vshll.u32 %v855, 16
        %v862 = vrot.slane %v860, 1
        %v863 = vor.u32 %v858, %v862
        %v865 = vshll.u32 %v856, 16
        %v867 = vrot.slane %v865, 1
        %v868 = vsel %vm269, %v863, %v867
        %v870 = vsel %vm282, %v868, 0
        %v873 = vsel %vm286, %v848, 0
        %875 = vmatprep.subr.bf16.mxu0 0
        %876 = vmatpush1.bf16.msra.mxu0 0
        %877 = vmatprep.subr.bf16.mxu0 0
        %878 = vmatpush1.bf16.msra.mxu0 0
        %879 = vmatprep.subr.bf16.mxu0 0
        %880 = vmatpush1.bf16.msra.mxu0 0
        %881 = vmatprep.subr.bf16.mxu0 0
        %882 = vmatpush1.bf16.msra.mxu0 0
        %883 = vmatprep.subr.bf16.mxu0 0
        %884 = vmatpush1.bf16.msra.mxu0 0
        %885 = vmatprep.subr.bf16.mxu0 0
        %886 = vmatpush1.bf16.msra.mxu0 0
        %887 = vmatprep.subr.bf16.mxu0 0
        %888 = vmatpush1.bf16.msra.mxu0 0
        %889 = vmatprep.subr.bf16.mxu0 0
        %890 = vmatpush1.bf16.msra.mxu0 %v873
        %891 = vmatprep.subr.bf16.mxu0 0
        %892 = vmatpush2.bf16.msra.mxu0 0
        %893 = vmatprep.subr.bf16.mxu0 0
        %894 = vmatpush2.bf16.msra.mxu0 0
        %895 = vmatprep.subr.bf16.mxu0 0
        %896 = vmatpush2.bf16.msra.mxu0 0
        %897 = vmatprep.subr.bf16.mxu0 0
        %898 = vmatpush2.bf16.msra.mxu0 0
        %899 = vmatprep.subr.bf16.mxu0 0
        %900 = vmatpush2.bf16.msra.mxu0 0
        %901 = vmatprep.subr.bf16.mxu0 0
        %902 = vmatpush2.bf16.msra.mxu0 0
        %903 = vmatprep.subr.bf16.mxu0 0
        %904 = vmatpush2.bf16.msra.mxu0 0
        %905 = vmatprep.subr.bf16.mxu0 0
        %906 = vmatpush2.bf16.msra.mxu0 0
        %907 = vmatprep.mubr.bf16.mxu0 0
        %908 = vmatmul.mubr.bf16.gmra.mxu0 %v870
        %v909 = vpop.f32.mrf.mxu0
        %v910 = vadd.f32 0.0, %v909
        %v911 = vpop.f32.mrf.mxu0
        %v912 = vpop.f32.mrf.mxu0
        %v913 = vadd.f32 0.0, %v912
        %v914 = vpop.f32.mrf.mxu0
        %915 = vdwg.mxu0
        %v916 = vsel %vm282, %v855, 0
        %v919 = vsel %vm286, %v846, 0
        %921 = vmatprep.subr.bf16.mxu0 0
        %922 = vmatpush1.bf16.msra.mxu0 0
        %923 = vmatprep.subr.bf16.mxu0 0
        %924 = vmatpush1.bf16.msra.mxu0 0
        %925 = vmatprep.subr.bf16.mxu0 0
        %926 = vmatpush1.bf16.msra.mxu0 0
        %927 = vmatprep.subr.bf16.mxu0 0
        %928 = vmatpush1.bf16.msra.mxu0 0
        %929 = vmatprep.subr.bf16.mxu0 0
        %930 = vmatpush1.bf16.msra.mxu0 0
        %931 = vmatprep.subr.bf16.mxu0 0
        %932 = vmatpush1.bf16.msra.mxu0 0
        %933 = vmatprep.subr.bf16.mxu0 0
        %934 = vmatpush1.bf16.msra.mxu0 0
        %935 = vmatprep.subr.bf16.mxu0 0
        %936 = vmatpush1.bf16.msra.mxu0 %v919
        %937 = vmatprep.subr.bf16.mxu0 0
        %938 = vmatpush2.bf16.msra.mxu0 0
        %939 = vmatprep.subr.bf16.mxu0 0
        %940 = vmatpush2.bf16.msra.mxu0 0
        %941 = vmatprep.subr.bf16.mxu0 0
        %942 = vmatpush2.bf16.msra.mxu0 0
        %943 = vmatprep.subr.bf16.mxu0 0
        %944 = vmatpush2.bf16.msra.mxu0 0
        %945 = vmatprep.subr.bf16.mxu0 0
        %946 = vmatpush2.bf16.msra.mxu0 0
        %947 = vmatprep.subr.bf16.mxu0 0
        %948 = vmatpush2.bf16.msra.mxu0 0
        %949 = vmatprep.subr.bf16.mxu0 0
        %950 = vmatpush2.bf16.msra.mxu0 0
        %951 = vmatprep.subr.bf16.mxu0 0
        %952 = vmatpush2.bf16.msra.mxu0 0
        %953 = vmatprep.mubr.bf16.mxu0 0
        %954 = vmatmul.mubr.bf16.gmra.mxu0 %v916
        %v955 = vpop.f32.mrf.mxu0
        %v956 = vadd.f32 %v910, %v955
        %v957 = vpop.f32.mrf.mxu0
        %v958 = vpop.f32.mrf.mxu0
        %v959 = vadd.f32 %v913, %v958
        %v960 = vpop.f32.mrf.mxu0
        %961 = vdwg.mxu0
        %v962 = vld [vmem:[%s436] sm:$0xe]
        %v963 = vld [vmem:[%s378] sm:$0xf]
        %v965 = vunpack.c.l.b16 %v962
        %v966 = vpack.c.b16 %v853, %v965
        %v967 = vrot.slane %v966, 1
        %v968 = vrot.slane %v856, 1
        %v969 = vsel %vm383, %v967, %v968
        %v971 = vsel %vm282, %v969, 0
        %v974 = vsel %vm286, %v963, 0
        %976 = vmatprep.subr.bf16.mxu0 0
        %977 = vmatpush1.bf16.msra.mxu0 0
        %978 = vmatprep.subr.bf16.mxu0 0
        %979 = vmatpush1.bf16.msra.mxu0 0
        %980 = vmatprep.subr.bf16.mxu0 0
        %981 = vmatpush1.bf16.msra.mxu0 0
        %982 = vmatprep.subr.bf16.mxu0 0
        %983 = vmatpush1.bf16.msra.mxu0 0
        %984 = vmatprep.subr.bf16.mxu0 0
        %985 = vmatpush1.bf16.msra.mxu0 0
        %986 = vmatprep.subr.bf16.mxu0 0
        %987 = vmatpush1.bf16.msra.mxu0 0
        %988 = vmatprep.subr.bf16.mxu0 0
        %989 = vmatpush1.bf16.msra.mxu0 0
        %990 = vmatprep.subr.bf16.mxu0 0
        %991 = vmatpush1.bf16.msra.mxu0 %v974
        %992 = vmatprep.subr.bf16.mxu0 0
        %993 = vmatpush2.bf16.msra.mxu0 0
        %994 = vmatprep.subr.bf16.mxu0 0
        %995 = vmatpush2.bf16.msra.mxu0 0
        %996 = vmatprep.subr.bf16.mxu0 0
        %997 = vmatpush2.bf16.msra.mxu0 0
        %998 = vmatprep.subr.bf16.mxu0 0
        %999 = vmatpush2.bf16.msra.mxu0 0
        %1000 = vmatprep.subr.bf16.mxu0 0
        %1001 = vmatpush2.bf16.msra.mxu0 0
        %1002 = vmatprep.subr.bf16.mxu0 0
        %1003 = vmatpush2.bf16.msra.mxu0 0
        %1004 = vmatprep.subr.bf16.mxu0 0
        %1005 = vmatpush2.bf16.msra.mxu0 0
        %1006 = vmatprep.subr.bf16.mxu0 0
        %1007 = vmatpush2.bf16.msra.mxu0 0
        %1008 = vmatprep.mubr.bf16.mxu0 0
        %1009 = vmatmul.mubr.bf16.gmra.mxu0 %v971
        %v1010 = vpop.f32.mrf.mxu0
        %v1011 = vadd.f32 0.0, %v1010
        %v1012 = vpop.f32.mrf.mxu0
        %v1013 = vpop.f32.mrf.mxu0
        %v1014 = vadd.f32 0.0, %v1013
        %v1015 = vpop.f32.mrf.mxu0
        %1016 = vdwg.mxu0
        %v1017 = vadd.f32 %v956, %v1011
        %v1018 = vadd.f32 %v959, %v1014
        %v1019 = vld [vmem:[%s627] sm:$0xf]
        %v1020 = vld [vmem:[%s627 + $0x4] sm:$0xf]
        %v1021 = vld [vmem:[%s439] sm:$0xf]
        %v1024 = vunpack.c.l.b16 %v1019
        %v1025 = vunpack.c.l.b16 %v1020
        %v1026 = vpack.c.b16 %v1025, %v1024
        %v1028 = vsel %vm282, %v1026, 0
        %v1031 = vsel %vm286, %v1021, 0
        %1033 = vmatprep.subr.bf16.mxu0 0
        %1034 = vmatpush1.bf16.msra.mxu0 0
        %1035 = vmatprep.subr.bf16.mxu0 0
        %1036 = vmatpush1.bf16.msra.mxu0 0
        %1037 = vmatprep.subr.bf16.mxu0 0
        %1038 = vmatpush1.bf16.msra.mxu0 0
        %1039 = vmatprep.subr.bf16.mxu0 0
        %1040 = vmatpush1.bf16.msra.mxu0 0
        %1041 = vmatprep.subr.bf16.mxu0 0
        %1042 = vmatpush1.bf16.msra.mxu0 0
        %1043 = vmatprep.subr.bf16.mxu0 0
        %1044 = vmatpush1.bf16.msra.mxu0 0
        %1045 = vmatprep.subr.bf16.mxu0 0
        %1046 = vmatpush1.bf16.msra.mxu0 0
        %1047 = vmatprep.subr.bf16.mxu0 0
        %1048 = vmatpush1.bf16.msra.mxu0 %v1031
        %1049 = vmatprep.subr.bf16.mxu0 0
        %1050 = vmatpush2.bf16.msra.mxu0 0
        %1051 = vmatprep.subr.bf16.mxu0 0
        %1052 = vmatpush2.bf16.msra.mxu0 0
        %1053 = vmatprep.subr.bf16.mxu0 0
        %1054 = vmatpush2.bf16.msra.mxu0 0
        %1055 = vmatprep.subr.bf16.mxu0 0
        %1056 = vmatpush2.bf16.msra.mxu0 0
        %1057 = vmatprep.subr.bf16.mxu0 0
        %1058 = vmatpush2.bf16.msra.mxu0 0
        %1059 = vmatprep.subr.bf16.mxu0 0
        %1060 = vmatpush2.bf16.msra.mxu0 0
        %1061 = vmatprep.subr.bf16.mxu0 0
        %1062 = vmatpush2.bf16.msra.mxu0 0
        %1063 = vmatprep.subr.bf16.mxu0 0
        %1064 = vmatpush2.bf16.msra.mxu0 0
        %1065 = vmatprep.mubr.bf16.mxu0 0
        %1066 = vmatmul.mubr.bf16.gmra.mxu0 %v1028
        %v1067 = vpop.f32.mrf.mxu0
        %v1068 = vadd.f32 0.0, %v1067
        %v1069 = vpop.f32.mrf.mxu0
        %v1070 = vpop.f32.mrf.mxu0
        %v1071 = vadd.f32 0.0, %v1070
        %v1072 = vpop.f32.mrf.mxu0
        %1073 = vdwg.mxu0
        %v1074 = vadd.f32 %v1017, %v1068
        %v1075 = vadd.f32 %v1018, %v1071
        %v1076 = vld [vmem:[%s627] sm:$0xf]
        %v1077 = vld [vmem:[%s627 + $0x4] sm:$0xf]
        %v1078 = vld [vmem:[%s627 + $0x8] sm:$0x1]
        %v1079 = vld [vmem:[%s498] sm:$0xf]
        %v1083 = vunpack.c.l.b16 %v1076
        %v1084 = vunpack.c.l.b16 %v1077
        %v1085 = vunpack.c.l.b16 %v1078
        %v1086 = vpack.c.b16 %v1084, %v1083
        %v1087 = vpack.c.b16 %v1085, %v1085
        %v1089 = vshrl.u32 %v1086, 16
        %v1091 = vshll.u32 %v1086, 16
        %v1093 = vrot.slane %v1091, 1
        %v1094 = vor.u32 %v1089, %v1093
        %v1096 = vshll.u32 %v1087, 16
        %v1098 = vrot.slane %v1096, 1
        %v1099 = vsel %vm269, %v1094, %v1098
        %v1101 = vsel %vm282, %v1099, 0
        %v1104 = vsel %vm286, %v1079, 0
        %1106 = vmatprep.subr.bf16.mxu0 0
        %1107 = vmatpush1.bf16.msra.mxu0 0
        %1108 = vmatprep.subr.bf16.mxu0 0
        %1109 = vmatpush1.bf16.msra.mxu0 0
        %1110 = vmatprep.subr.bf16.mxu0 0
        %1111 = vmatpush1.bf16.msra.mxu0 0
        %1112 = vmatprep.subr.bf16.mxu0 0
        %1113 = vmatpush1.bf16.msra.mxu0 0
        %1114 = vmatprep.subr.bf16.mxu0 0
        %1115 = vmatpush1.bf16.msra.mxu0 0
        %1116 = vmatprep.subr.bf16.mxu0 0
        %1117 = vmatpush1.bf16.msra.mxu0 0
        %1118 = vmatprep.subr.bf16.mxu0 0
        %1119 = vmatpush1.bf16.msra.mxu0 0
        %1120 = vmatprep.subr.bf16.mxu0 0
        %1121 = vmatpush1.bf16.msra.mxu0 %v1104
        %1122 = vmatprep.subr.bf16.mxu0 0
        %1123 = vmatpush2.bf16.msra.mxu0 0
        %1124 = vmatprep.subr.bf16.mxu0 0
        %1125 = vmatpush2.bf16.msra.mxu0 0
        %1126 = vmatprep.subr.bf16.mxu0 0
        %1127 = vmatpush2.bf16.msra.mxu0 0
        %1128 = vmatprep.subr.bf16.mxu0 0
        %1129 = vmatpush2.bf16.msra.mxu0 0
        %1130 = vmatprep.subr.bf16.mxu0 0
        %1131 = vmatpush2.bf16.msra.mxu0 0
        %1132 = vmatprep.subr.bf16.mxu0 0
        %1133 = vmatpush2.bf16.msra.mxu0 0
        %1134 = vmatprep.subr.bf16.mxu0 0
        %1135 = vmatpush2.bf16.msra.mxu0 0
        %1136 = vmatprep.subr.bf16.mxu0 0
        %1137 = vmatpush2.bf16.msra.mxu0 0
        %1138 = vmatprep.mubr.bf16.mxu0 0
        %1139 = vmatmul.mubr.bf16.gmra.mxu0 %v1101
        %v1140 = vpop.f32.mrf.mxu0
        %v1141 = vadd.f32 0.0, %v1140
        %v1142 = vpop.f32.mrf.mxu0
        %v1143 = vpop.f32.mrf.mxu0
        %v1144 = vadd.f32 0.0, %v1143
        %v1145 = vpop.f32.mrf.mxu0
        %1146 = vdwg.mxu0
        %v1147 = vadd.f32 %v1074, %v1141
        %v1148 = vadd.f32 %v1075, %v1144
        %v1149 = vld [vmem:[%s627] sm:$0xe]
        %v1150 = vld [vmem:[%s570] sm:$0xf]
        %v1152 = vunpack.c.l.b16 %v1149
        %v1153 = vpack.c.b16 %v1084, %v1152
        %v1154 = vrot.slane %v1153, 1
        %v1155 = vrot.slane %v1087, 1
        %v1156 = vsel %vm383, %v1154, %v1155
        %v1158 = vsel %vm282, %v1156, 0
        %v1161 = vsel %vm286, %v1150, 0
        %1163 = vmatprep.subr.bf16.mxu0 0
        %1164 = vmatpush1.bf16.msra.mxu0 0
        %1165 = vmatprep.subr.bf16.mxu0 0
        %1166 = vmatpush1.bf16.msra.mxu0 0
        %1167 = vmatprep.subr.bf16.mxu0 0
        %1168 = vmatpush1.bf16.msra.mxu0 0
        %1169 = vmatprep.subr.bf16.mxu0 0
        %1170 = vmatpush1.bf16.msra.mxu0 0
        %1171 = vmatprep.subr.bf16.mxu0 0
        %1172 = vmatpush1.bf16.msra.mxu0 0
        %1173 = vmatprep.subr.bf16.mxu0 0
        %1174 = vmatpush1.bf16.msra.mxu0 0
        %1175 = vmatprep.subr.bf16.mxu0 0
        %1176 = vmatpush1.bf16.msra.mxu0 0
        %1177 = vmatprep.subr.bf16.mxu0 0
        %1178 = vmatpush1.bf16.msra.mxu0 %v1161
        %1179 = vmatprep.subr.bf16.mxu0 0
        %1180 = vmatpush2.bf16.msra.mxu0 0
        %1181 = vmatprep.subr.bf16.mxu0 0
        %1182 = vmatpush2.bf16.msra.mxu0 0
        %1183 = vmatprep.subr.bf16.mxu0 0
        %1184 = vmatpush2.bf16.msra.mxu0 0
        %1185 = vmatprep.subr.bf16.mxu0 0
        %1186 = vmatpush2.bf16.msra.mxu0 0
        %1187 = vmatprep.subr.bf16.mxu0 0
        %1188 = vmatpush2.bf16.msra.mxu0 0
        %1189 = vmatprep.subr.bf16.mxu0 0
        %1190 = vmatpush2.bf16.msra.mxu0 0
        %1191 = vmatprep.subr.bf16.mxu0 0
        %1192 = vmatpush2.bf16.msra.mxu0 0
        %1193 = vmatprep.subr.bf16.mxu0 0
        %1194 = vmatpush2.bf16.msra.mxu0 0
        %1195 = vmatprep.mubr.bf16.mxu0 0
        %1196 = vmatmul.mubr.bf16.gmra.mxu0 %v1158
        %v1197 = vpop.f32.mrf.mxu0
        %v1198 = vadd.f32 0.0, %v1197
        %v1199 = vpop.f32.mrf.mxu0
        %v1200 = vpop.f32.mrf.mxu0
        %v1201 = vadd.f32 0.0, %v1200
        %v1202 = vpop.f32.mrf.mxu0
        %1203 = vdwg.mxu0
        %v1204 = vadd.f32 %v1147, %v1198
        %v1205 = vadd.f32 %v1148, %v1201
        %s1206 = scalar_lea.vmem %s247, 36
        %v1207 = vld [vmem:[%s1206] sm:$0xf]
        %v1208 = vld [vmem:[%s1206 + $0x4] sm:$0xf]
        %v1209 = vld [vmem:[%s630] sm:$0xf]
        %v1212 = vunpack.c.l.b16 %v1207
        %v1213 = vunpack.c.l.b16 %v1208
        %v1214 = vpack.c.b16 %v1213, %v1212
        %v1216 = vsel %vm282, %v1214, 0
        %v1219 = vsel %vm286, %v1209, 0
        %1221 = vmatprep.subr.bf16.mxu0 0
        %1222 = vmatpush1.bf16.msra.mxu0 0
        %1223 = vmatprep.subr.bf16.mxu0 0
        %1224 = vmatpush1.bf16.msra.mxu0 0
        %1225 = vmatprep.subr.bf16.mxu0 0
        %1226 = vmatpush1.bf16.msra.mxu0 0
        %1227 = vmatprep.subr.bf16.mxu0 0
        %1228 = vmatpush1.bf16.msra.mxu0 0
        %1229 = vmatprep.subr.bf16.mxu0 0
        %1230 = vmatpush1.bf16.msra.mxu0 0
        %1231 = vmatprep.subr.bf16.mxu0 0
        %1232 = vmatpush1.bf16.msra.mxu0 0
        %1233 = vmatprep.subr.bf16.mxu0 0
        %1234 = vmatpush1.bf16.msra.mxu0 0
        %1235 = vmatprep.subr.bf16.mxu0 0
        %1236 = vmatpush1.bf16.msra.mxu0 %v1219
        %1237 = vmatprep.subr.bf16.mxu0 0
        %1238 = vmatpush2.bf16.msra.mxu0 0
        %1239 = vmatprep.subr.bf16.mxu0 0
        %1240 = vmatpush2.bf16.msra.mxu0 0
        %1241 = vmatprep.subr.bf16.mxu0 0
        %1242 = vmatpush2.bf16.msra.mxu0 0
        %1243 = vmatprep.subr.bf16.mxu0 0
        %1244 = vmatpush2.bf16.msra.mxu0 0
        %1245 = vmatprep.subr.bf16.mxu0 0
        %1246 = vmatpush2.bf16.msra.mxu0 0
        %1247 = vmatprep.subr.bf16.mxu0 0
        %1248 = vmatpush2.bf16.msra.mxu0 0
        %1249 = vmatprep.subr.bf16.mxu0 0
        %1250 = vmatpush2.bf16.msra.mxu0 0
        %1251 = vmatprep.subr.bf16.mxu0 0
        %1252 = vmatpush2.bf16.msra.mxu0 0
        %1253 = vmatprep.mubr.bf16.mxu0 0
        %1254 = vmatmul.mubr.bf16.gmra.mxu0 %v1216
        %v1255 = vpop.f32.mrf.mxu0
        %v1256 = vadd.f32 0.0, %v1255
        %v1257 = vpop.f32.mrf.mxu0
        %v1258 = vpop.f32.mrf.mxu0
        %v1259 = vadd.f32 0.0, %v1258
        %v1260 = vpop.f32.mrf.mxu0
        %1261 = vdwg.mxu0
        %v1262 = vadd.f32 %v1204, %v1256
        %v1263 = vadd.f32 %v1205, %v1259
        %v1264 = vld [vmem:[%s1206] sm:$0xf]
        %v1265 = vld [vmem:[%s1206 + $0x4] sm:$0xf]
        %v1266 = vld [vmem:[%s1206 + $0x8] sm:$0x1]
        %v1267 = vld [vmem:[%s689] sm:$0xf]
        %v1271 = vunpack.c.l.b16 %v1264
        %v1272 = vunpack.c.l.b16 %v1265
        %v1273 = vunpack.c.l.b16 %v1266
        %v1274 = vpack.c.b16 %v1272, %v1271
        %v1275 = vpack.c.b16 %v1273, %v1273
        %v1277 = vshrl.u32 %v1274, 16
        %v1279 = vshll.u32 %v1274, 16
        %v1281 = vrot.slane %v1279, 1
        %v1282 = vor.u32 %v1277, %v1281
        %v1284 = vshll.u32 %v1275, 16
        %v1286 = vrot.slane %v1284, 1
        %v1287 = vsel %vm269, %v1282, %v1286
        %v1289 = vsel %vm282, %v1287, 0
        %v1292 = vsel %vm286, %v1267, 0
        %1294 = vmatprep.subr.bf16.mxu0 0
        %1295 = vmatpush1.bf16.msra.mxu0 0
        %1296 = vmatprep.subr.bf16.mxu0 0
        %1297 = vmatpush1.bf16.msra.mxu0 0
        %1298 = vmatprep.subr.bf16.mxu0 0
        %1299 = vmatpush1.bf16.msra.mxu0 0
        %1300 = vmatprep.subr.bf16.mxu0 0
        %1301 = vmatpush1.bf16.msra.mxu0 0
        %1302 = vmatprep.subr.bf16.mxu0 0
        %1303 = vmatpush1.bf16.msra.mxu0 0
        %1304 = vmatprep.subr.bf16.mxu0 0
        %1305 = vmatpush1.bf16.msra.mxu0 0
        %1306 = vmatprep.subr.bf16.mxu0 0
        %1307 = vmatpush1.bf16.msra.mxu0 0
        %1308 = vmatprep.subr.bf16.mxu0 0
        %1309 = vmatpush1.bf16.msra.mxu0 %v1292
        %1310 = vmatprep.subr.bf16.mxu0 0
        %1311 = vmatpush2.bf16.msra.mxu0 0
        %1312 = vmatprep.subr.bf16.mxu0 0
        %1313 = vmatpush2.bf16.msra.mxu0 0
        %1314 = vmatprep.subr.bf16.mxu0 0
        %1315 = vmatpush2.bf16.msra.mxu0 0
        %1316 = vmatprep.subr.bf16.mxu0 0
        %1317 = vmatpush2.bf16.msra.mxu0 0
        %1318 = vmatprep.subr.bf16.mxu0 0
        %1319 = vmatpush2.bf16.msra.mxu0 0
        %1320 = vmatprep.subr.bf16.mxu0 0
        %1321 = vmatpush2.bf16.msra.mxu0 0
        %1322 = vmatprep.subr.bf16.mxu0 0
        %1323 = vmatpush2.bf16.msra.mxu0 0
        %1324 = vmatprep.subr.bf16.mxu0 0
        %1325 = vmatpush2.bf16.msra.mxu0 0
        %1326 = vmatprep.mubr.bf16.mxu0 0
        %1327 = vmatmul.mubr.bf16.gmra.mxu0 %v1289
        %v1328 = vpop.f32.mrf.mxu0
        %v1329 = vadd.f32 0.0, %v1328
        %v1330 = vpop.f32.mrf.mxu0
        %v1331 = vpop.f32.mrf.mxu0
        %v1332 = vadd.f32 0.0, %v1331
        %v1333 = vpop.f32.mrf.mxu0
        %1334 = vdwg.mxu0
        %v1335 = vadd.f32 %v1262, %v1329
        %v1336 = vadd.f32 %v1263, %v1332
        %v1337 = vld [vmem:[%s1206] sm:$0xe]
        %v1338 = vld [vmem:[%s761] sm:$0xf]
        %v1340 = vunpack.c.l.b16 %v1337
        %v1341 = vpack.c.b16 %v1272, %v1340
        %v1342 = vrot.slane %v1341, 1
        %v1343 = vrot.slane %v1275, 1
        %v1344 = vsel %vm383, %v1342, %v1343
        %v1346 = vsel %vm282, %v1344, 0
        %v1349 = vsel %vm286, %v1338, 0
        %1351 = vmatprep.subr.bf16.mxu0 0
        %1352 = vmatpush1.bf16.msra.mxu0 0
        %1353 = vmatprep.subr.bf16.mxu0 0
        %1354 = vmatpush1.bf16.msra.mxu0 0
        %1355 = vmatprep.subr.bf16.mxu0 0
        %1356 = vmatpush1.bf16.msra.mxu0 0
        %1357 = vmatprep.subr.bf16.mxu0 0
        %1358 = vmatpush1.bf16.msra.mxu0 0
        %1359 = vmatprep.subr.bf16.mxu0 0
        %1360 = vmatpush1.bf16.msra.mxu0 0
        %1361 = vmatprep.subr.bf16.mxu0 0
        %1362 = vmatpush1.bf16.msra.mxu0 0
        %1363 = vmatprep.subr.bf16.mxu0 0
        %1364 = vmatpush1.bf16.msra.mxu0 0
        %1365 = vmatprep.subr.bf16.mxu0 0
        %1366 = vmatpush1.bf16.msra.mxu0 %v1349
        %1367 = vmatprep.subr.bf16.mxu0 0
        %1368 = vmatpush2.bf16.msra.mxu0 0
        %1369 = vmatprep.subr.bf16.mxu0 0
        %1370 = vmatpush2.bf16.msra.mxu0 0
        %1371 = vmatprep.subr.bf16.mxu0 0
        %1372 = vmatpush2.bf16.msra.mxu0 0
        %1373 = vmatprep.subr.bf16.mxu0 0
        %1374 = vmatpush2.bf16.msra.mxu0 0
        %1375 = vmatprep.subr.bf16.mxu0 0
        %1376 = vmatpush2.bf16.msra.mxu0 0
        %1377 = vmatprep.subr.bf16.mxu0 0
        %1378 = vmatpush2.bf16.msra.mxu0 0
        %1379 = vmatprep.subr.bf16.mxu0 0
        %1380 = vmatpush2.bf16.msra.mxu0 0
        %1381 = vmatprep.subr.bf16.mxu0 0
        %1382 = vmatpush2.bf16.msra.mxu0 0
        %1383 = vmatprep.mubr.bf16.mxu0 0
        %1384 = vmatmul.mubr.bf16.gmra.mxu0 %v1346
        %v1385 = vpop.f32.mrf.mxu0
        %v1386 = vadd.f32 0.0, %v1385
        %v1387 = vpop.f32.mrf.mxu0
        %v1388 = vpop.f32.mrf.mxu0
        %v1389 = vadd.f32 0.0, %v1388
        %v1390 = vpop.f32.mrf.mxu0
        %1391 = vdwg.mxu0
        %v1392 = vadd.f32 %v1335, %v1386
        %v1393 = vadd.f32 %v1336, %v1389
        %v1394 = vadd.f32 %v1392, %v822
        %v1395 = vadd.f32 %v1393, %v822
        %v1396 = vmax.f32 %v1394, 0.0
        %v1397 = vmax.f32 %v1395, 0.0
        %v1398 = vadd.f32 %v1396, %v1397
        %v1399 = vrot.slane %v1398, 4
        %v1400 = vadd.f32 %v1398, %v1399
        %v1401 = vrot.slane %v1400, 2
        %v1402 = vadd.f32 %v1400, %v1401
        %v1403 = vrot.slane %v1402, 1
        %v1404 = vadd.f32 %v1402, %v1403
        %s1405 = sadd.s32 %s835, 1
        %p1406 = scmp.lt.s32.totalorder %s1405, 16
        %v1407 = vld [vmem:[#allocation2] sm:$0x1]
        %s1408 = scalar_select %p1406, 1, 0
        %v1409 = vstv %s1408
        %vm1410 = vcmp.eq.s32.totalorder %v1409, 1
        %v1411 = vsel %vm1410, %v1404, 0.0
        %v1412 = vadd.f32 %v1407, %v1411
        %1413 = vst [vmem:[#allocation2] sm:$0x1] %v1412
        %v1414 = vld [vmem:[%s627] sm:$0xf]
        %v1415 = vld [vmem:[%s627 + $0x4] sm:$0xf]
        %v1416 = vld [vmem:[%s1] sm:$0xf]
        %v1417 = vld [vmem:[%s627 + $0x8] sm:$0x1]
        %v1418 = vld [vmem:[%s259] sm:$0xf]
        %v1422 = vunpack.c.l.b16 %v1414
        %v1423 = vunpack.c.l.b16 %v1415
        %v1424 = vunpack.c.l.b16 %v1417
        %v1425 = vpack.c.b16 %v1423, %v1422
        %v1426 = vpack.c.b16 %v1424, %v1424
        %v1428 = vshrl.u32 %v1425, 16
        %v1430 = vshll.u32 %v1425, 16
        %v1432 = vrot.slane %v1430, 1
        %v1433 = vor.u32 %v1428, %v1432
        %v1435 = vshll.u32 %v1426, 16
        %v1437 = vrot.slane %v1435, 1
        %v1438 = vsel %vm269, %v1433, %v1437
        %v1440 = vsel %vm282, %v1438, 0
        %v1443 = vsel %vm286, %v1418, 0
        %1445 = vmatprep.subr.bf16.mxu0 0
        %1446 = vmatpush1.bf16.msra.mxu0 0
        %1447 = vmatprep.subr.bf16.mxu0 0
        %1448 = vmatpush1.bf16.msra.mxu0 0
        %1449 = vmatprep.subr.bf16.mxu0 0
        %1450 = vmatpush1.bf16.msra.mxu0 0
        %1451 = vmatprep.subr.bf16.mxu0 0
        %1452 = vmatpush1.bf16.msra.mxu0 0
        %1453 = vmatprep.subr.bf16.mxu0 0
        %1454 = vmatpush1.bf16.msra.mxu0 0
        %1455 = vmatprep.subr.bf16.mxu0 0
        %1456 = vmatpush1.bf16.msra.mxu0 0
        %1457 = vmatprep.subr.bf16.mxu0 0
        %1458 = vmatpush1.bf16.msra.mxu0 0
        %1459 = vmatprep.subr.bf16.mxu0 0
        %1460 = vmatpush1.bf16.msra.mxu0 %v1443
        %1461 = vmatprep.subr.bf16.mxu0 0
        %1462 = vmatpush2.bf16.msra.mxu0 0
        %1463 = vmatprep.subr.bf16.mxu0 0
        %1464 = vmatpush2.bf16.msra.mxu0 0
        %1465 = vmatprep.subr.bf16.mxu0 0
        %1466 = vmatpush2.bf16.msra.mxu0 0
        %1467 = vmatprep.subr.bf16.mxu0 0
        %1468 = vmatpush2.bf16.msra.mxu0 0
        %1469 = vmatprep.subr.bf16.mxu0 0
        %1470 = vmatpush2.bf16.msra.mxu0 0
        %1471 = vmatprep.subr.bf16.mxu0 0
        %1472 = vmatpush2.bf16.msra.mxu0 0
        %1473 = vmatprep.subr.bf16.mxu0 0
        %1474 = vmatpush2.bf16.msra.mxu0 0
        %1475 = vmatprep.subr.bf16.mxu0 0
        %1476 = vmatpush2.bf16.msra.mxu0 0
        %1477 = vmatprep.mubr.bf16.mxu0 0
        %1478 = vmatmul.mubr.bf16.gmra.mxu0 %v1440
        %v1479 = vpop.f32.mrf.mxu0
        %v1480 = vadd.f32 0.0, %v1479
        %v1481 = vpop.f32.mrf.mxu0
        %v1482 = vpop.f32.mrf.mxu0
        %v1483 = vadd.f32 0.0, %v1482
        %v1484 = vpop.f32.mrf.mxu0
        %1485 = vdwg.mxu0
        %v1486 = vsel %vm282, %v1425, 0
        %v1489 = vsel %vm286, %v1416, 0
        %1491 = vmatprep.subr.bf16.mxu0 0
        %1492 = vmatpush1.bf16.msra.mxu0 0
        %1493 = vmatprep.subr.bf16.mxu0 0
        %1494 = vmatpush1.bf16.msra.mxu0 0
        %1495 = vmatprep.subr.bf16.mxu0 0
        %1496 = vmatpush1.bf16.msra.mxu0 0
        %1497 = vmatprep.subr.bf16.mxu0 0
        %1498 = vmatpush1.bf16.msra.mxu0 0
        %1499 = vmatprep.subr.bf16.mxu0 0
        %1500 = vmatpush1.bf16.msra.mxu0 0
        %1501 = vmatprep.subr.bf16.mxu0 0
        %1502 = vmatpush1.bf16.msra.mxu0 0
        %1503 = vmatprep.subr.bf16.mxu0 0
        %1504 = vmatpush1.bf16.msra.mxu0 0
        %1505 = vmatprep.subr.bf16.mxu0 0
        %1506 = vmatpush1.bf16.msra.mxu0 %v1489
        %1507 = vmatprep.subr.bf16.mxu0 0
        %1508 = vmatpush2.bf16.msra.mxu0 0
        %1509 = vmatprep.subr.bf16.mxu0 0
        %1510 = vmatpush2.bf16.msra.mxu0 0
        %1511 = vmatprep.subr.bf16.mxu0 0
        %1512 = vmatpush2.bf16.msra.mxu0 0
        %1513 = vmatprep.subr.bf16.mxu0 0
        %1514 = vmatpush2.bf16.msra.mxu0 0
        %1515 = vmatprep.subr.bf16.mxu0 0
        %1516 = vmatpush2.bf16.msra.mxu0 0
        %1517 = vmatprep.subr.bf16.mxu0 0
        %1518 = vmatpush2.bf16.msra.mxu0 0
        %1519 = vmatprep.subr.bf16.mxu0 0
        %1520 = vmatpush2.bf16.msra.mxu0 0
        %1521 = vmatprep.subr.bf16.mxu0 0
        %1522 = vmatpush2.bf16.msra.mxu0 0
        %1523 = vmatprep.mubr.bf16.mxu0 0
        %1524 = vmatmul.mubr.bf16.gmra.mxu0 %v1486
        %v1525 = vpop.f32.mrf.mxu0
        %v1526 = vadd.f32 %v1480, %v1525
        %v1527 = vpop.f32.mrf.mxu0
        %v1528 = vpop.f32.mrf.mxu0
        %v1529 = vadd.f32 %v1483, %v1528
        %v1530 = vpop.f32.mrf.mxu0
        %1531 = vdwg.mxu0
        %v1532 = vld [vmem:[%s627] sm:$0xe]
        %v1533 = vld [vmem:[%s378] sm:$0xf]
        %v1535 = vunpack.c.l.b16 %v1532
        %v1536 = vpack.c.b16 %v1423, %v1535
        %v1537 = vrot.slane %v1536, 1
        %v1538 = vrot.slane %v1426, 1
        %v1539 = vsel %vm383, %v1537, %v1538
        %v1541 = vsel %vm282, %v1539, 0
        %v1544 = vsel %vm286, %v1533, 0
        %1546 = vmatprep.subr.bf16.mxu0 0
        %1547 = vmatpush1.bf16.msra.mxu0 0
        %1548 = vmatprep.subr.bf16.mxu0 0
        %1549 = vmatpush1.bf16.msra.mxu0 0
        %1550 = vmatprep.subr.bf16.mxu0 0
        %1551 = vmatpush1.bf16.msra.mxu0 0
        %1552 = vmatprep.subr.bf16.mxu0 0
        %1553 = vmatpush1.bf16.msra.mxu0 0
        %1554 = vmatprep.subr.bf16.mxu0 0
        %1555 = vmatpush1.bf16.msra.mxu0 0
        %1556 = vmatprep.subr.bf16.mxu0 0
        %1557 = vmatpush1.bf16.msra.mxu0 0
        %1558 = vmatprep.subr.bf16.mxu0 0
        %1559 = vmatpush1.bf16.msra.mxu0 0
        %1560 = vmatprep.subr.bf16.mxu0 0
        %1561 = vmatpush1.bf16.msra.mxu0 %v1544
        %1562 = vmatprep.subr.bf16.mxu0 0
        %1563 = vmatpush2.bf16.msra.mxu0 0
        %1564 = vmatprep.subr.bf16.mxu0 0
        %1565 = vmatpush2.bf16.msra.mxu0 0
        %1566 = vmatprep.subr.bf16.mxu0 0
        %1567 = vmatpush2.bf16.msra.mxu0 0
        %1568 = vmatprep.subr.bf16.mxu0 0
        %1569 = vmatpush2.bf16.msra.mxu0 0
        %1570 = vmatprep.subr.bf16.mxu0 0
        %1571 = vmatpush2.bf16.msra.mxu0 0
        %1572 = vmatprep.subr.bf16.mxu0 0
        %1573 = vmatpush2.bf16.msra.mxu0 0
        %1574 = vmatprep.subr.bf16.mxu0 0
        %1575 = vmatpush2.bf16.msra.mxu0 0
        %1576 = vmatprep.subr.bf16.mxu0 0
        %1577 = vmatpush2.bf16.msra.mxu0 0
        %1578 = vmatprep.mubr.bf16.mxu0 0
        %1579 = vmatmul.mubr.bf16.gmra.mxu0 %v1541
        %v1580 = vpop.f32.mrf.mxu0
        %v1581 = vadd.f32 0.0, %v1580
        %v1582 = vpop.f32.mrf.mxu0
        %v1583 = vpop.f32.mrf.mxu0
        %v1584 = vadd.f32 0.0, %v1583
        %v1585 = vpop.f32.mrf.mxu0
        %1586 = vdwg.mxu0
        %v1587 = vadd.f32 %v1526, %v1581
        %v1588 = vadd.f32 %v1529, %v1584
        %v1589 = vld [vmem:[%s1206] sm:$0xf]
        %v1590 = vld [vmem:[%s1206 + $0x4] sm:$0xf]
        %v1591 = vld [vmem:[%s439] sm:$0xf]
        %v1594 = vunpack.c.l.b16 %v1589
        %v1595 = vunpack.c.l.b16 %v1590
        %v1596 = vpack.c.b16 %v1595, %v1594
        %v1598 = vsel %vm282, %v1596, 0
        %v1601 = vsel %vm286, %v1591, 0
        %1603 = vmatprep.subr.bf16.mxu0 0
        %1604 = vmatpush1.bf16.msra.mxu0 0
        %1605 = vmatprep.subr.bf16.mxu0 0
        %1606 = vmatpush1.bf16.msra.mxu0 0
        %1607 = vmatprep.subr.bf16.mxu0 0
        %1608 = vmatpush1.bf16.msra.mxu0 0
        %1609 = vmatprep.subr.bf16.mxu0 0
        %1610 = vmatpush1.bf16.msra.mxu0 0
        %1611 = vmatprep.subr.bf16.mxu0 0
        %1612 = vmatpush1.bf16.msra.mxu0 0
        %1613 = vmatprep.subr.bf16.mxu0 0
        %1614 = vmatpush1.bf16.msra.mxu0 0
        %1615 = vmatprep.subr.bf16.mxu0 0
        %1616 = vmatpush1.bf16.msra.mxu0 0
        %1617 = vmatprep.subr.bf16.mxu0 0
        %1618 = vmatpush1.bf16.msra.mxu0 %v1601
        %1619 = vmatprep.subr.bf16.mxu0 0
        %1620 = vmatpush2.bf16.msra.mxu0 0
        %1621 = vmatprep.subr.bf16.mxu0 0
        %1622 = vmatpush2.bf16.msra.mxu0 0
        %1623 = vmatprep.subr.bf16.mxu0 0
        %1624 = vmatpush2.bf16.msra.mxu0 0
        %1625 = vmatprep.subr.bf16.mxu0 0
        %1626 = vmatpush2.bf16.msra.mxu0 0
        %1627 = vmatprep.subr.bf16.mxu0 0
        %1628 = vmatpush2.bf16.msra.mxu0 0
        %1629 = vmatprep.subr.bf16.mxu0 0
        %1630 = vmatpush2.bf16.msra.mxu0 0
        %1631 = vmatprep.subr.bf16.mxu0 0
        %1632 = vmatpush2.bf16.msra.mxu0 0
        %1633 = vmatprep.subr.bf16.mxu0 0
        %1634 = vmatpush2.bf16.msra.mxu0 0
        %1635 = vmatprep.mubr.bf16.mxu0 0
        %1636 = vmatmul.mubr.bf16.gmra.mxu0 %v1598
        %v1637 = vpop.f32.mrf.mxu0
        %v1638 = vadd.f32 0.0, %v1637
        %v1639 = vpop.f32.mrf.mxu0
        %v1640 = vpop.f32.mrf.mxu0
        %v1641 = vadd.f32 0.0, %v1640
        %v1642 = vpop.f32.mrf.mxu0
        %1643 = vdwg.mxu0
        %v1644 = vadd.f32 %v1587, %v1638
        %v1645 = vadd.f32 %v1588, %v1641
        %v1646 = vld [vmem:[%s1206] sm:$0xf]
        %v1647 = vld [vmem:[%s1206 + $0x4] sm:$0xf]
        %v1648 = vld [vmem:[%s1206 + $0x8] sm:$0x1]
        %v1649 = vld [vmem:[%s498] sm:$0xf]
        %v1653 = vunpack.c.l.b16 %v1646
        %v1654 = vunpack.c.l.b16 %v1647
        %v1655 = vunpack.c.l.b16 %v1648
        %v1656 = vpack.c.b16 %v1654, %v1653
        %v1657 = vpack.c.b16 %v1655, %v1655
        %v1659 = vshrl.u32 %v1656, 16
        %v1661 = vshll.u32 %v1656, 16
        %v1663 = vrot.slane %v1661, 1
        %v1664 = vor.u32 %v1659, %v1663
        %v1666 = vshll.u32 %v1657, 16
        %v1668 = vrot.slane %v1666, 1
        %v1669 = vsel %vm269, %v1664, %v1668
        %v1671 = vsel %vm282, %v1669, 0
        %v1674 = vsel %vm286, %v1649, 0
        %1676 = vmatprep.subr.bf16.mxu0 0
        %1677 = vmatpush1.bf16.msra.mxu0 0
        %1678 = vmatprep.subr.bf16.mxu0 0
        %1679 = vmatpush1.bf16.msra.mxu0 0
        %1680 = vmatprep.subr.bf16.mxu0 0
        %1681 = vmatpush1.bf16.msra.mxu0 0
        %1682 = vmatprep.subr.bf16.mxu0 0
        %1683 = vmatpush1.bf16.msra.mxu0 0
        %1684 = vmatprep.subr.bf16.mxu0 0
        %1685 = vmatpush1.bf16.msra.mxu0 0
        %1686 = vmatprep.subr.bf16.mxu0 0
        %1687 = vmatpush1.bf16.msra.mxu0 0
        %1688 = vmatprep.subr.bf16.mxu0 0
        %1689 = vmatpush1.bf16.msra.mxu0 0
        %1690 = vmatprep.subr.bf16.mxu0 0
        %1691 = vmatpush1.bf16.msra.mxu0 %v1674
        %1692 = vmatprep.subr.bf16.mxu0 0
        %1693 = vmatpush2.bf16.msra.mxu0 0
        %1694 = vmatprep.subr.bf16.mxu0 0
        %1695 = vmatpush2.bf16.msra.mxu0 0
        %1696 = vmatprep.subr.bf16.mxu0 0
        %1697 = vmatpush2.bf16.msra.mxu0 0
        %1698 = vmatprep.subr.bf16.mxu0 0
        %1699 = vmatpush2.bf16.msra.mxu0 0
        %1700 = vmatprep.subr.bf16.mxu0 0
        %1701 = vmatpush2.bf16.msra.mxu0 0
        %1702 = vmatprep.subr.bf16.mxu0 0
        %1703 = vmatpush2.bf16.msra.mxu0 0
        %1704 = vmatprep.subr.bf16.mxu0 0
        %1705 = vmatpush2.bf16.msra.mxu0 0
        %1706 = vmatprep.subr.bf16.mxu0 0
        %1707 = vmatpush2.bf16.msra.mxu0 0
        %1708 = vmatprep.mubr.bf16.mxu0 0
        %1709 = vmatmul.mubr.bf16.gmra.mxu0 %v1671
        %v1710 = vpop.f32.mrf.mxu0
        %v1711 = vadd.f32 0.0, %v1710
        %v1712 = vpop.f32.mrf.mxu0
        %v1713 = vpop.f32.mrf.mxu0
        %v1714 = vadd.f32 0.0, %v1713
        %v1715 = vpop.f32.mrf.mxu0
        %1716 = vdwg.mxu0
        %v1717 = vadd.f32 %v1644, %v1711
        %v1718 = vadd.f32 %v1645, %v1714
        %v1719 = vld [vmem:[%s1206] sm:$0xe]
        %v1720 = vld [vmem:[%s570] sm:$0xf]
        %v1722 = vunpack.c.l.b16 %v1719
        %v1723 = vpack.c.b16 %v1654, %v1722
        %v1724 = vrot.slane %v1723, 1
        %v1725 = vrot.slane %v1657, 1
        %v1726 = vsel %vm383, %v1724, %v1725
        %v1728 = vsel %vm282, %v1726, 0
        %v1731 = vsel %vm286, %v1720, 0
        %1733 = vmatprep.subr.bf16.mxu0 0
        %1734 = vmatpush1.bf16.msra.mxu0 0
        %1735 = vmatprep.subr.bf16.mxu0 0
        %1736 = vmatpush1.bf16.msra.mxu0 0
        %1737 = vmatprep.subr.bf16.mxu0 0
        %1738 = vmatpush1.bf16.msra.mxu0 0
        %1739 = vmatprep.subr.bf16.mxu0 0
        %1740 = vmatpush1.bf16.msra.mxu0 0
        %1741 = vmatprep.subr.bf16.mxu0 0
        %1742 = vmatpush1.bf16.msra.mxu0 0
        %1743 = vmatprep.subr.bf16.mxu0 0
        %1744 = vmatpush1.bf16.msra.mxu0 0
        %1745 = vmatprep.subr.bf16.mxu0 0
        %1746 = vmatpush1.bf16.msra.mxu0 0
        %1747 = vmatprep.subr.bf16.mxu0 0
        %1748 = vmatpush1.bf16.msra.mxu0 %v1731
        %1749 = vmatprep.subr.bf16.mxu0 0
        %1750 = vmatpush2.bf16.msra.mxu0 0
        %1751 = vmatprep.subr.bf16.mxu0 0
        %1752 = vmatpush2.bf16.msra.mxu0 0
        %1753 = vmatprep.subr.bf16.mxu0 0
        %1754 = vmatpush2.bf16.msra.mxu0 0
        %1755 = vmatprep.subr.bf16.mxu0 0
        %1756 = vmatpush2.bf16.msra.mxu0 0
        %1757 = vmatprep.subr.bf16.mxu0 0
        %1758 = vmatpush2.bf16.msra.mxu0 0
        %1759 = vmatprep.subr.bf16.mxu0 0
        %1760 = vmatpush2.bf16.msra.mxu0 0
        %1761 = vmatprep.subr.bf16.mxu0 0
        %1762 = vmatpush2.bf16.msra.mxu0 0
        %1763 = vmatprep.subr.bf16.mxu0 0
        %1764 = vmatpush2.bf16.msra.mxu0 0
        %1765 = vmatprep.mubr.bf16.mxu0 0
        %1766 = vmatmul.mubr.bf16.gmra.mxu0 %v1728
        %v1767 = vpop.f32.mrf.mxu0
        %v1768 = vadd.f32 0.0, %v1767
        %v1769 = vpop.f32.mrf.mxu0
        %v1770 = vpop.f32.mrf.mxu0
        %v1771 = vadd.f32 0.0, %v1770
        %v1772 = vpop.f32.mrf.mxu0
        %1773 = vdwg.mxu0
        %v1774 = vadd.f32 %v1717, %v1768
        %v1775 = vadd.f32 %v1718, %v1771
        %s1776 = scalar_lea.vmem %s247, 48
        %v1777 = vld [vmem:[%s1776] sm:$0xf]
        %v1778 = vld [vmem:[%s1776 + $0x4] sm:$0xf]
        %v1779 = vld [vmem:[%s630] sm:$0xf]
        %v1782 = vunpack.c.l.b16 %v1777
        %v1783 = vunpack.c.l.b16 %v1778
        %v1784 = vpack.c.b16 %v1783, %v1782
        %v1786 = vsel %vm282, %v1784, 0
        %v1789 = vsel %vm286, %v1779, 0
        %1791 = vmatprep.subr.bf16.mxu0 0
        %1792 = vmatpush1.bf16.msra.mxu0 0
        %1793 = vmatprep.subr.bf16.mxu0 0
        %1794 = vmatpush1.bf16.msra.mxu0 0
        %1795 = vmatprep.subr.bf16.mxu0 0
        %1796 = vmatpush1.bf16.msra.mxu0 0
        %1797 = vmatprep.subr.bf16.mxu0 0
        %1798 = vmatpush1.bf16.msra.mxu0 0
        %1799 = vmatprep.subr.bf16.mxu0 0
        %1800 = vmatpush1.bf16.msra.mxu0 0
        %1801 = vmatprep.subr.bf16.mxu0 0
        %1802 = vmatpush1.bf16.msra.mxu0 0
        %1803 = vmatprep.subr.bf16.mxu0 0
        %1804 = vmatpush1.bf16.msra.mxu0 0
        %1805 = vmatprep.subr.bf16.mxu0 0
        %1806 = vmatpush1.bf16.msra.mxu0 %v1789
        %1807 = vmatprep.subr.bf16.mxu0 0
        %1808 = vmatpush2.bf16.msra.mxu0 0
        %1809 = vmatprep.subr.bf16.mxu0 0
        %1810 = vmatpush2.bf16.msra.mxu0 0
        %1811 = vmatprep.subr.bf16.mxu0 0
        %1812 = vmatpush2.bf16.msra.mxu0 0
        %1813 = vmatprep.subr.bf16.mxu0 0
        %1814 = vmatpush2.bf16.msra.mxu0 0
        %1815 = vmatprep.subr.bf16.mxu0 0
        %1816 = vmatpush2.bf16.msra.mxu0 0
        %1817 = vmatprep.subr.bf16.mxu0 0
        %1818 = vmatpush2.bf16.msra.mxu0 0
        %1819 = vmatprep.subr.bf16.mxu0 0
        %1820 = vmatpush2.bf16.msra.mxu0 0
        %1821 = vmatprep.subr.bf16.mxu0 0
        %1822 = vmatpush2.bf16.msra.mxu0 0
        %1823 = vmatprep.mubr.bf16.mxu0 0
        %1824 = vmatmul.mubr.bf16.gmra.mxu0 %v1786
        %v1825 = vpop.f32.mrf.mxu0
        %v1826 = vadd.f32 0.0, %v1825
        %v1827 = vpop.f32.mrf.mxu0
        %v1828 = vpop.f32.mrf.mxu0
        %v1829 = vadd.f32 0.0, %v1828
        %v1830 = vpop.f32.mrf.mxu0
        %1831 = vdwg.mxu0
        %v1832 = vadd.f32 %v1774, %v1826
        %v1833 = vadd.f32 %v1775, %v1829
        %v1834 = vld [vmem:[%s1776] sm:$0xf]
        %v1835 = vld [vmem:[%s1776 + $0x4] sm:$0xf]
        %v1836 = vld [vmem:[%s1776 + $0x8] sm:$0x1]
        %v1837 = vld [vmem:[%s689] sm:$0xf]
        %v1841 = vunpack.c.l.b16 %v1834
        %v1842 = vunpack.c.l.b16 %v1835
        %v1843 = vunpack.c.l.b16 %v1836
        %v1844 = vpack.c.b16 %v1842, %v1841
        %v1845 = vpack.c.b16 %v1843, %v1843
        %v1847 = vshrl.u32 %v1844, 16
        %v1849 = vshll.u32 %v1844, 16
        %v1851 = vrot.slane %v1849, 1
        %v1852 = vor.u32 %v1847, %v1851
        %v1854 = vshll.u32 %v1845, 16
        %v1856 = vrot.slane %v1854, 1
        %v1857 = vsel %vm269, %v1852, %v1856
        %v1859 = vsel %vm282, %v1857, 0
        %v1862 = vsel %vm286, %v1837, 0
        %1864 = vmatprep.subr.bf16.mxu0 0
        %1865 = vmatpush1.bf16.msra.mxu0 0
        %1866 = vmatprep.subr.bf16.mxu0 0
        %1867 = vmatpush1.bf16.msra.mxu0 0
        %1868 = vmatprep.subr.bf16.mxu0 0
        %1869 = vmatpush1.bf16.msra.mxu0 0
        %1870 = vmatprep.subr.bf16.mxu0 0
        %1871 = vmatpush1.bf16.msra.mxu0 0
        %1872 = vmatprep.subr.bf16.mxu0 0
        %1873 = vmatpush1.bf16.msra.mxu0 0
        %1874 = vmatprep.subr.bf16.mxu0 0
        %1875 = vmatpush1.bf16.msra.mxu0 0
        %1876 = vmatprep.subr.bf16.mxu0 0
        %1877 = vmatpush1.bf16.msra.mxu0 0
        %1878 = vmatprep.subr.bf16.mxu0 0
        %1879 = vmatpush1.bf16.msra.mxu0 %v1862
        %1880 = vmatprep.subr.bf16.mxu0 0
        %1881 = vmatpush2.bf16.msra.mxu0 0
        %1882 = vmatprep.subr.bf16.mxu0 0
        %1883 = vmatpush2.bf16.msra.mxu0 0
        %1884 = vmatprep.subr.bf16.mxu0 0
        %1885 = vmatpush2.bf16.msra.mxu0 0
        %1886 = vmatprep.subr.bf16.mxu0 0
        %1887 = vmatpush2.bf16.msra.mxu0 0
        %1888 = vmatprep.subr.bf16.mxu0 0
        %1889 = vmatpush2.bf16.msra.mxu0 0
        %1890 = vmatprep.subr.bf16.mxu0 0
        %1891 = vmatpush2.bf16.msra.mxu0 0
        %1892 = vmatprep.subr.bf16.mxu0 0
        %1893 = vmatpush2.bf16.msra.mxu0 0
        %1894 = vmatprep.subr.bf16.mxu0 0
        %1895 = vmatpush2.bf16.msra.mxu0 0
        %1896 = vmatprep.mubr.bf16.mxu0 0
        %1897 = vmatmul.mubr.bf16.gmra.mxu0 %v1859
        %v1898 = vpop.f32.mrf.mxu0
        %v1899 = vadd.f32 0.0, %v1898
        %v1900 = vpop.f32.mrf.mxu0
        %v1901 = vpop.f32.mrf.mxu0
        %v1902 = vadd.f32 0.0, %v1901
        %v1903 = vpop.f32.mrf.mxu0
        %1904 = vdwg.mxu0
        %v1905 = vadd.f32 %v1832, %v1899
        %v1906 = vadd.f32 %v1833, %v1902
        %v1907 = vld [vmem:[%s1776] sm:$0xe]
        %v1908 = vld [vmem:[%s761] sm:$0xf]
        %v1910 = vunpack.c.l.b16 %v1907
        %v1911 = vpack.c.b16 %v1842, %v1910
        %v1912 = vrot.slane %v1911, 1
        %v1913 = vrot.slane %v1845, 1
        %v1914 = vsel %vm383, %v1912, %v1913
        %v1916 = vsel %vm282, %v1914, 0
        %v1919 = vsel %vm286, %v1908, 0
        %1921 = vmatprep.subr.bf16.mxu0 0
        %1922 = vmatpush1.bf16.msra.mxu0 0
        %1923 = vmatprep.subr.bf16.mxu0 0
        %1924 = vmatpush1.bf16.msra.mxu0 0
        %1925 = vmatprep.subr.bf16.mxu0 0
        %1926 = vmatpush1.bf16.msra.mxu0 0
        %1927 = vmatprep.subr.bf16.mxu0 0
        %1928 = vmatpush1.bf16.msra.mxu0 0
        %1929 = vmatprep.subr.bf16.mxu0 0
        %1930 = vmatpush1.bf16.msra.mxu0 0
        %1931 = vmatprep.subr.bf16.mxu0 0
        %1932 = vmatpush1.bf16.msra.mxu0 0
        %1933 = vmatprep.subr.bf16.mxu0 0
        %1934 = vmatpush1.bf16.msra.mxu0 0
        %1935 = vmatprep.subr.bf16.mxu0 0
        %1936 = vmatpush1.bf16.msra.mxu0 %v1919
        %1937 = vmatprep.subr.bf16.mxu0 0
        %1938 = vmatpush2.bf16.msra.mxu0 0
        %1939 = vmatprep.subr.bf16.mxu0 0
        %1940 = vmatpush2.bf16.msra.mxu0 0
        %1941 = vmatprep.subr.bf16.mxu0 0
        %1942 = vmatpush2.bf16.msra.mxu0 0
        %1943 = vmatprep.subr.bf16.mxu0 0
        %1944 = vmatpush2.bf16.msra.mxu0 0
        %1945 = vmatprep.subr.bf16.mxu0 0
        %1946 = vmatpush2.bf16.msra.mxu0 0
        %1947 = vmatprep.subr.bf16.mxu0 0
        %1948 = vmatpush2.bf16.msra.mxu0 0
        %1949 = vmatprep.subr.bf16.mxu0 0
        %1950 = vmatpush2.bf16.msra.mxu0 0
        %1951 = vmatprep.subr.bf16.mxu0 0
        %1952 = vmatpush2.bf16.msra.mxu0 0
        %1953 = vmatprep.mubr.bf16.mxu0 0
        %1954 = vmatmul.mubr.bf16.gmra.mxu0 %v1916
        %v1955 = vpop.f32.mrf.mxu0
        %v1956 = vadd.f32 0.0, %v1955
        %v1957 = vpop.f32.mrf.mxu0
        %v1958 = vpop.f32.mrf.mxu0
        %v1959 = vadd.f32 0.0, %v1958
        %v1960 = vpop.f32.mrf.mxu0
        %1961 = vdwg.mxu0
        %v1962 = vadd.f32 %v1905, %v1956
        %v1963 = vadd.f32 %v1906, %v1959
        %v1964 = vadd.f32 %v1962, %v822
        %v1965 = vadd.f32 %v1963, %v822
        %v1966 = vmax.f32 %v1964, 0.0
        %v1967 = vmax.f32 %v1965, 0.0
        %v1968 = vadd.f32 %v1966, %v1967
        %v1969 = vrot.slane %v1968, 4
        %v1970 = vadd.f32 %v1968, %v1969
        %v1971 = vrot.slane %v1970, 2
        %v1972 = vadd.f32 %v1970, %v1971
        %v1973 = vrot.slane %v1972, 1
        %v1974 = vadd.f32 %v1972, %v1973
        %s1975 = sadd.s32 %s835, 2
        %p1976 = scmp.lt.s32.totalorder %s1975, 16
        %v1977 = vld [vmem:[#allocation2] sm:$0x1]
        %s1978 = scalar_select %p1976, 1, 0
        %v1979 = vstv %s1978
        %vm1980 = vcmp.eq.s32.totalorder %v1979, 1
        %v1981 = vsel %vm1980, %v1974, 0.0
        %v1982 = vadd.f32 %v1977, %v1981
        %1983 = vst [vmem:[#allocation2] sm:$0x1] %v1982
        %v1984 = vld [vmem:[%s1206] sm:$0xf]
        %v1985 = vld [vmem:[%s1206 + $0x4] sm:$0xf]
        %v1986 = vld [vmem:[%s1] sm:$0xf]
        %v1987 = vld [vmem:[%s1206 + $0x8] sm:$0x1]
        %v1988 = vld [vmem:[%s259] sm:$0xf]
        %v1992 = vunpack.c.l.b16 %v1984
        %v1993 = vunpack.c.l.b16 %v1985
        %v1994 = vunpack.c.l.b16 %v1987
        %v1995 = vpack.c.b16 %v1993, %v1992
        %v1996 = vpack.c.b16 %v1994, %v1994
        %v1998 = vshrl.u32 %v1995, 16
        %v2000 = vshll.u32 %v1995, 16
        %v2002 = vrot.slane %v2000, 1
        %v2003 = vor.u32 %v1998, %v2002
        %v2005 = vshll.u32 %v1996, 16
        %v2007 = vrot.slane %v2005, 1
        %v2008 = vsel %vm269, %v2003, %v2007
        %v2010 = vsel %vm282, %v2008, 0
        %v2013 = vsel %vm286, %v1988, 0
        %2015 = vmatprep.subr.bf16.mxu0 0
        %2016 = vmatpush1.bf16.msra.mxu0 0
        %2017 = vmatprep.subr.bf16.mxu0 0
        %2018 = vmatpush1.bf16.msra.mxu0 0
        %2019 = vmatprep.subr.bf16.mxu0 0
        %2020 = vmatpush1.bf16.msra.mxu0 0
        %2021 = vmatprep.subr.bf16.mxu0 0
        %2022 = vmatpush1.bf16.msra.mxu0 0
        %2023 = vmatprep.subr.bf16.mxu0 0
        %2024 = vmatpush1.bf16.msra.mxu0 0
        %2025 = vmatprep.subr.bf16.mxu0 0
        %2026 = vmatpush1.bf16.msra.mxu0 0
        %2027 = vmatprep.subr.bf16.mxu0 0
        %2028 = vmatpush1.bf16.msra.mxu0 0
        %2029 = vmatprep.subr.bf16.mxu0 0
        %2030 = vmatpush1.bf16.msra.mxu0 %v2013
        %2031 = vmatprep.subr.bf16.mxu0 0
        %2032 = vmatpush2.bf16.msra.mxu0 0
        %2033 = vmatprep.subr.bf16.mxu0 0
        %2034 = vmatpush2.bf16.msra.mxu0 0
        %2035 = vmatprep.subr.bf16.mxu0 0
        %2036 = vmatpush2.bf16.msra.mxu0 0
        %2037 = vmatprep.subr.bf16.mxu0 0
        %2038 = vmatpush2.bf16.msra.mxu0 0
        %2039 = vmatprep.subr.bf16.mxu0 0
        %2040 = vmatpush2.bf16.msra.mxu0 0
        %2041 = vmatprep.subr.bf16.mxu0 0
        %2042 = vmatpush2.bf16.msra.mxu0 0
        %2043 = vmatprep.subr.bf16.mxu0 0
        %2044 = vmatpush2.bf16.msra.mxu0 0
        %2045 = vmatprep.subr.bf16.mxu0 0
        %2046 = vmatpush2.bf16.msra.mxu0 0
        %2047 = vmatprep.mubr.bf16.mxu0 0
        %2048 = vmatmul.mubr.bf16.gmra.mxu0 %v2010
        %v2049 = vpop.f32.mrf.mxu0
        %v2050 = vadd.f32 0.0, %v2049
        %v2051 = vpop.f32.mrf.mxu0
        %v2052 = vpop.f32.mrf.mxu0
        %v2053 = vadd.f32 0.0, %v2052
        %v2054 = vpop.f32.mrf.mxu0
        %2055 = vdwg.mxu0
        %v2056 = vsel %vm282, %v1995, 0
        %v2059 = vsel %vm286, %v1986, 0
        %2061 = vmatprep.subr.bf16.mxu0 0
        %2062 = vmatpush1.bf16.msra.mxu0 0
        %2063 = vmatprep.subr.bf16.mxu0 0
        %2064 = vmatpush1.bf16.msra.mxu0 0
        %2065 = vmatprep.subr.bf16.mxu0 0
        %2066 = vmatpush1.bf16.msra.mxu0 0
        %2067 = vmatprep.subr.bf16.mxu0 0
        %2068 = vmatpush1.bf16.msra.mxu0 0
        %2069 = vmatprep.subr.bf16.mxu0 0
        %2070 = vmatpush1.bf16.msra.mxu0 0
        %2071 = vmatprep.subr.bf16.mxu0 0
        %2072 = vmatpush1.bf16.msra.mxu0 0
        %2073 = vmatprep.subr.bf16.mxu0 0
        %2074 = vmatpush1.bf16.msra.mxu0 0
        %2075 = vmatprep.subr.bf16.mxu0 0
        %2076 = vmatpush1.bf16.msra.mxu0 %v2059
        %2077 = vmatprep.subr.bf16.mxu0 0
        %2078 = vmatpush2.bf16.msra.mxu0 0
        %2079 = vmatprep.subr.bf16.mxu0 0
        %2080 = vmatpush2.bf16.msra.mxu0 0
        %2081 = vmatprep.subr.bf16.mxu0 0
        %2082 = vmatpush2.bf16.msra.mxu0 0
        %2083 = vmatprep.subr.bf16.mxu0 0
        %2084 = vmatpush2.bf16.msra.mxu0 0
        %2085 = vmatprep.subr.bf16.mxu0 0
        %2086 = vmatpush2.bf16.msra.mxu0 0
        %2087 = vmatprep.subr.bf16.mxu0 0
        %2088 = vmatpush2.bf16.msra.mxu0 0
        %2089 = vmatprep.subr.bf16.mxu0 0
        %2090 = vmatpush2.bf16.msra.mxu0 0
        %2091 = vmatprep.subr.bf16.mxu0 0
        %2092 = vmatpush2.bf16.msra.mxu0 0
        %2093 = vmatprep.mubr.bf16.mxu0 0
        %2094 = vmatmul.mubr.bf16.gmra.mxu0 %v2056
        %v2095 = vpop.f32.mrf.mxu0
        %v2096 = vadd.f32 %v2050, %v2095
        %v2097 = vpop.f32.mrf.mxu0
        %v2098 = vpop.f32.mrf.mxu0
        %v2099 = vadd.f32 %v2053, %v2098
        %v2100 = vpop.f32.mrf.mxu0
        %2101 = vdwg.mxu0
        %v2102 = vld [vmem:[%s1206] sm:$0xe]
        %v2103 = vld [vmem:[%s378] sm:$0xf]
        %v2105 = vunpack.c.l.b16 %v2102
        %v2106 = vpack.c.b16 %v1993, %v2105
        %v2107 = vrot.slane %v2106, 1
        %v2108 = vrot.slane %v1996, 1
        %v2109 = vsel %vm383, %v2107, %v2108
        %v2111 = vsel %vm282, %v2109, 0
        %v2114 = vsel %vm286, %v2103, 0
        %2116 = vmatprep.subr.bf16.mxu0 0
        %2117 = vmatpush1.bf16.msra.mxu0 0
        %2118 = vmatprep.subr.bf16.mxu0 0
        %2119 = vmatpush1.bf16.msra.mxu0 0
        %2120 = vmatprep.subr.bf16.mxu0 0
        %2121 = vmatpush1.bf16.msra.mxu0 0
        %2122 = vmatprep.subr.bf16.mxu0 0
        %2123 = vmatpush1.bf16.msra.mxu0 0
        %2124 = vmatprep.subr.bf16.mxu0 0
        %2125 = vmatpush1.bf16.msra.mxu0 0
        %2126 = vmatprep.subr.bf16.mxu0 0
        %2127 = vmatpush1.bf16.msra.mxu0 0
        %2128 = vmatprep.subr.bf16.mxu0 0
        %2129 = vmatpush1.bf16.msra.mxu0 0
        %2130 = vmatprep.subr.bf16.mxu0 0
        %2131 = vmatpush1.bf16.msra.mxu0 %v2114
        %2132 = vmatprep.subr.bf16.mxu0 0
        %2133 = vmatpush2.bf16.msra.mxu0 0
        %2134 = vmatprep.subr.bf16.mxu0 0
        %2135 = vmatpush2.bf16.msra.mxu0 0
        %2136 = vmatprep.subr.bf16.mxu0 0
        %2137 = vmatpush2.bf16.msra.mxu0 0
        %2138 = vmatprep.subr.bf16.mxu0 0
        %2139 = vmatpush2.bf16.msra.mxu0 0
        %2140 = vmatprep.subr.bf16.mxu0 0
        %2141 = vmatpush2.bf16.msra.mxu0 0
        %2142 = vmatprep.subr.bf16.mxu0 0
        %2143 = vmatpush2.bf16.msra.mxu0 0
        %2144 = vmatprep.subr.bf16.mxu0 0
        %2145 = vmatpush2.bf16.msra.mxu0 0
        %2146 = vmatprep.subr.bf16.mxu0 0
        %2147 = vmatpush2.bf16.msra.mxu0 0
        %2148 = vmatprep.mubr.bf16.mxu0 0
        %2149 = vmatmul.mubr.bf16.gmra.mxu0 %v2111
        %v2150 = vpop.f32.mrf.mxu0
        %v2151 = vadd.f32 0.0, %v2150
        %v2152 = vpop.f32.mrf.mxu0
        %v2153 = vpop.f32.mrf.mxu0
        %v2154 = vadd.f32 0.0, %v2153
        %v2155 = vpop.f32.mrf.mxu0
        %2156 = vdwg.mxu0
        %v2157 = vadd.f32 %v2096, %v2151
        %v2158 = vadd.f32 %v2099, %v2154
        %v2159 = vld [vmem:[%s1776] sm:$0xf]
        %v2160 = vld [vmem:[%s1776 + $0x4] sm:$0xf]
        %v2161 = vld [vmem:[%s439] sm:$0xf]
        %v2164 = vunpack.c.l.b16 %v2159
        %v2165 = vunpack.c.l.b16 %v2160
        %v2166 = vpack.c.b16 %v2165, %v2164
        %v2168 = vsel %vm282, %v2166, 0
        %v2171 = vsel %vm286, %v2161, 0
        %2173 = vmatprep.subr.bf16.mxu0 0
        %2174 = vmatpush1.bf16.msra.mxu0 0
        %2175 = vmatprep.subr.bf16.mxu0 0
        %2176 = vmatpush1.bf16.msra.mxu0 0
        %2177 = vmatprep.subr.bf16.mxu0 0
        %2178 = vmatpush1.bf16.msra.mxu0 0
        %2179 = vmatprep.subr.bf16.mxu0 0
        %2180 = vmatpush1.bf16.msra.mxu0 0
        %2181 = vmatprep.subr.bf16.mxu0 0
        %2182 = vmatpush1.bf16.msra.mxu0 0
        %2183 = vmatprep.subr.bf16.mxu0 0
        %2184 = vmatpush1.bf16.msra.mxu0 0
        %2185 = vmatprep.subr.bf16.mxu0 0
        %2186 = vmatpush1.bf16.msra.mxu0 0
        %2187 = vmatprep.subr.bf16.mxu0 0
        %2188 = vmatpush1.bf16.msra.mxu0 %v2171
        %2189 = vmatprep.subr.bf16.mxu0 0
        %2190 = vmatpush2.bf16.msra.mxu0 0
        %2191 = vmatprep.subr.bf16.mxu0 0
        %2192 = vmatpush2.bf16.msra.mxu0 0
        %2193 = vmatprep.subr.bf16.mxu0 0
        %2194 = vmatpush2.bf16.msra.mxu0 0
        %2195 = vmatprep.subr.bf16.mxu0 0
        %2196 = vmatpush2.bf16.msra.mxu0 0
        %2197 = vmatprep.subr.bf16.mxu0 0
        %2198 = vmatpush2.bf16.msra.mxu0 0
        %2199 = vmatprep.subr.bf16.mxu0 0
        %2200 = vmatpush2.bf16.msra.mxu0 0
        %2201 = vmatprep.subr.bf16.mxu0 0
        %2202 = vmatpush2.bf16.msra.mxu0 0
        %2203 = vmatprep.subr.bf16.mxu0 0
        %2204 = vmatpush2.bf16.msra.mxu0 0
        %2205 = vmatprep.mubr.bf16.mxu0 0
        %2206 = vmatmul.mubr.bf16.gmra.mxu0 %v2168
        %v2207 = vpop.f32.mrf.mxu0
        %v2208 = vadd.f32 0.0, %v2207
        %v2209 = vpop.f32.mrf.mxu0
        %v2210 = vpop.f32.mrf.mxu0
        %v2211 = vadd.f32 0.0, %v2210
        %v2212 = vpop.f32.mrf.mxu0
        %2213 = vdwg.mxu0
        %v2214 = vadd.f32 %v2157, %v2208
        %v2215 = vadd.f32 %v2158, %v2211
        %v2216 = vld [vmem:[%s1776] sm:$0xf]
        %v2217 = vld [vmem:[%s1776 + $0x4] sm:$0xf]
        %v2218 = vld [vmem:[%s1776 + $0x8] sm:$0x1]
        %v2219 = vld [vmem:[%s498] sm:$0xf]
        %v2223 = vunpack.c.l.b16 %v2216
        %v2224 = vunpack.c.l.b16 %v2217
        %v2225 = vunpack.c.l.b16 %v2218
        %v2226 = vpack.c.b16 %v2224, %v2223
        %v2227 = vpack.c.b16 %v2225, %v2225
        %v2229 = vshrl.u32 %v2226, 16
        %v2231 = vshll.u32 %v2226, 16
        %v2233 = vrot.slane %v2231, 1
        %v2234 = vor.u32 %v2229, %v2233
        %v2236 = vshll.u32 %v2227, 16
        %v2238 = vrot.slane %v2236, 1
        %v2239 = vsel %vm269, %v2234, %v2238
        %v2241 = vsel %vm282, %v2239, 0
        %v2244 = vsel %vm286, %v2219, 0
        %2246 = vmatprep.subr.bf16.mxu0 0
        %2247 = vmatpush1.bf16.msra.mxu0 0
        %2248 = vmatprep.subr.bf16.mxu0 0
        %2249 = vmatpush1.bf16.msra.mxu0 0
        %2250 = vmatprep.subr.bf16.mxu0 0
        %2251 = vmatpush1.bf16.msra.mxu0 0
        %2252 = vmatprep.subr.bf16.mxu0 0
        %2253 = vmatpush1.bf16.msra.mxu0 0
        %2254 = vmatprep.subr.bf16.mxu0 0
        %2255 = vmatpush1.bf16.msra.mxu0 0
        %2256 = vmatprep.subr.bf16.mxu0 0
        %2257 = vmatpush1.bf16.msra.mxu0 0
        %2258 = vmatprep.subr.bf16.mxu0 0
        %2259 = vmatpush1.bf16.msra.mxu0 0
        %2260 = vmatprep.subr.bf16.mxu0 0
        %2261 = vmatpush1.bf16.msra.mxu0 %v2244
        %2262 = vmatprep.subr.bf16.mxu0 0
        %2263 = vmatpush2.bf16.msra.mxu0 0
        %2264 = vmatprep.subr.bf16.mxu0 0
        %2265 = vmatpush2.bf16.msra.mxu0 0
        %2266 = vmatprep.subr.bf16.mxu0 0
        %2267 = vmatpush2.bf16.msra.mxu0 0
        %2268 = vmatprep.subr.bf16.mxu0 0
        %2269 = vmatpush2.bf16.msra.mxu0 0
        %2270 = vmatprep.subr.bf16.mxu0 0
        %2271 = vmatpush2.bf16.msra.mxu0 0
        %2272 = vmatprep.subr.bf16.mxu0 0
        %2273 = vmatpush2.bf16.msra.mxu0 0
        %2274 = vmatprep.subr.bf16.mxu0 0
        %2275 = vmatpush2.bf16.msra.mxu0 0
        %2276 = vmatprep.subr.bf16.mxu0 0
        %2277 = vmatpush2.bf16.msra.mxu0 0
        %2278 = vmatprep.mubr.bf16.mxu0 0
        %2279 = vmatmul.mubr.bf16.gmra.mxu0 %v2241
        %v2280 = vpop.f32.mrf.mxu0
        %v2281 = vadd.f32 0.0, %v2280
        %v2282 = vpop.f32.mrf.mxu0
        %v2283 = vpop.f32.mrf.mxu0
        %v2284 = vadd.f32 0.0, %v2283
        %v2285 = vpop.f32.mrf.mxu0
        %2286 = vdwg.mxu0
        %v2287 = vadd.f32 %v2214, %v2281
        %v2288 = vadd.f32 %v2215, %v2284
        %v2289 = vld [vmem:[%s1776] sm:$0xe]
        %v2290 = vld [vmem:[%s570] sm:$0xf]
        %v2292 = vunpack.c.l.b16 %v2289
        %v2293 = vpack.c.b16 %v2224, %v2292
        %v2294 = vrot.slane %v2293, 1
        %v2295 = vrot.slane %v2227, 1
        %v2296 = vsel %vm383, %v2294, %v2295
        %v2298 = vsel %vm282, %v2296, 0
        %v2301 = vsel %vm286, %v2290, 0
        %2303 = vmatprep.subr.bf16.mxu0 0
        %2304 = vmatpush1.bf16.msra.mxu0 0
        %2305 = vmatprep.subr.bf16.mxu0 0
        %2306 = vmatpush1.bf16.msra.mxu0 0
        %2307 = vmatprep.subr.bf16.mxu0 0
        %2308 = vmatpush1.bf16.msra.mxu0 0
        %2309 = vmatprep.subr.bf16.mxu0 0
        %2310 = vmatpush1.bf16.msra.mxu0 0
        %2311 = vmatprep.subr.bf16.mxu0 0
        %2312 = vmatpush1.bf16.msra.mxu0 0
        %2313 = vmatprep.subr.bf16.mxu0 0
        %2314 = vmatpush1.bf16.msra.mxu0 0
        %2315 = vmatprep.subr.bf16.mxu0 0
        %2316 = vmatpush1.bf16.msra.mxu0 0
        %2317 = vmatprep.subr.bf16.mxu0 0
        %2318 = vmatpush1.bf16.msra.mxu0 %v2301
        %2319 = vmatprep.subr.bf16.mxu0 0
        %2320 = vmatpush2.bf16.msra.mxu0 0
        %2321 = vmatprep.subr.bf16.mxu0 0
        %2322 = vmatpush2.bf16.msra.mxu0 0
        %2323 = vmatprep.subr.bf16.mxu0 0
        %2324 = vmatpush2.bf16.msra.mxu0 0
        %2325 = vmatprep.subr.bf16.mxu0 0
        %2326 = vmatpush2.bf16.msra.mxu0 0
        %2327 = vmatprep.subr.bf16.mxu0 0
        %2328 = vmatpush2.bf16.msra.mxu0 0
        %2329 = vmatprep.subr.bf16.mxu0 0
        %2330 = vmatpush2.bf16.msra.mxu0 0
        %2331 = vmatprep.subr.bf16.mxu0 0
        %2332 = vmatpush2.bf16.msra.mxu0 0
        %2333 = vmatprep.subr.bf16.mxu0 0
        %2334 = vmatpush2.bf16.msra.mxu0 0
        %2335 = vmatprep.mubr.bf16.mxu0 0
        %2336 = vmatmul.mubr.bf16.gmra.mxu0 %v2298
        %v2337 = vpop.f32.mrf.mxu0
        %v2338 = vadd.f32 0.0, %v2337
        %v2339 = vpop.f32.mrf.mxu0
        %v2340 = vpop.f32.mrf.mxu0
        %v2341 = vadd.f32 0.0, %v2340
        %v2342 = vpop.f32.mrf.mxu0
        %2343 = vdwg.mxu0
        %v2344 = vadd.f32 %v2287, %v2338
        %v2345 = vadd.f32 %v2288, %v2341
        %s2346 = scalar_lea.vmem %s247, 60
        %v2347 = vld [vmem:[%s2346] sm:$0xf]
        %v2348 = vld [vmem:[%s2346 + $0x4] sm:$0xf]
        %v2349 = vld [vmem:[%s630] sm:$0xf]
        %v2352 = vunpack.c.l.b16 %v2347
        %v2353 = vunpack.c.l.b16 %v2348
        %v2354 = vpack.c.b16 %v2353, %v2352
        %v2356 = vsel %vm282, %v2354, 0
        %v2359 = vsel %vm286, %v2349, 0
        %2361 = vmatprep.subr.bf16.mxu0 0
        %2362 = vmatpush1.bf16.msra.mxu0 0
        %2363 = vmatprep.subr.bf16.mxu0 0
        %2364 = vmatpush1.bf16.msra.mxu0 0
        %2365 = vmatprep.subr.bf16.mxu0 0
        %2366 = vmatpush1.bf16.msra.mxu0 0
        %2367 = vmatprep.subr.bf16.mxu0 0
        %2368 = vmatpush1.bf16.msra.mxu0 0
        %2369 = vmatprep.subr.bf16.mxu0 0
        %2370 = vmatpush1.bf16.msra.mxu0 0
        %2371 = vmatprep.subr.bf16.mxu0 0
        %2372 = vmatpush1.bf16.msra.mxu0 0
        %2373 = vmatprep.subr.bf16.mxu0 0
        %2374 = vmatpush1.bf16.msra.mxu0 0
        %2375 = vmatprep.subr.bf16.mxu0 0
        %2376 = vmatpush1.bf16.msra.mxu0 %v2359
        %2377 = vmatprep.subr.bf16.mxu0 0
        %2378 = vmatpush2.bf16.msra.mxu0 0
        %2379 = vmatprep.subr.bf16.mxu0 0
        %2380 = vmatpush2.bf16.msra.mxu0 0
        %2381 = vmatprep.subr.bf16.mxu0 0
        %2382 = vmatpush2.bf16.msra.mxu0 0
        %2383 = vmatprep.subr.bf16.mxu0 0
        %2384 = vmatpush2.bf16.msra.mxu0 0
        %2385 = vmatprep.subr.bf16.mxu0 0
        %2386 = vmatpush2.bf16.msra.mxu0 0
        %2387 = vmatprep.subr.bf16.mxu0 0
        %2388 = vmatpush2.bf16.msra.mxu0 0
        %2389 = vmatprep.subr.bf16.mxu0 0
        %2390 = vmatpush2.bf16.msra.mxu0 0
        %2391 = vmatprep.subr.bf16.mxu0 0
        %2392 = vmatpush2.bf16.msra.mxu0 0
        %2393 = vmatprep.mubr.bf16.mxu0 0
        %2394 = vmatmul.mubr.bf16.gmra.mxu0 %v2356
        %v2395 = vpop.f32.mrf.mxu0
        %v2396 = vadd.f32 0.0, %v2395
        %v2397 = vpop.f32.mrf.mxu0
        %v2398 = vpop.f32.mrf.mxu0
        %v2399 = vadd.f32 0.0, %v2398
        %v2400 = vpop.f32.mrf.mxu0
        %2401 = vdwg.mxu0
        %v2402 = vadd.f32 %v2344, %v2396
        %v2403 = vadd.f32 %v2345, %v2399
        %v2404 = vld [vmem:[%s2346] sm:$0xf]
        %v2405 = vld [vmem:[%s2346 + $0x4] sm:$0xf]
        %v2406 = vld [vmem:[%s2346 + $0x8] sm:$0x1]
        %v2407 = vld [vmem:[%s689] sm:$0xf]
        %v2411 = vunpack.c.l.b16 %v2404
        %v2412 = vunpack.c.l.b16 %v2405
        %v2413 = vunpack.c.l.b16 %v2406
        %v2414 = vpack.c.b16 %v2412, %v2411
        %v2415 = vpack.c.b16 %v2413, %v2413
        %v2417 = vshrl.u32 %v2414, 16
        %v2419 = vshll.u32 %v2414, 16
        %v2421 = vrot.slane %v2419, 1
        %v2422 = vor.u32 %v2417, %v2421
        %v2424 = vshll.u32 %v2415, 16
        %v2426 = vrot.slane %v2424, 1
        %v2427 = vsel %vm269, %v2422, %v2426
        %v2429 = vsel %vm282, %v2427, 0
        %v2432 = vsel %vm286, %v2407, 0
        %2434 = vmatprep.subr.bf16.mxu0 0
        %2435 = vmatpush1.bf16.msra.mxu0 0
        %2436 = vmatprep.subr.bf16.mxu0 0
        %2437 = vmatpush1.bf16.msra.mxu0 0
        %2438 = vmatprep.subr.bf16.mxu0 0
        %2439 = vmatpush1.bf16.msra.mxu0 0
        %2440 = vmatprep.subr.bf16.mxu0 0
        %2441 = vmatpush1.bf16.msra.mxu0 0
        %2442 = vmatprep.subr.bf16.mxu0 0
        %2443 = vmatpush1.bf16.msra.mxu0 0
        %2444 = vmatprep.subr.bf16.mxu0 0
        %2445 = vmatpush1.bf16.msra.mxu0 0
        %2446 = vmatprep.subr.bf16.mxu0 0
        %2447 = vmatpush1.bf16.msra.mxu0 0
        %2448 = vmatprep.subr.bf16.mxu0 0
        %2449 = vmatpush1.bf16.msra.mxu0 %v2432
        %2450 = vmatprep.subr.bf16.mxu0 0
        %2451 = vmatpush2.bf16.msra.mxu0 0
        %2452 = vmatprep.subr.bf16.mxu0 0
        %2453 = vmatpush2.bf16.msra.mxu0 0
        %2454 = vmatprep.subr.bf16.mxu0 0
        %2455 = vmatpush2.bf16.msra.mxu0 0
        %2456 = vmatprep.subr.bf16.mxu0 0
        %2457 = vmatpush2.bf16.msra.mxu0 0
        %2458 = vmatprep.subr.bf16.mxu0 0
        %2459 = vmatpush2.bf16.msra.mxu0 0
        %2460 = vmatprep.subr.bf16.mxu0 0
        %2461 = vmatpush2.bf16.msra.mxu0 0
        %2462 = vmatprep.subr.bf16.mxu0 0
        %2463 = vmatpush2.bf16.msra.mxu0 0
        %2464 = vmatprep.subr.bf16.mxu0 0
        %2465 = vmatpush2.bf16.msra.mxu0 0
        %2466 = vmatprep.mubr.bf16.mxu0 0
        %2467 = vmatmul.mubr.bf16.gmra.mxu0 %v2429
        %v2468 = vpop.f32.mrf.mxu0
        %v2469 = vadd.f32 0.0, %v2468
        %v2470 = vpop.f32.mrf.mxu0
        %v2471 = vpop.f32.mrf.mxu0
        %v2472 = vadd.f32 0.0, %v2471
        %v2473 = vpop.f32.mrf.mxu0
        %2474 = vdwg.mxu0
        %v2475 = vadd.f32 %v2402, %v2469
        %v2476 = vadd.f32 %v2403, %v2472
        %v2477 = vld [vmem:[%s2346] sm:$0xe]
        %v2478 = vld [vmem:[%s761] sm:$0xf]
        %v2480 = vunpack.c.l.b16 %v2477
        %v2481 = vpack.c.b16 %v2412, %v2480
        %v2482 = vrot.slane %v2481, 1
        %v2483 = vrot.slane %v2415, 1
        %v2484 = vsel %vm383, %v2482, %v2483
        %v2486 = vsel %vm282, %v2484, 0
        %v2489 = vsel %vm286, %v2478, 0
        %2491 = vmatprep.subr.bf16.mxu0 0
        %2492 = vmatpush1.bf16.msra.mxu0 0
        %2493 = vmatprep.subr.bf16.mxu0 0
        %2494 = vmatpush1.bf16.msra.mxu0 0
        %2495 = vmatprep.subr.bf16.mxu0 0
        %2496 = vmatpush1.bf16.msra.mxu0 0
        %2497 = vmatprep.subr.bf16.mxu0 0
        %2498 = vmatpush1.bf16.msra.mxu0 0
        %2499 = vmatprep.subr.bf16.mxu0 0
        %2500 = vmatpush1.bf16.msra.mxu0 0
        %2501 = vmatprep.subr.bf16.mxu0 0
        %2502 = vmatpush1.bf16.msra.mxu0 0
        %2503 = vmatprep.subr.bf16.mxu0 0
        %2504 = vmatpush1.bf16.msra.mxu0 0
        %2505 = vmatprep.subr.bf16.mxu0 0
        %2506 = vmatpush1.bf16.msra.mxu0 %v2489
        %2507 = vmatprep.subr.bf16.mxu0 0
        %2508 = vmatpush2.bf16.msra.mxu0 0
        %2509 = vmatprep.subr.bf16.mxu0 0
        %2510 = vmatpush2.bf16.msra.mxu0 0
        %2511 = vmatprep.subr.bf16.mxu0 0
        %2512 = vmatpush2.bf16.msra.mxu0 0
        %2513 = vmatprep.subr.bf16.mxu0 0
        %2514 = vmatpush2.bf16.msra.mxu0 0
        %2515 = vmatprep.subr.bf16.mxu0 0
        %2516 = vmatpush2.bf16.msra.mxu0 0
        %2517 = vmatprep.subr.bf16.mxu0 0
        %2518 = vmatpush2.bf16.msra.mxu0 0
        %2519 = vmatprep.subr.bf16.mxu0 0
        %2520 = vmatpush2.bf16.msra.mxu0 0
        %2521 = vmatprep.subr.bf16.mxu0 0
        %2522 = vmatpush2.bf16.msra.mxu0 0
        %2523 = vmatprep.mubr.bf16.mxu0 0
        %2524 = vmatmul.mubr.bf16.gmra.mxu0 %v2486
        %v2525 = vpop.f32.mrf.mxu0
        %v2526 = vadd.f32 0.0, %v2525
        %v2527 = vpop.f32.mrf.mxu0
        %v2528 = vpop.f32.mrf.mxu0
        %v2529 = vadd.f32 0.0, %v2528
        %v2530 = vpop.f32.mrf.mxu0
        %2531 = vdwg.mxu0
        %v2532 = vadd.f32 %v2475, %v2526
        %v2533 = vadd.f32 %v2476, %v2529
        %v2534 = vadd.f32 %v2532, %v822
        %v2535 = vadd.f32 %v2533, %v822
        %v2536 = vmax.f32 %v2534, 0.0
        %v2537 = vmax.f32 %v2535, 0.0
        %v2538 = vadd.f32 %v2536, %v2537
        %v2539 = vrot.slane %v2538, 4
        %v2540 = vadd.f32 %v2538, %v2539
        %v2541 = vrot.slane %v2540, 2
        %v2542 = vadd.f32 %v2540, %v2541
        %v2543 = vrot.slane %v2542, 1
        %v2544 = vadd.f32 %v2542, %v2543
        %s2545 = sadd.s32 %s835, 3
        %p2546 = scmp.lt.s32.totalorder %s2545, 16
        %v2547 = vld [vmem:[#allocation2] sm:$0x1]
        %s2548 = scalar_select %p2546, 1, 0
        %v2549 = vstv %s2548
        %vm2550 = vcmp.eq.s32.totalorder %v2549, 1
        %v2551 = vsel %vm2550, %v2544, 0.0
        %v2552 = vadd.f32 %v2547, %v2551
        %2553 = vst [vmem:[#allocation2] sm:$0x1] %v2552
        %v2554 = vld [vmem:[%s1776] sm:$0xf]
        %v2555 = vld [vmem:[%s1776 + $0x4] sm:$0xf]
        %v2556 = vld [vmem:[%s1] sm:$0xf]
        %v2557 = vld [vmem:[%s1776 + $0x8] sm:$0x1]
        %v2558 = vld [vmem:[%s259] sm:$0xf]
        %v2562 = vunpack.c.l.b16 %v2554
        %v2563 = vunpack.c.l.b16 %v2555
        %v2564 = vunpack.c.l.b16 %v2557
        %v2565 = vpack.c.b16 %v2563, %v2562
        %v2566 = vpack.c.b16 %v2564, %v2564
        %v2568 = vshrl.u32 %v2565, 16
        %v2570 = vshll.u32 %v2565, 16
        %v2572 = vrot.slane %v2570, 1
        %v2573 = vor.u32 %v2568, %v2572
        %v2575 = vshll.u32 %v2566, 16
        %v2577 = vrot.slane %v2575, 1
        %v2578 = vsel %vm269, %v2573, %v2577
        %v2580 = vsel %vm282, %v2578, 0
        %v2583 = vsel %vm286, %v2558, 0
        %2585 = vmatprep.subr.bf16.mxu0 0
        %2586 = vmatpush1.bf16.msra.mxu0 0
        %2587 = vmatprep.subr.bf16.mxu0 0
        %2588 = vmatpush1.bf16.msra.mxu0 0
        %2589 = vmatprep.subr.bf16.mxu0 0
        %2590 = vmatpush1.bf16.msra.mxu0 0
        %2591 = vmatprep.subr.bf16.mxu0 0
        %2592 = vmatpush1.bf16.msra.mxu0 0
        %2593 = vmatprep.subr.bf16.mxu0 0
        %2594 = vmatpush1.bf16.msra.mxu0 0
        %2595 = vmatprep.subr.bf16.mxu0 0
        %2596 = vmatpush1.bf16.msra.mxu0 0
        %2597 = vmatprep.subr.bf16.mxu0 0
        %2598 = vmatpush1.bf16.msra.mxu0 0
        %2599 = vmatprep.subr.bf16.mxu0 0
        %2600 = vmatpush1.bf16.msra.mxu0 %v2583
        %2601 = vmatprep.subr.bf16.mxu0 0
        %2602 = vmatpush2.bf16.msra.mxu0 0
        %2603 = vmatprep.subr.bf16.mxu0 0
        %2604 = vmatpush2.bf16.msra.mxu0 0
        %2605 = vmatprep.subr.bf16.mxu0 0
        %2606 = vmatpush2.bf16.msra.mxu0 0
        %2607 = vmatprep.subr.bf16.mxu0 0
        %2608 = vmatpush2.bf16.msra.mxu0 0
        %2609 = vmatprep.subr.bf16.mxu0 0
        %2610 = vmatpush2.bf16.msra.mxu0 0
        %2611 = vmatprep.subr.bf16.mxu0 0
        %2612 = vmatpush2.bf16.msra.mxu0 0
        %2613 = vmatprep.subr.bf16.mxu0 0
        %2614 = vmatpush2.bf16.msra.mxu0 0
        %2615 = vmatprep.subr.bf16.mxu0 0
        %2616 = vmatpush2.bf16.msra.mxu0 0
        %2617 = vmatprep.mubr.bf16.mxu0 0
        %2618 = vmatmul.mubr.bf16.gmra.mxu0 %v2580
        %v2619 = vpop.f32.mrf.mxu0
        %v2620 = vadd.f32 0.0, %v2619
        %v2621 = vpop.f32.mrf.mxu0
        %v2622 = vpop.f32.mrf.mxu0
        %v2623 = vadd.f32 0.0, %v2622
        %v2624 = vpop.f32.mrf.mxu0
        %2625 = vdwg.mxu0
        %v2626 = vsel %vm282, %v2565, 0
        %v2629 = vsel %vm286, %v2556, 0
        %2631 = vmatprep.subr.bf16.mxu0 0
        %2632 = vmatpush1.bf16.msra.mxu0 0
        %2633 = vmatprep.subr.bf16.mxu0 0
        %2634 = vmatpush1.bf16.msra.mxu0 0
        %2635 = vmatprep.subr.bf16.mxu0 0
        %2636 = vmatpush1.bf16.msra.mxu0 0
        %2637 = vmatprep.subr.bf16.mxu0 0
        %2638 = vmatpush1.bf16.msra.mxu0 0
        %2639 = vmatprep.subr.bf16.mxu0 0
        %2640 = vmatpush1.bf16.msra.mxu0 0
        %2641 = vmatprep.subr.bf16.mxu0 0
        %2642 = vmatpush1.bf16.msra.mxu0 0
        %2643 = vmatprep.subr.bf16.mxu0 0
        %2644 = vmatpush1.bf16.msra.mxu0 0
        %2645 = vmatprep.subr.bf16.mxu0 0
        %2646 = vmatpush1.bf16.msra.mxu0 %v2629
        %2647 = vmatprep.subr.bf16.mxu0 0
        %2648 = vmatpush2.bf16.msra.mxu0 0
        %2649 = vmatprep.subr.bf16.mxu0 0
        %2650 = vmatpush2.bf16.msra.mxu0 0
        %2651 = vmatprep.subr.bf16.mxu0 0
        %2652 = vmatpush2.bf16.msra.mxu0 0
        %2653 = vmatprep.subr.bf16.mxu0 0
        %2654 = vmatpush2.bf16.msra.mxu0 0
        %2655 = vmatprep.subr.bf16.mxu0 0
        %2656 = vmatpush2.bf16.msra.mxu0 0
        %2657 = vmatprep.subr.bf16.mxu0 0
        %2658 = vmatpush2.bf16.msra.mxu0 0
        %2659 = vmatprep.subr.bf16.mxu0 0
        %2660 = vmatpush2.bf16.msra.mxu0 0
        %2661 = vmatprep.subr.bf16.mxu0 0
        %2662 = vmatpush2.bf16.msra.mxu0 0
        %2663 = vmatprep.mubr.bf16.mxu0 0
        %2664 = vmatmul.mubr.bf16.gmra.mxu0 %v2626
        %v2665 = vpop.f32.mrf.mxu0
        %v2666 = vadd.f32 %v2620, %v2665
        %v2667 = vpop.f32.mrf.mxu0
        %v2668 = vpop.f32.mrf.mxu0
        %v2669 = vadd.f32 %v2623, %v2668
        %v2670 = vpop.f32.mrf.mxu0
        %2671 = vdwg.mxu0
        %v2672 = vld [vmem:[%s1776] sm:$0xe]
        %v2673 = vld [vmem:[%s378] sm:$0xf]
        %v2675 = vunpack.c.l.b16 %v2672
        %v2676 = vpack.c.b16 %v2563, %v2675
        %v2677 = vrot.slane %v2676, 1
        %v2678 = vrot.slane %v2566, 1
        %v2679 = vsel %vm383, %v2677, %v2678
        %v2681 = vsel %vm282, %v2679, 0
        %v2684 = vsel %vm286, %v2673, 0
        %2686 = vmatprep.subr.bf16.mxu0 0
        %2687 = vmatpush1.bf16.msra.mxu0 0
        %2688 = vmatprep.subr.bf16.mxu0 0
        %2689 = vmatpush1.bf16.msra.mxu0 0
        %2690 = vmatprep.subr.bf16.mxu0 0
        %2691 = vmatpush1.bf16.msra.mxu0 0
        %2692 = vmatprep.subr.bf16.mxu0 0
        %2693 = vmatpush1.bf16.msra.mxu0 0
        %2694 = vmatprep.subr.bf16.mxu0 0
        %2695 = vmatpush1.bf16.msra.mxu0 0
        %2696 = vmatprep.subr.bf16.mxu0 0
        %2697 = vmatpush1.bf16.msra.mxu0 0
        %2698 = vmatprep.subr.bf16.mxu0 0
        %2699 = vmatpush1.bf16.msra.mxu0 0
        %2700 = vmatprep.subr.bf16.mxu0 0
        %2701 = vmatpush1.bf16.msra.mxu0 %v2684
        %2702 = vmatprep.subr.bf16.mxu0 0
        %2703 = vmatpush2.bf16.msra.mxu0 0
        %2704 = vmatprep.subr.bf16.mxu0 0
        %2705 = vmatpush2.bf16.msra.mxu0 0
        %2706 = vmatprep.subr.bf16.mxu0 0
        %2707 = vmatpush2.bf16.msra.mxu0 0
        %2708 = vmatprep.subr.bf16.mxu0 0
        %2709 = vmatpush2.bf16.msra.mxu0 0
        %2710 = vmatprep.subr.bf16.mxu0 0
        %2711 = vmatpush2.bf16.msra.mxu0 0
        %2712 = vmatprep.subr.bf16.mxu0 0
        %2713 = vmatpush2.bf16.msra.mxu0 0
        %2714 = vmatprep.subr.bf16.mxu0 0
        %2715 = vmatpush2.bf16.msra.mxu0 0
        %2716 = vmatprep.subr.bf16.mxu0 0
        %2717 = vmatpush2.bf16.msra.mxu0 0
        %2718 = vmatprep.mubr.bf16.mxu0 0
        %2719 = vmatmul.mubr.bf16.gmra.mxu0 %v2681
        %v2720 = vpop.f32.mrf.mxu0
        %v2721 = vadd.f32 0.0, %v2720
        %v2722 = vpop.f32.mrf.mxu0
        %v2723 = vpop.f32.mrf.mxu0
        %v2724 = vadd.f32 0.0, %v2723
        %v2725 = vpop.f32.mrf.mxu0
        %2726 = vdwg.mxu0
        %v2727 = vadd.f32 %v2666, %v2721
        %v2728 = vadd.f32 %v2669, %v2724
        %v2729 = vld [vmem:[%s2346] sm:$0xf]
        %v2730 = vld [vmem:[%s2346 + $0x4] sm:$0xf]
        %v2731 = vld [vmem:[%s439] sm:$0xf]
        %v2734 = vunpack.c.l.b16 %v2729
        %v2735 = vunpack.c.l.b16 %v2730
        %v2736 = vpack.c.b16 %v2735, %v2734
        %v2738 = vsel %vm282, %v2736, 0
        %v2741 = vsel %vm286, %v2731, 0
        %2743 = vmatprep.subr.bf16.mxu0 0
        %2744 = vmatpush1.bf16.msra.mxu0 0
        %2745 = vmatprep.subr.bf16.mxu0 0
        %2746 = vmatpush1.bf16.msra.mxu0 0
        %2747 = vmatprep.subr.bf16.mxu0 0
        %2748 = vmatpush1.bf16.msra.mxu0 0
        %2749 = vmatprep.subr.bf16.mxu0 0
        %2750 = vmatpush1.bf16.msra.mxu0 0
        %2751 = vmatprep.subr.bf16.mxu0 0
        %2752 = vmatpush1.bf16.msra.mxu0 0
        %2753 = vmatprep.subr.bf16.mxu0 0
        %2754 = vmatpush1.bf16.msra.mxu0 0
        %2755 = vmatprep.subr.bf16.mxu0 0
        %2756 = vmatpush1.bf16.msra.mxu0 0
        %2757 = vmatprep.subr.bf16.mxu0 0
        %2758 = vmatpush1.bf16.msra.mxu0 %v2741
        %2759 = vmatprep.subr.bf16.mxu0 0
        %2760 = vmatpush2.bf16.msra.mxu0 0
        %2761 = vmatprep.subr.bf16.mxu0 0
        %2762 = vmatpush2.bf16.msra.mxu0 0
        %2763 = vmatprep.subr.bf16.mxu0 0
        %2764 = vmatpush2.bf16.msra.mxu0 0
        %2765 = vmatprep.subr.bf16.mxu0 0
        %2766 = vmatpush2.bf16.msra.mxu0 0
        %2767 = vmatprep.subr.bf16.mxu0 0
        %2768 = vmatpush2.bf16.msra.mxu0 0
        %2769 = vmatprep.subr.bf16.mxu0 0
        %2770 = vmatpush2.bf16.msra.mxu0 0
        %2771 = vmatprep.subr.bf16.mxu0 0
        %2772 = vmatpush2.bf16.msra.mxu0 0
        %2773 = vmatprep.subr.bf16.mxu0 0
        %2774 = vmatpush2.bf16.msra.mxu0 0
        %2775 = vmatprep.mubr.bf16.mxu0 0
        %2776 = vmatmul.mubr.bf16.gmra.mxu0 %v2738
        %v2777 = vpop.f32.mrf.mxu0
        %v2778 = vadd.f32 0.0, %v2777
        %v2779 = vpop.f32.mrf.mxu0
        %v2780 = vpop.f32.mrf.mxu0
        %v2781 = vadd.f32 0.0, %v2780
        %v2782 = vpop.f32.mrf.mxu0
        %2783 = vdwg.mxu0
        %v2784 = vadd.f32 %v2727, %v2778
        %v2785 = vadd.f32 %v2728, %v2781
        %v2786 = vld [vmem:[%s2346] sm:$0xf]
        %v2787 = vld [vmem:[%s2346 + $0x4] sm:$0xf]
        %v2788 = vld [vmem:[%s2346 + $0x8] sm:$0x1]
        %v2789 = vld [vmem:[%s498] sm:$0xf]
        %v2793 = vunpack.c.l.b16 %v2786
        %v2794 = vunpack.c.l.b16 %v2787
        %v2795 = vunpack.c.l.b16 %v2788
        %v2796 = vpack.c.b16 %v2794, %v2793
        %v2797 = vpack.c.b16 %v2795, %v2795
        %v2799 = vshrl.u32 %v2796, 16
        %v2801 = vshll.u32 %v2796, 16
        %v2803 = vrot.slane %v2801, 1
        %v2804 = vor.u32 %v2799, %v2803
        %v2806 = vshll.u32 %v2797, 16
        %v2808 = vrot.slane %v2806, 1
        %v2809 = vsel %vm269, %v2804, %v2808
        %v2811 = vsel %vm282, %v2809, 0
        %v2814 = vsel %vm286, %v2789, 0
        %2816 = vmatprep.subr.bf16.mxu0 0
        %2817 = vmatpush1.bf16.msra.mxu0 0
        %2818 = vmatprep.subr.bf16.mxu0 0
        %2819 = vmatpush1.bf16.msra.mxu0 0
        %2820 = vmatprep.subr.bf16.mxu0 0
        %2821 = vmatpush1.bf16.msra.mxu0 0
        %2822 = vmatprep.subr.bf16.mxu0 0
        %2823 = vmatpush1.bf16.msra.mxu0 0
        %2824 = vmatprep.subr.bf16.mxu0 0
        %2825 = vmatpush1.bf16.msra.mxu0 0
        %2826 = vmatprep.subr.bf16.mxu0 0
        %2827 = vmatpush1.bf16.msra.mxu0 0
        %2828 = vmatprep.subr.bf16.mxu0 0
        %2829 = vmatpush1.bf16.msra.mxu0 0
        %2830 = vmatprep.subr.bf16.mxu0 0
        %2831 = vmatpush1.bf16.msra.mxu0 %v2814
        %2832 = vmatprep.subr.bf16.mxu0 0
        %2833 = vmatpush2.bf16.msra.mxu0 0
        %2834 = vmatprep.subr.bf16.mxu0 0
        %2835 = vmatpush2.bf16.msra.mxu0 0
        %2836 = vmatprep.subr.bf16.mxu0 0
        %2837 = vmatpush2.bf16.msra.mxu0 0
        %2838 = vmatprep.subr.bf16.mxu0 0
        %2839 = vmatpush2.bf16.msra.mxu0 0
        %2840 = vmatprep.subr.bf16.mxu0 0
        %2841 = vmatpush2.bf16.msra.mxu0 0
        %2842 = vmatprep.subr.bf16.mxu0 0
        %2843 = vmatpush2.bf16.msra.mxu0 0
        %2844 = vmatprep.subr.bf16.mxu0 0
        %2845 = vmatpush2.bf16.msra.mxu0 0
        %2846 = vmatprep.subr.bf16.mxu0 0
        %2847 = vmatpush2.bf16.msra.mxu0 0
        %2848 = vmatprep.mubr.bf16.mxu0 0
        %2849 = vmatmul.mubr.bf16.gmra.mxu0 %v2811
        %v2850 = vpop.f32.mrf.mxu0
        %v2851 = vadd.f32 0.0, %v2850
        %v2852 = vpop.f32.mrf.mxu0
        %v2853 = vpop.f32.mrf.mxu0
        %v2854 = vadd.f32 0.0, %v2853
        %v2855 = vpop.f32.mrf.mxu0
        %2856 = vdwg.mxu0
        %v2857 = vadd.f32 %v2784, %v2851
        %v2858 = vadd.f32 %v2785, %v2854
        %v2859 = vld [vmem:[%s2346] sm:$0xe]
        %v2860 = vld [vmem:[%s570] sm:$0xf]
        %v2862 = vunpack.c.l.b16 %v2859
        %v2863 = vpack.c.b16 %v2794, %v2862
        %v2864 = vrot.slane %v2863, 1
        %v2865 = vrot.slane %v2797, 1
        %v2866 = vsel %vm383, %v2864, %v2865
        %v2868 = vsel %vm282, %v2866, 0
        %v2871 = vsel %vm286, %v2860, 0
        %2873 = vmatprep.subr.bf16.mxu0 0
        %2874 = vmatpush1.bf16.msra.mxu0 0
        %2875 = vmatprep.subr.bf16.mxu0 0
        %2876 = vmatpush1.bf16.msra.mxu0 0
        %2877 = vmatprep.subr.bf16.mxu0 0
        %2878 = vmatpush1.bf16.msra.mxu0 0
        %2879 = vmatprep.subr.bf16.mxu0 0
        %2880 = vmatpush1.bf16.msra.mxu0 0
        %2881 = vmatprep.subr.bf16.mxu0 0
        %2882 = vmatpush1.bf16.msra.mxu0 0
        %2883 = vmatprep.subr.bf16.mxu0 0
        %2884 = vmatpush1.bf16.msra.mxu0 0
        %2885 = vmatprep.subr.bf16.mxu0 0
        %2886 = vmatpush1.bf16.msra.mxu0 0
        %2887 = vmatprep.subr.bf16.mxu0 0
        %2888 = vmatpush1.bf16.msra.mxu0 %v2871
        %2889 = vmatprep.subr.bf16.mxu0 0
        %2890 = vmatpush2.bf16.msra.mxu0 0
        %2891 = vmatprep.subr.bf16.mxu0 0
        %2892 = vmatpush2.bf16.msra.mxu0 0
        %2893 = vmatprep.subr.bf16.mxu0 0
        %2894 = vmatpush2.bf16.msra.mxu0 0
        %2895 = vmatprep.subr.bf16.mxu0 0
        %2896 = vmatpush2.bf16.msra.mxu0 0
        %2897 = vmatprep.subr.bf16.mxu0 0
        %2898 = vmatpush2.bf16.msra.mxu0 0
        %2899 = vmatprep.subr.bf16.mxu0 0
        %2900 = vmatpush2.bf16.msra.mxu0 0
        %2901 = vmatprep.subr.bf16.mxu0 0
        %2902 = vmatpush2.bf16.msra.mxu0 0
        %2903 = vmatprep.subr.bf16.mxu0 0
        %2904 = vmatpush2.bf16.msra.mxu0 0
        %2905 = vmatprep.mubr.bf16.mxu0 0
        %2906 = vmatmul.mubr.bf16.gmra.mxu0 %v2868
        %v2907 = vpop.f32.mrf.mxu0
        %v2908 = vadd.f32 0.0, %v2907
        %v2909 = vpop.f32.mrf.mxu0
        %v2910 = vpop.f32.mrf.mxu0
        %v2911 = vadd.f32 0.0, %v2910
        %v2912 = vpop.f32.mrf.mxu0
        %2913 = vdwg.mxu0
        %v2914 = vadd.f32 %v2857, %v2908
        %v2915 = vadd.f32 %v2858, %v2911
        %s2916 = scalar_lea.vmem %s247, 72
        %v2917 = vld [vmem:[%s2916] sm:$0xf]
        %v2918 = vld [vmem:[%s2916 + $0x4] sm:$0xf]
        %v2919 = vld [vmem:[%s630] sm:$0xf]
        %v2922 = vunpack.c.l.b16 %v2917
        %v2923 = vunpack.c.l.b16 %v2918
        %v2924 = vpack.c.b16 %v2923, %v2922
        %v2926 = vsel %vm282, %v2924, 0
        %v2929 = vsel %vm286, %v2919, 0
        %2931 = vmatprep.subr.bf16.mxu0 0
        %2932 = vmatpush1.bf16.msra.mxu0 0
        %2933 = vmatprep.subr.bf16.mxu0 0
        %2934 = vmatpush1.bf16.msra.mxu0 0
        %2935 = vmatprep.subr.bf16.mxu0 0
        %2936 = vmatpush1.bf16.msra.mxu0 0
        %2937 = vmatprep.subr.bf16.mxu0 0
        %2938 = vmatpush1.bf16.msra.mxu0 0
        %2939 = vmatprep.subr.bf16.mxu0 0
        %2940 = vmatpush1.bf16.msra.mxu0 0
        %2941 = vmatprep.subr.bf16.mxu0 0
        %2942 = vmatpush1.bf16.msra.mxu0 0
        %2943 = vmatprep.subr.bf16.mxu0 0
        %2944 = vmatpush1.bf16.msra.mxu0 0
        %2945 = vmatprep.subr.bf16.mxu0 0
        %2946 = vmatpush1.bf16.msra.mxu0 %v2929
        %2947 = vmatprep.subr.bf16.mxu0 0
        %2948 = vmatpush2.bf16.msra.mxu0 0
        %2949 = vmatprep.subr.bf16.mxu0 0
        %2950 = vmatpush2.bf16.msra.mxu0 0
        %2951 = vmatprep.subr.bf16.mxu0 0
        %2952 = vmatpush2.bf16.msra.mxu0 0
        %2953 = vmatprep.subr.bf16.mxu0 0
        %2954 = vmatpush2.bf16.msra.mxu0 0
        %2955 = vmatprep.subr.bf16.mxu0 0
        %2956 = vmatpush2.bf16.msra.mxu0 0
        %2957 = vmatprep.subr.bf16.mxu0 0
        %2958 = vmatpush2.bf16.msra.mxu0 0
        %2959 = vmatprep.subr.bf16.mxu0 0
        %2960 = vmatpush2.bf16.msra.mxu0 0
        %2961 = vmatprep.subr.bf16.mxu0 0
        %2962 = vmatpush2.bf16.msra.mxu0 0
        %2963 = vmatprep.mubr.bf16.mxu0 0
        %2964 = vmatmul.mubr.bf16.gmra.mxu0 %v2926
        %v2965 = vpop.f32.mrf.mxu0
        %v2966 = vadd.f32 0.0, %v2965
        %v2967 = vpop.f32.mrf.mxu0
        %v2968 = vpop.f32.mrf.mxu0
        %v2969 = vadd.f32 0.0, %v2968
        %v2970 = vpop.f32.mrf.mxu0
        %2971 = vdwg.mxu0
        %v2972 = vadd.f32 %v2914, %v2966
        %v2973 = vadd.f32 %v2915, %v2969
        %v2974 = vld [vmem:[%s2916] sm:$0xf]
        %v2975 = vld [vmem:[%s2916 + $0x4] sm:$0xf]
        %v2976 = vld [vmem:[%s2916 + $0x8] sm:$0x1]
        %v2977 = vld [vmem:[%s689] sm:$0xf]
        %v2981 = vunpack.c.l.b16 %v2974
        %v2982 = vunpack.c.l.b16 %v2975
        %v2983 = vunpack.c.l.b16 %v2976
        %v2984 = vpack.c.b16 %v2982, %v2981
        %v2985 = vpack.c.b16 %v2983, %v2983
        %v2987 = vshrl.u32 %v2984, 16
        %v2989 = vshll.u32 %v2984, 16
        %v2991 = vrot.slane %v2989, 1
        %v2992 = vor.u32 %v2987, %v2991
        %v2994 = vshll.u32 %v2985, 16
        %v2996 = vrot.slane %v2994, 1
        %v2997 = vsel %vm269, %v2992, %v2996
        %v2999 = vsel %vm282, %v2997, 0
        %v3002 = vsel %vm286, %v2977, 0
        %3004 = vmatprep.subr.bf16.mxu0 0
        %3005 = vmatpush1.bf16.msra.mxu0 0
        %3006 = vmatprep.subr.bf16.mxu0 0
        %3007 = vmatpush1.bf16.msra.mxu0 0
        %3008 = vmatprep.subr.bf16.mxu0 0
        %3009 = vmatpush1.bf16.msra.mxu0 0
        %3010 = vmatprep.subr.bf16.mxu0 0
        %3011 = vmatpush1.bf16.msra.mxu0 0
        %3012 = vmatprep.subr.bf16.mxu0 0
        %3013 = vmatpush1.bf16.msra.mxu0 0
        %3014 = vmatprep.subr.bf16.mxu0 0
        %3015 = vmatpush1.bf16.msra.mxu0 0
        %3016 = vmatprep.subr.bf16.mxu0 0
        %3017 = vmatpush1.bf16.msra.mxu0 0
        %3018 = vmatprep.subr.bf16.mxu0 0
        %3019 = vmatpush1.bf16.msra.mxu0 %v3002
        %3020 = vmatprep.subr.bf16.mxu0 0
        %3021 = vmatpush2.bf16.msra.mxu0 0
        %3022 = vmatprep.subr.bf16.mxu0 0
        %3023 = vmatpush2.bf16.msra.mxu0 0
        %3024 = vmatprep.subr.bf16.mxu0 0
        %3025 = vmatpush2.bf16.msra.mxu0 0
        %3026 = vmatprep.subr.bf16.mxu0 0
        %3027 = vmatpush2.bf16.msra.mxu0 0
        %3028 = vmatprep.subr.bf16.mxu0 0
        %3029 = vmatpush2.bf16.msra.mxu0 0
        %3030 = vmatprep.subr.bf16.mxu0 0
        %3031 = vmatpush2.bf16.msra.mxu0 0
        %3032 = vmatprep.subr.bf16.mxu0 0
        %3033 = vmatpush2.bf16.msra.mxu0 0
        %3034 = vmatprep.subr.bf16.mxu0 0
        %3035 = vmatpush2.bf16.msra.mxu0 0
        %3036 = vmatprep.mubr.bf16.mxu0 0
        %3037 = vmatmul.mubr.bf16.gmra.mxu0 %v2999
        %v3038 = vpop.f32.mrf.mxu0
        %v3039 = vadd.f32 0.0, %v3038
        %v3040 = vpop.f32.mrf.mxu0
        %v3041 = vpop.f32.mrf.mxu0
        %v3042 = vadd.f32 0.0, %v3041
        %v3043 = vpop.f32.mrf.mxu0
        %3044 = vdwg.mxu0
        %v3045 = vadd.f32 %v2972, %v3039
        %v3046 = vadd.f32 %v2973, %v3042
        %v3047 = vld [vmem:[%s2916] sm:$0xe]
        %v3048 = vld [vmem:[%s761] sm:$0xf]
        %v3050 = vunpack.c.l.b16 %v3047
        %v3051 = vpack.c.b16 %v2982, %v3050
        %v3052 = vrot.slane %v3051, 1
        %v3053 = vrot.slane %v2985, 1
        %v3054 = vsel %vm383, %v3052, %v3053
        %v3056 = vsel %vm282, %v3054, 0
        %v3059 = vsel %vm286, %v3048, 0
        %3061 = vmatprep.subr.bf16.mxu0 0
        %3062 = vmatpush1.bf16.msra.mxu0 0
        %3063 = vmatprep.subr.bf16.mxu0 0
        %3064 = vmatpush1.bf16.msra.mxu0 0
        %3065 = vmatprep.subr.bf16.mxu0 0
        %3066 = vmatpush1.bf16.msra.mxu0 0
        %3067 = vmatprep.subr.bf16.mxu0 0
        %3068 = vmatpush1.bf16.msra.mxu0 0
        %3069 = vmatprep.subr.bf16.mxu0 0
        %3070 = vmatpush1.bf16.msra.mxu0 0
        %3071 = vmatprep.subr.bf16.mxu0 0
        %3072 = vmatpush1.bf16.msra.mxu0 0
        %3073 = vmatprep.subr.bf16.mxu0 0
        %3074 = vmatpush1.bf16.msra.mxu0 0
        %3075 = vmatprep.subr.bf16.mxu0 0
        %3076 = vmatpush1.bf16.msra.mxu0 %v3059
        %3077 = vmatprep.subr.bf16.mxu0 0
        %3078 = vmatpush2.bf16.msra.mxu0 0
        %3079 = vmatprep.subr.bf16.mxu0 0
        %3080 = vmatpush2.bf16.msra.mxu0 0
        %3081 = vmatprep.subr.bf16.mxu0 0
        %3082 = vmatpush2.bf16.msra.mxu0 0
        %3083 = vmatprep.subr.bf16.mxu0 0
        %3084 = vmatpush2.bf16.msra.mxu0 0
        %3085 = vmatprep.subr.bf16.mxu0 0
        %3086 = vmatpush2.bf16.msra.mxu0 0
        %3087 = vmatprep.subr.bf16.mxu0 0
        %3088 = vmatpush2.bf16.msra.mxu0 0
        %3089 = vmatprep.subr.bf16.mxu0 0
        %3090 = vmatpush2.bf16.msra.mxu0 0
        %3091 = vmatprep.subr.bf16.mxu0 0
        %3092 = vmatpush2.bf16.msra.mxu0 0
        %3093 = vmatprep.mubr.bf16.mxu0 0
        %3094 = vmatmul.mubr.bf16.gmra.mxu0 %v3056
        %v3095 = vpop.f32.mrf.mxu0
        %v3096 = vadd.f32 0.0, %v3095
        %v3097 = vpop.f32.mrf.mxu0
        %v3098 = vpop.f32.mrf.mxu0
        %v3099 = vadd.f32 0.0, %v3098
        %v3100 = vpop.f32.mrf.mxu0
        %3101 = vdwg.mxu0
        %v3102 = vadd.f32 %v3045, %v3096
        %v3103 = vadd.f32 %v3046, %v3099
        %v3104 = vadd.f32 %v3102, %v822
        %v3105 = vadd.f32 %v3103, %v822
        %v3106 = vmax.f32 %v3104, 0.0
        %v3107 = vmax.f32 %v3105, 0.0
        %v3108 = vadd.f32 %v3106, %v3107
        %v3109 = vrot.slane %v3108, 4
        %v3110 = vadd.f32 %v3108, %v3109
        %v3111 = vrot.slane %v3110, 2
        %v3112 = vadd.f32 %v3110, %v3111
        %v3113 = vrot.slane %v3112, 1
        %v3114 = vadd.f32 %v3112, %v3113
        %s3115 = sadd.s32 %s835, 4
        %p3116 = scmp.lt.s32.totalorder %s3115, 16
        %v3117 = vld [vmem:[#allocation2] sm:$0x1]
        %s3118 = scalar_select %p3116, 1, 0
        %v3119 = vstv %s3118
        %vm3120 = vcmp.eq.s32.totalorder %v3119, 1
        %v3121 = vsel %vm3120, %v3114, 0.0
        %v3122 = vadd.f32 %v3117, %v3121
        %3123 = vst [vmem:[#allocation2] sm:$0x1] %v3122
        %v3124 = vld [vmem:[%s2346] sm:$0xf]
        %v3125 = vld [vmem:[%s2346 + $0x4] sm:$0xf]
        %v3126 = vld [vmem:[%s1] sm:$0xf]
        %v3127 = vld [vmem:[%s2346 + $0x8] sm:$0x1]
        %v3128 = vld [vmem:[%s259] sm:$0xf]
        %v3132 = vunpack.c.l.b16 %v3124
        %v3133 = vunpack.c.l.b16 %v3125
        %v3134 = vunpack.c.l.b16 %v3127
        %v3135 = vpack.c.b16 %v3133, %v3132
        %v3136 = vpack.c.b16 %v3134, %v3134
        %v3138 = vshrl.u32 %v3135, 16
        %v3140 = vshll.u32 %v3135, 16
        %v3142 = vrot.slane %v3140, 1
        %v3143 = vor.u32 %v3138, %v3142
        %v3145 = vshll.u32 %v3136, 16
        %v3147 = vrot.slane %v3145, 1
        %v3148 = vsel %vm269, %v3143, %v3147
        %v3150 = vsel %vm282, %v3148, 0
        %v3153 = vsel %vm286, %v3128, 0
        %3155 = vmatprep.subr.bf16.mxu0 0
        %3156 = vmatpush1.bf16.msra.mxu0 0
        %3157 = vmatprep.subr.bf16.mxu0 0
        %3158 = vmatpush1.bf16.msra.mxu0 0
        %3159 = vmatprep.subr.bf16.mxu0 0
        %3160 = vmatpush1.bf16.msra.mxu0 0
        %3161 = vmatprep.subr.bf16.mxu0 0
        %3162 = vmatpush1.bf16.msra.mxu0 0
        %3163 = vmatprep.subr.bf16.mxu0 0
        %3164 = vmatpush1.bf16.msra.mxu0 0
        %3165 = vmatprep.subr.bf16.mxu0 0
        %3166 = vmatpush1.bf16.msra.mxu0 0
        %3167 = vmatprep.subr.bf16.mxu0 0
        %3168 = vmatpush1.bf16.msra.mxu0 0
        %3169 = vmatprep.subr.bf16.mxu0 0
        %3170 = vmatpush1.bf16.msra.mxu0 %v3153
        %3171 = vmatprep.subr.bf16.mxu0 0
        %3172 = vmatpush2.bf16.msra.mxu0 0
        %3173 = vmatprep.subr.bf16.mxu0 0
        %3174 = vmatpush2.bf16.msra.mxu0 0
        %3175 = vmatprep.subr.bf16.mxu0 0
        %3176 = vmatpush2.bf16.msra.mxu0 0
        %3177 = vmatprep.subr.bf16.mxu0 0
        %3178 = vmatpush2.bf16.msra.mxu0 0
        %3179 = vmatprep.subr.bf16.mxu0 0
        %3180 = vmatpush2.bf16.msra.mxu0 0
        %3181 = vmatprep.subr.bf16.mxu0 0
        %3182 = vmatpush2.bf16.msra.mxu0 0
        %3183 = vmatprep.subr.bf16.mxu0 0
        %3184 = vmatpush2.bf16.msra.mxu0 0
        %3185 = vmatprep.subr.bf16.mxu0 0
        %3186 = vmatpush2.bf16.msra.mxu0 0
        %3187 = vmatprep.mubr.bf16.mxu0 0
        %3188 = vmatmul.mubr.bf16.gmra.mxu0 %v3150
        %v3189 = vpop.f32.mrf.mxu0
        %v3190 = vadd.f32 0.0, %v3189
        %v3191 = vpop.f32.mrf.mxu0
        %v3192 = vpop.f32.mrf.mxu0
        %v3193 = vadd.f32 0.0, %v3192
        %v3194 = vpop.f32.mrf.mxu0
        %3195 = vdwg.mxu0
        %v3196 = vsel %vm282, %v3135, 0
        %v3199 = vsel %vm286, %v3126, 0
        %3201 = vmatprep.subr.bf16.mxu0 0
        %3202 = vmatpush1.bf16.msra.mxu0 0
        %3203 = vmatprep.subr.bf16.mxu0 0
        %3204 = vmatpush1.bf16.msra.mxu0 0
        %3205 = vmatprep.subr.bf16.mxu0 0
        %3206 = vmatpush1.bf16.msra.mxu0 0
        %3207 = vmatprep.subr.bf16.mxu0 0
        %3208 = vmatpush1.bf16.msra.mxu0 0
        %3209 = vmatprep.subr.bf16.mxu0 0
        %3210 = vmatpush1.bf16.msra.mxu0 0
        %3211 = vmatprep.subr.bf16.mxu0 0
        %3212 = vmatpush1.bf16.msra.mxu0 0
        %3213 = vmatprep.subr.bf16.mxu0 0
        %3214 = vmatpush1.bf16.msra.mxu0 0
        %3215 = vmatprep.subr.bf16.mxu0 0
        %3216 = vmatpush1.bf16.msra.mxu0 %v3199
        %3217 = vmatprep.subr.bf16.mxu0 0
        %3218 = vmatpush2.bf16.msra.mxu0 0
        %3219 = vmatprep.subr.bf16.mxu0 0
        %3220 = vmatpush2.bf16.msra.mxu0 0
        %3221 = vmatprep.subr.bf16.mxu0 0
        %3222 = vmatpush2.bf16.msra.mxu0 0
        %3223 = vmatprep.subr.bf16.mxu0 0
        %3224 = vmatpush2.bf16.msra.mxu0 0
        %3225 = vmatprep.subr.bf16.mxu0 0
        %3226 = vmatpush2.bf16.msra.mxu0 0
        %3227 = vmatprep.subr.bf16.mxu0 0
        %3228 = vmatpush2.bf16.msra.mxu0 0
        %3229 = vmatprep.subr.bf16.mxu0 0
        %3230 = vmatpush2.bf16.msra.mxu0 0
        %3231 = vmatprep.subr.bf16.mxu0 0
        %3232 = vmatpush2.bf16.msra.mxu0 0
        %3233 = vmatprep.mubr.bf16.mxu0 0
        %3234 = vmatmul.mubr.bf16.gmra.mxu0 %v3196
        %v3235 = vpop.f32.mrf.mxu0
        %v3236 = vadd.f32 %v3190, %v3235
        %v3237 = vpop.f32.mrf.mxu0
        %v3238 = vpop.f32.mrf.mxu0
        %v3239 = vadd.f32 %v3193, %v3238
        %v3240 = vpop.f32.mrf.mxu0
        %3241 = vdwg.mxu0
        %v3242 = vld [vmem:[%s2346] sm:$0xe]
        %v3243 = vld [vmem:[%s378] sm:$0xf]
        %v3245 = vunpack.c.l.b16 %v3242
        %v3246 = vpack.c.b16 %v3133, %v3245
        %v3247 = vrot.slane %v3246, 1
        %v3248 = vrot.slane %v3136, 1
        %v3249 = vsel %vm383, %v3247, %v3248
        %v3251 = vsel %vm282, %v3249, 0
        %v3254 = vsel %vm286, %v3243, 0
        %3256 = vmatprep.subr.bf16.mxu0 0
        %3257 = vmatpush1.bf16.msra.mxu0 0
        %3258 = vmatprep.subr.bf16.mxu0 0
        %3259 = vmatpush1.bf16.msra.mxu0 0
        %3260 = vmatprep.subr.bf16.mxu0 0
        %3261 = vmatpush1.bf16.msra.mxu0 0
        %3262 = vmatprep.subr.bf16.mxu0 0
        %3263 = vmatpush1.bf16.msra.mxu0 0
        %3264 = vmatprep.subr.bf16.mxu0 0
        %3265 = vmatpush1.bf16.msra.mxu0 0
        %3266 = vmatprep.subr.bf16.mxu0 0
        %3267 = vmatpush1.bf16.msra.mxu0 0
        %3268 = vmatprep.subr.bf16.mxu0 0
        %3269 = vmatpush1.bf16.msra.mxu0 0
        %3270 = vmatprep.subr.bf16.mxu0 0
        %3271 = vmatpush1.bf16.msra.mxu0 %v3254
        %3272 = vmatprep.subr.bf16.mxu0 0
        %3273 = vmatpush2.bf16.msra.mxu0 0
        %3274 = vmatprep.subr.bf16.mxu0 0
        %3275 = vmatpush2.bf16.msra.mxu0 0
        %3276 = vmatprep.subr.bf16.mxu0 0
        %3277 = vmatpush2.bf16.msra.mxu0 0
        %3278 = vmatprep.subr.bf16.mxu0 0
        %3279 = vmatpush2.bf16.msra.mxu0 0
        %3280 = vmatprep.subr.bf16.mxu0 0
        %3281 = vmatpush2.bf16.msra.mxu0 0
        %3282 = vmatprep.subr.bf16.mxu0 0
        %3283 = vmatpush2.bf16.msra.mxu0 0
        %3284 = vmatprep.subr.bf16.mxu0 0
        %3285 = vmatpush2.bf16.msra.mxu0 0
        %3286 = vmatprep.subr.bf16.mxu0 0
        %3287 = vmatpush2.bf16.msra.mxu0 0
        %3288 = vmatprep.mubr.bf16.mxu0 0
        %3289 = vmatmul.mubr.bf16.gmra.mxu0 %v3251
        %v3290 = vpop.f32.mrf.mxu0
        %v3291 = vadd.f32 0.0, %v3290
        %v3292 = vpop.f32.mrf.mxu0
        %v3293 = vpop.f32.mrf.mxu0
        %v3294 = vadd.f32 0.0, %v3293
        %v3295 = vpop.f32.mrf.mxu0
        %3296 = vdwg.mxu0
        %v3297 = vadd.f32 %v3236, %v3291
        %v3298 = vadd.f32 %v3239, %v3294
        %v3299 = vld [vmem:[%s2916] sm:$0xf]
        %v3300 = vld [vmem:[%s2916 + $0x4] sm:$0xf]
        %v3301 = vld [vmem:[%s439] sm:$0xf]
        %v3304 = vunpack.c.l.b16 %v3299
        %v3305 = vunpack.c.l.b16 %v3300
        %v3306 = vpack.c.b16 %v3305, %v3304
        %v3308 = vsel %vm282, %v3306, 0
        %v3311 = vsel %vm286, %v3301, 0
        %3313 = vmatprep.subr.bf16.mxu0 0
        %3314 = vmatpush1.bf16.msra.mxu0 0
        %3315 = vmatprep.subr.bf16.mxu0 0
        %3316 = vmatpush1.bf16.msra.mxu0 0
        %3317 = vmatprep.subr.bf16.mxu0 0
        %3318 = vmatpush1.bf16.msra.mxu0 0
        %3319 = vmatprep.subr.bf16.mxu0 0
        %3320 = vmatpush1.bf16.msra.mxu0 0
        %3321 = vmatprep.subr.bf16.mxu0 0
        %3322 = vmatpush1.bf16.msra.mxu0 0
        %3323 = vmatprep.subr.bf16.mxu0 0
        %3324 = vmatpush1.bf16.msra.mxu0 0
        %3325 = vmatprep.subr.bf16.mxu0 0
        %3326 = vmatpush1.bf16.msra.mxu0 0
        %3327 = vmatprep.subr.bf16.mxu0 0
        %3328 = vmatpush1.bf16.msra.mxu0 %v3311
        %3329 = vmatprep.subr.bf16.mxu0 0
        %3330 = vmatpush2.bf16.msra.mxu0 0
        %3331 = vmatprep.subr.bf16.mxu0 0
        %3332 = vmatpush2.bf16.msra.mxu0 0
        %3333 = vmatprep.subr.bf16.mxu0 0
        %3334 = vmatpush2.bf16.msra.mxu0 0
        %3335 = vmatprep.subr.bf16.mxu0 0
        %3336 = vmatpush2.bf16.msra.mxu0 0
        %3337 = vmatprep.subr.bf16.mxu0 0
        %3338 = vmatpush2.bf16.msra.mxu0 0
        %3339 = vmatprep.subr.bf16.mxu0 0
        %3340 = vmatpush2.bf16.msra.mxu0 0
        %3341 = vmatprep.subr.bf16.mxu0 0
        %3342 = vmatpush2.bf16.msra.mxu0 0
        %3343 = vmatprep.subr.bf16.mxu0 0
        %3344 = vmatpush2.bf16.msra.mxu0 0
        %3345 = vmatprep.mubr.bf16.mxu0 0
        %3346 = vmatmul.mubr.bf16.gmra.mxu0 %v3308
        %v3347 = vpop.f32.mrf.mxu0
        %v3348 = vadd.f32 0.0, %v3347
        %v3349 = vpop.f32.mrf.mxu0
        %v3350 = vpop.f32.mrf.mxu0
        %v3351 = vadd.f32 0.0, %v3350
        %v3352 = vpop.f32.mrf.mxu0
        %3353 = vdwg.mxu0
        %v3354 = vadd.f32 %v3297, %v3348
        %v3355 = vadd.f32 %v3298, %v3351
        %v3356 = vld [vmem:[%s2916] sm:$0xf]
        %v3357 = vld [vmem:[%s2916 + $0x4] sm:$0xf]
        %v3358 = vld [vmem:[%s2916 + $0x8] sm:$0x1]
        %v3359 = vld [vmem:[%s498] sm:$0xf]
        %v3363 = vunpack.c.l.b16 %v3356
        %v3364 = vunpack.c.l.b16 %v3357
        %v3365 = vunpack.c.l.b16 %v3358
        %v3366 = vpack.c.b16 %v3364, %v3363
        %v3367 = vpack.c.b16 %v3365, %v3365
        %v3369 = vshrl.u32 %v3366, 16
        %v3371 = vshll.u32 %v3366, 16
        %v3373 = vrot.slane %v3371, 1
        %v3374 = vor.u32 %v3369, %v3373
        %v3376 = vshll.u32 %v3367, 16
        %v3378 = vrot.slane %v3376, 1
        %v3379 = vsel %vm269, %v3374, %v3378
        %v3381 = vsel %vm282, %v3379, 0
        %v3384 = vsel %vm286, %v3359, 0
        %3386 = vmatprep.subr.bf16.mxu0 0
        %3387 = vmatpush1.bf16.msra.mxu0 0
        %3388 = vmatprep.subr.bf16.mxu0 0
        %3389 = vmatpush1.bf16.msra.mxu0 0
        %3390 = vmatprep.subr.bf16.mxu0 0
        %3391 = vmatpush1.bf16.msra.mxu0 0
        %3392 = vmatprep.subr.bf16.mxu0 0
        %3393 = vmatpush1.bf16.msra.mxu0 0
        %3394 = vmatprep.subr.bf16.mxu0 0
        %3395 = vmatpush1.bf16.msra.mxu0 0
        %3396 = vmatprep.subr.bf16.mxu0 0
        %3397 = vmatpush1.bf16.msra.mxu0 0
        %3398 = vmatprep.subr.bf16.mxu0 0
        %3399 = vmatpush1.bf16.msra.mxu0 0
        %3400 = vmatprep.subr.bf16.mxu0 0
        %3401 = vmatpush1.bf16.msra.mxu0 %v3384
        %3402 = vmatprep.subr.bf16.mxu0 0
        %3403 = vmatpush2.bf16.msra.mxu0 0
        %3404 = vmatprep.subr.bf16.mxu0 0
        %3405 = vmatpush2.bf16.msra.mxu0 0
        %3406 = vmatprep.subr.bf16.mxu0 0
        %3407 = vmatpush2.bf16.msra.mxu0 0
        %3408 = vmatprep.subr.bf16.mxu0 0
        %3409 = vmatpush2.bf16.msra.mxu0 0
        %3410 = vmatprep.subr.bf16.mxu0 0
        %3411 = vmatpush2.bf16.msra.mxu0 0
        %3412 = vmatprep.subr.bf16.mxu0 0
        %3413 = vmatpush2.bf16.msra.mxu0 0
        %3414 = vmatprep.subr.bf16.mxu0 0
        %3415 = vmatpush2.bf16.msra.mxu0 0
        %3416 = vmatprep.subr.bf16.mxu0 0
        %3417 = vmatpush2.bf16.msra.mxu0 0
        %3418 = vmatprep.mubr.bf16.mxu0 0
        %3419 = vmatmul.mubr.bf16.gmra.mxu0 %v3381
        %v3420 = vpop.f32.mrf.mxu0
        %v3421 = vadd.f32 0.0, %v3420
        %v3422 = vpop.f32.mrf.mxu0
        %v3423 = vpop.f32.mrf.mxu0
        %v3424 = vadd.f32 0.0, %v3423
        %v3425 = vpop.f32.mrf.mxu0
        %3426 = vdwg.mxu0
        %v3427 = vadd.f32 %v3354, %v3421
        %v3428 = vadd.f32 %v3355, %v3424
        %v3429 = vld [vmem:[%s2916] sm:$0xe]
        %v3430 = vld [vmem:[%s570] sm:$0xf]
        %v3432 = vunpack.c.l.b16 %v3429
        %v3433 = vpack.c.b16 %v3364, %v3432
        %v3434 = vrot.slane %v3433, 1
        %v3435 = vrot.slane %v3367, 1
        %v3436 = vsel %vm383, %v3434, %v3435
        %v3438 = vsel %vm282, %v3436, 0
        %v3441 = vsel %vm286, %v3430, 0
        %3443 = vmatprep.subr.bf16.mxu0 0
        %3444 = vmatpush1.bf16.msra.mxu0 0
        %3445 = vmatprep.subr.bf16.mxu0 0
        %3446 = vmatpush1.bf16.msra.mxu0 0
        %3447 = vmatprep.subr.bf16.mxu0 0
        %3448 = vmatpush1.bf16.msra.mxu0 0
        %3449 = vmatprep.subr.bf16.mxu0 0
        %3450 = vmatpush1.bf16.msra.mxu0 0
        %3451 = vmatprep.subr.bf16.mxu0 0
        %3452 = vmatpush1.bf16.msra.mxu0 0
        %3453 = vmatprep.subr.bf16.mxu0 0
        %3454 = vmatpush1.bf16.msra.mxu0 0
        %3455 = vmatprep.subr.bf16.mxu0 0
        %3456 = vmatpush1.bf16.msra.mxu0 0
        %3457 = vmatprep.subr.bf16.mxu0 0
        %3458 = vmatpush1.bf16.msra.mxu0 %v3441
        %3459 = vmatprep.subr.bf16.mxu0 0
        %3460 = vmatpush2.bf16.msra.mxu0 0
        %3461 = vmatprep.subr.bf16.mxu0 0
        %3462 = vmatpush2.bf16.msra.mxu0 0
        %3463 = vmatprep.subr.bf16.mxu0 0
        %3464 = vmatpush2.bf16.msra.mxu0 0
        %3465 = vmatprep.subr.bf16.mxu0 0
        %3466 = vmatpush2.bf16.msra.mxu0 0
        %3467 = vmatprep.subr.bf16.mxu0 0
        %3468 = vmatpush2.bf16.msra.mxu0 0
        %3469 = vmatprep.subr.bf16.mxu0 0
        %3470 = vmatpush2.bf16.msra.mxu0 0
        %3471 = vmatprep.subr.bf16.mxu0 0
        %3472 = vmatpush2.bf16.msra.mxu0 0
        %3473 = vmatprep.subr.bf16.mxu0 0
        %3474 = vmatpush2.bf16.msra.mxu0 0
        %3475 = vmatprep.mubr.bf16.mxu0 0
        %3476 = vmatmul.mubr.bf16.gmra.mxu0 %v3438
        %v3477 = vpop.f32.mrf.mxu0
        %v3478 = vadd.f32 0.0, %v3477
        %v3479 = vpop.f32.mrf.mxu0
        %v3480 = vpop.f32.mrf.mxu0
        %v3481 = vadd.f32 0.0, %v3480
        %v3482 = vpop.f32.mrf.mxu0
        %3483 = vdwg.mxu0
        %v3484 = vadd.f32 %v3427, %v3478
        %v3485 = vadd.f32 %v3428, %v3481
        %s3486 = scalar_lea.vmem %s247, 84
        %v3487 = vld [vmem:[%s3486] sm:$0xf]
        %v3488 = vld [vmem:[%s3486 + $0x4] sm:$0xf]
        %v3489 = vld [vmem:[%s630] sm:$0xf]
        %v3492 = vunpack.c.l.b16 %v3487
        %v3493 = vunpack.c.l.b16 %v3488
        %v3494 = vpack.c.b16 %v3493, %v3492
        %v3496 = vsel %vm282, %v3494, 0
        %v3499 = vsel %vm286, %v3489, 0
        %3501 = vmatprep.subr.bf16.mxu0 0
        %3502 = vmatpush1.bf16.msra.mxu0 0
        %3503 = vmatprep.subr.bf16.mxu0 0
        %3504 = vmatpush1.bf16.msra.mxu0 0
        %3505 = vmatprep.subr.bf16.mxu0 0
        %3506 = vmatpush1.bf16.msra.mxu0 0
        %3507 = vmatprep.subr.bf16.mxu0 0
        %3508 = vmatpush1.bf16.msra.mxu0 0
        %3509 = vmatprep.subr.bf16.mxu0 0
        %3510 = vmatpush1.bf16.msra.mxu0 0
        %3511 = vmatprep.subr.bf16.mxu0 0
        %3512 = vmatpush1.bf16.msra.mxu0 0
        %3513 = vmatprep.subr.bf16.mxu0 0
        %3514 = vmatpush1.bf16.msra.mxu0 0
        %3515 = vmatprep.subr.bf16.mxu0 0
        %3516 = vmatpush1.bf16.msra.mxu0 %v3499
        %3517 = vmatprep.subr.bf16.mxu0 0
        %3518 = vmatpush2.bf16.msra.mxu0 0
        %3519 = vmatprep.subr.bf16.mxu0 0
        %3520 = vmatpush2.bf16.msra.mxu0 0
        %3521 = vmatprep.subr.bf16.mxu0 0
        %3522 = vmatpush2.bf16.msra.mxu0 0
        %3523 = vmatprep.subr.bf16.mxu0 0
        %3524 = vmatpush2.bf16.msra.mxu0 0
        %3525 = vmatprep.subr.bf16.mxu0 0
        %3526 = vmatpush2.bf16.msra.mxu0 0
        %3527 = vmatprep.subr.bf16.mxu0 0
        %3528 = vmatpush2.bf16.msra.mxu0 0
        %3529 = vmatprep.subr.bf16.mxu0 0
        %3530 = vmatpush2.bf16.msra.mxu0 0
        %3531 = vmatprep.subr.bf16.mxu0 0
        %3532 = vmatpush2.bf16.msra.mxu0 0
        %3533 = vmatprep.mubr.bf16.mxu0 0
        %3534 = vmatmul.mubr.bf16.gmra.mxu0 %v3496
        %v3535 = vpop.f32.mrf.mxu0
        %v3536 = vadd.f32 0.0, %v3535
        %v3537 = vpop.f32.mrf.mxu0
        %v3538 = vpop.f32.mrf.mxu0
        %v3539 = vadd.f32 0.0, %v3538
        %v3540 = vpop.f32.mrf.mxu0
        %3541 = vdwg.mxu0
        %v3542 = vadd.f32 %v3484, %v3536
        %v3543 = vadd.f32 %v3485, %v3539
        %v3544 = vld [vmem:[%s3486] sm:$0xf]
        %v3545 = vld [vmem:[%s3486 + $0x4] sm:$0xf]
        %v3546 = vld [vmem:[%s3486 + $0x8] sm:$0x1]
        %v3547 = vld [vmem:[%s689] sm:$0xf]
        %v3551 = vunpack.c.l.b16 %v3544
        %v3552 = vunpack.c.l.b16 %v3545
        %v3553 = vunpack.c.l.b16 %v3546
        %v3554 = vpack.c.b16 %v3552, %v3551
        %v3555 = vpack.c.b16 %v3553, %v3553
        %v3557 = vshrl.u32 %v3554, 16
        %v3559 = vshll.u32 %v3554, 16
        %v3561 = vrot.slane %v3559, 1
        %v3562 = vor.u32 %v3557, %v3561
        %v3564 = vshll.u32 %v3555, 16
        %v3566 = vrot.slane %v3564, 1
        %v3567 = vsel %vm269, %v3562, %v3566
        %v3569 = vsel %vm282, %v3567, 0
        %v3572 = vsel %vm286, %v3547, 0
        %3574 = vmatprep.subr.bf16.mxu0 0
        %3575 = vmatpush1.bf16.msra.mxu0 0
        %3576 = vmatprep.subr.bf16.mxu0 0
        %3577 = vmatpush1.bf16.msra.mxu0 0
        %3578 = vmatprep.subr.bf16.mxu0 0
        %3579 = vmatpush1.bf16.msra.mxu0 0
        %3580 = vmatprep.subr.bf16.mxu0 0
        %3581 = vmatpush1.bf16.msra.mxu0 0
        %3582 = vmatprep.subr.bf16.mxu0 0
        %3583 = vmatpush1.bf16.msra.mxu0 0
        %3584 = vmatprep.subr.bf16.mxu0 0
        %3585 = vmatpush1.bf16.msra.mxu0 0
        %3586 = vmatprep.subr.bf16.mxu0 0
        %3587 = vmatpush1.bf16.msra.mxu0 0
        %3588 = vmatprep.subr.bf16.mxu0 0
        %3589 = vmatpush1.bf16.msra.mxu0 %v3572
        %3590 = vmatprep.subr.bf16.mxu0 0
        %3591 = vmatpush2.bf16.msra.mxu0 0
        %3592 = vmatprep.subr.bf16.mxu0 0
        %3593 = vmatpush2.bf16.msra.mxu0 0
        %3594 = vmatprep.subr.bf16.mxu0 0
        %3595 = vmatpush2.bf16.msra.mxu0 0
        %3596 = vmatprep.subr.bf16.mxu0 0
        %3597 = vmatpush2.bf16.msra.mxu0 0
        %3598 = vmatprep.subr.bf16.mxu0 0
        %3599 = vmatpush2.bf16.msra.mxu0 0
        %3600 = vmatprep.subr.bf16.mxu0 0
        %3601 = vmatpush2.bf16.msra.mxu0 0
        %3602 = vmatprep.subr.bf16.mxu0 0
        %3603 = vmatpush2.bf16.msra.mxu0 0
        %3604 = vmatprep.subr.bf16.mxu0 0
        %3605 = vmatpush2.bf16.msra.mxu0 0
        %3606 = vmatprep.mubr.bf16.mxu0 0
        %3607 = vmatmul.mubr.bf16.gmra.mxu0 %v3569
        %v3608 = vpop.f32.mrf.mxu0
        %v3609 = vadd.f32 0.0, %v3608
        %v3610 = vpop.f32.mrf.mxu0
        %v3611 = vpop.f32.mrf.mxu0
        %v3612 = vadd.f32 0.0, %v3611
        %v3613 = vpop.f32.mrf.mxu0
        %3614 = vdwg.mxu0
        %v3615 = vadd.f32 %v3542, %v3609
        %v3616 = vadd.f32 %v3543, %v3612
        %v3617 = vld [vmem:[%s3486] sm:$0xe]
        %v3618 = vld [vmem:[%s761] sm:$0xf]
        %v3620 = vunpack.c.l.b16 %v3617
        %v3621 = vpack.c.b16 %v3552, %v3620
        %v3622 = vrot.slane %v3621, 1
        %v3623 = vrot.slane %v3555, 1
        %v3624 = vsel %vm383, %v3622, %v3623
        %v3626 = vsel %vm282, %v3624, 0
        %v3629 = vsel %vm286, %v3618, 0
        %3631 = vmatprep.subr.bf16.mxu0 0
        %3632 = vmatpush1.bf16.msra.mxu0 0
        %3633 = vmatprep.subr.bf16.mxu0 0
        %3634 = vmatpush1.bf16.msra.mxu0 0
        %3635 = vmatprep.subr.bf16.mxu0 0
        %3636 = vmatpush1.bf16.msra.mxu0 0
        %3637 = vmatprep.subr.bf16.mxu0 0
        %3638 = vmatpush1.bf16.msra.mxu0 0
        %3639 = vmatprep.subr.bf16.mxu0 0
        %3640 = vmatpush1.bf16.msra.mxu0 0
        %3641 = vmatprep.subr.bf16.mxu0 0
        %3642 = vmatpush1.bf16.msra.mxu0 0
        %3643 = vmatprep.subr.bf16.mxu0 0
        %3644 = vmatpush1.bf16.msra.mxu0 0
        %3645 = vmatprep.subr.bf16.mxu0 0
        %3646 = vmatpush1.bf16.msra.mxu0 %v3629
        %3647 = vmatprep.subr.bf16.mxu0 0
        %3648 = vmatpush2.bf16.msra.mxu0 0
        %3649 = vmatprep.subr.bf16.mxu0 0
        %3650 = vmatpush2.bf16.msra.mxu0 0
        %3651 = vmatprep.subr.bf16.mxu0 0
        %3652 = vmatpush2.bf16.msra.mxu0 0
        %3653 = vmatprep.subr.bf16.mxu0 0
        %3654 = vmatpush2.bf16.msra.mxu0 0
        %3655 = vmatprep.subr.bf16.mxu0 0
        %3656 = vmatpush2.bf16.msra.mxu0 0
        %3657 = vmatprep.subr.bf16.mxu0 0
        %3658 = vmatpush2.bf16.msra.mxu0 0
        %3659 = vmatprep.subr.bf16.mxu0 0
        %3660 = vmatpush2.bf16.msra.mxu0 0
        %3661 = vmatprep.subr.bf16.mxu0 0
        %3662 = vmatpush2.bf16.msra.mxu0 0
        %3663 = vmatprep.mubr.bf16.mxu0 0
        %3664 = vmatmul.mubr.bf16.gmra.mxu0 %v3626
        %v3665 = vpop.f32.mrf.mxu0
        %v3666 = vadd.f32 0.0, %v3665
        %v3667 = vpop.f32.mrf.mxu0
        %v3668 = vpop.f32.mrf.mxu0
        %v3669 = vadd.f32 0.0, %v3668
        %v3670 = vpop.f32.mrf.mxu0
        %3671 = vdwg.mxu0
        %v3672 = vadd.f32 %v3615, %v3666
        %v3673 = vadd.f32 %v3616, %v3669
        %v3674 = vadd.f32 %v3672, %v822
        %v3675 = vadd.f32 %v3673, %v822
        %v3676 = vmax.f32 %v3674, 0.0
        %v3677 = vmax.f32 %v3675, 0.0
        %v3678 = vadd.f32 %v3676, %v3677
        %v3679 = vrot.slane %v3678, 4
        %v3680 = vadd.f32 %v3678, %v3679
        %v3681 = vrot.slane %v3680, 2
        %v3682 = vadd.f32 %v3680, %v3681
        %v3683 = vrot.slane %v3682, 1
        %v3684 = vadd.f32 %v3682, %v3683
        %s3685 = sadd.s32 %s835, 5
        %p3686 = scmp.lt.s32.totalorder %s3685, 16
        %v3687 = vld [vmem:[#allocation2] sm:$0x1]
        %s3688 = scalar_select %p3686, 1, 0
        %v3689 = vstv %s3688
        %vm3690 = vcmp.eq.s32.totalorder %v3689, 1
        %v3691 = vsel %vm3690, %v3684, 0.0
        %v3692 = vadd.f32 %v3687, %v3691
        %3693 = vst [vmem:[#allocation2] sm:$0x1] %v3692
        %v3694 = vld [vmem:[%s2916] sm:$0xf]
        %v3695 = vld [vmem:[%s2916 + $0x4] sm:$0xf]
        %v3696 = vld [vmem:[%s1] sm:$0xf]
        %v3697 = vld [vmem:[%s2916 + $0x8] sm:$0x1]
        %v3698 = vld [vmem:[%s259] sm:$0xf]
        %v3702 = vunpack.c.l.b16 %v3694
        %v3703 = vunpack.c.l.b16 %v3695
        %v3704 = vunpack.c.l.b16 %v3697
        %v3705 = vpack.c.b16 %v3703, %v3702
        %v3706 = vpack.c.b16 %v3704, %v3704
        %v3708 = vshrl.u32 %v3705, 16
        %v3710 = vshll.u32 %v3705, 16
        %v3712 = vrot.slane %v3710, 1
        %v3713 = vor.u32 %v3708, %v3712
        %v3715 = vshll.u32 %v3706, 16
        %v3717 = vrot.slane %v3715, 1
        %v3718 = vsel %vm269, %v3713, %v3717
        %v3720 = vsel %vm282, %v3718, 0
        %v3723 = vsel %vm286, %v3698, 0
        %3725 = vmatprep.subr.bf16.mxu0 0
        %3726 = vmatpush1.bf16.msra.mxu0 0
        %3727 = vmatprep.subr.bf16.mxu0 0
        %3728 = vmatpush1.bf16.msra.mxu0 0
        %3729 = vmatprep.subr.bf16.mxu0 0
        %3730 = vmatpush1.bf16.msra.mxu0 0
        %3731 = vmatprep.subr.bf16.mxu0 0
        %3732 = vmatpush1.bf16.msra.mxu0 0
        %3733 = vmatprep.subr.bf16.mxu0 0
        %3734 = vmatpush1.bf16.msra.mxu0 0
        %3735 = vmatprep.subr.bf16.mxu0 0
        %3736 = vmatpush1.bf16.msra.mxu0 0
        %3737 = vmatprep.subr.bf16.mxu0 0
        %3738 = vmatpush1.bf16.msra.mxu0 0
        %3739 = vmatprep.subr.bf16.mxu0 0
        %3740 = vmatpush1.bf16.msra.mxu0 %v3723
        %3741 = vmatprep.subr.bf16.mxu0 0
        %3742 = vmatpush2.bf16.msra.mxu0 0
        %3743 = vmatprep.subr.bf16.mxu0 0
        %3744 = vmatpush2.bf16.msra.mxu0 0
        %3745 = vmatprep.subr.bf16.mxu0 0
        %3746 = vmatpush2.bf16.msra.mxu0 0
        %3747 = vmatprep.subr.bf16.mxu0 0
        %3748 = vmatpush2.bf16.msra.mxu0 0
        %3749 = vmatprep.subr.bf16.mxu0 0
        %3750 = vmatpush2.bf16.msra.mxu0 0
        %3751 = vmatprep.subr.bf16.mxu0 0
        %3752 = vmatpush2.bf16.msra.mxu0 0
        %3753 = vmatprep.subr.bf16.mxu0 0
        %3754 = vmatpush2.bf16.msra.mxu0 0
        %3755 = vmatprep.subr.bf16.mxu0 0
        %3756 = vmatpush2.bf16.msra.mxu0 0
        %3757 = vmatprep.mubr.bf16.mxu0 0
        %3758 = vmatmul.mubr.bf16.gmra.mxu0 %v3720
        %v3759 = vpop.f32.mrf.mxu0
        %v3760 = vadd.f32 0.0, %v3759
        %v3761 = vpop.f32.mrf.mxu0
        %v3762 = vpop.f32.mrf.mxu0
        %v3763 = vadd.f32 0.0, %v3762
        %v3764 = vpop.f32.mrf.mxu0
        %3765 = vdwg.mxu0
        %v3766 = vsel %vm282, %v3705, 0
        %v3769 = vsel %vm286, %v3696, 0
        %3771 = vmatprep.subr.bf16.mxu0 0
        %3772 = vmatpush1.bf16.msra.mxu0 0
        %3773 = vmatprep.subr.bf16.mxu0 0
        %3774 = vmatpush1.bf16.msra.mxu0 0
        %3775 = vmatprep.subr.bf16.mxu0 0
        %3776 = vmatpush1.bf16.msra.mxu0 0
        %3777 = vmatprep.subr.bf16.mxu0 0
        %3778 = vmatpush1.bf16.msra.mxu0 0
        %3779 = vmatprep.subr.bf16.mxu0 0
        %3780 = vmatpush1.bf16.msra.mxu0 0
        %3781 = vmatprep.subr.bf16.mxu0 0
        %3782 = vmatpush1.bf16.msra.mxu0 0
        %3783 = vmatprep.subr.bf16.mxu0 0
        %3784 = vmatpush1.bf16.msra.mxu0 0
        %3785 = vmatprep.subr.bf16.mxu0 0
        %3786 = vmatpush1.bf16.msra.mxu0 %v3769
        %3787 = vmatprep.subr.bf16.mxu0 0
        %3788 = vmatpush2.bf16.msra.mxu0 0
        %3789 = vmatprep.subr.bf16.mxu0 0
        %3790 = vmatpush2.bf16.msra.mxu0 0
        %3791 = vmatprep.subr.bf16.mxu0 0
        %3792 = vmatpush2.bf16.msra.mxu0 0
        %3793 = vmatprep.subr.bf16.mxu0 0
        %3794 = vmatpush2.bf16.msra.mxu0 0
        %3795 = vmatprep.subr.bf16.mxu0 0
        %3796 = vmatpush2.bf16.msra.mxu0 0
        %3797 = vmatprep.subr.bf16.mxu0 0
        %3798 = vmatpush2.bf16.msra.mxu0 0
        %3799 = vmatprep.subr.bf16.mxu0 0
        %3800 = vmatpush2.bf16.msra.mxu0 0
        %3801 = vmatprep.subr.bf16.mxu0 0
        %3802 = vmatpush2.bf16.msra.mxu0 0
        %3803 = vmatprep.mubr.bf16.mxu0 0
        %3804 = vmatmul.mubr.bf16.gmra.mxu0 %v3766
        %v3805 = vpop.f32.mrf.mxu0
        %v3806 = vadd.f32 %v3760, %v3805
        %v3807 = vpop.f32.mrf.mxu0
        %v3808 = vpop.f32.mrf.mxu0
        %v3809 = vadd.f32 %v3763, %v3808
        %v3810 = vpop.f32.mrf.mxu0
        %3811 = vdwg.mxu0
        %v3812 = vld [vmem:[%s2916] sm:$0xe]
        %v3813 = vld [vmem:[%s378] sm:$0xf]
        %v3815 = vunpack.c.l.b16 %v3812
        %v3816 = vpack.c.b16 %v3703, %v3815
        %v3817 = vrot.slane %v3816, 1
        %v3818 = vrot.slane %v3706, 1
        %v3819 = vsel %vm383, %v3817, %v3818
        %v3821 = vsel %vm282, %v3819, 0
        %v3824 = vsel %vm286, %v3813, 0
        %3826 = vmatprep.subr.bf16.mxu0 0
        %3827 = vmatpush1.bf16.msra.mxu0 0
        %3828 = vmatprep.subr.bf16.mxu0 0
        %3829 = vmatpush1.bf16.msra.mxu0 0
        %3830 = vmatprep.subr.bf16.mxu0 0
        %3831 = vmatpush1.bf16.msra.mxu0 0
        %3832 = vmatprep.subr.bf16.mxu0 0
        %3833 = vmatpush1.bf16.msra.mxu0 0
        %3834 = vmatprep.subr.bf16.mxu0 0
        %3835 = vmatpush1.bf16.msra.mxu0 0
        %3836 = vmatprep.subr.bf16.mxu0 0
        %3837 = vmatpush1.bf16.msra.mxu0 0
        %3838 = vmatprep.subr.bf16.mxu0 0
        %3839 = vmatpush1.bf16.msra.mxu0 0
        %3840 = vmatprep.subr.bf16.mxu0 0
        %3841 = vmatpush1.bf16.msra.mxu0 %v3824
        %3842 = vmatprep.subr.bf16.mxu0 0
        %3843 = vmatpush2.bf16.msra.mxu0 0
        %3844 = vmatprep.subr.bf16.mxu0 0
        %3845 = vmatpush2.bf16.msra.mxu0 0
        %3846 = vmatprep.subr.bf16.mxu0 0
        %3847 = vmatpush2.bf16.msra.mxu0 0
        %3848 = vmatprep.subr.bf16.mxu0 0
        %3849 = vmatpush2.bf16.msra.mxu0 0
        %3850 = vmatprep.subr.bf16.mxu0 0
        %3851 = vmatpush2.bf16.msra.mxu0 0
        %3852 = vmatprep.subr.bf16.mxu0 0
        %3853 = vmatpush2.bf16.msra.mxu0 0
        %3854 = vmatprep.subr.bf16.mxu0 0
        %3855 = vmatpush2.bf16.msra.mxu0 0
        %3856 = vmatprep.subr.bf16.mxu0 0
        %3857 = vmatpush2.bf16.msra.mxu0 0
        %3858 = vmatprep.mubr.bf16.mxu0 0
        %3859 = vmatmul.mubr.bf16.gmra.mxu0 %v3821
        %v3860 = vpop.f32.mrf.mxu0
        %v3861 = vadd.f32 0.0, %v3860
        %v3862 = vpop.f32.mrf.mxu0
        %v3863 = vpop.f32.mrf.mxu0
        %v3864 = vadd.f32 0.0, %v3863
        %v3865 = vpop.f32.mrf.mxu0
        %3866 = vdwg.mxu0
        %v3867 = vadd.f32 %v3806, %v3861
        %v3868 = vadd.f32 %v3809, %v3864
        %v3869 = vld [vmem:[%s3486] sm:$0xf]
        %v3870 = vld [vmem:[%s3486 + $0x4] sm:$0xf]
        %v3871 = vld [vmem:[%s439] sm:$0xf]
        %v3874 = vunpack.c.l.b16 %v3869
        %v3875 = vunpack.c.l.b16 %v3870
        %v3876 = vpack.c.b16 %v3875, %v3874
        %v3878 = vsel %vm282, %v3876, 0
        %v3881 = vsel %vm286, %v3871, 0
        %3883 = vmatprep.subr.bf16.mxu0 0
        %3884 = vmatpush1.bf16.msra.mxu0 0
        %3885 = vmatprep.subr.bf16.mxu0 0
        %3886 = vmatpush1.bf16.msra.mxu0 0
        %3887 = vmatprep.subr.bf16.mxu0 0
        %3888 = vmatpush1.bf16.msra.mxu0 0
        %3889 = vmatprep.subr.bf16.mxu0 0
        %3890 = vmatpush1.bf16.msra.mxu0 0
        %3891 = vmatprep.subr.bf16.mxu0 0
        %3892 = vmatpush1.bf16.msra.mxu0 0
        %3893 = vmatprep.subr.bf16.mxu0 0
        %3894 = vmatpush1.bf16.msra.mxu0 0
        %3895 = vmatprep.subr.bf16.mxu0 0
        %3896 = vmatpush1.bf16.msra.mxu0 0
        %3897 = vmatprep.subr.bf16.mxu0 0
        %3898 = vmatpush1.bf16.msra.mxu0 %v3881
        %3899 = vmatprep.subr.bf16.mxu0 0
        %3900 = vmatpush2.bf16.msra.mxu0 0
        %3901 = vmatprep.subr.bf16.mxu0 0
        %3902 = vmatpush2.bf16.msra.mxu0 0
        %3903 = vmatprep.subr.bf16.mxu0 0
        %3904 = vmatpush2.bf16.msra.mxu0 0
        %3905 = vmatprep.subr.bf16.mxu0 0
        %3906 = vmatpush2.bf16.msra.mxu0 0
        %3907 = vmatprep.subr.bf16.mxu0 0
        %3908 = vmatpush2.bf16.msra.mxu0 0
        %3909 = vmatprep.subr.bf16.mxu0 0
        %3910 = vmatpush2.bf16.msra.mxu0 0
        %3911 = vmatprep.subr.bf16.mxu0 0
        %3912 = vmatpush2.bf16.msra.mxu0 0
        %3913 = vmatprep.subr.bf16.mxu0 0
        %3914 = vmatpush2.bf16.msra.mxu0 0
        %3915 = vmatprep.mubr.bf16.mxu0 0
        %3916 = vmatmul.mubr.bf16.gmra.mxu0 %v3878
        %v3917 = vpop.f32.mrf.mxu0
        %v3918 = vadd.f32 0.0, %v3917
        %v3919 = vpop.f32.mrf.mxu0
        %v3920 = vpop.f32.mrf.mxu0
        %v3921 = vadd.f32 0.0, %v3920
        %v3922 = vpop.f32.mrf.mxu0
        %3923 = vdwg.mxu0
        %v3924 = vadd.f32 %v3867, %v3918
        %v3925 = vadd.f32 %v3868, %v3921
        %v3926 = vld [vmem:[%s3486] sm:$0xf]
        %v3927 = vld [vmem:[%s3486 + $0x4] sm:$0xf]
        %v3928 = vld [vmem:[%s3486 + $0x8] sm:$0x1]
        %v3929 = vld [vmem:[%s498] sm:$0xf]
        %v3933 = vunpack.c.l.b16 %v3926
        %v3934 = vunpack.c.l.b16 %v3927
        %v3935 = vunpack.c.l.b16 %v3928
        %v3936 = vpack.c.b16 %v3934, %v3933
        %v3937 = vpack.c.b16 %v3935, %v3935
        %v3939 = vshrl.u32 %v3936, 16
        %v3941 = vshll.u32 %v3936, 16
        %v3943 = vrot.slane %v3941, 1
        %v3944 = vor.u32 %v3939, %v3943
        %v3946 = vshll.u32 %v3937, 16
        %v3948 = vrot.slane %v3946, 1
        %v3949 = vsel %vm269, %v3944, %v3948
        %v3951 = vsel %vm282, %v3949, 0
        %v3954 = vsel %vm286, %v3929, 0
        %3956 = vmatprep.subr.bf16.mxu0 0
        %3957 = vmatpush1.bf16.msra.mxu0 0
        %3958 = vmatprep.subr.bf16.mxu0 0
        %3959 = vmatpush1.bf16.msra.mxu0 0
        %3960 = vmatprep.subr.bf16.mxu0 0
        %3961 = vmatpush1.bf16.msra.mxu0 0
        %3962 = vmatprep.subr.bf16.mxu0 0
        %3963 = vmatpush1.bf16.msra.mxu0 0
        %3964 = vmatprep.subr.bf16.mxu0 0
        %3965 = vmatpush1.bf16.msra.mxu0 0
        %3966 = vmatprep.subr.bf16.mxu0 0
        %3967 = vmatpush1.bf16.msra.mxu0 0
        %3968 = vmatprep.subr.bf16.mxu0 0
        %3969 = vmatpush1.bf16.msra.mxu0 0
        %3970 = vmatprep.subr.bf16.mxu0 0
        %3971 = vmatpush1.bf16.msra.mxu0 %v3954
        %3972 = vmatprep.subr.bf16.mxu0 0
        %3973 = vmatpush2.bf16.msra.mxu0 0
        %3974 = vmatprep.subr.bf16.mxu0 0
        %3975 = vmatpush2.bf16.msra.mxu0 0
        %3976 = vmatprep.subr.bf16.mxu0 0
        %3977 = vmatpush2.bf16.msra.mxu0 0
        %3978 = vmatprep.subr.bf16.mxu0 0
        %3979 = vmatpush2.bf16.msra.mxu0 0
        %3980 = vmatprep.subr.bf16.mxu0 0
        %3981 = vmatpush2.bf16.msra.mxu0 0
        %3982 = vmatprep.subr.bf16.mxu0 0
        %3983 = vmatpush2.bf16.msra.mxu0 0
        %3984 = vmatprep.subr.bf16.mxu0 0
        %3985 = vmatpush2.bf16.msra.mxu0 0
        %3986 = vmatprep.subr.bf16.mxu0 0
        %3987 = vmatpush2.bf16.msra.mxu0 0
        %3988 = vmatprep.mubr.bf16.mxu0 0
        %3989 = vmatmul.mubr.bf16.gmra.mxu0 %v3951
        %v3990 = vpop.f32.mrf.mxu0
        %v3991 = vadd.f32 0.0, %v3990
        %v3992 = vpop.f32.mrf.mxu0
        %v3993 = vpop.f32.mrf.mxu0
        %v3994 = vadd.f32 0.0, %v3993
        %v3995 = vpop.f32.mrf.mxu0
        %3996 = vdwg.mxu0
        %v3997 = vadd.f32 %v3924, %v3991
        %v3998 = vadd.f32 %v3925, %v3994
        %v3999 = vld [vmem:[%s3486] sm:$0xe]
        %v4000 = vld [vmem:[%s570] sm:$0xf]
        %v4002 = vunpack.c.l.b16 %v3999
        %v4003 = vpack.c.b16 %v3934, %v4002
        %v4004 = vrot.slane %v4003, 1
        %v4005 = vrot.slane %v3937, 1
        %v4006 = vsel %vm383, %v4004, %v4005
        %v4008 = vsel %vm282, %v4006, 0
        %v4011 = vsel %vm286, %v4000, 0
        %4013 = vmatprep.subr.bf16.mxu0 0
        %4014 = vmatpush1.bf16.msra.mxu0 0
        %4015 = vmatprep.subr.bf16.mxu0 0
        %4016 = vmatpush1.bf16.msra.mxu0 0
        %4017 = vmatprep.subr.bf16.mxu0 0
        %4018 = vmatpush1.bf16.msra.mxu0 0
        %4019 = vmatprep.subr.bf16.mxu0 0
        %4020 = vmatpush1.bf16.msra.mxu0 0
        %4021 = vmatprep.subr.bf16.mxu0 0
        %4022 = vmatpush1.bf16.msra.mxu0 0
        %4023 = vmatprep.subr.bf16.mxu0 0
        %4024 = vmatpush1.bf16.msra.mxu0 0
        %4025 = vmatprep.subr.bf16.mxu0 0
        %4026 = vmatpush1.bf16.msra.mxu0 0
        %4027 = vmatprep.subr.bf16.mxu0 0
        %4028 = vmatpush1.bf16.msra.mxu0 %v4011
        %4029 = vmatprep.subr.bf16.mxu0 0
        %4030 = vmatpush2.bf16.msra.mxu0 0
        %4031 = vmatprep.subr.bf16.mxu0 0
        %4032 = vmatpush2.bf16.msra.mxu0 0
        %4033 = vmatprep.subr.bf16.mxu0 0
        %4034 = vmatpush2.bf16.msra.mxu0 0
        %4035 = vmatprep.subr.bf16.mxu0 0
        %4036 = vmatpush2.bf16.msra.mxu0 0
        %4037 = vmatprep.subr.bf16.mxu0 0
        %4038 = vmatpush2.bf16.msra.mxu0 0
        %4039 = vmatprep.subr.bf16.mxu0 0
        %4040 = vmatpush2.bf16.msra.mxu0 0
        %4041 = vmatprep.subr.bf16.mxu0 0
        %4042 = vmatpush2.bf16.msra.mxu0 0
        %4043 = vmatprep.subr.bf16.mxu0 0
        %4044 = vmatpush2.bf16.msra.mxu0 0
        %4045 = vmatprep.mubr.bf16.mxu0 0
        %4046 = vmatmul.mubr.bf16.gmra.mxu0 %v4008
        %v4047 = vpop.f32.mrf.mxu0
        %v4048 = vadd.f32 0.0, %v4047
        %v4049 = vpop.f32.mrf.mxu0
        %v4050 = vpop.f32.mrf.mxu0
        %v4051 = vadd.f32 0.0, %v4050
        %v4052 = vpop.f32.mrf.mxu0
        %4053 = vdwg.mxu0
        %v4054 = vadd.f32 %v3997, %v4048
        %v4055 = vadd.f32 %v3998, %v4051
        %s4056 = scalar_lea.vmem %s247, 96
        %v4057 = vld [vmem:[%s4056] sm:$0xf]
        %v4058 = vld [vmem:[%s4056 + $0x4] sm:$0xf]
        %v4059 = vld [vmem:[%s630] sm:$0xf]
        %v4062 = vunpack.c.l.b16 %v4057
        %v4063 = vunpack.c.l.b16 %v4058
        %v4064 = vpack.c.b16 %v4063, %v4062
        %v4066 = vsel %vm282, %v4064, 0
        %v4069 = vsel %vm286, %v4059, 0
        %4071 = vmatprep.subr.bf16.mxu0 0
        %4072 = vmatpush1.bf16.msra.mxu0 0
        %4073 = vmatprep.subr.bf16.mxu0 0
        %4074 = vmatpush1.bf16.msra.mxu0 0
        %4075 = vmatprep.subr.bf16.mxu0 0
        %4076 = vmatpush1.bf16.msra.mxu0 0
        %4077 = vmatprep.subr.bf16.mxu0 0
        %4078 = vmatpush1.bf16.msra.mxu0 0
        %4079 = vmatprep.subr.bf16.mxu0 0
        %4080 = vmatpush1.bf16.msra.mxu0 0
        %4081 = vmatprep.subr.bf16.mxu0 0
        %4082 = vmatpush1.bf16.msra.mxu0 0
        %4083 = vmatprep.subr.bf16.mxu0 0
        %4084 = vmatpush1.bf16.msra.mxu0 0
        %4085 = vmatprep.subr.bf16.mxu0 0
        %4086 = vmatpush1.bf16.msra.mxu0 %v4069
        %4087 = vmatprep.subr.bf16.mxu0 0
        %4088 = vmatpush2.bf16.msra.mxu0 0
        %4089 = vmatprep.subr.bf16.mxu0 0
        %4090 = vmatpush2.bf16.msra.mxu0 0
        %4091 = vmatprep.subr.bf16.mxu0 0
        %4092 = vmatpush2.bf16.msra.mxu0 0
        %4093 = vmatprep.subr.bf16.mxu0 0
        %4094 = vmatpush2.bf16.msra.mxu0 0
        %4095 = vmatprep.subr.bf16.mxu0 0
        %4096 = vmatpush2.bf16.msra.mxu0 0
        %4097 = vmatprep.subr.bf16.mxu0 0
        %4098 = vmatpush2.bf16.msra.mxu0 0
        %4099 = vmatprep.subr.bf16.mxu0 0
        %4100 = vmatpush2.bf16.msra.mxu0 0
        %4101 = vmatprep.subr.bf16.mxu0 0
        %4102 = vmatpush2.bf16.msra.mxu0 0
        %4103 = vmatprep.mubr.bf16.mxu0 0
        %4104 = vmatmul.mubr.bf16.gmra.mxu0 %v4066
        %v4105 = vpop.f32.mrf.mxu0
        %v4106 = vadd.f32 0.0, %v4105
        %v4107 = vpop.f32.mrf.mxu0
        %v4108 = vpop.f32.mrf.mxu0
        %v4109 = vadd.f32 0.0, %v4108
        %v4110 = vpop.f32.mrf.mxu0
        %4111 = vdwg.mxu0
        %v4112 = vadd.f32 %v4054, %v4106
        %v4113 = vadd.f32 %v4055, %v4109
        %v4114 = vld [vmem:[%s4056] sm:$0xf]
        %v4115 = vld [vmem:[%s4056 + $0x4] sm:$0xf]
        %v4116 = vld [vmem:[%s4056 + $0x8] sm:$0x1]
        %v4117 = vld [vmem:[%s689] sm:$0xf]
        %v4121 = vunpack.c.l.b16 %v4114
        %v4122 = vunpack.c.l.b16 %v4115
        %v4123 = vunpack.c.l.b16 %v4116
        %v4124 = vpack.c.b16 %v4122, %v4121
        %v4125 = vpack.c.b16 %v4123, %v4123
        %v4127 = vshrl.u32 %v4124, 16
        %v4129 = vshll.u32 %v4124, 16
        %v4131 = vrot.slane %v4129, 1
        %v4132 = vor.u32 %v4127, %v4131
        %v4134 = vshll.u32 %v4125, 16
        %v4136 = vrot.slane %v4134, 1
        %v4137 = vsel %vm269, %v4132, %v4136
        %v4139 = vsel %vm282, %v4137, 0
        %v4142 = vsel %vm286, %v4117, 0
        %4144 = vmatprep.subr.bf16.mxu0 0
        %4145 = vmatpush1.bf16.msra.mxu0 0
        %4146 = vmatprep.subr.bf16.mxu0 0
        %4147 = vmatpush1.bf16.msra.mxu0 0
        %4148 = vmatprep.subr.bf16.mxu0 0
        %4149 = vmatpush1.bf16.msra.mxu0 0
        %4150 = vmatprep.subr.bf16.mxu0 0
        %4151 = vmatpush1.bf16.msra.mxu0 0
        %4152 = vmatprep.subr.bf16.mxu0 0
        %4153 = vmatpush1.bf16.msra.mxu0 0
        %4154 = vmatprep.subr.bf16.mxu0 0
        %4155 = vmatpush1.bf16.msra.mxu0 0
        %4156 = vmatprep.subr.bf16.mxu0 0
        %4157 = vmatpush1.bf16.msra.mxu0 0
        %4158 = vmatprep.subr.bf16.mxu0 0
        %4159 = vmatpush1.bf16.msra.mxu0 %v4142
        %4160 = vmatprep.subr.bf16.mxu0 0
        %4161 = vmatpush2.bf16.msra.mxu0 0
        %4162 = vmatprep.subr.bf16.mxu0 0
        %4163 = vmatpush2.bf16.msra.mxu0 0
        %4164 = vmatprep.subr.bf16.mxu0 0
        %4165 = vmatpush2.bf16.msra.mxu0 0
        %4166 = vmatprep.subr.bf16.mxu0 0
        %4167 = vmatpush2.bf16.msra.mxu0 0
        %4168 = vmatprep.subr.bf16.mxu0 0
        %4169 = vmatpush2.bf16.msra.mxu0 0
        %4170 = vmatprep.subr.bf16.mxu0 0
        %4171 = vmatpush2.bf16.msra.mxu0 0
        %4172 = vmatprep.subr.bf16.mxu0 0
        %4173 = vmatpush2.bf16.msra.mxu0 0
        %4174 = vmatprep.subr.bf16.mxu0 0
        %4175 = vmatpush2.bf16.msra.mxu0 0
        %4176 = vmatprep.mubr.bf16.mxu0 0
        %4177 = vmatmul.mubr.bf16.gmra.mxu0 %v4139
        %v4178 = vpop.f32.mrf.mxu0
        %v4179 = vadd.f32 0.0, %v4178
        %v4180 = vpop.f32.mrf.mxu0
        %v4181 = vpop.f32.mrf.mxu0
        %v4182 = vadd.f32 0.0, %v4181
        %v4183 = vpop.f32.mrf.mxu0
        %4184 = vdwg.mxu0
        %v4185 = vadd.f32 %v4112, %v4179
        %v4186 = vadd.f32 %v4113, %v4182
        %v4187 = vld [vmem:[%s4056] sm:$0xe]
        %v4188 = vld [vmem:[%s761] sm:$0xf]
        %v4190 = vunpack.c.l.b16 %v4187
        %v4191 = vpack.c.b16 %v4122, %v4190
        %v4192 = vrot.slane %v4191, 1
        %v4193 = vrot.slane %v4125, 1
        %v4194 = vsel %vm383, %v4192, %v4193
        %v4196 = vsel %vm282, %v4194, 0
        %v4199 = vsel %vm286, %v4188, 0
        %4201 = vmatprep.subr.bf16.mxu0 0
        %4202 = vmatpush1.bf16.msra.mxu0 0
        %4203 = vmatprep.subr.bf16.mxu0 0
        %4204 = vmatpush1.bf16.msra.mxu0 0
        %4205 = vmatprep.subr.bf16.mxu0 0
        %4206 = vmatpush1.bf16.msra.mxu0 0
        %4207 = vmatprep.subr.bf16.mxu0 0
        %4208 = vmatpush1.bf16.msra.mxu0 0
        %4209 = vmatprep.subr.bf16.mxu0 0
        %4210 = vmatpush1.bf16.msra.mxu0 0
        %4211 = vmatprep.subr.bf16.mxu0 0
        %4212 = vmatpush1.bf16.msra.mxu0 0
        %4213 = vmatprep.subr.bf16.mxu0 0
        %4214 = vmatpush1.bf16.msra.mxu0 0
        %4215 = vmatprep.subr.bf16.mxu0 0
        %4216 = vmatpush1.bf16.msra.mxu0 %v4199
        %4217 = vmatprep.subr.bf16.mxu0 0
        %4218 = vmatpush2.bf16.msra.mxu0 0
        %4219 = vmatprep.subr.bf16.mxu0 0
        %4220 = vmatpush2.bf16.msra.mxu0 0
        %4221 = vmatprep.subr.bf16.mxu0 0
        %4222 = vmatpush2.bf16.msra.mxu0 0
        %4223 = vmatprep.subr.bf16.mxu0 0
        %4224 = vmatpush2.bf16.msra.mxu0 0
        %4225 = vmatprep.subr.bf16.mxu0 0
        %4226 = vmatpush2.bf16.msra.mxu0 0
        %4227 = vmatprep.subr.bf16.mxu0 0
        %4228 = vmatpush2.bf16.msra.mxu0 0
        %4229 = vmatprep.subr.bf16.mxu0 0
        %4230 = vmatpush2.bf16.msra.mxu0 0
        %4231 = vmatprep.subr.bf16.mxu0 0
        %4232 = vmatpush2.bf16.msra.mxu0 0
        %4233 = vmatprep.mubr.bf16.mxu0 0
        %4234 = vmatmul.mubr.bf16.gmra.mxu0 %v4196
        %v4235 = vpop.f32.mrf.mxu0
        %v4236 = vadd.f32 0.0, %v4235
        %v4237 = vpop.f32.mrf.mxu0
        %v4238 = vpop.f32.mrf.mxu0
        %v4239 = vadd.f32 0.0, %v4238
        %v4240 = vpop.f32.mrf.mxu0
        %4241 = vdwg.mxu0
        %v4242 = vadd.f32 %v4185, %v4236
        %v4243 = vadd.f32 %v4186, %v4239
        %v4244 = vadd.f32 %v4242, %v822
        %v4245 = vadd.f32 %v4243, %v822
        %v4246 = vmax.f32 %v4244, 0.0
        %v4247 = vmax.f32 %v4245, 0.0
        %v4248 = vadd.f32 %v4246, %v4247
        %v4249 = vrot.slane %v4248, 4
        %v4250 = vadd.f32 %v4248, %v4249
        %v4251 = vrot.slane %v4250, 2
        %v4252 = vadd.f32 %v4250, %v4251
        %v4253 = vrot.slane %v4252, 1
        %v4254 = vadd.f32 %v4252, %v4253
        %s4255 = sadd.s32 %s835, 6
        %p4256 = scmp.lt.s32.totalorder %s4255, 16
        %v4257 = vld [vmem:[#allocation2] sm:$0x1]
        %s4258 = scalar_select %p4256, 1, 0
        %v4259 = vstv %s4258
        %vm4260 = vcmp.eq.s32.totalorder %v4259, 1
        %v4261 = vsel %vm4260, %v4254, 0.0
        %v4262 = vadd.f32 %v4257, %v4261
        %4263 = vst [vmem:[#allocation2] sm:$0x1] %v4262
        %v4264 = vld [vmem:[%s3486] sm:$0xf]
        %v4265 = vld [vmem:[%s3486 + $0x4] sm:$0xf]
        %v4266 = vld [vmem:[%s1] sm:$0xf]
        %v4267 = vld [vmem:[%s3486 + $0x8] sm:$0x1]
        %v4268 = vld [vmem:[%s259] sm:$0xf]
        %v4272 = vunpack.c.l.b16 %v4264
        %v4273 = vunpack.c.l.b16 %v4265
        %v4274 = vunpack.c.l.b16 %v4267
        %v4275 = vpack.c.b16 %v4273, %v4272
        %v4276 = vpack.c.b16 %v4274, %v4274
        %v4278 = vshrl.u32 %v4275, 16
        %v4280 = vshll.u32 %v4275, 16
        %v4282 = vrot.slane %v4280, 1
        %v4283 = vor.u32 %v4278, %v4282
        %v4285 = vshll.u32 %v4276, 16
        %v4287 = vrot.slane %v4285, 1
        %v4288 = vsel %vm269, %v4283, %v4287
        %v4290 = vsel %vm282, %v4288, 0
        %v4293 = vsel %vm286, %v4268, 0
        %4295 = vmatprep.subr.bf16.mxu0 0
        %4296 = vmatpush1.bf16.msra.mxu0 0
        %4297 = vmatprep.subr.bf16.mxu0 0
        %4298 = vmatpush1.bf16.msra.mxu0 0
        %4299 = vmatprep.subr.bf16.mxu0 0
        %4300 = vmatpush1.bf16.msra.mxu0 0
        %4301 = vmatprep.subr.bf16.mxu0 0
        %4302 = vmatpush1.bf16.msra.mxu0 0
        %4303 = vmatprep.subr.bf16.mxu0 0
        %4304 = vmatpush1.bf16.msra.mxu0 0
        %4305 = vmatprep.subr.bf16.mxu0 0
        %4306 = vmatpush1.bf16.msra.mxu0 0
        %4307 = vmatprep.subr.bf16.mxu0 0
        %4308 = vmatpush1.bf16.msra.mxu0 0
        %4309 = vmatprep.subr.bf16.mxu0 0
        %4310 = vmatpush1.bf16.msra.mxu0 %v4293
        %4311 = vmatprep.subr.bf16.mxu0 0
        %4312 = vmatpush2.bf16.msra.mxu0 0
        %4313 = vmatprep.subr.bf16.mxu0 0
        %4314 = vmatpush2.bf16.msra.mxu0 0
        %4315 = vmatprep.subr.bf16.mxu0 0
        %4316 = vmatpush2.bf16.msra.mxu0 0
        %4317 = vmatprep.subr.bf16.mxu0 0
        %4318 = vmatpush2.bf16.msra.mxu0 0
        %4319 = vmatprep.subr.bf16.mxu0 0
        %4320 = vmatpush2.bf16.msra.mxu0 0
        %4321 = vmatprep.subr.bf16.mxu0 0
        %4322 = vmatpush2.bf16.msra.mxu0 0
        %4323 = vmatprep.subr.bf16.mxu0 0
        %4324 = vmatpush2.bf16.msra.mxu0 0
        %4325 = vmatprep.subr.bf16.mxu0 0
        %4326 = vmatpush2.bf16.msra.mxu0 0
        %4327 = vmatprep.mubr.bf16.mxu0 0
        %4328 = vmatmul.mubr.bf16.gmra.mxu0 %v4290
        %v4329 = vpop.f32.mrf.mxu0
        %v4330 = vadd.f32 0.0, %v4329
        %v4331 = vpop.f32.mrf.mxu0
        %v4332 = vpop.f32.mrf.mxu0
        %v4333 = vadd.f32 0.0, %v4332
        %v4334 = vpop.f32.mrf.mxu0
        %4335 = vdwg.mxu0
        %v4336 = vsel %vm282, %v4275, 0
        %v4339 = vsel %vm286, %v4266, 0
        %4341 = vmatprep.subr.bf16.mxu0 0
        %4342 = vmatpush1.bf16.msra.mxu0 0
        %4343 = vmatprep.subr.bf16.mxu0 0
        %4344 = vmatpush1.bf16.msra.mxu0 0
        %4345 = vmatprep.subr.bf16.mxu0 0
        %4346 = vmatpush1.bf16.msra.mxu0 0
        %4347 = vmatprep.subr.bf16.mxu0 0
        %4348 = vmatpush1.bf16.msra.mxu0 0
        %4349 = vmatprep.subr.bf16.mxu0 0
        %4350 = vmatpush1.bf16.msra.mxu0 0
        %4351 = vmatprep.subr.bf16.mxu0 0
        %4352 = vmatpush1.bf16.msra.mxu0 0
        %4353 = vmatprep.subr.bf16.mxu0 0
        %4354 = vmatpush1.bf16.msra.mxu0 0
        %4355 = vmatprep.subr.bf16.mxu0 0
        %4356 = vmatpush1.bf16.msra.mxu0 %v4339
        %4357 = vmatprep.subr.bf16.mxu0 0
        %4358 = vmatpush2.bf16.msra.mxu0 0
        %4359 = vmatprep.subr.bf16.mxu0 0
        %4360 = vmatpush2.bf16.msra.mxu0 0
        %4361 = vmatprep.subr.bf16.mxu0 0
        %4362 = vmatpush2.bf16.msra.mxu0 0
        %4363 = vmatprep.subr.bf16.mxu0 0
        %4364 = vmatpush2.bf16.msra.mxu0 0
        %4365 = vmatprep.subr.bf16.mxu0 0
        %4366 = vmatpush2.bf16.msra.mxu0 0
        %4367 = vmatprep.subr.bf16.mxu0 0
        %4368 = vmatpush2.bf16.msra.mxu0 0
        %4369 = vmatprep.subr.bf16.mxu0 0
        %4370 = vmatpush2.bf16.msra.mxu0 0
        %4371 = vmatprep.subr.bf16.mxu0 0
        %4372 = vmatpush2.bf16.msra.mxu0 0
        %4373 = vmatprep.mubr.bf16.mxu0 0
        %4374 = vmatmul.mubr.bf16.gmra.mxu0 %v4336
        %v4375 = vpop.f32.mrf.mxu0
        %v4376 = vadd.f32 %v4330, %v4375
        %v4377 = vpop.f32.mrf.mxu0
        %v4378 = vpop.f32.mrf.mxu0
        %v4379 = vadd.f32 %v4333, %v4378
        %v4380 = vpop.f32.mrf.mxu0
        %4381 = vdwg.mxu0
        %v4382 = vld [vmem:[%s3486] sm:$0xe]
        %v4383 = vld [vmem:[%s378] sm:$0xf]
        %v4385 = vunpack.c.l.b16 %v4382
        %v4386 = vpack.c.b16 %v4273, %v4385
        %v4387 = vrot.slane %v4386, 1
        %v4388 = vrot.slane %v4276, 1
        %v4389 = vsel %vm383, %v4387, %v4388
        %v4391 = vsel %vm282, %v4389, 0
        %v4394 = vsel %vm286, %v4383, 0
        %4396 = vmatprep.subr.bf16.mxu0 0
        %4397 = vmatpush1.bf16.msra.mxu0 0
        %4398 = vmatprep.subr.bf16.mxu0 0
        %4399 = vmatpush1.bf16.msra.mxu0 0
        %4400 = vmatprep.subr.bf16.mxu0 0
        %4401 = vmatpush1.bf16.msra.mxu0 0
        %4402 = vmatprep.subr.bf16.mxu0 0
        %4403 = vmatpush1.bf16.msra.mxu0 0
        %4404 = vmatprep.subr.bf16.mxu0 0
        %4405 = vmatpush1.bf16.msra.mxu0 0
        %4406 = vmatprep.subr.bf16.mxu0 0
        %4407 = vmatpush1.bf16.msra.mxu0 0
        %4408 = vmatprep.subr.bf16.mxu0 0
        %4409 = vmatpush1.bf16.msra.mxu0 0
        %4410 = vmatprep.subr.bf16.mxu0 0
        %4411 = vmatpush1.bf16.msra.mxu0 %v4394
        %4412 = vmatprep.subr.bf16.mxu0 0
        %4413 = vmatpush2.bf16.msra.mxu0 0
        %4414 = vmatprep.subr.bf16.mxu0 0
        %4415 = vmatpush2.bf16.msra.mxu0 0
        %4416 = vmatprep.subr.bf16.mxu0 0
        %4417 = vmatpush2.bf16.msra.mxu0 0
        %4418 = vmatprep.subr.bf16.mxu0 0
        %4419 = vmatpush2.bf16.msra.mxu0 0
        %4420 = vmatprep.subr.bf16.mxu0 0
        %4421 = vmatpush2.bf16.msra.mxu0 0
        %4422 = vmatprep.subr.bf16.mxu0 0
        %4423 = vmatpush2.bf16.msra.mxu0 0
        %4424 = vmatprep.subr.bf16.mxu0 0
        %4425 = vmatpush2.bf16.msra.mxu0 0
        %4426 = vmatprep.subr.bf16.mxu0 0
        %4427 = vmatpush2.bf16.msra.mxu0 0
        %4428 = vmatprep.mubr.bf16.mxu0 0
        %4429 = vmatmul.mubr.bf16.gmra.mxu0 %v4391
        %v4430 = vpop.f32.mrf.mxu0
        %v4431 = vadd.f32 0.0, %v4430
        %v4432 = vpop.f32.mrf.mxu0
        %v4433 = vpop.f32.mrf.mxu0
        %v4434 = vadd.f32 0.0, %v4433
        %v4435 = vpop.f32.mrf.mxu0
        %4436 = vdwg.mxu0
        %v4437 = vadd.f32 %v4376, %v4431
        %v4438 = vadd.f32 %v4379, %v4434
        %v4439 = vld [vmem:[%s4056] sm:$0xf]
        %v4440 = vld [vmem:[%s4056 + $0x4] sm:$0xf]
        %v4441 = vld [vmem:[%s439] sm:$0xf]
        %v4444 = vunpack.c.l.b16 %v4439
        %v4445 = vunpack.c.l.b16 %v4440
        %v4446 = vpack.c.b16 %v4445, %v4444
        %v4448 = vsel %vm282, %v4446, 0
        %v4451 = vsel %vm286, %v4441, 0
        %4453 = vmatprep.subr.bf16.mxu0 0
        %4454 = vmatpush1.bf16.msra.mxu0 0
        %4455 = vmatprep.subr.bf16.mxu0 0
        %4456 = vmatpush1.bf16.msra.mxu0 0
        %4457 = vmatprep.subr.bf16.mxu0 0
        %4458 = vmatpush1.bf16.msra.mxu0 0
        %4459 = vmatprep.subr.bf16.mxu0 0
        %4460 = vmatpush1.bf16.msra.mxu0 0
        %4461 = vmatprep.subr.bf16.mxu0 0
        %4462 = vmatpush1.bf16.msra.mxu0 0
        %4463 = vmatprep.subr.bf16.mxu0 0
        %4464 = vmatpush1.bf16.msra.mxu0 0
        %4465 = vmatprep.subr.bf16.mxu0 0
        %4466 = vmatpush1.bf16.msra.mxu0 0
        %4467 = vmatprep.subr.bf16.mxu0 0
        %4468 = vmatpush1.bf16.msra.mxu0 %v4451
        %4469 = vmatprep.subr.bf16.mxu0 0
        %4470 = vmatpush2.bf16.msra.mxu0 0
        %4471 = vmatprep.subr.bf16.mxu0 0
        %4472 = vmatpush2.bf16.msra.mxu0 0
        %4473 = vmatprep.subr.bf16.mxu0 0
        %4474 = vmatpush2.bf16.msra.mxu0 0
        %4475 = vmatprep.subr.bf16.mxu0 0
        %4476 = vmatpush2.bf16.msra.mxu0 0
        %4477 = vmatprep.subr.bf16.mxu0 0
        %4478 = vmatpush2.bf16.msra.mxu0 0
        %4479 = vmatprep.subr.bf16.mxu0 0
        %4480 = vmatpush2.bf16.msra.mxu0 0
        %4481 = vmatprep.subr.bf16.mxu0 0
        %4482 = vmatpush2.bf16.msra.mxu0 0
        %4483 = vmatprep.subr.bf16.mxu0 0
        %4484 = vmatpush2.bf16.msra.mxu0 0
        %4485 = vmatprep.mubr.bf16.mxu0 0
        %4486 = vmatmul.mubr.bf16.gmra.mxu0 %v4448
        %v4487 = vpop.f32.mrf.mxu0
        %v4488 = vadd.f32 0.0, %v4487
        %v4489 = vpop.f32.mrf.mxu0
        %v4490 = vpop.f32.mrf.mxu0
        %v4491 = vadd.f32 0.0, %v4490
        %v4492 = vpop.f32.mrf.mxu0
        %4493 = vdwg.mxu0
        %v4494 = vadd.f32 %v4437, %v4488
        %v4495 = vadd.f32 %v4438, %v4491
        %v4496 = vld [vmem:[%s4056] sm:$0xf]
        %v4497 = vld [vmem:[%s4056 + $0x4] sm:$0xf]
        %v4498 = vld [vmem:[%s4056 + $0x8] sm:$0x1]
        %v4499 = vld [vmem:[%s498] sm:$0xf]
        %v4503 = vunpack.c.l.b16 %v4496
        %v4504 = vunpack.c.l.b16 %v4497
        %v4505 = vunpack.c.l.b16 %v4498
        %v4506 = vpack.c.b16 %v4504, %v4503
        %v4507 = vpack.c.b16 %v4505, %v4505
        %v4509 = vshrl.u32 %v4506, 16
        %v4511 = vshll.u32 %v4506, 16
        %v4513 = vrot.slane %v4511, 1
        %v4514 = vor.u32 %v4509, %v4513
        %v4516 = vshll.u32 %v4507, 16
        %v4518 = vrot.slane %v4516, 1
        %v4519 = vsel %vm269, %v4514, %v4518
        %v4521 = vsel %vm282, %v4519, 0
        %v4524 = vsel %vm286, %v4499, 0
        %4526 = vmatprep.subr.bf16.mxu0 0
        %4527 = vmatpush1.bf16.msra.mxu0 0
        %4528 = vmatprep.subr.bf16.mxu0 0
        %4529 = vmatpush1.bf16.msra.mxu0 0
        %4530 = vmatprep.subr.bf16.mxu0 0
        %4531 = vmatpush1.bf16.msra.mxu0 0
        %4532 = vmatprep.subr.bf16.mxu0 0
        %4533 = vmatpush1.bf16.msra.mxu0 0
        %4534 = vmatprep.subr.bf16.mxu0 0
        %4535 = vmatpush1.bf16.msra.mxu0 0
        %4536 = vmatprep.subr.bf16.mxu0 0
        %4537 = vmatpush1.bf16.msra.mxu0 0
        %4538 = vmatprep.subr.bf16.mxu0 0
        %4539 = vmatpush1.bf16.msra.mxu0 0
        %4540 = vmatprep.subr.bf16.mxu0 0
        %4541 = vmatpush1.bf16.msra.mxu0 %v4524
        %4542 = vmatprep.subr.bf16.mxu0 0
        %4543 = vmatpush2.bf16.msra.mxu0 0
        %4544 = vmatprep.subr.bf16.mxu0 0
        %4545 = vmatpush2.bf16.msra.mxu0 0
        %4546 = vmatprep.subr.bf16.mxu0 0
        %4547 = vmatpush2.bf16.msra.mxu0 0
        %4548 = vmatprep.subr.bf16.mxu0 0
        %4549 = vmatpush2.bf16.msra.mxu0 0
        %4550 = vmatprep.subr.bf16.mxu0 0
        %4551 = vmatpush2.bf16.msra.mxu0 0
        %4552 = vmatprep.subr.bf16.mxu0 0
        %4553 = vmatpush2.bf16.msra.mxu0 0
        %4554 = vmatprep.subr.bf16.mxu0 0
        %4555 = vmatpush2.bf16.msra.mxu0 0
        %4556 = vmatprep.subr.bf16.mxu0 0
        %4557 = vmatpush2.bf16.msra.mxu0 0
        %4558 = vmatprep.mubr.bf16.mxu0 0
        %4559 = vmatmul.mubr.bf16.gmra.mxu0 %v4521
        %v4560 = vpop.f32.mrf.mxu0
        %v4561 = vadd.f32 0.0, %v4560
        %v4562 = vpop.f32.mrf.mxu0
        %v4563 = vpop.f32.mrf.mxu0
        %v4564 = vadd.f32 0.0, %v4563
        %v4565 = vpop.f32.mrf.mxu0
        %4566 = vdwg.mxu0
        %v4567 = vadd.f32 %v4494, %v4561
        %v4568 = vadd.f32 %v4495, %v4564
        %v4569 = vld [vmem:[%s4056] sm:$0xe]
        %v4570 = vld [vmem:[%s570] sm:$0xf]
        %v4572 = vunpack.c.l.b16 %v4569
        %v4573 = vpack.c.b16 %v4504, %v4572
        %v4574 = vrot.slane %v4573, 1
        %v4575 = vrot.slane %v4507, 1
        %v4576 = vsel %vm383, %v4574, %v4575
        %v4578 = vsel %vm282, %v4576, 0
        %v4581 = vsel %vm286, %v4570, 0
        %4583 = vmatprep.subr.bf16.mxu0 0
        %4584 = vmatpush1.bf16.msra.mxu0 0
        %4585 = vmatprep.subr.bf16.mxu0 0
        %4586 = vmatpush1.bf16.msra.mxu0 0
        %4587 = vmatprep.subr.bf16.mxu0 0
        %4588 = vmatpush1.bf16.msra.mxu0 0
        %4589 = vmatprep.subr.bf16.mxu0 0
        %4590 = vmatpush1.bf16.msra.mxu0 0
        %4591 = vmatprep.subr.bf16.mxu0 0
        %4592 = vmatpush1.bf16.msra.mxu0 0
        %4593 = vmatprep.subr.bf16.mxu0 0
        %4594 = vmatpush1.bf16.msra.mxu0 0
        %4595 = vmatprep.subr.bf16.mxu0 0
        %4596 = vmatpush1.bf16.msra.mxu0 0
        %4597 = vmatprep.subr.bf16.mxu0 0
        %4598 = vmatpush1.bf16.msra.mxu0 %v4581
        %4599 = vmatprep.subr.bf16.mxu0 0
        %4600 = vmatpush2.bf16.msra.mxu0 0
        %4601 = vmatprep.subr.bf16.mxu0 0
        %4602 = vmatpush2.bf16.msra.mxu0 0
        %4603 = vmatprep.subr.bf16.mxu0 0
        %4604 = vmatpush2.bf16.msra.mxu0 0
        %4605 = vmatprep.subr.bf16.mxu0 0
        %4606 = vmatpush2.bf16.msra.mxu0 0
        %4607 = vmatprep.subr.bf16.mxu0 0
        %4608 = vmatpush2.bf16.msra.mxu0 0
        %4609 = vmatprep.subr.bf16.mxu0 0
        %4610 = vmatpush2.bf16.msra.mxu0 0
        %4611 = vmatprep.subr.bf16.mxu0 0
        %4612 = vmatpush2.bf16.msra.mxu0 0
        %4613 = vmatprep.subr.bf16.mxu0 0
        %4614 = vmatpush2.bf16.msra.mxu0 0
        %4615 = vmatprep.mubr.bf16.mxu0 0
        %4616 = vmatmul.mubr.bf16.gmra.mxu0 %v4578
        %v4617 = vpop.f32.mrf.mxu0
        %v4618 = vadd.f32 0.0, %v4617
        %v4619 = vpop.f32.mrf.mxu0
        %v4620 = vpop.f32.mrf.mxu0
        %v4621 = vadd.f32 0.0, %v4620
        %v4622 = vpop.f32.mrf.mxu0
        %4623 = vdwg.mxu0
        %v4624 = vadd.f32 %v4567, %v4618
        %v4625 = vadd.f32 %v4568, %v4621
        %s4626 = scalar_lea.vmem %s247, 108
        %v4627 = vld [vmem:[%s4626] sm:$0xf]
        %v4628 = vld [vmem:[%s4626 + $0x4] sm:$0xf]
        %v4629 = vld [vmem:[%s630] sm:$0xf]
        %v4632 = vunpack.c.l.b16 %v4627
        %v4633 = vunpack.c.l.b16 %v4628
        %v4634 = vpack.c.b16 %v4633, %v4632
        %v4636 = vsel %vm282, %v4634, 0
        %v4639 = vsel %vm286, %v4629, 0
        %4641 = vmatprep.subr.bf16.mxu0 0
        %4642 = vmatpush1.bf16.msra.mxu0 0
        %4643 = vmatprep.subr.bf16.mxu0 0
        %4644 = vmatpush1.bf16.msra.mxu0 0
        %4645 = vmatprep.subr.bf16.mxu0 0
        %4646 = vmatpush1.bf16.msra.mxu0 0
        %4647 = vmatprep.subr.bf16.mxu0 0
        %4648 = vmatpush1.bf16.msra.mxu0 0
        %4649 = vmatprep.subr.bf16.mxu0 0
        %4650 = vmatpush1.bf16.msra.mxu0 0
        %4651 = vmatprep.subr.bf16.mxu0 0
        %4652 = vmatpush1.bf16.msra.mxu0 0
        %4653 = vmatprep.subr.bf16.mxu0 0
        %4654 = vmatpush1.bf16.msra.mxu0 0
        %4655 = vmatprep.subr.bf16.mxu0 0
        %4656 = vmatpush1.bf16.msra.mxu0 %v4639
        %4657 = vmatprep.subr.bf16.mxu0 0
        %4658 = vmatpush2.bf16.msra.mxu0 0
        %4659 = vmatprep.subr.bf16.mxu0 0
        %4660 = vmatpush2.bf16.msra.mxu0 0
        %4661 = vmatprep.subr.bf16.mxu0 0
        %4662 = vmatpush2.bf16.msra.mxu0 0
        %4663 = vmatprep.subr.bf16.mxu0 0
        %4664 = vmatpush2.bf16.msra.mxu0 0
        %4665 = vmatprep.subr.bf16.mxu0 0
        %4666 = vmatpush2.bf16.msra.mxu0 0
        %4667 = vmatprep.subr.bf16.mxu0 0
        %4668 = vmatpush2.bf16.msra.mxu0 0
        %4669 = vmatprep.subr.bf16.mxu0 0
        %4670 = vmatpush2.bf16.msra.mxu0 0
        %4671 = vmatprep.subr.bf16.mxu0 0
        %4672 = vmatpush2.bf16.msra.mxu0 0
        %4673 = vmatprep.mubr.bf16.mxu0 0
        %4674 = vmatmul.mubr.bf16.gmra.mxu0 %v4636
        %v4675 = vpop.f32.mrf.mxu0
        %v4676 = vadd.f32 0.0, %v4675
        %v4677 = vpop.f32.mrf.mxu0
        %v4678 = vpop.f32.mrf.mxu0
        %v4679 = vadd.f32 0.0, %v4678
        %v4680 = vpop.f32.mrf.mxu0
        %4681 = vdwg.mxu0
        %v4682 = vadd.f32 %v4624, %v4676
        %v4683 = vadd.f32 %v4625, %v4679
        %v4684 = vld [vmem:[%s4626] sm:$0xf]
        %v4685 = vld [vmem:[%s4626 + $0x4] sm:$0xf]
        %v4686 = vld [vmem:[%s4626 + $0x8] sm:$0x1]
        %v4687 = vld [vmem:[%s689] sm:$0xf]
        %v4691 = vunpack.c.l.b16 %v4684
        %v4692 = vunpack.c.l.b16 %v4685
        %v4693 = vunpack.c.l.b16 %v4686
        %v4694 = vpack.c.b16 %v4692, %v4691
        %v4695 = vpack.c.b16 %v4693, %v4693
        %v4697 = vshrl.u32 %v4694, 16
        %v4699 = vshll.u32 %v4694, 16
        %v4701 = vrot.slane %v4699, 1
        %v4702 = vor.u32 %v4697, %v4701
        %v4704 = vshll.u32 %v4695, 16
        %v4706 = vrot.slane %v4704, 1
        %v4707 = vsel %vm269, %v4702, %v4706
        %v4709 = vsel %vm282, %v4707, 0
        %v4712 = vsel %vm286, %v4687, 0
        %4714 = vmatprep.subr.bf16.mxu0 0
        %4715 = vmatpush1.bf16.msra.mxu0 0
        %4716 = vmatprep.subr.bf16.mxu0 0
        %4717 = vmatpush1.bf16.msra.mxu0 0
        %4718 = vmatprep.subr.bf16.mxu0 0
        %4719 = vmatpush1.bf16.msra.mxu0 0
        %4720 = vmatprep.subr.bf16.mxu0 0
        %4721 = vmatpush1.bf16.msra.mxu0 0
        %4722 = vmatprep.subr.bf16.mxu0 0
        %4723 = vmatpush1.bf16.msra.mxu0 0
        %4724 = vmatprep.subr.bf16.mxu0 0
        %4725 = vmatpush1.bf16.msra.mxu0 0
        %4726 = vmatprep.subr.bf16.mxu0 0
        %4727 = vmatpush1.bf16.msra.mxu0 0
        %4728 = vmatprep.subr.bf16.mxu0 0
        %4729 = vmatpush1.bf16.msra.mxu0 %v4712
        %4730 = vmatprep.subr.bf16.mxu0 0
        %4731 = vmatpush2.bf16.msra.mxu0 0
        %4732 = vmatprep.subr.bf16.mxu0 0
        %4733 = vmatpush2.bf16.msra.mxu0 0
        %4734 = vmatprep.subr.bf16.mxu0 0
        %4735 = vmatpush2.bf16.msra.mxu0 0
        %4736 = vmatprep.subr.bf16.mxu0 0
        %4737 = vmatpush2.bf16.msra.mxu0 0
        %4738 = vmatprep.subr.bf16.mxu0 0
        %4739 = vmatpush2.bf16.msra.mxu0 0
        %4740 = vmatprep.subr.bf16.mxu0 0
        %4741 = vmatpush2.bf16.msra.mxu0 0
        %4742 = vmatprep.subr.bf16.mxu0 0
        %4743 = vmatpush2.bf16.msra.mxu0 0
        %4744 = vmatprep.subr.bf16.mxu0 0
        %4745 = vmatpush2.bf16.msra.mxu0 0
        %4746 = vmatprep.mubr.bf16.mxu0 0
        %4747 = vmatmul.mubr.bf16.gmra.mxu0 %v4709
        %v4748 = vpop.f32.mrf.mxu0
        %v4749 = vadd.f32 0.0, %v4748
        %v4750 = vpop.f32.mrf.mxu0
        %v4751 = vpop.f32.mrf.mxu0
        %v4752 = vadd.f32 0.0, %v4751
        %v4753 = vpop.f32.mrf.mxu0
        %4754 = vdwg.mxu0
        %v4755 = vadd.f32 %v4682, %v4749
        %v4756 = vadd.f32 %v4683, %v4752
        %v4757 = vld [vmem:[%s4626] sm:$0xe]
        %v4758 = vld [vmem:[%s761] sm:$0xf]
        %v4760 = vunpack.c.l.b16 %v4757
        %v4761 = vpack.c.b16 %v4692, %v4760
        %v4762 = vrot.slane %v4761, 1
        %v4763 = vrot.slane %v4695, 1
        %v4764 = vsel %vm383, %v4762, %v4763
        %v4766 = vsel %vm282, %v4764, 0
        %v4769 = vsel %vm286, %v4758, 0
        %4771 = vmatprep.subr.bf16.mxu0 0
        %4772 = vmatpush1.bf16.msra.mxu0 0
        %4773 = vmatprep.subr.bf16.mxu0 0
        %4774 = vmatpush1.bf16.msra.mxu0 0
        %4775 = vmatprep.subr.bf16.mxu0 0
        %4776 = vmatpush1.bf16.msra.mxu0 0
        %4777 = vmatprep.subr.bf16.mxu0 0
        %4778 = vmatpush1.bf16.msra.mxu0 0
        %4779 = vmatprep.subr.bf16.mxu0 0
        %4780 = vmatpush1.bf16.msra.mxu0 0
        %4781 = vmatprep.subr.bf16.mxu0 0
        %4782 = vmatpush1.bf16.msra.mxu0 0
        %4783 = vmatprep.subr.bf16.mxu0 0
        %4784 = vmatpush1.bf16.msra.mxu0 0
        %4785 = vmatprep.subr.bf16.mxu0 0
        %4786 = vmatpush1.bf16.msra.mxu0 %v4769
        %4787 = vmatprep.subr.bf16.mxu0 0
        %4788 = vmatpush2.bf16.msra.mxu0 0
        %4789 = vmatprep.subr.bf16.mxu0 0
        %4790 = vmatpush2.bf16.msra.mxu0 0
        %4791 = vmatprep.subr.bf16.mxu0 0
        %4792 = vmatpush2.bf16.msra.mxu0 0
        %4793 = vmatprep.subr.bf16.mxu0 0
        %4794 = vmatpush2.bf16.msra.mxu0 0
        %4795 = vmatprep.subr.bf16.mxu0 0
        %4796 = vmatpush2.bf16.msra.mxu0 0
        %4797 = vmatprep.subr.bf16.mxu0 0
        %4798 = vmatpush2.bf16.msra.mxu0 0
        %4799 = vmatprep.subr.bf16.mxu0 0
        %4800 = vmatpush2.bf16.msra.mxu0 0
        %4801 = vmatprep.subr.bf16.mxu0 0
        %4802 = vmatpush2.bf16.msra.mxu0 0
        %4803 = vmatprep.mubr.bf16.mxu0 0
        %4804 = vmatmul.mubr.bf16.gmra.mxu0 %v4766
        %v4805 = vpop.f32.mrf.mxu0
        %v4806 = vadd.f32 0.0, %v4805
        %v4807 = vpop.f32.mrf.mxu0
        %v4808 = vpop.f32.mrf.mxu0
        %v4809 = vadd.f32 0.0, %v4808
        %v4810 = vpop.f32.mrf.mxu0
        %4811 = vdwg.mxu0
        %v4812 = vadd.f32 %v4755, %v4806
        %v4813 = vadd.f32 %v4756, %v4809
        %v4814 = vadd.f32 %v4812, %v822
        %v4815 = vadd.f32 %v4813, %v822
        %v4816 = vmax.f32 %v4814, 0.0
        %v4817 = vmax.f32 %v4815, 0.0
        %v4818 = vadd.f32 %v4816, %v4817
        %v4819 = vrot.slane %v4818, 4
        %v4820 = vadd.f32 %v4818, %v4819
        %v4821 = vrot.slane %v4820, 2
        %v4822 = vadd.f32 %v4820, %v4821
        %v4823 = vrot.slane %v4822, 1
        %v4824 = vadd.f32 %v4822, %v4823
        %s4825 = sadd.s32 %s835, 7
        %p4826 = scmp.lt.s32.totalorder %s4825, 16
        %v4827 = vld [vmem:[#allocation2] sm:$0x1]
        %s4828 = scalar_select %p4826, 1, 0
        %v4829 = vstv %s4828
        %vm4830 = vcmp.eq.s32.totalorder %v4829, 1
        %v4831 = vsel %vm4830, %v4824, 0.0
        %v4832 = vadd.f32 %v4827, %v4831
        %4833 = vst [vmem:[#allocation2] sm:$0x1] %v4832
        %p4834 = scmp.eq.s32.totalorder %s24, 1
        // Predicated region
        $region45: #{tpu_custom_call.1} parent=39 // pred_check
          %p4835 = pneg %p4834
        $region46: #{tpu_custom_call.1} parent=39 // pred_check_branch
          %4837 = sbr.rel (%p4835) target = $region48
        $region47: #{tpu_custom_call.1} parent=39 // pred_region
          %v4838 = vld [vmem:[#allocation2] sm:$0x1]
          %v4839 = vmul.f32 %v4838, 0.00390625
          %v4840 = vld [vmem:[%s3] sm:$0xff]
          %v4841 = vld [vmem:[%s3 + $0x8] sm:$0xff]
          %v4842 = vld [vmem:[%s3 + $0x10] sm:$0xff]
          %v4843 = vld [vmem:[%s3 + $0x18] sm:$0xff]
          %v4844 = vld [vmem:[%s3 + $0x20] sm:$0xff]
          %v4845 = vld [vmem:[%s3 + $0x28] sm:$0xff]
          %v4846 = vld [vmem:[%s3 + $0x30] sm:$0xff]
          %v4847 = vld [vmem:[%s3 + $0x38] sm:$0xff]
          %v4848 = vld [vmem:[%s3 + $0x40] sm:$0xff]
          %v4849 = vld [vmem:[%s3 + $0x48] sm:$0xff]
          %v4850 = vld [vmem:[%s3 + $0x50] sm:$0xff]
          %v4851 = vld [vmem:[%s3 + $0x58] sm:$0xff]
          %v4852 = vld [vmem:[%s3 + $0x60] sm:$0xff]
          %v4853 = vld [vmem:[%s3 + $0x68] sm:$0xff]
          %v4854 = vld [vmem:[%s3 + $0x70] sm:$0xff]
          %v4855 = vld [vmem:[%s3 + $0x78] sm:$0xff]
          %v4856 = vld [vmem:[%s4] sm:$0x1]
          %4857 = vmatprep.subr.mxu0 0.0
          %4858 = vmatpush1.msra.mxu0 %v4855
          %4859 = vmatprep.subr.mxu0 0.0
          %4860 = vmatpush1.msra.mxu0 %v4854
          %4861 = vmatprep.subr.mxu0 0.0
          %4862 = vmatpush1.msra.mxu0 %v4853
          %4863 = vmatprep.subr.mxu0 0.0
          %4864 = vmatpush1.msra.mxu0 %v4852
          %4865 = vmatprep.subr.mxu0 0.0
          %4866 = vmatpush1.msra.mxu0 %v4851
          %4867 = vmatprep.subr.mxu0 0.0
          %4868 = vmatpush1.msra.mxu0 %v4850
          %4869 = vmatprep.subr.mxu0 0.0
          %4870 = vmatpush1.msra.mxu0 %v4849
          %4871 = vmatprep.subr.mxu0 0.0
          %4872 = vmatpush1.msra.mxu0 %v4848
          %4873 = vmatprep.subr.mxu0 0.0
          %4874 = vmatpush1.msra.mxu0 %v4847
          %4875 = vmatprep.subr.mxu0 0.0
          %4876 = vmatpush1.msra.mxu0 %v4846
          %4877 = vmatprep.subr.mxu0 0.0
          %4878 = vmatpush1.msra.mxu0 %v4845
          %4879 = vmatprep.subr.mxu0 0.0
          %4880 = vmatpush1.msra.mxu0 %v4844
          %4881 = vmatprep.subr.mxu0 0.0
          %4882 = vmatpush1.msra.mxu0 %v4843
          %4883 = vmatprep.subr.mxu0 0.0
          %4884 = vmatpush1.msra.mxu0 %v4842
          %4885 = vmatprep.subr.mxu0 0.0
          %4886 = vmatpush1.msra.mxu0 %v4841
          %4887 = vmatprep.subr.mxu0 0.0
          %4888 = vmatpush1.msra.mxu0 %v4840
          %4889 = vmatprep.subr.mxu0 0.0
          %4890 = vmatpush2.msra.mxu0 0.0
          %4891 = vmatprep.subr.mxu0 0.0
          %4892 = vmatpush2.msra.mxu0 0.0
          %4893 = vmatprep.subr.mxu0 0.0
          %4894 = vmatpush2.msra.mxu0 0.0
          %4895 = vmatprep.subr.mxu0 0.0
          %4896 = vmatpush2.msra.mxu0 0.0
          %4897 = vmatprep.subr.mxu0 0.0
          %4898 = vmatpush2.msra.mxu0 0.0
          %4899 = vmatprep.subr.mxu0 0.0
          %4900 = vmatpush2.msra.mxu0 0.0
          %4901 = vmatprep.subr.mxu0 0.0
          %4902 = vmatpush2.msra.mxu0 0.0
          %4903 = vmatprep.subr.mxu0 0.0
          %4904 = vmatpush2.msra.mxu0 0.0
          %4905 = vmatprep.subr.mxu0 0.0
          %4906 = vmatpush2.msra.mxu0 0.0
          %4907 = vmatprep.subr.mxu0 0.0
          %4908 = vmatpush2.msra.mxu0 0.0
          %4909 = vmatprep.subr.mxu0 0.0
          %4910 = vmatpush2.msra.mxu0 0.0
          %4911 = vmatprep.subr.mxu0 0.0
          %4912 = vmatpush2.msra.mxu0 0.0
          %4913 = vmatprep.subr.mxu0 0.0
          %4914 = vmatpush2.msra.mxu0 0.0
          %4915 = vmatprep.subr.mxu0 0.0
          %4916 = vmatpush2.msra.mxu0 0.0
          %4917 = vmatprep.subr.mxu0 0.0
          %4918 = vmatpush2.msra.mxu0 0.0
          %4919 = vmatprep.subr.mxu0 0.0
          %4920 = vmatpush2.msra.mxu0 0.0
          %4921 = vmatprep.mubr.f32.mxu0 0.0
          %4922 = vmatmul.mubr.f32.gmra.mxu0 %v4839
          %v4923 = vpop.f32.mrf.mxu0
          %v4924 = vadd.f32 %v4856, %v4923
          %v4925 = vpop.f32.mrf.mxu0
          %4926 = vdwg.mxu0
          %4927 = vst [vmem:[%s238] sm:$0x1] %v4924
        $region48: #{tpu_custom_call.1} parent=39 // pred_fallthru
          _
        %s4928 = sand.u32 %s151, 1
        %s4929 = scalar_lea.sflag [#allocation4], %s4928
        %s4930 = sand.u32 %s151, 1
        %s4931 = scalar_lea.vmem [#allocation3], %s4930
        // Predicated region
        $region49: #{tpu_custom_call.1} parent=39 // pred_check
          %p4932 = pneg %p161
        $region50: #{tpu_custom_call.1} parent=39 // pred_check_branch
          %4934 = sbr.rel (%p4932) target = $region52
        $region51: #{tpu_custom_call.1} parent=39 // pred_region
          %s4936 = ssub.s32 16, 16
          %4937 = vsyncadd %s4929, %s4936
          %s4938 = smul.addr %s23, 16
          %s4939 = scalar_lea.hbm %s5, %s4938
          %s4941 = sshll.u32 %s4931, 4
          %s4942 = int_to_ptr.vmem [resolvable:$true] %s4941
          %4944 = dma.vmem_to_hbm [thread:$0]  %s4942, 16, %s4939, %s4929
        $region52: #{tpu_custom_call.1} parent=39 // pred_fallthru
          _
      $region40: #{tpu_custom_call.1} parent=5 // pred_fallthru
        _
      %p4945 = scmp.le.s32.totalorder 2, %s14
      // Predicated region
      $region53: #{tpu_custom_call.1} parent=5 // pred_check
        %p4946 = pneg %p4945
      $region54: #{tpu_custom_call.1} parent=5 // pred_check_branch
        %4948 = sbr.rel (%p4946) target = $region56
      $region55: #{tpu_custom_call.1} parent=5 // pred_region
        %s4949 = ssub.s32 %s14, 2
        // Predicated region
        $region57: #{tpu_custom_call.1} parent=55 // pred_check
          %p4950 = pneg %p167
        $region58: #{tpu_custom_call.1} parent=55 // pred_check_branch
          %4952 = sbr.rel (%p4950) target = $region60
        $region59: #{tpu_custom_call.1} parent=55 // pred_region
          %s4953 = sand.u32 %s152, 1
          %s4954 = scalar_lea.sflag [#allocation4], %s4953
          %s4955 = sand.u32 %s152, 1
          %s4956 = scalar_lea.vmem [#allocation3], %s4955
          %4957 = dma.done %s4954, 16
        $region60: #{tpu_custom_call.1} parent=55 // pred_fallthru
          _
      $region56: #{tpu_custom_call.1} parent=5 // pred_fallthru
        _
    $region6: #{tpu_custom_call.1} parent=1 // loop_footer
      %s18 = sadd.s32 1, %s14
    $region7: #{tpu_custom_call.1} parent=1 // loop_footer_branch
      %13 = sbr.rel target = $region3
    $region8: #{tpu_custom_call.1} parent=1 // loop_exit
      _
    %4958 = vsyncpa [#allocation4], 1
    %s4959 = scalar_lea.sflag [#allocation4], 1
    %4960 = vsyncpa %s4959, 1

</llo_original>
